<compile_context>
chip_gen: v7x
topology: tpu7x:2x2x1
jax: 0.10.0
libtpu: 0.0.40
codegen_flags: <defaults>
</compile_context>

<pallas_src>
import math

import jax
import jax.numpy as jnp
from jax.experimental import pallas as pl
from jax.experimental.pallas import tpu as pltpu

EMBED_DIM = 1280
NUM_HEADS = 5
HEAD_DIM = EMBED_DIM // NUM_HEADS   # 256
SEQ_Q = 11                          # fixed by nn.LayerNorm((11, 1280))
NUM_LAYERS = 2
LN_EPS = 1e-5
SCALE = 1.0 / math.sqrt(HEAD_DIM)


def _fused_cross_attn_kernel(tgt_ref, mem_ref,
                             wq_ref, wkv_ref, wo_ref,
                             bq_ref, bkv_ref, bo_ref,
                             lnw_ref, lnb_ref,
                             out_ref,
                             x_ref, acc_ref):
    """One grid step = one (layer, head) pair, processing the whole batch."""
    l = pl.program_id(0)
    h = pl.program_id(1)
    last_h = pl.num_programs(1) - 1

    # Load the running `tgt` state once, at the very first grid step.
    @pl.when(jnp.logical_and(l == 0, h == 0))
    def _():
        x_ref[...] = tgt_ref[...]

    # Zero the per-layer head accumulator at the first head of every layer.
    @pl.when(h == 0)
    def _():
        acc_ref[...] = jnp.zeros_like(acc_ref)

    wq = wq_ref[0, 0]     # (E, Dh)    bf16
    wkv = wkv_ref[0, 0]   # (E, 2*Dh)  bf16  (K and V fused)
    wo = wo_ref[0, 0]     # (Dh, E)    bf16
    bq = bq_ref[0, 0]     # (1, Dh)    f32
    bkv = bkv_ref[0, 0]   # (1, 2*Dh)  f32

    batch = x_ref.shape[0]
    for b in range(batch):                       # batch is tiny -> static unroll
        x = x_ref[b]                             # (Lq, E)  f32 running tgt / residual
        m = mem_ref[b]                           # (Lk, E)  f32 key/value source

        # Per-head projections (f32 activations x bf16 weights, f32 accumulation).
        q = jnp.dot(x, wq, preferred_element_type=jnp.float32) + bq        # (Lq, Dh)
        kv = jnp.dot(m, wkv, preferred_element_type=jnp.float32) + bkv     # (Lk, 2*Dh)
        k = kv[:, :HEAD_DIM]
        v = kv[:, HEAD_DIM:]

        # Scaled dot-product attention with numerically stable softmax.
        s = jnp.dot(q, k.T, preferred_element_type=jnp.float32) * SCALE    # (Lq, Lk)
        s = s - jnp.max(s, axis=-1, keepdims=True)
        p = jnp.exp(s)
        p = p * pl.reciprocal(jnp.sum(p, axis=-1, keepdims=True), approx=True)

        o = jnp.dot(p, v, preferred_element_type=jnp.float32)              # (Lq, Dh)
        # Accumulate this head's slice of the output projection.
        acc_ref[b] += jnp.dot(o, wo, preferred_element_type=jnp.float32)   # (Lq, E)

    # Layer epilogue: residual + joint LayerNorm over (Lq, E), update state & output.
    @pl.when(h == last_h)
    def _():
        lq, e = lnw_ref.shape
        denom = float(lq * e)
        for b in range(batch):
            y = x_ref[b] + acc_ref[b] + bo_ref[0]          # (Lq, E)
            mu = jnp.sum(y) / denom
            d = y - mu
            var = jnp.sum(d * d) / denom
            yn = d * jax.lax.rsqrt(var + LN_EPS)
            new_x = yn * lnw_ref[...] + lnb_ref[...]
            x_ref[b] = new_x
            out_ref[b] = new_x.astype(out_ref.dtype)


def cross_attention_multi_layer(tgt, memory, prepared):
    """Full CrossAttentionMutilLayer.forward in one pallas_call (both layers fused)."""
    B, Lq, E = tgt.shape
    _, Lk, _ = memory.shape
    H, Dh = NUM_HEADS, HEAD_DIM
    L = prepared["wq"].shape[0]                  # number of layers (2)

    grid_spec = pltpu.PrefetchScalarGridSpec(
        num_scalar_prefetch=0,
        grid=(L, H),
        in_specs=[
            pl.BlockSpec((B, Lq, E), lambda l, h: (0, 0, 0)),            # tgt (resident)
            pl.BlockSpec((B, Lk, E), lambda l, h: (0, 0, 0)),            # memory (resident)
            pl.BlockSpec((1, 1, E, Dh), lambda l, h: (l, h, 0, 0)),      # wq   bf16
            pl.BlockSpec((1, 1, E, 2 * Dh), lambda l, h: (l, h, 0, 0)),  # wkv  bf16
            pl.BlockSpec((1, 1, Dh, E), lambda l, h: (l, h, 0, 0)),      # wo   bf16
            pl.BlockSpec((1, 1, 1, Dh), lambda l, h: (l, h, 0, 0)),      # bq
            pl.BlockSpec((1, 1, 1, 2 * Dh), lambda l, h: (l, h, 0, 0)),  # bkv
            pl.BlockSpec((1, 1, E), lambda l, h: (l, 0, 0)),             # bo
            pl.BlockSpec((Lq, E), lambda l, h: (0, 0)),                  # ln weight
            pl.BlockSpec((Lq, E), lambda l, h: (0, 0)),                  # ln bias
        ],
        out_specs=pl.BlockSpec((B, Lq, E), lambda l, h: (0, 0, 0)),
        scratch_shapes=[
            pltpu.VMEM((B, Lq, E), jnp.float32),   # running tgt state (across layers)
            pltpu.VMEM((B, Lq, E), jnp.float32),   # per-layer head accumulator
        ],
    )

    return pl.pallas_call(
        _fused_cross_attn_kernel,
        out_shape=jax.ShapeDtypeStruct((B, Lq, E), jnp.float32),
        grid_spec=grid_spec,
        compiler_params=pltpu.CompilerParams(
            dimension_semantics=("arbitrary", "arbitrary")),
    )(tgt, memory,
      prepared["wq"], prepared["wkv"], prepared["wo"],
      prepared["bq"], prepared["bkv"], prepared["bo"],
      prepared["ln_w"], prepared["ln_b"])


# ------------------------- one-time parameter packing ------------------------

def prepare_params(params):
    """Pack per-(layer, head) weight blocks and cast weights to bf16 (done once)."""
    E, H, Dh = EMBED_DIM, NUM_HEADS, HEAD_DIM
    wq, wkv, wo, bq, bkv, bo = [], [], [], [], [], []
    for lp in params["layers"]:
        wq.append(lp["wq_t"].reshape(E, H, Dh).transpose(1, 0, 2))        # (H, E, Dh)
        wk = lp["wk_t"].reshape(E, H, Dh).transpose(1, 0, 2)
        wv = lp["wv_t"].reshape(E, H, Dh).transpose(1, 0, 2)
        wkv.append(jnp.concatenate([wk, wv], axis=-1))                    # (H, E, 2Dh)
        wo.append(lp["wo_t"].reshape(H, Dh, E))                           # (H, Dh, E)
        bq.append(lp["bq"].reshape(H, 1, Dh))
        bkv.append(jnp.concatenate([lp["bk"].reshape(H, 1, Dh),
                                    lp["bv"].reshape(H, 1, Dh)], axis=-1))
        bo.append(lp["bo"].reshape(1, E))
    return dict(
        wq=jnp.stack(wq).astype(jnp.bfloat16),     # (L, H, E, Dh)
        wkv=jnp.stack(wkv).astype(jnp.bfloat16),   # (L, H, E, 2Dh)
        wo=jnp.stack(wo).astype(jnp.bfloat16),     # (L, H, Dh, E)
        bq=jnp.stack(bq),                          # (L, H, 1, Dh)   f32
        bkv=jnp.stack(bkv),                        # (L, H, 1, 2Dh)  f32
        bo=jnp.stack(bo),                          # (L, 1, E)       f32
        ln_w=params["ln_w"], ln_b=params["ln_b"],
    )


# ----------------------------- pure-JAX reference ----------------------------

def _mha_ref(tgt, mem, lp):
    B, Lq, E = tgt.shape
    Lk = mem.shape[1]
    H, Dh = NUM_HEADS, HEAD_DIM
    hp = "highest"
    q = jnp.dot(tgt, lp["wq_t"], precision=hp) + lp["bq"].reshape(E)
    k = jnp.dot(mem, lp["wk_t"], precision=hp) + lp["bk"].reshape(E)
    v = jnp.dot(mem, lp["wv_t"], precision=hp) + lp["bv"].reshape(E)
    q = q.reshape(B, Lq, H, Dh).transpose(0, 2, 1, 3)
    k = k.reshape(B, Lk, H, Dh).transpose(0, 2, 1, 3)
    v = v.reshape(B, Lk, H, Dh).transpose(0, 2, 1, 3)
    s = jnp.einsum("bhqd,bhkd->bhqk", q, k, precision=hp) * SCALE
    a = jax.nn.softmax(s, axis=-1)
    o = jnp.einsum("bhqk,bhkd->bhqd", a, v, precision=hp)
    o = o.transpose(0, 2, 1, 3).reshape(B, Lq, E)
    return jnp.dot(o, lp["wo_t"], precision=hp) + lp["bo"].reshape(E)


def _layernorm_ref(x, w, b):
    mu = x.mean(axis=(-2, -1), keepdims=True)
    var = ((x - mu) ** 2).mean(axis=(-2, -1), keepdims=True)
    return (x - mu) / jnp.sqrt(var + LN_EPS) * w + b


def reference(tgt, memory, params):
    for lp in params["layers"]:
        x = _mha_ref(tgt, memory, lp)
        tgt = _layernorm_ref(tgt + x, params["ln_w"], params["ln_b"])
    return tgt


# ------------------------------- params / main -------------------------------

def init_params(key):
    E, H, Dh, Lq = EMBED_DIM, NUM_HEADS, HEAD_DIM, SEQ_Q
    std = 1.0 / math.sqrt(E)
    layers = []
    for l in range(NUM_LAYERS):
        lk = jax.random.fold_in(key, l)
        ks = jax.random.split(lk, 8)
        layers.append(dict(
            wq_t=jax.random.normal(ks[0], (E, E), jnp.float32) * std,
            wk_t=jax.random.normal(ks[1], (E, E), jnp.float32) * std,
            wv_t=jax.random.normal(ks[2], (E, E), jnp.float32) * std,
            wo_t=jax.random.normal(ks[3], (E, E), jnp.float32) * std,
            bq=jax.random.normal(ks[4], (H, 1, Dh), jnp.float32) * 0.01,
            bk=jax.random.normal(ks[5], (H, 1, Dh), jnp.float32) * 0.01,
            bv=jax.random.normal(ks[6], (H, 1, Dh), jnp.float32) * 0.01,
            bo=jax.random.normal(ks[7], (1, E), jnp.float32) * 0.01,
        ))
    lnk = jax.random.fold_in(key, 99)
    k1, k2 = jax.random.split(lnk)
    ln_w = 1.0 + 0.01 * jax.random.normal(k1, (Lq, E), jnp.float32)
    ln_b = 0.01 * jax.random.normal(k2, (Lq, E), jnp.float32)
    return dict(layers=layers, ln_w=ln_w, ln_b=ln_b)


if __name__ == "__main__":
    key = jax.random.PRNGKey(0)
    kp, kt, km = jax.random.split(key, 3)

    B, Lk = 2, 16
    params = init_params(kp)
    prepared = prepare_params(params)          # pack + bf16-cast weights once

    tgt = jax.random.normal(kt, (B, SEQ_Q, EMBED_DIM), jnp.float32)
    memory = jax.random.normal(km, (B, Lk, EMBED_DIM), jnp.float32)

    out = jax.block_until_ready(cross_attention_multi_layer(tgt, memory, prepared))
    ref = jax.block_until_ready(reference(tgt, memory, params))

    assert out.shape == (B, SEQ_Q, EMBED_DIM)
    assert bool(jnp.all(jnp.isfinite(out)))
    # Error budget: bf16-rounded projection weights through two layers (activations,
    # accumulation and LayerNorm all stay f32) -> well under 5e-2 max-abs vs f32 ref.
    max_diff = float(jnp.max(jnp.abs(out - ref)))
    assert max_diff < 5e-2, f"max diff vs reference too large: {max_diff}"

    print("KERNEL_OK")
</pallas_src>

<mosaic_0001>
module attributes {stable_mosaic.version = 11 : i64} {
  func.func @_fused_cross_attn_kernel(%arg0: i32, %arg1: i32, %arg2: memref<2x11x1280xf32, #tpu.memory_space<vmem>>, %arg3: memref<2x16x1280xf32, #tpu.memory_space<vmem>>, %arg4: memref<1x1x1280x256xbf16, #tpu.memory_space<vmem>>, %arg5: memref<1x1x1280x512xbf16, #tpu.memory_space<vmem>>, %arg6: memref<1x1x256x1280xbf16, #tpu.memory_space<vmem>>, %arg7: memref<1x1x1x256xf32, #tpu.memory_space<vmem>>, %arg8: memref<1x1x1x512xf32, #tpu.memory_space<vmem>>, %arg9: memref<1x1x1280xf32, #tpu.memory_space<vmem>>, %arg10: memref<11x1280xf32, #tpu.memory_space<vmem>>, %arg11: memref<11x1280xf32, #tpu.memory_space<vmem>>, %arg12: memref<2x11x1280xf32, #tpu.memory_space<vmem>>, %arg13: memref<2x11x1280xf32, #tpu.memory_space<vmem>>, %arg14: memref<2x11x1280xf32, #tpu.memory_space<vmem>>) attributes {dimension_semantics = [#tpu.dimension_semantics<arbitrary>, #tpu.dimension_semantics<arbitrary>], iteration_bounds = array<i64: 2, 5>, scalar_prefetch = 0 : i64, scratch_operands = 2 : i64, tpu.core_type = #tpu.core_type<tc>, window_params = [{pipeline_mode = #tpu.pipeline_mode<synchronous>, transform_indices = @transform_0, window_bounds = array<i64: 2, 11, 1280>}, {pipeline_mode = #tpu.pipeline_mode<synchronous>, transform_indices = @transform_1, window_bounds = array<i64: 2, 16, 1280>}, {transform_indices = @transform_2, window_bounds = array<i64: 1, 1, 1280, 256>}, {transform_indices = @transform_3, window_bounds = array<i64: 1, 1, 1280, 512>}, {transform_indices = @transform_4, window_bounds = array<i64: 1, 1, 256, 1280>}, {transform_indices = @transform_5, window_bounds = array<i64: 1, 1, 1, 256>}, {transform_indices = @transform_6, window_bounds = array<i64: 1, 1, 1, 512>}, {transform_indices = @transform_7, window_bounds = array<i64: 1, 1, 1280>}, {pipeline_mode = #tpu.pipeline_mode<synchronous>, transform_indices = @transform_8, window_bounds = array<i64: 11, 1280>}, {pipeline_mode = #tpu.pipeline_mode<synchronous>, transform_indices = @transform_9, window_bounds = array<i64: 11, 1280>}, {pipeline_mode = #tpu.pipeline_mode<synchronous>, transform_indices = @transform_10, window_bounds = array<i64: 2, 11, 1280>}]} {
    %c0_i32 = arith.constant 0 : i32
    %0 = arith.cmpi eq, %arg0, %c0_i32 : i32
    %c0_i32_0 = arith.constant 0 : i32
    %1 = arith.cmpi eq, %arg1, %c0_i32_0 : i32
    %2 = arith.andi %0, %1 : i1
    %3 = arith.extui %2 : i1 to i32
    %c0_i32_1 = arith.constant 0 : i32
    %4 = arith.cmpi ne, %3, %c0_i32_1 : i32
    scf.if %4 {
      %c0_62 = arith.constant 0 : index
      %c0_63 = arith.constant 0 : index
      %c0_64 = arith.constant 0 : index
      %89 = vector.load %arg2[%c0_62, %c0_63, %c0_64] : memref<2x11x1280xf32, #tpu.memory_space<vmem>>, vector<2x11x1280xf32>
      %c0_65 = arith.constant 0 : index
      %c0_66 = arith.constant 0 : index
      %c0_67 = arith.constant 0 : index
      %90 = vector.load %arg13[%c0_65, %c0_66, %c0_67] : memref<2x11x1280xf32, #tpu.memory_space<vmem>>, vector<2x11x1280xf32>
      tpu.vector_store %arg13[%c0_65, %c0_66, %c0_67], %89 {strides = array<i32>} : memref<2x11x1280xf32, #tpu.memory_space<vmem>>, vector<2x11x1280xf32>,
    } else {
    }
    %c0_i32_2 = arith.constant 0 : i32
    %5 = arith.cmpi eq, %arg1, %c0_i32_2 : i32
    %6 = arith.extui %5 : i1 to i32
    %c0_i32_3 = arith.constant 0 : i32
    %7 = arith.cmpi ne, %6, %c0_i32_3 : i32
    scf.if %7 {
      %cst_62 = arith.constant 0.000000e+00 : f32
      %89 = vector.broadcast %cst_62 : f32 to vector<2x11x1280xf32>
      %c0_63 = arith.constant 0 : index
      %c0_64 = arith.constant 0 : index
      %c0_65 = arith.constant 0 : index
      %90 = vector.load %arg14[%c0_63, %c0_64, %c0_65] : memref<2x11x1280xf32, #tpu.memory_space<vmem>>, vector<2x11x1280xf32>
      tpu.vector_store %arg14[%c0_63, %c0_64, %c0_65], %89 {strides = array<i32>} : memref<2x11x1280xf32, #tpu.memory_space<vmem>>, vector<2x11x1280xf32>,
    } else {
    }
    %c0 = arith.constant 0 : index
    %c0_4 = arith.constant 0 : index
    %c0_5 = arith.constant 0 : index
    %c0_6 = arith.constant 0 : index
    %8 = vector.load %arg4[%c0, %c0_4, %c0_5, %c0_6] : memref<1x1x1280x256xbf16, #tpu.memory_space<vmem>>, vector<1x1x1280x256xbf16>
    %9 = vector.shape_cast %8 : vector<1x1x1280x256xbf16> to vector<1280x256xbf16>
    %c0_7 = arith.constant 0 : index
    %c0_8 = arith.constant 0 : index
    %c0_9 = arith.constant 0 : index
    %c0_10 = arith.constant 0 : index
    %10 = vector.load %arg5[%c0_7, %c0_8, %c0_9, %c0_10] : memref<1x1x1280x512xbf16, #tpu.memory_space<vmem>>, vector<1x1x1280x512xbf16>
    %11 = vector.shape_cast %10 : vector<1x1x1280x512xbf16> to vector<1280x512xbf16>
    %c0_11 = arith.constant 0 : index
    %c0_12 = arith.constant 0 : index
    %c0_13 = arith.constant 0 : index
    %c0_14 = arith.constant 0 : index
    %12 = vector.load %arg6[%c0_11, %c0_12, %c0_13, %c0_14] : memref<1x1x256x1280xbf16, #tpu.memory_space<vmem>>, vector<1x1x256x1280xbf16>
    %13 = vector.shape_cast %12 : vector<1x1x256x1280xbf16> to vector<256x1280xbf16>
    %c0_15 = arith.constant 0 : index
    %c0_16 = arith.constant 0 : index
    %c0_17 = arith.constant 0 : index
    %c0_18 = arith.constant 0 : index
    %14 = vector.load %arg7[%c0_15, %c0_16, %c0_17, %c0_18] : memref<1x1x1x256xf32, #tpu.memory_space<vmem>>, vector<1x1x1x256xf32>
    %15 = vector.shape_cast %14 : vector<1x1x1x256xf32> to vector<1x256xf32>
    %c0_19 = arith.constant 0 : index
    %c0_20 = arith.constant 0 : index
    %c0_21 = arith.constant 0 : index
    %c0_22 = arith.constant 0 : index
    %16 = vector.load %arg8[%c0_19, %c0_20, %c0_21, %c0_22] : memref<1x1x1x512xf32, #tpu.memory_space<vmem>>, vector<1x1x1x512xf32>
    %17 = vector.shape_cast %16 : vector<1x1x1x512xf32> to vector<1x512xf32>
    %c0_23 = arith.constant 0 : index
    %c0_24 = arith.constant 0 : index
    %c0_25 = arith.constant 0 : index
    %18 = vector.load %arg13[%c0_23, %c0_24, %c0_25] : memref<2x11x1280xf32, #tpu.memory_space<vmem>>, vector<1x11x1280xf32>
    %19 = vector.shape_cast %18 : vector<1x11x1280xf32> to vector<11x1280xf32>
    %c0_26 = arith.constant 0 : index
    %c0_27 = arith.constant 0 : index
    %c0_28 = arith.constant 0 : index
    %20 = vector.load %arg3[%c0_26, %c0_27, %c0_28] : memref<2x16x1280xf32, #tpu.memory_space<vmem>>, vector<1x16x1280xf32>
    %21 = vector.shape_cast %20 : vector<1x16x1280xf32> to vector<16x1280xf32>
    %cst = arith.constant dense<0.000000e+00> : vector<11x256xf32>
    %22 = tpu.matmul %19, %9, %cst {dimension_numbers = #tpu.dot_dimension_numbers<[1], [0], [0], [1], [0, 0, 1, 1], [], []>} : vector<11x1280xf32>, vector<1280x256xbf16>, vector<11x256xf32> -> vector<11x256xf32>
    %23 = vector.broadcast %15 : vector<1x256xf32> to vector<11x256xf32>
    %24 = arith.addf %22, %23 : vector<11x256xf32>
    %cst_29 = arith.constant dense<0.000000e+00> : vector<16x512xf32>
    %25 = tpu.matmul %21, %11, %cst_29 {dimension_numbers = #tpu.dot_dimension_numbers<[1], [0], [0], [1], [0, 0, 1, 1], [], []>} : vector<16x1280xf32>, vector<1280x512xbf16>, vector<16x512xf32> -> vector<16x512xf32>
    %26 = vector.broadcast %17 : vector<1x512xf32> to vector<16x512xf32>
    %27 = arith.addf %25, %26 : vector<16x512xf32>
    %28 = vector.extract_strided_slice %27 {offsets = [0, 0], sizes = [16, 256], strides = [1, 1]} : vector<16x512xf32> to vector<16x256xf32>
    %29 = vector.extract_strided_slice %27 {offsets = [0, 256], sizes = [16, 256], strides = [1, 1]} : vector<16x512xf32> to vector<16x256xf32>
    %30 = tpu.transpose %28, [1, 0] : vector<16x256xf32> -> vector<256x16xf32>
    %cst_30 = arith.constant dense<0.000000e+00> : vector<11x16xf32>
    %31 = tpu.matmul %24, %30, %cst_30 {dimension_numbers = #tpu.dot_dimension_numbers<[1], [0], [0], [1], [0, 0, 1, 1], [], []>} : vector<11x256xf32>, vector<256x16xf32>, vector<11x16xf32> -> vector<11x16xf32>
    %cst_31 = arith.constant 6.250000e-02 : f32
    %32 = vector.broadcast %cst_31 : f32 to vector<11x16xf32>
    %33 = arith.mulf %31, %32 : vector<11x16xf32>
    %cst_32 = arith.constant dense<0xFF800000> : vector<11xf32>
    %34 = vector.multi_reduction <maximumf>, %33, %cst_32 [1] : vector<11x16xf32> to vector<11xf32>
    %35 = vector.shape_cast %34 : vector<11xf32> to vector<11x1xf32>
    %36 = vector.broadcast %35 : vector<11x1xf32> to vector<11x16xf32>
    %37 = arith.subf %33, %36 : vector<11x16xf32>
    %38 = math.exp %37 : vector<11x16xf32>
    %cst_33 = arith.constant dense<0.000000e+00> : vector<11xf32>
    %39 = vector.multi_reduction <add>, %38, %cst_33 [1] : vector<11x16xf32> to vector<11xf32>
    %40 = vector.shape_cast %39 : vector<11xf32> to vector<11x1xf32>
    %41 = tpu.reciprocal %40 {approx = true} : vector<11x1xf32> -> vector<11x1xf32>
    %42 = vector.broadcast %41 : vector<11x1xf32> to vector<11x16xf32>
    %43 = arith.mulf %38, %42 : vector<11x16xf32>
    %cst_34 = arith.constant dense<0.000000e+00> : vector<11x256xf32>
    %44 = tpu.matmul %43, %29, %cst_34 {dimension_numbers = #tpu.dot_dimension_numbers<[1], [0], [0], [1], [0, 0, 1, 1], [], []>} : vector<11x16xf32>, vector<16x256xf32>, vector<11x256xf32> -> vector<11x256xf32>
    %c0_35 = arith.constant 0 : index
    %c0_36 = arith.constant 0 : index
    %c0_37 = arith.constant 0 : index
    %45 = vector.load %arg14[%c0_35, %c0_36, %c0_37] : memref<2x11x1280xf32, #tpu.memory_space<vmem>>, vector<1x11x1280xf32>
    %46 = vector.shape_cast %45 : vector<1x11x1280xf32> to vector<11x1280xf32>
    %cst_38 = arith.constant dense<0.000000e+00> : vector<11x1280xf32>
    %47 = tpu.matmul %44, %13, %cst_38 {dimension_numbers = #tpu.dot_dimension_numbers<[1], [0], [0], [1], [0, 0, 1, 1], [], []>} : vector<11x256xf32>, vector<256x1280xbf16>, vector<11x1280xf32> -> vector<11x1280xf32>
    %48 = arith.addf %46, %47 : vector<11x1280xf32>
    %c0_39 = arith.constant 0 : index
    %c0_40 = arith.constant 0 : index
    %c0_41 = arith.constant 0 : index
    %49 = vector.load %arg14[%c0_39, %c0_40, %c0_41] : memref<2x11x1280xf32, #tpu.memory_space<vmem>>, vector<1x11x1280xf32>
    %50 = vector.shape_cast %49 : vector<1x11x1280xf32> to vector<11x1280xf32>
    %51 = vector.shape_cast %48 : vector<11x1280xf32> to vector<1x11x1280xf32>
    tpu.vector_store %arg14[%c0_39, %c0_40, %c0_41], %51 {strides = array<i32>} : memref<2x11x1280xf32, #tpu.memory_space<vmem>>, vector<1x11x1280xf32>,
    %c1 = arith.constant 1 : index
    %c0_42 = arith.constant 0 : index
    %c0_43 = arith.constant 0 : index
    %52 = vector.load %arg13[%c1, %c0_42, %c0_43] : memref<2x11x1280xf32, #tpu.memory_space<vmem>>, vector<1x11x1280xf32>
    %53 = vector.shape_cast %52 : vector<1x11x1280xf32> to vector<11x1280xf32>
    %c1_44 = arith.constant 1 : index
    %c0_45 = arith.constant 0 : index
    %c0_46 = arith.constant 0 : index
    %54 = vector.load %arg3[%c1_44, %c0_45, %c0_46] : memref<2x16x1280xf32, #tpu.memory_space<vmem>>, vector<1x16x1280xf32>
    %55 = vector.shape_cast %54 : vector<1x16x1280xf32> to vector<16x1280xf32>
    %cst_47 = arith.constant dense<0.000000e+00> : vector<11x256xf32>
    %56 = tpu.matmul %53, %9, %cst_47 {dimension_numbers = #tpu.dot_dimension_numbers<[1], [0], [0], [1], [0, 0, 1, 1], [], []>} : vector<11x1280xf32>, vector<1280x256xbf16>, vector<11x256xf32> -> vector<11x256xf32>
    %57 = vector.broadcast %15 : vector<1x256xf32> to vector<11x256xf32>
    %58 = arith.addf %56, %57 : vector<11x256xf32>
    %cst_48 = arith.constant dense<0.000000e+00> : vector<16x512xf32>
    %59 = tpu.matmul %55, %11, %cst_48 {dimension_numbers = #tpu.dot_dimension_numbers<[1], [0], [0], [1], [0, 0, 1, 1], [], []>} : vector<16x1280xf32>, vector<1280x512xbf16>, vector<16x512xf32> -> vector<16x512xf32>
    %60 = vector.broadcast %17 : vector<1x512xf32> to vector<16x512xf32>
    %61 = arith.addf %59, %60 : vector<16x512xf32>
    %62 = vector.extract_strided_slice %61 {offsets = [0, 0], sizes = [16, 256], strides = [1, 1]} : vector<16x512xf32> to vector<16x256xf32>
    %63 = vector.extract_strided_slice %61 {offsets = [0, 256], sizes = [16, 256], strides = [1, 1]} : vector<16x512xf32> to vector<16x256xf32>
    %64 = tpu.transpose %62, [1, 0] : vector<16x256xf32> -> vector<256x16xf32>
    %cst_49 = arith.constant dense<0.000000e+00> : vector<11x16xf32>
    %65 = tpu.matmul %58, %64, %cst_49 {dimension_numbers = #tpu.dot_dimension_numbers<[1], [0], [0], [1], [0, 0, 1, 1], [], []>} : vector<11x256xf32>, vector<256x16xf32>, vector<11x16xf32> -> vector<11x16xf32>
    %cst_50 = arith.constant 6.250000e-02 : f32
    %66 = vector.broadcast %cst_50 : f32 to vector<11x16xf32>
    %67 = arith.mulf %65, %66 : vector<11x16xf32>
    %cst_51 = arith.constant dense<0xFF800000> : vector<11xf32>
    %68 = vector.multi_reduction <maximumf>, %67, %cst_51 [1] : vector<11x16xf32> to vector<11xf32>
    %69 = vector.shape_cast %68 : vector<11xf32> to vector<11x1xf32>
    %70 = vector.broadcast %69 : vector<11x1xf32> to vector<11x16xf32>
    %71 = arith.subf %67, %70 : vector<11x16xf32>
    %72 = math.exp %71 : vector<11x16xf32>
    %cst_52 = arith.constant dense<0.000000e+00> : vector<11xf32>
    %73 = vector.multi_reduction <add>, %72, %cst_52 [1] : vector<11x16xf32> to vector<11xf32>
    %74 = vector.shape_cast %73 : vector<11xf32> to vector<11x1xf32>
    %75 = tpu.reciprocal %74 {approx = true} : vector<11x1xf32> -> vector<11x1xf32>
    %76 = vector.broadcast %75 : vector<11x1xf32> to vector<11x16xf32>
    %77 = arith.mulf %72, %76 : vector<11x16xf32>
    %cst_53 = arith.constant dense<0.000000e+00> : vector<11x256xf32>
    %78 = tpu.matmul %77, %63, %cst_53 {dimension_numbers = #tpu.dot_dimension_numbers<[1], [0], [0], [1], [0, 0, 1, 1], [], []>} : vector<11x16xf32>, vector<16x256xf32>, vector<11x256xf32> -> vector<11x256xf32>
    %c1_54 = arith.constant 1 : index
    %c0_55 = arith.constant 0 : index
    %c0_56 = arith.constant 0 : index
    %79 = vector.load %arg14[%c1_54, %c0_55, %c0_56] : memref<2x11x1280xf32, #tpu.memory_space<vmem>>, vector<1x11x1280xf32>
    %80 = vector.shape_cast %79 : vector<1x11x1280xf32> to vector<11x1280xf32>
    %cst_57 = arith.constant dense<0.000000e+00> : vector<11x1280xf32>
    %81 = tpu.matmul %78, %13, %cst_57 {dimension_numbers = #tpu.dot_dimension_numbers<[1], [0], [0], [1], [0, 0, 1, 1], [], []>} : vector<11x256xf32>, vector<256x1280xbf16>, vector<11x1280xf32> -> vector<11x1280xf32>
    %82 = arith.addf %80, %81 : vector<11x1280xf32>
    %c1_58 = arith.constant 1 : index
    %c0_59 = arith.constant 0 : index
    %c0_60 = arith.constant 0 : index
    %83 = vector.load %arg14[%c1_58, %c0_59, %c0_60] : memref<2x11x1280xf32, #tpu.memory_space<vmem>>, vector<1x11x1280xf32>
    %84 = vector.shape_cast %83 : vector<1x11x1280xf32> to vector<11x1280xf32>
    %85 = vector.shape_cast %82 : vector<11x1280xf32> to vector<1x11x1280xf32>
    tpu.vector_store %arg14[%c1_58, %c0_59, %c0_60], %85 {strides = array<i32>} : memref<2x11x1280xf32, #tpu.memory_space<vmem>>, vector<1x11x1280xf32>,
    %c4_i32 = arith.constant 4 : i32
    %86 = arith.cmpi eq, %arg1, %c4_i32 : i32
    %87 = arith.extui %86 : i1 to i32
    %c0_i32_61 = arith.constant 0 : i32
    %88 = arith.cmpi ne, %87, %c0_i32_61 : i32
    scf.if %88 {
      %c0_62 = arith.constant 0 : index
      %c0_63 = arith.constant 0 : index
      %c0_64 = arith.constant 0 : index
      %89 = vector.load %arg13[%c0_62, %c0_63, %c0_64] : memref<2x11x1280xf32, #tpu.memory_space<vmem>>, vector<1x11x1280xf32>
      %90 = vector.shape_cast %89 : vector<1x11x1280xf32> to vector<11x1280xf32>
      %c0_65 = arith.constant 0 : index
      %c0_66 = arith.constant 0 : index
      %c0_67 = arith.constant 0 : index
      %91 = vector.load %arg14[%c0_65, %c0_66, %c0_67] : memref<2x11x1280xf32, #tpu.memory_space<vmem>>, vector<1x11x1280xf32>
      %92 = vector.shape_cast %91 : vector<1x11x1280xf32> to vector<11x1280xf32>
      %93 = arith.addf %90, %92 : vector<11x1280xf32>
      %c0_68 = arith.constant 0 : index
      %c0_69 = arith.constant 0 : index
      %c0_70 = arith.constant 0 : index
      %94 = vector.load %arg9[%c0_68, %c0_69, %c0_70] : memref<1x1x1280xf32, #tpu.memory_space<vmem>>, vector<1x1x1280xf32>
      %95 = vector.shape_cast %94 : vector<1x1x1280xf32> to vector<1x1280xf32>
      %96 = vector.broadcast %95 : vector<1x1280xf32> to vector<11x1280xf32>
      %97 = arith.addf %93, %96 : vector<11x1280xf32>
      %98 = vector.shape_cast %97 : vector<11x1280xf32> to vector<1x11x1280xf32>
      %cst_71 = arith.constant dense<0.000000e+00> : vector<1xf32>
      %99 = vector.multi_reduction <add>, %98, %cst_71 [1, 2] : vector<1x11x1280xf32> to vector<1xf32>
      %100 = vector.shape_cast %99 : vector<1xf32> to vector<1x1x1xf32>
      %101 = vector.extract %100[0, 0, 0] : f32 from vector<1x1x1xf32>
      %cst_72 = arith.constant 1.408000e+04 : f32
      %102 = arith.divf %101, %cst_72 : f32
      %103 = vector.broadcast %102 : f32 to vector<11x1280xf32>
      %104 = arith.subf %97, %103 : vector<11x1280xf32>
      %105 = arith.mulf %104, %104 : vector<11x1280xf32>
      %106 = vector.shape_cast %105 : vector<11x1280xf32> to vector<1x11x1280xf32>
      %cst_73 = arith.constant dense<0.000000e+00> : vector<1xf32>
      %107 = vector.multi_reduction <add>, %106, %cst_73 [1, 2] : vector<1x11x1280xf32> to vector<1xf32>
      %108 = vector.shape_cast %107 : vector<1xf32> to vector<1x1x1xf32>
      %109 = vector.extract %108[0, 0, 0] : f32 from vector<1x1x1xf32>
      %cst_74 = arith.constant 1.408000e+04 : f32
      %110 = arith.divf %109, %cst_74 : f32
      %cst_75 = arith.constant 9.99999974E-6 : f32
      %111 = arith.addf %110, %cst_75 : f32
      %112 = math.rsqrt %111 : f32
      %113 = vector.broadcast %112 : f32 to vector<11x1280xf32>
      %114 = arith.mulf %104, %113 : vector<11x1280xf32>
      %c0_76 = arith.constant 0 : index
      %c0_77 = arith.constant 0 : index
      %115 = vector.load %arg10[%c0_76, %c0_77] : memref<11x1280xf32, #tpu.memory_space<vmem>>, vector<11x1280xf32>
      %116 = arith.mulf %114, %115 : vector<11x1280xf32>
      %c0_78 = arith.constant 0 : index
      %c0_79 = arith.constant 0 : index
      %117 = vector.load %arg11[%c0_78, %c0_79] : memref<11x1280xf32, #tpu.memory_space<vmem>>, vector<11x1280xf32>
      %118 = arith.addf %116, %117 : vector<11x1280xf32>
      %c0_80 = arith.constant 0 : index
      %c0_81 = arith.constant 0 : index
      %c0_82 = arith.constant 0 : index
      %119 = vector.load %arg13[%c0_80, %c0_81, %c0_82] : memref<2x11x1280xf32, #tpu.memory_space<vmem>>, vector<1x11x1280xf32>
      %120 = vector.shape_cast %119 : vector<1x11x1280xf32> to vector<11x1280xf32>
      %121 = vector.shape_cast %118 : vector<11x1280xf32> to vector<1x11x1280xf32>
      tpu.vector_store %arg13[%c0_80, %c0_81, %c0_82], %121 {strides = array<i32>} : memref<2x11x1280xf32, #tpu.memory_space<vmem>>, vector<1x11x1280xf32>,
      %c0_83 = arith.constant 0 : index
      %c0_84 = arith.constant 0 : index
      %c0_85 = arith.constant 0 : index
      %122 = vector.load %arg12[%c0_83, %c0_84, %c0_85] : memref<2x11x1280xf32, #tpu.memory_space<vmem>>, vector<1x11x1280xf32>
      %123 = vector.shape_cast %122 : vector<1x11x1280xf32> to vector<11x1280xf32>
      %124 = vector.shape_cast %118 : vector<11x1280xf32> to vector<1x11x1280xf32>
      tpu.vector_store %arg12[%c0_83, %c0_84, %c0_85], %124 {strides = array<i32>} : memref<2x11x1280xf32, #tpu.memory_space<vmem>>, vector<1x11x1280xf32>,
      %c1_86 = arith.constant 1 : index
      %c0_87 = arith.constant 0 : index
      %c0_88 = arith.constant 0 : index
      %125 = vector.load %arg13[%c1_86, %c0_87, %c0_88] : memref<2x11x1280xf32, #tpu.memory_space<vmem>>, vector<1x11x1280xf32>
      %126 = vector.shape_cast %125 : vector<1x11x1280xf32> to vector<11x1280xf32>
      %c1_89 = arith.constant 1 : index
      %c0_90 = arith.constant 0 : index
      %c0_91 = arith.constant 0 : index
      %127 = vector.load %arg14[%c1_89, %c0_90, %c0_91] : memref<2x11x1280xf32, #tpu.memory_space<vmem>>, vector<1x11x1280xf32>
      %128 = vector.shape_cast %127 : vector<1x11x1280xf32> to vector<11x1280xf32>
      %129 = arith.addf %126, %128 : vector<11x1280xf32>
      %c0_92 = arith.constant 0 : index
      %c0_93 = arith.constant 0 : index
      %c0_94 = arith.constant 0 : index
      %130 = vector.load %arg9[%c0_92, %c0_93, %c0_94] : memref<1x1x1280xf32, #tpu.memory_space<vmem>>, vector<1x1x1280xf32>
      %131 = vector.shape_cast %130 : vector<1x1x1280xf32> to vector<1x1280xf32>
      %132 = vector.broadcast %131 : vector<1x1280xf32> to vector<11x1280xf32>
      %133 = arith.addf %129, %132 : vector<11x1280xf32>
      %134 = vector.shape_cast %133 : vector<11x1280xf32> to vector<1x11x1280xf32>
      %cst_95 = arith.constant dense<0.000000e+00> : vector<1xf32>
      %135 = vector.multi_reduction <add>, %134, %cst_95 [1, 2] : vector<1x11x1280xf32> to vector<1xf32>
      %136 = vector.shape_cast %135 : vector<1xf32> to vector<1x1x1xf32>
      %137 = vector.extract %136[0, 0, 0] : f32 from vector<1x1x1xf32>
      %cst_96 = arith.constant 1.408000e+04 : f32
      %138 = arith.divf %137, %cst_96 : f32
      %139 = vector.broadcast %138 : f32 to vector<11x1280xf32>
      %140 = arith.subf %133, %139 : vector<11x1280xf32>
      %141 = arith.mulf %140, %140 : vector<11x1280xf32>
      %142 = vector.shape_cast %141 : vector<11x1280xf32> to vector<1x11x1280xf32>
      %cst_97 = arith.constant dense<0.000000e+00> : vector<1xf32>
      %143 = vector.multi_reduction <add>, %142, %cst_97 [1, 2] : vector<1x11x1280xf32> to vector<1xf32>
      %144 = vector.shape_cast %143 : vector<1xf32> to vector<1x1x1xf32>
      %145 = vector.extract %144[0, 0, 0] : f32 from vector<1x1x1xf32>
      %cst_98 = arith.constant 1.408000e+04 : f32
      %146 = arith.divf %145, %cst_98 : f32
      %cst_99 = arith.constant 9.99999974E-6 : f32
      %147 = arith.addf %146, %cst_99 : f32
      %148 = math.rsqrt %147 : f32
      %149 = vector.broadcast %148 : f32 to vector<11x1280xf32>
      %150 = arith.mulf %140, %149 : vector<11x1280xf32>
      %c0_100 = arith.constant 0 : index
      %c0_101 = arith.constant 0 : index
      %151 = vector.load %arg10[%c0_100, %c0_101] : memref<11x1280xf32, #tpu.memory_space<vmem>>, vector<11x1280xf32>
      %152 = arith.mulf %150, %151 : vector<11x1280xf32>
      %c0_102 = arith.constant 0 : index
      %c0_103 = arith.constant 0 : index
      %153 = vector.load %arg11[%c0_102, %c0_103] : memref<11x1280xf32, #tpu.memory_space<vmem>>, vector<11x1280xf32>
      %154 = arith.addf %152, %153 : vector<11x1280xf32>
      %c1_104 = arith.constant 1 : index
      %c0_105 = arith.constant 0 : index
      %c0_106 = arith.constant 0 : index
      %155 = vector.load %arg13[%c1_104, %c0_105, %c0_106] : memref<2x11x1280xf32, #tpu.memory_space<vmem>>, vector<1x11x1280xf32>
      %156 = vector.shape_cast %155 : vector<1x11x1280xf32> to vector<11x1280xf32>
      %157 = vector.shape_cast %154 : vector<11x1280xf32> to vector<1x11x1280xf32>
      tpu.vector_store %arg13[%c1_104, %c0_105, %c0_106], %157 {strides = array<i32>} : memref<2x11x1280xf32, #tpu.memory_space<vmem>>, vector<1x11x1280xf32>,
      %c1_107 = arith.constant 1 : index
      %c0_108 = arith.constant 0 : index
      %c0_109 = arith.constant 0 : index
      %158 = vector.load %arg12[%c1_107, %c0_108, %c0_109] : memref<2x11x1280xf32, #tpu.memory_space<vmem>>, vector<1x11x1280xf32>
      %159 = vector.shape_cast %158 : vector<1x11x1280xf32> to vector<11x1280xf32>
      %160 = vector.shape_cast %154 : vector<11x1280xf32> to vector<1x11x1280xf32>
      tpu.vector_store %arg12[%c1_107, %c0_108, %c0_109], %160 {strides = array<i32>} : memref<2x11x1280xf32, #tpu.memory_space<vmem>>, vector<1x11x1280xf32>,
    } else {
    }
    return
  }
  func.func @transform_0(%arg0: i32, %arg1: i32) -> (i32, i32, i32) {
    %c0_i32 = arith.constant 0 : i32
    %c0_i32_0 = arith.constant 0 : i32
    %c0_i32_1 = arith.constant 0 : i32
    %c0_i32_2 = arith.constant 0 : i32
    return %c0_i32, %c0_i32_0, %c0_i32_1 : i32, i32, i32
  }
  func.func @transform_1(%arg0: i32, %arg1: i32) -> (i32, i32, i32) {
    %c0_i32 = arith.constant 0 : i32
    %c0_i32_0 = arith.constant 0 : i32
    %c0_i32_1 = arith.constant 0 : i32
    %c0_i32_2 = arith.constant 0 : i32
    return %c0_i32, %c0_i32_0, %c0_i32_1 : i32, i32, i32
  }
  func.func @transform_2(%arg0: i32, %arg1: i32) -> (i32, i32, i32, i32) {
    %c0_i32 = arith.constant 0 : i32
    %c0_i32_0 = arith.constant 0 : i32
    %c0_i32_1 = arith.constant 0 : i32
    return %arg0, %arg1, %c0_i32, %c0_i32_0 : i32, i32, i32, i32
  }
  func.func @transform_3(%arg0: i32, %arg1: i32) -> (i32, i32, i32, i32) {
    %c0_i32 = arith.constant 0 : i32
    %c0_i32_0 = arith.constant 0 : i32
    %c0_i32_1 = arith.constant 0 : i32
    return %arg0, %arg1, %c0_i32, %c0_i32_0 : i32, i32, i32, i32
  }
  func.func @transform_4(%arg0: i32, %arg1: i32) -> (i32, i32, i32, i32) {
    %c0_i32 = arith.constant 0 : i32
    %c0_i32_0 = arith.constant 0 : i32
    %c0_i32_1 = arith.constant 0 : i32
    return %arg0, %arg1, %c0_i32, %c0_i32_0 : i32, i32, i32, i32
  }
  func.func @transform_5(%arg0: i32, %arg1: i32) -> (i32, i32, i32, i32) {
    %c0_i32 = arith.constant 0 : i32
    %c0_i32_0 = arith.constant 0 : i32
    %c0_i32_1 = arith.constant 0 : i32
    return %arg0, %arg1, %c0_i32, %c0_i32_0 : i32, i32, i32, i32
  }
  func.func @transform_6(%arg0: i32, %arg1: i32) -> (i32, i32, i32, i32) {
    %c0_i32 = arith.constant 0 : i32
    %c0_i32_0 = arith.constant 0 : i32
    %c0_i32_1 = arith.constant 0 : i32
    return %arg0, %arg1, %c0_i32, %c0_i32_0 : i32, i32, i32, i32
  }
  func.func @transform_7(%arg0: i32, %arg1: i32) -> (i32, i32, i32) {
    %c0_i32 = arith.constant 0 : i32
    %c0_i32_0 = arith.constant 0 : i32
    %c0_i32_1 = arith.constant 0 : i32
    return %arg0, %c0_i32, %c0_i32_0 : i32, i32, i32
  }
  func.func @transform_8(%arg0: i32, %arg1: i32) -> (i32, i32) {
    %c0_i32 = arith.constant 0 : i32
    %c0_i32_0 = arith.constant 0 : i32
    %c0_i32_1 = arith.constant 0 : i32
    return %c0_i32, %c0_i32_0 : i32, i32
  }
  func.func @transform_9(%arg0: i32, %arg1: i32) -> (i32, i32) {
    %c0_i32 = arith.constant 0 : i32
    %c0_i32_0 = arith.constant 0 : i32
    %c0_i32_1 = arith.constant 0 : i32
    return %c0_i32, %c0_i32_0 : i32, i32
  }
  func.func @transform_10(%arg0: i32, %arg1: i32) -> (i32, i32, i32) {
    %c0_i32 = arith.constant 0 : i32
    %c0_i32_0 = arith.constant 0 : i32
    %c0_i32_1 = arith.constant 0 : i32
    %c0_i32_2 = arith.constant 0 : i32
    return %c0_i32, %c0_i32_0, %c0_i32_1 : i32, i32, i32
  }
}

</mosaic_0001>

<llo_original>
// kernel: tpu_custom_call.1
$region0: #{tpu_custom_call.1}
  #allocation0 [shape = 'u32[]', space=smem, size = 0x4, offset = 0x4, fixed_abs, tag = 'smem constant byte address 0x4 - core index']
  #allocation1 [shape = 'u32[144,128]{1,0:T(1,128)}', space=vmem, size = 0x12000, scoped, tag = 'internal scratch']
  #allocation2 [shape = 'f32[2,11,1280]{2,1,0:T(8,128)}', space=vmem, size = 0x28000, scoped, tag = 'scratch operand']
  #allocation3 [shape = 'f32[2,11,1280]{2,1,0:T(8,128)}', space=vmem, size = 0x28000, scoped, tag = 'scratch operand']
  %s0 = inlined_call_operand.vmem [shape: f32[2,11,1280], index: 0, kind: input, shape index: {}]
  %s1 = inlined_call_operand.hbm [shape: f32[2,16,1280], index: 1, kind: input, shape index: {}]
  %s2 = inlined_call_operand.hbm [shape: bf16[2,5,1280,256], index: 2, kind: input, shape index: {}]
  %s3 = inlined_call_operand.hbm [shape: bf16[2,5,1280,512], index: 3, kind: input, shape index: {}]
  %s4 = inlined_call_operand.hbm [shape: bf16[2,5,256,1280], index: 4, kind: input, shape index: {}]
  %s5 = inlined_call_operand.hbm [shape: f32[2,5,1,256], index: 5, kind: input, shape index: {}]
  %s6 = inlined_call_operand.hbm [shape: f32[2,5,1,512], index: 6, kind: input, shape index: {}]
  %s7 = inlined_call_operand.hbm [shape: f32[2,1,1280], index: 7, kind: input, shape index: {}]
  %s8 = inlined_call_operand.hbm [shape: f32[11,1280], index: 8, kind: input, shape index: {}]
  %s9 = inlined_call_operand.hbm [shape: f32[11,1280], index: 9, kind: input, shape index: {}]
  %s10 = inlined_call_operand.vmem [shape: f32[2,11,1280], index: 10, kind: output, shape index: {}]
  %s11 = sld [smem:[#allocation0]]
  $region121: #{tpu_custom_call.1} parent=0
    _
  %s13 = ssub.s32 1, %s11
  %s14 = scalar_select 0, %s13, %s11
  $region1: #{tpu_custom_call.1} parent=0
    #allocation4 [shape = 'u8[163840]{0}', space=vmem, size = 0x28000, scoped, tag = 'input window, operand 1, single buffered']
    #allocation5 [shape = 's32[2]{0}', space=sflag, size = 0x8, scoped, tag = 'scoped memory for tpu_custom_call.1']
    #allocation6 [shape = 'u8[1310720]{0}', space=vmem, size = 0x140000, scoped, tag = 'input window, operand 2']
    #allocation7 [shape = 's32[2]{0}', space=sflag, size = 0x8, scoped, tag = 'scoped memory for tpu_custom_call.1']
    #allocation8 [shape = 'u8[2621440]{0}', space=vmem, size = 0x280000, scoped, tag = 'input window, operand 3']
    #allocation9 [shape = 'u8[1310720]{0}', space=vmem, size = 0x140000, scoped, tag = 'input window, operand 4']
    #allocation10 [shape = 's32[2]{0}', space=sflag, size = 0x8, scoped, tag = 'scoped memory for tpu_custom_call.1']
    #allocation11 [shape = 'u8[2048]{0}', space=vmem, size = 0x800, scoped, tag = 'input window, operand 5']
    #allocation12 [shape = 'u8[4096]{0}', space=vmem, size = 0x1000, scoped, tag = 'input window, operand 6']
    #allocation13 [shape = 's32[2]{0}', space=sflag, size = 0x8, scoped, tag = 'scoped memory for tpu_custom_call.1']
    #allocation14 [shape = 'u8[10240]{0}', space=vmem, size = 0x2800, scoped, tag = 'input window, operand 7']
    #allocation15 [shape = 'u8[81920]{0}', space=vmem, size = 0x14000, scoped, tag = 'input window, operand 8, single buffered']
    #allocation16 [shape = 's32[1]{0}', space=sflag, size = 0x4, scoped, tag = 'scoped memory for tpu_custom_call.1']
    #allocation17 [shape = 'u8[81920]{0}', space=vmem, size = 0x14000, scoped, tag = 'input window, operand 9, single buffered']
    %15 = vsyncpa [#allocation5], 0
    %16 = vsyncpa [#allocation7], 0
    %s17 = scalar_lea.sflag [#allocation7], 1
    %18 = vsyncpa %s17, 0
    %19 = vsyncpa [#allocation10], 0
    %s20 = scalar_lea.sflag [#allocation10], 1
    %21 = vsyncpa %s20, 0
    %22 = vsyncpa [#allocation13], 0
    %s23 = scalar_lea.sflag [#allocation13], 1
    %24 = vsyncpa %s23, 0
    %25 = vsyncpa [#allocation16], 0
    loop: start=0, step=1, limit=12
    $region2: #{tpu_custom_call.1} parent=1 // loop_pre_header
      _
    $region3: #{tpu_custom_call.1} parent=1 // loop_header
      %s27 = sphi 0, %s31
      %p28 = scmp.ge.s32.totalorder %s27, 12
      %s34 = sphi 0, %s46
      %s35 = sphi 0, %s42
      %s36 = sphi 0, %s34
      %s37 = sphi 0, %s35
      %s38 = sphi 0, %s36
      %s39 = sphi 0, %s37
      %s47 = sphi 0, %s47
      %s49 = sphi 0, %s47
      %s50 = sphi 0, %s49
      %s64 = sphi 0, %s50
      %s68 = sphi 0, %s68
      %s70 = sphi 0, %s68
      %s71 = sphi 0, %s70
      %s85 = sphi 0, %s71
      %s93 = sphi 0, %s95
      %s96 = sphi 0, %s93
      %s97 = sphi 0, %s96
      %s113 = sphi 0, %s97
      %s121 = sphi 0, %s123
      %s124 = sphi 0, %s121
      %s125 = sphi 0, %s124
      %s141 = sphi 0, %s125
      %s149 = sphi 0, %s151
      %s152 = sphi 0, %s149
      %s153 = sphi 0, %s152
      %s169 = sphi 0, %s153
      %s177 = sphi 0, %s179
      %s180 = sphi 0, %s177
      %s181 = sphi 0, %s180
      %s197 = sphi 0, %s181
      %s205 = sphi 0, %s207
      %s208 = sphi 0, %s205
      %s209 = sphi 0, %s208
      %s225 = sphi 0, %s209
      %s231 = sphi 0, %s233
      %s234 = sphi 0, %s231
      %s235 = sphi 0, %s234
      %s251 = sphi 0, %s235
      %s255 = sphi 0, %s255
      %s257 = sphi 0, %s255
      %s258 = sphi 0, %s257
      %s272 = sphi 0, %s258
      %s276 = sphi 0, %s276
      %s278 = sphi 0, %s276
      %s279 = sphi 0, %s278
      %s293 = sphi 0, %s279
      %s297 = sphi 0, %s297
      %s299 = sphi 0, %s297
      %s300 = sphi 0, %s299
      %s314 = sphi 0, %s300
    $region4: #{tpu_custom_call.1} parent=1 // loop_header_branch
      %30 = sbr.rel (%p28) target = $region8
    $region5: #{tpu_custom_call.1} parent=1 // loop_body
      %s32 = ssub.s32 %s27, 1
      %s33 = ssub.s32 %s27, 2
      %s40 = sadd.s32 1, %s35
      %p41 = scmp.ge.s32.totalorder %s40, 5
      %s42 = scalar_select %p41, 0, %s40
      %s43 = sadd.s32 1, %s34
      %s44 = scalar_select %p41, %s43, %s34
      %p45 = scmp.ge.s32.totalorder %s44, 2
      %s46 = scalar_select %p45, 0, %s44
      %s48 = sadd.s32 %s47, 1
      %p51 = scmp.eq.s32.totalorder %s27, 9
      %p52 = scmp.ne.s32.totalorder %s47, %s49
      %p53 = scmp.eq.s32.totalorder %s27, 0
      %p54 = por %p52, %p53
      %p55 = scmp.ne.s32.totalorder %s47, %s49
      %p56 = scmp.eq.s32.totalorder %s32, 9
      %p57 = por %p55, %p56
      %p58 = scmp.ne.s32.totalorder %s49, %s50
      %p59 = scmp.eq.s32.totalorder %s32, 0
      %p60 = por %p58, %p59
      %p61 = scmp.ne.s32.totalorder %s49, %s50
      %p62 = scmp.eq.s32.totalorder %s33, 9
      %p63 = por %p61, %p62
      %p65 = scmp.ne.s32.totalorder %s50, %s64
      %p66 = scmp.eq.s32.totalorder %s33, 0
      %p67 = por %p65, %p66
      %s69 = sadd.s32 %s68, 1
      %p72 = scmp.eq.s32.totalorder %s27, 9
      %p73 = scmp.ne.s32.totalorder %s68, %s70
      %p74 = scmp.eq.s32.totalorder %s27, 0
      %p75 = por %p73, %p74
      %p76 = scmp.ne.s32.totalorder %s68, %s70
      %p77 = scmp.eq.s32.totalorder %s32, 9
      %p78 = por %p76, %p77
      %p79 = scmp.ne.s32.totalorder %s70, %s71
      %p80 = scmp.eq.s32.totalorder %s32, 0
      %p81 = por %p79, %p80
      %p82 = scmp.ne.s32.totalorder %s70, %s71
      %p83 = scmp.eq.s32.totalorder %s33, 9
      %p84 = por %p82, %p83
      %p86 = scmp.ne.s32.totalorder %s71, %s85
      %p87 = scmp.eq.s32.totalorder %s33, 0
      %p88 = por %p86, %p87
      %s89 = ssub.s32 %s34, %s46
      %s90 = ssub.s32 %s35, %s42
      %s91 = sor.u32 %s89, %s90
      %p92 = scmp.eq.s32.totalorder %s91, 0
      %s94 = sadd.s32 %s93, 1
      %s95 = scalar_select %p92, %s93, %s94
      %p98 = pneg %p92
      %p99 = scmp.eq.s32.totalorder %s27, 9
      %p100 = por %p98, %p99
      %p101 = scmp.ne.s32.totalorder %s93, %s96
      %p102 = scmp.eq.s32.totalorder %s27, 0
      %p103 = por %p101, %p102
      %p104 = scmp.ne.s32.totalorder %s93, %s96
      %p105 = scmp.eq.s32.totalorder %s32, 9
      %p106 = por %p104, %p105
      %p107 = scmp.ne.s32.totalorder %s96, %s97
      %p108 = scmp.eq.s32.totalorder %s32, 0
      %p109 = por %p107, %p108
      %p110 = scmp.ne.s32.totalorder %s96, %s97
      %p111 = scmp.eq.s32.totalorder %s33, 9
      %p112 = por %p110, %p111
      %p114 = scmp.ne.s32.totalorder %s97, %s113
      %p115 = scmp.eq.s32.totalorder %s33, 0
      %p116 = por %p114, %p115
      %s117 = ssub.s32 %s34, %s46
      %s118 = ssub.s32 %s35, %s42
      %s119 = sor.u32 %s117, %s118
      %p120 = scmp.eq.s32.totalorder %s119, 0
      %s122 = sadd.s32 %s121, 1
      %s123 = scalar_select %p120, %s121, %s122
      %p126 = pneg %p120
      %p127 = scmp.eq.s32.totalorder %s27, 9
      %p128 = por %p126, %p127
      %p129 = scmp.ne.s32.totalorder %s121, %s124
      %p130 = scmp.eq.s32.totalorder %s27, 0
      %p131 = por %p129, %p130
      %p132 = scmp.ne.s32.totalorder %s121, %s124
      %p133 = scmp.eq.s32.totalorder %s32, 9
      %p134 = por %p132, %p133
      %p135 = scmp.ne.s32.totalorder %s124, %s125
      %p136 = scmp.eq.s32.totalorder %s32, 0
      %p137 = por %p135, %p136
      %p138 = scmp.ne.s32.totalorder %s124, %s125
      %p139 = scmp.eq.s32.totalorder %s33, 9
      %p140 = por %p138, %p139
      %p142 = scmp.ne.s32.totalorder %s125, %s141
      %p143 = scmp.eq.s32.totalorder %s33, 0
      %p144 = por %p142, %p143
      %s145 = ssub.s32 %s34, %s46
      %s146 = ssub.s32 %s35, %s42
      %s147 = sor.u32 %s145, %s146
      %p148 = scmp.eq.s32.totalorder %s147, 0
      %s150 = sadd.s32 %s149, 1
      %s151 = scalar_select %p148, %s149, %s150
      %p154 = pneg %p148
      %p155 = scmp.eq.s32.totalorder %s27, 9
      %p156 = por %p154, %p155
      %p157 = scmp.ne.s32.totalorder %s149, %s152
      %p158 = scmp.eq.s32.totalorder %s27, 0
      %p159 = por %p157, %p158
      %p160 = scmp.ne.s32.totalorder %s149, %s152
      %p161 = scmp.eq.s32.totalorder %s32, 9
      %p162 = por %p160, %p161
      %p163 = scmp.ne.s32.totalorder %s152, %s153
      %p164 = scmp.eq.s32.totalorder %s32, 0
      %p165 = por %p163, %p164
      %p166 = scmp.ne.s32.totalorder %s152, %s153
      %p167 = scmp.eq.s32.totalorder %s33, 9
      %p168 = por %p166, %p167
      %p170 = scmp.ne.s32.totalorder %s153, %s169
      %p171 = scmp.eq.s32.totalorder %s33, 0
      %p172 = por %p170, %p171
      %s173 = ssub.s32 %s34, %s46
      %s174 = ssub.s32 %s35, %s42
      %s175 = sor.u32 %s173, %s174
      %p176 = scmp.eq.s32.totalorder %s175, 0
      %s178 = sadd.s32 %s177, 1
      %s179 = scalar_select %p176, %s177, %s178
      %p182 = pneg %p176
      %p183 = scmp.eq.s32.totalorder %s27, 9
      %p184 = por %p182, %p183
      %p185 = scmp.ne.s32.totalorder %s177, %s180
      %p186 = scmp.eq.s32.totalorder %s27, 0
      %p187 = por %p185, %p186
      %p188 = scmp.ne.s32.totalorder %s177, %s180
      %p189 = scmp.eq.s32.totalorder %s32, 9
      %p190 = por %p188, %p189
      %p191 = scmp.ne.s32.totalorder %s180, %s181
      %p192 = scmp.eq.s32.totalorder %s32, 0
      %p193 = por %p191, %p192
      %p194 = scmp.ne.s32.totalorder %s180, %s181
      %p195 = scmp.eq.s32.totalorder %s33, 9
      %p196 = por %p194, %p195
      %p198 = scmp.ne.s32.totalorder %s181, %s197
      %p199 = scmp.eq.s32.totalorder %s33, 0
      %p200 = por %p198, %p199
      %s201 = ssub.s32 %s34, %s46
      %s202 = ssub.s32 %s35, %s42
      %s203 = sor.u32 %s201, %s202
      %p204 = scmp.eq.s32.totalorder %s203, 0
      %s206 = sadd.s32 %s205, 1
      %s207 = scalar_select %p204, %s205, %s206
      %p210 = pneg %p204
      %p211 = scmp.eq.s32.totalorder %s27, 9
      %p212 = por %p210, %p211
      %p213 = scmp.ne.s32.totalorder %s205, %s208
      %p214 = scmp.eq.s32.totalorder %s27, 0
      %p215 = por %p213, %p214
      %p216 = scmp.ne.s32.totalorder %s205, %s208
      %p217 = scmp.eq.s32.totalorder %s32, 9
      %p218 = por %p216, %p217
      %p219 = scmp.ne.s32.totalorder %s208, %s209
      %p220 = scmp.eq.s32.totalorder %s32, 0
      %p221 = por %p219, %p220
      %p222 = scmp.ne.s32.totalorder %s208, %s209
      %p223 = scmp.eq.s32.totalorder %s33, 9
      %p224 = por %p222, %p223
      %p226 = scmp.ne.s32.totalorder %s209, %s225
      %p227 = scmp.eq.s32.totalorder %s33, 0
      %p228 = por %p226, %p227
      %s229 = ssub.s32 %s34, %s46
      %p230 = scmp.eq.s32.totalorder %s229, 0
      %s232 = sadd.s32 %s231, 1
      %s233 = scalar_select %p230, %s231, %s232
      %p236 = pneg %p230
      %p237 = scmp.eq.s32.totalorder %s27, 9
      %p238 = por %p236, %p237
      %p239 = scmp.ne.s32.totalorder %s231, %s234
      %p240 = scmp.eq.s32.totalorder %s27, 0
      %p241 = por %p239, %p240
      %p242 = scmp.ne.s32.totalorder %s231, %s234
      %p243 = scmp.eq.s32.totalorder %s32, 9
      %p244 = por %p242, %p243
      %p245 = scmp.ne.s32.totalorder %s234, %s235
      %p246 = scmp.eq.s32.totalorder %s32, 0
      %p247 = por %p245, %p246
      %p248 = scmp.ne.s32.totalorder %s234, %s235
      %p249 = scmp.eq.s32.totalorder %s33, 9
      %p250 = por %p248, %p249
      %p252 = scmp.ne.s32.totalorder %s235, %s251
      %p253 = scmp.eq.s32.totalorder %s33, 0
      %p254 = por %p252, %p253
      %s256 = sadd.s32 %s255, 1
      %p259 = scmp.eq.s32.totalorder %s27, 9
      %p260 = scmp.ne.s32.totalorder %s255, %s257
      %p261 = scmp.eq.s32.totalorder %s27, 0
      %p262 = por %p260, %p261
      %p263 = scmp.ne.s32.totalorder %s255, %s257
      %p264 = scmp.eq.s32.totalorder %s32, 9
      %p265 = por %p263, %p264
      %p266 = scmp.ne.s32.totalorder %s257, %s258
      %p267 = scmp.eq.s32.totalorder %s32, 0
      %p268 = por %p266, %p267
      %p269 = scmp.ne.s32.totalorder %s257, %s258
      %p270 = scmp.eq.s32.totalorder %s33, 9
      %p271 = por %p269, %p270
      %p273 = scmp.ne.s32.totalorder %s258, %s272
      %p274 = scmp.eq.s32.totalorder %s33, 0
      %p275 = por %p273, %p274
      %s277 = sadd.s32 %s276, 1
      %p280 = scmp.eq.s32.totalorder %s27, 9
      %p281 = scmp.ne.s32.totalorder %s276, %s278
      %p282 = scmp.eq.s32.totalorder %s27, 0
      %p283 = por %p281, %p282
      %p284 = scmp.ne.s32.totalorder %s276, %s278
      %p285 = scmp.eq.s32.totalorder %s32, 9
      %p286 = por %p284, %p285
      %p287 = scmp.ne.s32.totalorder %s278, %s279
      %p288 = scmp.eq.s32.totalorder %s32, 0
      %p289 = por %p287, %p288
      %p290 = scmp.ne.s32.totalorder %s278, %s279
      %p291 = scmp.eq.s32.totalorder %s33, 9
      %p292 = por %p290, %p291
      %p294 = scmp.ne.s32.totalorder %s279, %s293
      %p295 = scmp.eq.s32.totalorder %s33, 0
      %p296 = por %p294, %p295
      %s298 = sadd.s32 %s297, 1
      %p301 = scmp.eq.s32.totalorder %s27, 9
      %p302 = scmp.ne.s32.totalorder %s297, %s299
      %p303 = scmp.eq.s32.totalorder %s27, 0
      %p304 = por %p302, %p303
      %p305 = scmp.ne.s32.totalorder %s297, %s299
      %p306 = scmp.eq.s32.totalorder %s32, 9
      %p307 = por %p305, %p306
      %p308 = scmp.ne.s32.totalorder %s299, %s300
      %p309 = scmp.eq.s32.totalorder %s32, 0
      %p310 = por %p308, %p309
      %p311 = scmp.ne.s32.totalorder %s299, %s300
      %p312 = scmp.eq.s32.totalorder %s33, 9
      %p313 = por %p311, %p312
      %p315 = scmp.ne.s32.totalorder %s300, %s314
      %p316 = scmp.eq.s32.totalorder %s33, 0
      %p317 = por %p315, %p316
      %p318 = scmp.le.s32.totalorder 1, %s27
      %p319 = scmp.lt.s32.totalorder %s27, 11
      %p320 = pnand %p318, %p319
      %p321 = pneg %p320
      // Predicated region
      $region9: #{tpu_custom_call.1} parent=5 // pred_check
        _
      $region10: #{tpu_custom_call.1} parent=5 // pred_check_branch
        %323 = sbr.rel (%p320) target = $region12
      $region11: #{tpu_custom_call.1} parent=5 // pred_region
        %s324 = ssub.s32 %s27, 1
        // Predicated region
        $region13: #{tpu_custom_call.1} parent=11 // pred_check
          %p325 = pneg %p60
        $region14: #{tpu_custom_call.1} parent=11 // pred_check_branch
          %327 = sbr.rel (%p325) target = $region16
        $region15: #{tpu_custom_call.1} parent=11 // pred_region
          _
        $region16: #{tpu_custom_call.1} parent=11 // pred_fallthru
          _
        // Predicated region
        $region17: #{tpu_custom_call.1} parent=11 // pred_check
          %p328 = pneg %p81
        $region18: #{tpu_custom_call.1} parent=11 // pred_check_branch
          %330 = sbr.rel (%p328) target = $region20
        $region19: #{tpu_custom_call.1} parent=11 // pred_region
          %s332 = ssub.s32 5120, 5120
          %333 = vsyncadd [#allocation5], %s332
          %s334 = sshll.u32 [#allocation4], 4
          %s335 = int_to_ptr.vmem [resolvable:$true] %s334
          %340 = dma.hbm_to_vmem [thread:$0]  %s1, 5120, %s335, [#allocation5], 1280, 1280, 80
        $region20: #{tpu_custom_call.1} parent=11 // pred_fallthru
          _
        // Predicated region
        $region21: #{tpu_custom_call.1} parent=11 // pred_check
          %p341 = pneg %p268
        $region22: #{tpu_custom_call.1} parent=11 // pred_check_branch
          %343 = sbr.rel (%p341) target = $region24
        $region23: #{tpu_custom_call.1} parent=11 // pred_region
          %s345 = ssub.s32 2560, 2560
          %346 = vsyncadd [#allocation16], %s345
          %s347 = sshll.u32 [#allocation15], 4
          %s348 = int_to_ptr.vmem [resolvable:$true] %s347
          %353 = dma.hbm_to_vmem [thread:$0]  %s8, 2560, %s348, [#allocation16], 1280, 1280, 80
        $region24: #{tpu_custom_call.1} parent=11 // pred_fallthru
          _
        // Predicated region
        $region25: #{tpu_custom_call.1} parent=11 // pred_check
          %p354 = pneg %p289
        $region26: #{tpu_custom_call.1} parent=11 // pred_check_branch
          %356 = sbr.rel (%p354) target = $region28
        $region27: #{tpu_custom_call.1} parent=11 // pred_region
          %s358 = ssub.s32 2560, 2560
          %359 = vsyncadd [#allocation16], %s358
          %s360 = sshll.u32 [#allocation17], 4
          %s361 = int_to_ptr.vmem [resolvable:$true] %s360
          %366 = dma.hbm_to_vmem [thread:$0]  %s9, 2560, %s361, [#allocation16], 1280, 1280, 80
        $region28: #{tpu_custom_call.1} parent=11 // pred_fallthru
          _
      $region12: #{tpu_custom_call.1} parent=5 // pred_fallthru
        _
      %p367 = scmp.lt.s32.totalorder %s27, 10
      // Predicated region
      $region29: #{tpu_custom_call.1} parent=5 // pred_check
        %p368 = pneg %p367
      $region30: #{tpu_custom_call.1} parent=5 // pred_check_branch
        %370 = sbr.rel (%p368) target = $region32
      $region31: #{tpu_custom_call.1} parent=5 // pred_region
        // Predicated region
        $region33: #{tpu_custom_call.1} parent=31 // pred_check
          %p371 = pneg %p103
        $region34: #{tpu_custom_call.1} parent=31 // pred_check_branch
          %373 = sbr.rel (%p371) target = $region36
        $region35: #{tpu_custom_call.1} parent=31 // pred_region
          %s374 = sand.u32 %s27, 1
          %s375 = scalar_lea.sflag [#allocation7], %s374
          %s376 = sand.u32 %s93, 1
          %s377 = smul.addr %s376, 1280
          %s378 = scalar_lea.vmem [#allocation6], %s377
          %s380 = ssub.s32 20480, 20480
          %381 = vsyncadd %s375, %s380
          %s382 = smul.addr %s35, 320
          %s383 = smul.addr %s34, 1600
          %s384 = sadd.s32 %s382, %s383
          %s385 = smul.addr %s384, 64
          %s386 = scalar_lea.hbm %s2, %s385
          %s387 = sshll.u32 %s378, 4
          %s388 = int_to_ptr.vmem [resolvable:$true] %s387
          %393 = dma.hbm_to_vmem [thread:$0]  %s386, 20480, %s388, %s375, 128, 128, 8
        $region36: #{tpu_custom_call.1} parent=31 // pred_fallthru
          _
        // Predicated region
        $region37: #{tpu_custom_call.1} parent=31 // pred_check
          %p394 = pneg %p131
        $region38: #{tpu_custom_call.1} parent=31 // pred_check_branch
          %396 = sbr.rel (%p394) target = $region40
        $region39: #{tpu_custom_call.1} parent=31 // pred_region
          %s397 = sand.u32 %s27, 1
          %s398 = scalar_lea.sflag [#allocation7], %s397
          %s399 = sand.u32 %s121, 1
          %s400 = smul.addr %s399, 2560
          %s401 = scalar_lea.vmem [#allocation8], %s400
          %s403 = ssub.s32 40960, 40960
          %404 = vsyncadd %s398, %s403
          %s405 = smul.addr %s35, 640
          %s406 = smul.addr %s34, 3200
          %s407 = sadd.s32 %s405, %s406
          %s408 = smul.addr %s407, 64
          %s409 = scalar_lea.hbm %s3, %s408
          %s410 = sshll.u32 %s401, 4
          %s411 = int_to_ptr.vmem [resolvable:$true] %s410
          %416 = dma.hbm_to_vmem [thread:$0]  %s409, 40960, %s411, %s398, 256, 256, 16
        $region40: #{tpu_custom_call.1} parent=31 // pred_fallthru
          _
        // Predicated region
        $region41: #{tpu_custom_call.1} parent=31 // pred_check
          %p417 = pneg %p159
        $region42: #{tpu_custom_call.1} parent=31 // pred_check_branch
          %419 = sbr.rel (%p417) target = $region44
        $region43: #{tpu_custom_call.1} parent=31 // pred_region
          %s420 = sand.u32 %s27, 1
          %s421 = scalar_lea.sflag [#allocation10], %s420
          %s422 = sand.u32 %s149, 1
          %s423 = smul.addr %s422, 1280
          %s424 = scalar_lea.vmem [#allocation9], %s423
          %s426 = ssub.s32 20480, 20480
          %427 = vsyncadd %s421, %s426
          %s428 = smul.addr %s35, 320
          %s429 = smul.addr %s34, 1600
          %s430 = sadd.s32 %s428, %s429
          %s431 = smul.addr %s430, 64
          %s432 = scalar_lea.hbm %s4, %s431
          %s433 = sshll.u32 %s424, 4
          %s434 = int_to_ptr.vmem [resolvable:$true] %s433
          %439 = dma.hbm_to_vmem [thread:$0]  %s432, 20480, %s434, %s421, 640, 640, 40
        $region44: #{tpu_custom_call.1} parent=31 // pred_fallthru
          _
        // Predicated region
        $region45: #{tpu_custom_call.1} parent=31 // pred_check
          %p440 = pneg %p187
        $region46: #{tpu_custom_call.1} parent=31 // pred_check_branch
          %442 = sbr.rel (%p440) target = $region48
        $region47: #{tpu_custom_call.1} parent=31 // pred_region
          %s443 = sand.u32 %s27, 1
          %s444 = scalar_lea.sflag [#allocation10], %s443
          %s445 = sand.u32 %s177, 1
          %s446 = smul.addr %s445, 2
          %s447 = scalar_lea.vmem [#allocation11], %s446
          %s449 = ssub.s32 32, 32
          %450 = vsyncadd %s444, %s449
          %s451 = smul.addr %s35, 2
          %s452 = smul.addr %s34, 10
          %s453 = sadd.s32 %s451, %s452
          %s454 = smul.addr %s453, 16
          %s455 = scalar_lea.hbm %s5, %s454
          %s457 = sshll.u32 %s447, 4
          %s458 = int_to_ptr.vmem [resolvable:$true] %s457
          %460 = dma.hbm_to_vmem [thread:$0]  %s455, 32, %s458, %s444
        $region48: #{tpu_custom_call.1} parent=31 // pred_fallthru
          _
        // Predicated region
        $region49: #{tpu_custom_call.1} parent=31 // pred_check
          %p461 = pneg %p215
        $region50: #{tpu_custom_call.1} parent=31 // pred_check_branch
          %463 = sbr.rel (%p461) target = $region52
        $region51: #{tpu_custom_call.1} parent=31 // pred_region
          %s464 = sand.u32 %s27, 1
          %s465 = scalar_lea.sflag [#allocation13], %s464
          %s466 = sand.u32 %s205, 1
          %s467 = smul.addr %s466, 4
          %s468 = scalar_lea.vmem [#allocation12], %s467
          %s470 = ssub.s32 64, 64
          %471 = vsyncadd %s465, %s470
          %s472 = smul.addr %s35, 4
          %s473 = smul.addr %s34, 20
          %s474 = sadd.s32 %s472, %s473
          %s475 = smul.addr %s474, 16
          %s476 = scalar_lea.hbm %s6, %s475
          %s478 = sshll.u32 %s468, 4
          %s479 = int_to_ptr.vmem [resolvable:$true] %s478
          %481 = dma.hbm_to_vmem [thread:$0]  %s476, 64, %s479, %s465
        $region52: #{tpu_custom_call.1} parent=31 // pred_fallthru
          _
        // Predicated region
        $region53: #{tpu_custom_call.1} parent=31 // pred_check
          %p482 = pneg %p241
        $region54: #{tpu_custom_call.1} parent=31 // pred_check_branch
          %484 = sbr.rel (%p482) target = $region56
        $region55: #{tpu_custom_call.1} parent=31 // pred_region
          %s485 = sand.u32 %s27, 1
          %s486 = scalar_lea.sflag [#allocation13], %s485
          %s487 = sand.u32 %s231, 1
          %s488 = smul.addr %s487, 10
          %s489 = scalar_lea.vmem [#allocation14], %s488
          %s491 = ssub.s32 160, 160
          %492 = vsyncadd %s486, %s491
          %s493 = smul.addr %s34, 10
          %s494 = smul.addr %s493, 16
          %s495 = scalar_lea.hbm %s7, %s494
          %s497 = sshll.u32 %s489, 4
          %s498 = int_to_ptr.vmem [resolvable:$true] %s497
          %500 = dma.hbm_to_vmem [thread:$0]  %s495, 160, %s498, %s486
        $region56: #{tpu_custom_call.1} parent=31 // pred_fallthru
          _
      $region32: #{tpu_custom_call.1} parent=5 // pred_fallthru
        _
      %p501 = scmp.le.s32.totalorder 1, %s27
      %p502 = scmp.lt.s32.totalorder %s27, 11
      %p503 = pnand %p501, %p502
      %p504 = pneg %p503
      // Predicated region
      $region57: #{tpu_custom_call.1} parent=5 // pred_check
        _
      $region58: #{tpu_custom_call.1} parent=5 // pred_check_branch
        %506 = sbr.rel (%p503) target = $region60
      $region59: #{tpu_custom_call.1} parent=5 // pred_region
        %s507 = ssub.s32 %s27, 1
        // Predicated region
        $region61: #{tpu_custom_call.1} parent=59 // pred_check
          %p508 = pneg %p81
        $region62: #{tpu_custom_call.1} parent=59 // pred_check_branch
          %510 = sbr.rel (%p508) target = $region64
        $region63: #{tpu_custom_call.1} parent=59 // pred_region
          %511 = dma.done [#allocation5], 5120
        $region64: #{tpu_custom_call.1} parent=59 // pred_fallthru
          _
        %s512 = sand.u32 %s32, 1
        %s513 = scalar_lea.sflag [#allocation7], %s512
        %s514 = sand.u32 %s96, 1
        %s515 = smul.addr %s514, 1280
        %s516 = scalar_lea.vmem [#allocation6], %s515
        // Predicated region
        $region65: #{tpu_custom_call.1} parent=59 // pred_check
          %p517 = pneg %p109
        $region66: #{tpu_custom_call.1} parent=59 // pred_check_branch
          %519 = sbr.rel (%p517) target = $region68
        $region67: #{tpu_custom_call.1} parent=59 // pred_region
          %520 = dma.done %s513, 20480
        $region68: #{tpu_custom_call.1} parent=59 // pred_fallthru
          _
        %s521 = sand.u32 %s32, 1
        %s522 = scalar_lea.sflag [#allocation7], %s521
        %s523 = sand.u32 %s124, 1
        %s524 = smul.addr %s523, 2560
        %s525 = scalar_lea.vmem [#allocation8], %s524
        // Predicated region
        $region69: #{tpu_custom_call.1} parent=59 // pred_check
          %p526 = pneg %p137
        $region70: #{tpu_custom_call.1} parent=59 // pred_check_branch
          %528 = sbr.rel (%p526) target = $region72
        $region71: #{tpu_custom_call.1} parent=59 // pred_region
          %529 = dma.done %s522, 40960
        $region72: #{tpu_custom_call.1} parent=59 // pred_fallthru
          _
        %s530 = sand.u32 %s32, 1
        %s531 = scalar_lea.sflag [#allocation10], %s530
        %s532 = sand.u32 %s152, 1
        %s533 = smul.addr %s532, 1280
        %s534 = scalar_lea.vmem [#allocation9], %s533
        // Predicated region
        $region73: #{tpu_custom_call.1} parent=59 // pred_check
          %p535 = pneg %p165
        $region74: #{tpu_custom_call.1} parent=59 // pred_check_branch
          %537 = sbr.rel (%p535) target = $region76
        $region75: #{tpu_custom_call.1} parent=59 // pred_region
          %538 = dma.done %s531, 20480
        $region76: #{tpu_custom_call.1} parent=59 // pred_fallthru
          _
        %s539 = sand.u32 %s32, 1
        %s540 = scalar_lea.sflag [#allocation10], %s539
        %s541 = sand.u32 %s180, 1
        %s542 = smul.addr %s541, 2
        %s543 = scalar_lea.vmem [#allocation11], %s542
        // Predicated region
        $region77: #{tpu_custom_call.1} parent=59 // pred_check
          %p544 = pneg %p193
        $region78: #{tpu_custom_call.1} parent=59 // pred_check_branch
          %546 = sbr.rel (%p544) target = $region80
        $region79: #{tpu_custom_call.1} parent=59 // pred_region
          %547 = dma.done %s540, 32
        $region80: #{tpu_custom_call.1} parent=59 // pred_fallthru
          _
        %s548 = sand.u32 %s32, 1
        %s549 = scalar_lea.sflag [#allocation13], %s548
        %s550 = sand.u32 %s208, 1
        %s551 = smul.addr %s550, 4
        %s552 = scalar_lea.vmem [#allocation12], %s551
        // Predicated region
        $region81: #{tpu_custom_call.1} parent=59 // pred_check
          %p553 = pneg %p221
        $region82: #{tpu_custom_call.1} parent=59 // pred_check_branch
          %555 = sbr.rel (%p553) target = $region84
        $region83: #{tpu_custom_call.1} parent=59 // pred_region
          %556 = dma.done %s549, 64
        $region84: #{tpu_custom_call.1} parent=59 // pred_fallthru
          _
        %s557 = sand.u32 %s32, 1
        %s558 = scalar_lea.sflag [#allocation13], %s557
        %s559 = sand.u32 %s234, 1
        %s560 = smul.addr %s559, 10
        %s561 = scalar_lea.vmem [#allocation14], %s560
        // Predicated region
        $region85: #{tpu_custom_call.1} parent=59 // pred_check
          %p562 = pneg %p247
        $region86: #{tpu_custom_call.1} parent=59 // pred_check_branch
          %564 = sbr.rel (%p562) target = $region88
        $region87: #{tpu_custom_call.1} parent=59 // pred_region
          %565 = dma.done %s558, 160
        $region88: #{tpu_custom_call.1} parent=59 // pred_fallthru
          _
        // Predicated region
        $region89: #{tpu_custom_call.1} parent=59 // pred_check
          %p566 = pneg %p268
        $region90: #{tpu_custom_call.1} parent=59 // pred_check_branch
          %568 = sbr.rel (%p566) target = $region92
        $region91: #{tpu_custom_call.1} parent=59 // pred_region
          %569 = dma.done [#allocation16], 2560
        $region92: #{tpu_custom_call.1} parent=59 // pred_fallthru
          _
        // Predicated region
        $region93: #{tpu_custom_call.1} parent=59 // pred_check
          %p570 = pneg %p289
        $region94: #{tpu_custom_call.1} parent=59 // pred_check_branch
          %572 = sbr.rel (%p570) target = $region96
        $region95: #{tpu_custom_call.1} parent=59 // pred_region
          %573 = dma.done [#allocation16], 2560
        $region96: #{tpu_custom_call.1} parent=59 // pred_fallthru
          _
        %p574 = pneg %p60
        %p575 = pneg %p57
        %p576 = pneg %p81
        %p577 = pneg %p78
        %s578 = sand.u32 %s32, 1
        %s579 = scalar_lea.sflag [#allocation7], %s578
        %s580 = sand.u32 %s96, 1
        %s581 = smul.addr %s580, 1280
        %s582 = scalar_lea.vmem [#allocation6], %s581
        %p583 = pneg %p109
        %p584 = pneg %p106
        %s585 = sand.u32 %s32, 1
        %s586 = scalar_lea.sflag [#allocation7], %s585
        %s587 = sand.u32 %s124, 1
        %s588 = smul.addr %s587, 2560
        %s589 = scalar_lea.vmem [#allocation8], %s588
        %p590 = pneg %p137
        %p591 = pneg %p134
        %s592 = sand.u32 %s32, 1
        %s593 = scalar_lea.sflag [#allocation10], %s592
        %s594 = sand.u32 %s152, 1
        %s595 = smul.addr %s594, 1280
        %s596 = scalar_lea.vmem [#allocation9], %s595
        %p597 = pneg %p165
        %p598 = pneg %p162
        %s599 = sand.u32 %s32, 1
        %s600 = scalar_lea.sflag [#allocation10], %s599
        %s601 = sand.u32 %s180, 1
        %s602 = smul.addr %s601, 2
        %s603 = scalar_lea.vmem [#allocation11], %s602
        %p604 = pneg %p193
        %p605 = pneg %p190
        %s606 = sand.u32 %s32, 1
        %s607 = scalar_lea.sflag [#allocation13], %s606
        %s608 = sand.u32 %s208, 1
        %s609 = smul.addr %s608, 4
        %s610 = scalar_lea.vmem [#allocation12], %s609
        %p611 = pneg %p221
        %p612 = pneg %p218
        %s613 = sand.u32 %s32, 1
        %s614 = scalar_lea.sflag [#allocation13], %s613
        %s615 = sand.u32 %s234, 1
        %s616 = smul.addr %s615, 10
        %s617 = scalar_lea.vmem [#allocation14], %s616
        %p618 = pneg %p247
        %p619 = pneg %p244
        %p620 = pneg %p268
        %p621 = pneg %p265
        %p622 = pneg %p289
        %p623 = pneg %p286
        %p624 = pneg %p310
        %p625 = pneg %p307
        %p626 = scmp.eq.s32.totalorder %s36, 0
        %p627 = scmp.eq.s32.totalorder %s37, 0
        %p628 = pnand %p626, %p627
        %p629 = pneg %p628
        // Predicated region
        $region97: #{tpu_custom_call.1} parent=59 // pred_check
          _
        $region98: #{tpu_custom_call.1} parent=59 // pred_check_branch
          %631 = sbr.rel (%p628) target = $region100
        $region99: #{tpu_custom_call.1} parent=59 // pred_region
          %v632 = vld [vmem:[%s0] sm:$0xff]
          %v633 = vld [vmem:[%s0 + $0x8] sm:$0xff]
          %v634 = vld [vmem:[%s0 + $0x10] sm:$0xff]
          %v635 = vld [vmem:[%s0 + $0x18] sm:$0xff]
          %v636 = vld [vmem:[%s0 + $0x20] sm:$0xff]
          %v637 = vld [vmem:[%s0 + $0x28] sm:$0xff]
          %v638 = vld [vmem:[%s0 + $0x30] sm:$0xff]
          %v639 = vld [vmem:[%s0 + $0x38] sm:$0xff]
          %v640 = vld [vmem:[%s0 + $0x40] sm:$0xff]
          %v641 = vld [vmem:[%s0 + $0x48] sm:$0xff]
          %v642 = vld [vmem:[%s0 + $0x50] sm:$0x7]
          %v643 = vld [vmem:[%s0 + $0x58] sm:$0x7]
          %v644 = vld [vmem:[%s0 + $0x60] sm:$0x7]
          %v645 = vld [vmem:[%s0 + $0x68] sm:$0x7]
          %v646 = vld [vmem:[%s0 + $0x70] sm:$0x7]
          %v647 = vld [vmem:[%s0 + $0x78] sm:$0x7]
          %v648 = vld [vmem:[%s0 + $0x80] sm:$0x7]
          %v649 = vld [vmem:[%s0 + $0x88] sm:$0x7]
          %v650 = vld [vmem:[%s0 + $0x90] sm:$0x7]
          %v651 = vld [vmem:[%s0 + $0x98] sm:$0x7]
          %v652 = vld [vmem:[%s0 + $0xa0] sm:$0xff]
          %v653 = vld [vmem:[%s0 + $0xa8] sm:$0xff]
          %v654 = vld [vmem:[%s0 + $0xb0] sm:$0xff]
          %v655 = vld [vmem:[%s0 + $0xb8] sm:$0xff]
          %v656 = vld [vmem:[%s0 + $0xc0] sm:$0xff]
          %v657 = vld [vmem:[%s0 + $0xc8] sm:$0xff]
          %v658 = vld [vmem:[%s0 + $0xd0] sm:$0xff]
          %v659 = vld [vmem:[%s0 + $0xd8] sm:$0xff]
          %v660 = vld [vmem:[%s0 + $0xe0] sm:$0xff]
          %v661 = vld [vmem:[%s0 + $0xe8] sm:$0xff]
          %v662 = vld [vmem:[%s0 + $0xf0] sm:$0x7]
          %v663 = vld [vmem:[%s0 + $0xf8] sm:$0x7]
          %v664 = vld [vmem:[%s0 + $0x100] sm:$0x7]
          %v665 = vld [vmem:[%s0 + $0x108] sm:$0x7]
          %v666 = vld [vmem:[%s0 + $0x110] sm:$0x7]
          %v667 = vld [vmem:[%s0 + $0x118] sm:$0x7]
          %v668 = vld [vmem:[%s0 + $0x120] sm:$0x7]
          %v669 = vld [vmem:[%s0 + $0x128] sm:$0x7]
          %v670 = vld [vmem:[%s0 + $0x130] sm:$0x7]
          %v671 = vld [vmem:[%s0 + $0x138] sm:$0x7]
          %672 = vst [vmem:[#allocation2] sm:$0xff] %v632
          %673 = vst [vmem:[#allocation2 + $0x8] sm:$0xff] %v633
          %674 = vst [vmem:[#allocation2 + $0x10] sm:$0xff] %v634
          %675 = vst [vmem:[#allocation2 + $0x18] sm:$0xff] %v635
          %676 = vst [vmem:[#allocation2 + $0x20] sm:$0xff] %v636
          %677 = vst [vmem:[#allocation2 + $0x28] sm:$0xff] %v637
          %678 = vst [vmem:[#allocation2 + $0x30] sm:$0xff] %v638
          %679 = vst [vmem:[#allocation2 + $0x38] sm:$0xff] %v639
          %680 = vst [vmem:[#allocation2 + $0x40] sm:$0xff] %v640
          %681 = vst [vmem:[#allocation2 + $0x48] sm:$0xff] %v641
          %682 = vst [vmem:[#allocation2 + $0x50] sm:$0x7] %v642
          %683 = vst [vmem:[#allocation2 + $0x58] sm:$0x7] %v643
          %684 = vst [vmem:[#allocation2 + $0x60] sm:$0x7] %v644
          %685 = vst [vmem:[#allocation2 + $0x68] sm:$0x7] %v645
          %686 = vst [vmem:[#allocation2 + $0x70] sm:$0x7] %v646
          %687 = vst [vmem:[#allocation2 + $0x78] sm:$0x7] %v647
          %688 = vst [vmem:[#allocation2 + $0x80] sm:$0x7] %v648
          %689 = vst [vmem:[#allocation2 + $0x88] sm:$0x7] %v649
          %690 = vst [vmem:[#allocation2 + $0x90] sm:$0x7] %v650
          %691 = vst [vmem:[#allocation2 + $0x98] sm:$0x7] %v651
          %692 = vst [vmem:[#allocation2 + $0xa0] sm:$0xff] %v652
          %693 = vst [vmem:[#allocation2 + $0xa8] sm:$0xff] %v653
          %694 = vst [vmem:[#allocation2 + $0xb0] sm:$0xff] %v654
          %695 = vst [vmem:[#allocation2 + $0xb8] sm:$0xff] %v655
          %696 = vst [vmem:[#allocation2 + $0xc0] sm:$0xff] %v656
          %697 = vst [vmem:[#allocation2 + $0xc8] sm:$0xff] %v657
          %698 = vst [vmem:[#allocation2 + $0xd0] sm:$0xff] %v658
          %699 = vst [vmem:[#allocation2 + $0xd8] sm:$0xff] %v659
          %700 = vst [vmem:[#allocation2 + $0xe0] sm:$0xff] %v660
          %701 = vst [vmem:[#allocation2 + $0xe8] sm:$0xff] %v661
          %702 = vst [vmem:[#allocation2 + $0xf0] sm:$0x7] %v662
          %703 = vst [vmem:[#allocation2 + $0xf8] sm:$0x7] %v663
          %704 = vst [vmem:[#allocation2 + $0x100] sm:$0x7] %v664
          %705 = vst [vmem:[#allocation2 + $0x108] sm:$0x7] %v665
          %706 = vst [vmem:[#allocation2 + $0x110] sm:$0x7] %v666
          %707 = vst [vmem:[#allocation2 + $0x118] sm:$0x7] %v667
          %708 = vst [vmem:[#allocation2 + $0x120] sm:$0x7] %v668
          %709 = vst [vmem:[#allocation2 + $0x128] sm:$0x7] %v669
          %710 = vst [vmem:[#allocation2 + $0x130] sm:$0x7] %v670
          %711 = vst [vmem:[#allocation2 + $0x138] sm:$0x7] %v671
        $region100: #{tpu_custom_call.1} parent=59 // pred_fallthru
          _
        // Predicated region
        $region101: #{tpu_custom_call.1} parent=59 // pred_check
          %p712 = pneg %p627
        $region102: #{tpu_custom_call.1} parent=59 // pred_check_branch
          %714 = sbr.rel (%p712) target = $region104
        $region103: #{tpu_custom_call.1} parent=59 // pred_region
          %715 = vst [vmem:[#allocation3] sm:$0xff] 0.0
          %716 = vst [vmem:[#allocation3 + $0x8] sm:$0xff] 0.0
          %717 = vst [vmem:[#allocation3 + $0x10] sm:$0xff] 0.0
          %718 = vst [vmem:[#allocation3 + $0x18] sm:$0xff] 0.0
          %719 = vst [vmem:[#allocation3 + $0x20] sm:$0xff] 0.0
          %720 = vst [vmem:[#allocation3 + $0x28] sm:$0xff] 0.0
          %721 = vst [vmem:[#allocation3 + $0x30] sm:$0xff] 0.0
          %722 = vst [vmem:[#allocation3 + $0x38] sm:$0xff] 0.0
          %723 = vst [vmem:[#allocation3 + $0x40] sm:$0xff] 0.0
          %724 = vst [vmem:[#allocation3 + $0x48] sm:$0xff] 0.0
          %725 = vst [vmem:[#allocation3 + $0x50] sm:$0x7] 0.0
          %726 = vst [vmem:[#allocation3 + $0x58] sm:$0x7] 0.0
          %727 = vst [vmem:[#allocation3 + $0x60] sm:$0x7] 0.0
          %728 = vst [vmem:[#allocation3 + $0x68] sm:$0x7] 0.0
          %729 = vst [vmem:[#allocation3 + $0x70] sm:$0x7] 0.0
          %730 = vst [vmem:[#allocation3 + $0x78] sm:$0x7] 0.0
          %731 = vst [vmem:[#allocation3 + $0x80] sm:$0x7] 0.0
          %732 = vst [vmem:[#allocation3 + $0x88] sm:$0x7] 0.0
          %733 = vst [vmem:[#allocation3 + $0x90] sm:$0x7] 0.0
          %734 = vst [vmem:[#allocation3 + $0x98] sm:$0x7] 0.0
          %735 = vst [vmem:[#allocation3 + $0xa0] sm:$0xff] 0.0
          %736 = vst [vmem:[#allocation3 + $0xa8] sm:$0xff] 0.0
          %737 = vst [vmem:[#allocation3 + $0xb0] sm:$0xff] 0.0
          %738 = vst [vmem:[#allocation3 + $0xb8] sm:$0xff] 0.0
          %739 = vst [vmem:[#allocation3 + $0xc0] sm:$0xff] 0.0
          %740 = vst [vmem:[#allocation3 + $0xc8] sm:$0xff] 0.0
          %741 = vst [vmem:[#allocation3 + $0xd0] sm:$0xff] 0.0
          %742 = vst [vmem:[#allocation3 + $0xd8] sm:$0xff] 0.0
          %743 = vst [vmem:[#allocation3 + $0xe0] sm:$0xff] 0.0
          %744 = vst [vmem:[#allocation3 + $0xe8] sm:$0xff] 0.0
          %745 = vst [vmem:[#allocation3 + $0xf0] sm:$0x7] 0.0
          %746 = vst [vmem:[#allocation3 + $0xf8] sm:$0x7] 0.0
          %747 = vst [vmem:[#allocation3 + $0x100] sm:$0x7] 0.0
          %748 = vst [vmem:[#allocation3 + $0x108] sm:$0x7] 0.0
          %749 = vst [vmem:[#allocation3 + $0x110] sm:$0x7] 0.0
          %750 = vst [vmem:[#allocation3 + $0x118] sm:$0x7] 0.0
          %751 = vst [vmem:[#allocation3 + $0x120] sm:$0x7] 0.0
          %752 = vst [vmem:[#allocation3 + $0x128] sm:$0x7] 0.0
          %753 = vst [vmem:[#allocation3 + $0x130] sm:$0x7] 0.0
          %754 = vst [vmem:[#allocation3 + $0x138] sm:$0x7] 0.0
        $region104: #{tpu_custom_call.1} parent=59 // pred_fallthru
          _
        %v755 = vld [vmem:[%s516] sm:$0xff]
        %v756 = vld [vmem:[%s516 + $0x8] sm:$0xff]
        %v757 = vld [vmem:[%s516 + $0x10] sm:$0xff]
        %v758 = vld [vmem:[%s516 + $0x18] sm:$0xff]
        %v759 = vld [vmem:[%s516 + $0x20] sm:$0xff]
        %v760 = vld [vmem:[%s516 + $0x28] sm:$0xff]
        %v761 = vld [vmem:[%s516 + $0x30] sm:$0xff]
        %v762 = vld [vmem:[%s516 + $0x38] sm:$0xff]
        %v763 = vld [vmem:[%s516 + $0x40] sm:$0xff]
        %v764 = vld [vmem:[%s516 + $0x48] sm:$0xff]
        %v765 = vld [vmem:[%s516 + $0x50] sm:$0xff]
        %v766 = vld [vmem:[%s516 + $0x58] sm:$0xff]
        %v767 = vld [vmem:[%s516 + $0x60] sm:$0xff]
        %v768 = vld [vmem:[%s516 + $0x68] sm:$0xff]
        %v769 = vld [vmem:[%s516 + $0x70] sm:$0xff]
        %v770 = vld [vmem:[%s516 + $0x78] sm:$0xff]
        %v771 = vld [vmem:[%s516 + $0x80] sm:$0xff]
        %v772 = vld [vmem:[%s516 + $0x88] sm:$0xff]
        %v773 = vld [vmem:[%s516 + $0x90] sm:$0xff]
        %v774 = vld [vmem:[%s516 + $0x98] sm:$0xff]
        %v775 = vld [vmem:[%s516 + $0xa0] sm:$0xff]
        %v776 = vld [vmem:[%s516 + $0xa8] sm:$0xff]
        %v777 = vld [vmem:[%s516 + $0xb0] sm:$0xff]
        %v778 = vld [vmem:[%s516 + $0xb8] sm:$0xff]
        %v779 = vld [vmem:[%s516 + $0xc0] sm:$0xff]
        %v780 = vld [vmem:[%s516 + $0xc8] sm:$0xff]
        %v781 = vld [vmem:[%s516 + $0xd0] sm:$0xff]
        %v782 = vld [vmem:[%s516 + $0xd8] sm:$0xff]
        %v783 = vld [vmem:[%s516 + $0xe0] sm:$0xff]
        %v784 = vld [vmem:[%s516 + $0xe8] sm:$0xff]
        %v785 = vld [vmem:[%s516 + $0xf0] sm:$0xff]
        %v786 = vld [vmem:[%s516 + $0xf8] sm:$0xff]
        %v787 = vld [vmem:[%s516 + $0x100] sm:$0xff]
        %v788 = vld [vmem:[%s516 + $0x108] sm:$0xff]
        %v789 = vld [vmem:[%s516 + $0x110] sm:$0xff]
        %v790 = vld [vmem:[%s516 + $0x118] sm:$0xff]
        %v791 = vld [vmem:[%s516 + $0x120] sm:$0xff]
        %v792 = vld [vmem:[%s516 + $0x128] sm:$0xff]
        %v793 = vld [vmem:[%s516 + $0x130] sm:$0xff]
        %v794 = vld [vmem:[%s516 + $0x138] sm:$0xff]
        %v795 = vld [vmem:[%s516 + $0x140] sm:$0xff]
        %v796 = vld [vmem:[%s516 + $0x148] sm:$0xff]
        %v797 = vld [vmem:[%s516 + $0x150] sm:$0xff]
        %v798 = vld [vmem:[%s516 + $0x158] sm:$0xff]
        %v799 = vld [vmem:[%s516 + $0x160] sm:$0xff]
        %v800 = vld [vmem:[%s516 + $0x168] sm:$0xff]
        %v801 = vld [vmem:[%s516 + $0x170] sm:$0xff]
        %v802 = vld [vmem:[%s516 + $0x178] sm:$0xff]
        %v803 = vld [vmem:[%s516 + $0x180] sm:$0xff]
        %v804 = vld [vmem:[%s516 + $0x188] sm:$0xff]
        %v805 = vld [vmem:[%s516 + $0x190] sm:$0xff]
        %v806 = vld [vmem:[%s516 + $0x198] sm:$0xff]
        %v807 = vld [vmem:[%s516 + $0x1a0] sm:$0xff]
        %v808 = vld [vmem:[%s516 + $0x1a8] sm:$0xff]
        %v809 = vld [vmem:[%s516 + $0x1b0] sm:$0xff]
        %v810 = vld [vmem:[%s516 + $0x1b8] sm:$0xff]
        %v811 = vld [vmem:[%s516 + $0x1c0] sm:$0xff]
        %v812 = vld [vmem:[%s516 + $0x1c8] sm:$0xff]
        %v813 = vld [vmem:[%s516 + $0x1d0] sm:$0xff]
        %v814 = vld [vmem:[%s516 + $0x1d8] sm:$0xff]
        %v815 = vld [vmem:[%s516 + $0x1e0] sm:$0xff]
        %v816 = vld [vmem:[%s516 + $0x1e8] sm:$0xff]
        %v817 = vld [vmem:[%s516 + $0x1f0] sm:$0xff]
        %v818 = vld [vmem:[%s516 + $0x1f8] sm:$0xff]
        %v819 = vld [vmem:[%s516 + $0x200] sm:$0xff]
        %v820 = vld [vmem:[%s516 + $0x208] sm:$0xff]
        %v821 = vld [vmem:[%s516 + $0x210] sm:$0xff]
        %v822 = vld [vmem:[%s516 + $0x218] sm:$0xff]
        %v823 = vld [vmem:[%s516 + $0x220] sm:$0xff]
        %v824 = vld [vmem:[%s516 + $0x228] sm:$0xff]
        %v825 = vld [vmem:[%s516 + $0x230] sm:$0xff]
        %v826 = vld [vmem:[%s516 + $0x238] sm:$0xff]
        %v827 = vld [vmem:[%s516 + $0x240] sm:$0xff]
        %v828 = vld [vmem:[%s516 + $0x248] sm:$0xff]
        %v829 = vld [vmem:[%s516 + $0x250] sm:$0xff]
        %v830 = vld [vmem:[%s516 + $0x258] sm:$0xff]
        %v831 = vld [vmem:[%s516 + $0x260] sm:$0xff]
        %v832 = vld [vmem:[%s516 + $0x268] sm:$0xff]
        %v833 = vld [vmem:[%s516 + $0x270] sm:$0xff]
        %v834 = vld [vmem:[%s516 + $0x278] sm:$0xff]
        %v835 = vld [vmem:[%s516 + $0x280] sm:$0xff]
        %v836 = vld [vmem:[%s516 + $0x288] sm:$0xff]
        %v837 = vld [vmem:[%s516 + $0x290] sm:$0xff]
        %v838 = vld [vmem:[%s516 + $0x298] sm:$0xff]
        %v839 = vld [vmem:[%s516 + $0x2a0] sm:$0xff]
        %v840 = vld [vmem:[%s516 + $0x2a8] sm:$0xff]
        %v841 = vld [vmem:[%s516 + $0x2b0] sm:$0xff]
        %v842 = vld [vmem:[%s516 + $0x2b8] sm:$0xff]
        %v843 = vld [vmem:[%s516 + $0x2c0] sm:$0xff]
        %v844 = vld [vmem:[%s516 + $0x2c8] sm:$0xff]
        %v845 = vld [vmem:[%s516 + $0x2d0] sm:$0xff]
        %v846 = vld [vmem:[%s516 + $0x2d8] sm:$0xff]
        %v847 = vld [vmem:[%s516 + $0x2e0] sm:$0xff]
        %v848 = vld [vmem:[%s516 + $0x2e8] sm:$0xff]
        %v849 = vld [vmem:[%s516 + $0x2f0] sm:$0xff]
        %v850 = vld [vmem:[%s516 + $0x2f8] sm:$0xff]
        %v851 = vld [vmem:[%s516 + $0x300] sm:$0xff]
        %v852 = vld [vmem:[%s516 + $0x308] sm:$0xff]
        %v853 = vld [vmem:[%s516 + $0x310] sm:$0xff]
        %v854 = vld [vmem:[%s516 + $0x318] sm:$0xff]
        %v855 = vld [vmem:[%s516 + $0x320] sm:$0xff]
        %v856 = vld [vmem:[%s516 + $0x328] sm:$0xff]
        %v857 = vld [vmem:[%s516 + $0x330] sm:$0xff]
        %v858 = vld [vmem:[%s516 + $0x338] sm:$0xff]
        %v859 = vld [vmem:[%s516 + $0x340] sm:$0xff]
        %v860 = vld [vmem:[%s516 + $0x348] sm:$0xff]
        %v861 = vld [vmem:[%s516 + $0x350] sm:$0xff]
        %v862 = vld [vmem:[%s516 + $0x358] sm:$0xff]
        %v863 = vld [vmem:[%s516 + $0x360] sm:$0xff]
        %v864 = vld [vmem:[%s516 + $0x368] sm:$0xff]
        %v865 = vld [vmem:[%s516 + $0x370] sm:$0xff]
        %v866 = vld [vmem:[%s516 + $0x378] sm:$0xff]
        %v867 = vld [vmem:[%s516 + $0x380] sm:$0xff]
        %v868 = vld [vmem:[%s516 + $0x388] sm:$0xff]
        %v869 = vld [vmem:[%s516 + $0x390] sm:$0xff]
        %v870 = vld [vmem:[%s516 + $0x398] sm:$0xff]
        %v871 = vld [vmem:[%s516 + $0x3a0] sm:$0xff]
        %v872 = vld [vmem:[%s516 + $0x3a8] sm:$0xff]
        %v873 = vld [vmem:[%s516 + $0x3b0] sm:$0xff]
        %v874 = vld [vmem:[%s516 + $0x3b8] sm:$0xff]
        %v875 = vld [vmem:[%s516 + $0x3c0] sm:$0xff]
        %v876 = vld [vmem:[%s516 + $0x3c8] sm:$0xff]
        %v877 = vld [vmem:[%s516 + $0x3d0] sm:$0xff]
        %v878 = vld [vmem:[%s516 + $0x3d8] sm:$0xff]
        %v879 = vld [vmem:[%s516 + $0x3e0] sm:$0xff]
        %v880 = vld [vmem:[%s516 + $0x3e8] sm:$0xff]
        %v881 = vld [vmem:[%s516 + $0x3f0] sm:$0xff]
        %v882 = vld [vmem:[%s516 + $0x3f8] sm:$0xff]
        %v883 = vld [vmem:[%s516 + $0x400] sm:$0xff]
        %v884 = vld [vmem:[%s516 + $0x408] sm:$0xff]
        %v885 = vld [vmem:[%s516 + $0x410] sm:$0xff]
        %v886 = vld [vmem:[%s516 + $0x418] sm:$0xff]
        %v887 = vld [vmem:[%s516 + $0x420] sm:$0xff]
        %v888 = vld [vmem:[%s516 + $0x428] sm:$0xff]
        %v889 = vld [vmem:[%s516 + $0x430] sm:$0xff]
        %v890 = vld [vmem:[%s516 + $0x438] sm:$0xff]
        %v891 = vld [vmem:[%s516 + $0x440] sm:$0xff]
        %v892 = vld [vmem:[%s516 + $0x448] sm:$0xff]
        %v893 = vld [vmem:[%s516 + $0x450] sm:$0xff]
        %v894 = vld [vmem:[%s516 + $0x458] sm:$0xff]
        %v895 = vld [vmem:[%s516 + $0x460] sm:$0xff]
        %v896 = vld [vmem:[%s516 + $0x468] sm:$0xff]
        %v897 = vld [vmem:[%s516 + $0x470] sm:$0xff]
        %v898 = vld [vmem:[%s516 + $0x478] sm:$0xff]
        %v899 = vld [vmem:[%s516 + $0x480] sm:$0xff]
        %v900 = vld [vmem:[%s516 + $0x488] sm:$0xff]
        %v901 = vld [vmem:[%s516 + $0x490] sm:$0xff]
        %v902 = vld [vmem:[%s516 + $0x498] sm:$0xff]
        %v903 = vld [vmem:[%s516 + $0x4a0] sm:$0xff]
        %v904 = vld [vmem:[%s516 + $0x4a8] sm:$0xff]
        %v905 = vld [vmem:[%s516 + $0x4b0] sm:$0xff]
        %v906 = vld [vmem:[%s516 + $0x4b8] sm:$0xff]
        %v907 = vld [vmem:[%s516 + $0x4c0] sm:$0xff]
        %v908 = vld [vmem:[%s516 + $0x4c8] sm:$0xff]
        %v909 = vld [vmem:[%s516 + $0x4d0] sm:$0xff]
        %v910 = vld [vmem:[%s516 + $0x4d8] sm:$0xff]
        %v911 = vld [vmem:[%s516 + $0x4e0] sm:$0xff]
        %v912 = vld [vmem:[%s516 + $0x4e8] sm:$0xff]
        %v913 = vld [vmem:[%s516 + $0x4f0] sm:$0xff]
        %v914 = vld [vmem:[%s516 + $0x4f8] sm:$0xff]
        %v915 = vld [vmem:[%s525] sm:$0xff]
        %v916 = vld [vmem:[%s525 + $0x8] sm:$0xff]
        %v917 = vld [vmem:[%s525 + $0x10] sm:$0xff]
        %v918 = vld [vmem:[%s525 + $0x18] sm:$0xff]
        %v919 = vld [vmem:[%s525 + $0x20] sm:$0xff]
        %v920 = vld [vmem:[%s525 + $0x28] sm:$0xff]
        %v921 = vld [vmem:[%s525 + $0x30] sm:$0xff]
        %v922 = vld [vmem:[%s525 + $0x38] sm:$0xff]
        %v923 = vld [vmem:[%s525 + $0x40] sm:$0xff]
        %v924 = vld [vmem:[%s525 + $0x48] sm:$0xff]
        %v925 = vld [vmem:[%s525 + $0x50] sm:$0xff]
        %v926 = vld [vmem:[%s525 + $0x58] sm:$0xff]
        %v927 = vld [vmem:[%s525 + $0x60] sm:$0xff]
        %v928 = vld [vmem:[%s525 + $0x68] sm:$0xff]
        %v929 = vld [vmem:[%s525 + $0x70] sm:$0xff]
        %v930 = vld [vmem:[%s525 + $0x78] sm:$0xff]
        %v931 = vld [vmem:[%s525 + $0x80] sm:$0xff]
        %v932 = vld [vmem:[%s525 + $0x88] sm:$0xff]
        %v933 = vld [vmem:[%s525 + $0x90] sm:$0xff]
        %v934 = vld [vmem:[%s525 + $0x98] sm:$0xff]
        %v935 = vld [vmem:[%s525 + $0xa0] sm:$0xff]
        %v936 = vld [vmem:[%s525 + $0xa8] sm:$0xff]
        %v937 = vld [vmem:[%s525 + $0xb0] sm:$0xff]
        %v938 = vld [vmem:[%s525 + $0xb8] sm:$0xff]
        %v939 = vld [vmem:[%s525 + $0xc0] sm:$0xff]
        %v940 = vld [vmem:[%s525 + $0xc8] sm:$0xff]
        %v941 = vld [vmem:[%s525 + $0xd0] sm:$0xff]
        %v942 = vld [vmem:[%s525 + $0xd8] sm:$0xff]
        %v943 = vld [vmem:[%s525 + $0xe0] sm:$0xff]
        %v944 = vld [vmem:[%s525 + $0xe8] sm:$0xff]
        %v945 = vld [vmem:[%s525 + $0xf0] sm:$0xff]
        %v946 = vld [vmem:[%s525 + $0xf8] sm:$0xff]
        %v947 = vld [vmem:[%s525 + $0x100] sm:$0xff]
        %v948 = vld [vmem:[%s525 + $0x108] sm:$0xff]
        %v949 = vld [vmem:[%s525 + $0x110] sm:$0xff]
        %v950 = vld [vmem:[%s525 + $0x118] sm:$0xff]
        %v951 = vld [vmem:[%s525 + $0x120] sm:$0xff]
        %v952 = vld [vmem:[%s525 + $0x128] sm:$0xff]
        %v953 = vld [vmem:[%s525 + $0x130] sm:$0xff]
        %v954 = vld [vmem:[%s525 + $0x138] sm:$0xff]
        %v955 = vld [vmem:[%s525 + $0x140] sm:$0xff]
        %v956 = vld [vmem:[%s525 + $0x148] sm:$0xff]
        %v957 = vld [vmem:[%s525 + $0x150] sm:$0xff]
        %v958 = vld [vmem:[%s525 + $0x158] sm:$0xff]
        %v959 = vld [vmem:[%s525 + $0x160] sm:$0xff]
        %v960 = vld [vmem:[%s525 + $0x168] sm:$0xff]
        %v961 = vld [vmem:[%s525 + $0x170] sm:$0xff]
        %v962 = vld [vmem:[%s525 + $0x178] sm:$0xff]
        %v963 = vld [vmem:[%s525 + $0x180] sm:$0xff]
        %v964 = vld [vmem:[%s525 + $0x188] sm:$0xff]
        %v965 = vld [vmem:[%s525 + $0x190] sm:$0xff]
        %v966 = vld [vmem:[%s525 + $0x198] sm:$0xff]
        %v967 = vld [vmem:[%s525 + $0x1a0] sm:$0xff]
        %v968 = vld [vmem:[%s525 + $0x1a8] sm:$0xff]
        %v969 = vld [vmem:[%s525 + $0x1b0] sm:$0xff]
        %v970 = vld [vmem:[%s525 + $0x1b8] sm:$0xff]
        %v971 = vld [vmem:[%s525 + $0x1c0] sm:$0xff]
        %v972 = vld [vmem:[%s525 + $0x1c8] sm:$0xff]
        %v973 = vld [vmem:[%s525 + $0x1d0] sm:$0xff]
        %v974 = vld [vmem:[%s525 + $0x1d8] sm:$0xff]
        %v975 = vld [vmem:[%s525 + $0x1e0] sm:$0xff]
        %v976 = vld [vmem:[%s525 + $0x1e8] sm:$0xff]
        %v977 = vld [vmem:[%s525 + $0x1f0] sm:$0xff]
        %v978 = vld [vmem:[%s525 + $0x1f8] sm:$0xff]
        %v979 = vld [vmem:[%s525 + $0x200] sm:$0xff]
        %v980 = vld [vmem:[%s525 + $0x208] sm:$0xff]
        %v981 = vld [vmem:[%s525 + $0x210] sm:$0xff]
        %v982 = vld [vmem:[%s525 + $0x218] sm:$0xff]
        %v983 = vld [vmem:[%s525 + $0x220] sm:$0xff]
        %v984 = vld [vmem:[%s525 + $0x228] sm:$0xff]
        %v985 = vld [vmem:[%s525 + $0x230] sm:$0xff]
        %v986 = vld [vmem:[%s525 + $0x238] sm:$0xff]
        %v987 = vld [vmem:[%s525 + $0x240] sm:$0xff]
        %v988 = vld [vmem:[%s525 + $0x248] sm:$0xff]
        %v989 = vld [vmem:[%s525 + $0x250] sm:$0xff]
        %v990 = vld [vmem:[%s525 + $0x258] sm:$0xff]
        %v991 = vld [vmem:[%s525 + $0x260] sm:$0xff]
        %v992 = vld [vmem:[%s525 + $0x268] sm:$0xff]
        %v993 = vld [vmem:[%s525 + $0x270] sm:$0xff]
        %v994 = vld [vmem:[%s525 + $0x278] sm:$0xff]
        %v995 = vld [vmem:[%s525 + $0x280] sm:$0xff]
        %v996 = vld [vmem:[%s525 + $0x288] sm:$0xff]
        %v997 = vld [vmem:[%s525 + $0x290] sm:$0xff]
        %v998 = vld [vmem:[%s525 + $0x298] sm:$0xff]
        %v999 = vld [vmem:[%s525 + $0x2a0] sm:$0xff]
        %v1000 = vld [vmem:[%s525 + $0x2a8] sm:$0xff]
        %v1001 = vld [vmem:[%s525 + $0x2b0] sm:$0xff]
        %v1002 = vld [vmem:[%s525 + $0x2b8] sm:$0xff]
        %v1003 = vld [vmem:[%s525 + $0x2c0] sm:$0xff]
        %v1004 = vld [vmem:[%s525 + $0x2c8] sm:$0xff]
        %v1005 = vld [vmem:[%s525 + $0x2d0] sm:$0xff]
        %v1006 = vld [vmem:[%s525 + $0x2d8] sm:$0xff]
        %v1007 = vld [vmem:[%s525 + $0x2e0] sm:$0xff]
        %v1008 = vld [vmem:[%s525 + $0x2e8] sm:$0xff]
        %v1009 = vld [vmem:[%s525 + $0x2f0] sm:$0xff]
        %v1010 = vld [vmem:[%s525 + $0x2f8] sm:$0xff]
        %v1011 = vld [vmem:[%s525 + $0x300] sm:$0xff]
        %v1012 = vld [vmem:[%s525 + $0x308] sm:$0xff]
        %v1013 = vld [vmem:[%s525 + $0x310] sm:$0xff]
        %v1014 = vld [vmem:[%s525 + $0x318] sm:$0xff]
        %v1015 = vld [vmem:[%s525 + $0x320] sm:$0xff]
        %v1016 = vld [vmem:[%s525 + $0x328] sm:$0xff]
        %v1017 = vld [vmem:[%s525 + $0x330] sm:$0xff]
        %v1018 = vld [vmem:[%s525 + $0x338] sm:$0xff]
        %v1019 = vld [vmem:[%s525 + $0x340] sm:$0xff]
        %v1020 = vld [vmem:[%s525 + $0x348] sm:$0xff]
        %v1021 = vld [vmem:[%s525 + $0x350] sm:$0xff]
        %v1022 = vld [vmem:[%s525 + $0x358] sm:$0xff]
        %v1023 = vld [vmem:[%s525 + $0x360] sm:$0xff]
        %v1024 = vld [vmem:[%s525 + $0x368] sm:$0xff]
        %v1025 = vld [vmem:[%s525 + $0x370] sm:$0xff]
        %v1026 = vld [vmem:[%s525 + $0x378] sm:$0xff]
        %v1027 = vld [vmem:[%s525 + $0x380] sm:$0xff]
        %v1028 = vld [vmem:[%s525 + $0x388] sm:$0xff]
        %v1029 = vld [vmem:[%s525 + $0x390] sm:$0xff]
        %v1030 = vld [vmem:[%s525 + $0x398] sm:$0xff]
        %v1031 = vld [vmem:[%s525 + $0x3a0] sm:$0xff]
        %v1032 = vld [vmem:[%s525 + $0x3a8] sm:$0xff]
        %v1033 = vld [vmem:[%s525 + $0x3b0] sm:$0xff]
        %v1034 = vld [vmem:[%s525 + $0x3b8] sm:$0xff]
        %v1035 = vld [vmem:[%s525 + $0x3c0] sm:$0xff]
        %v1036 = vld [vmem:[%s525 + $0x3c8] sm:$0xff]
        %v1037 = vld [vmem:[%s525 + $0x3d0] sm:$0xff]
        %v1038 = vld [vmem:[%s525 + $0x3d8] sm:$0xff]
        %v1039 = vld [vmem:[%s525 + $0x3e0] sm:$0xff]
        %v1040 = vld [vmem:[%s525 + $0x3e8] sm:$0xff]
        %v1041 = vld [vmem:[%s525 + $0x3f0] sm:$0xff]
        %v1042 = vld [vmem:[%s525 + $0x3f8] sm:$0xff]
        %v1043 = vld [vmem:[%s525 + $0x400] sm:$0xff]
        %v1044 = vld [vmem:[%s525 + $0x408] sm:$0xff]
        %v1045 = vld [vmem:[%s525 + $0x410] sm:$0xff]
        %v1046 = vld [vmem:[%s525 + $0x418] sm:$0xff]
        %v1047 = vld [vmem:[%s525 + $0x420] sm:$0xff]
        %v1048 = vld [vmem:[%s525 + $0x428] sm:$0xff]
        %v1049 = vld [vmem:[%s525 + $0x430] sm:$0xff]
        %v1050 = vld [vmem:[%s525 + $0x438] sm:$0xff]
        %v1051 = vld [vmem:[%s525 + $0x440] sm:$0xff]
        %v1052 = vld [vmem:[%s525 + $0x448] sm:$0xff]
        %v1053 = vld [vmem:[%s525 + $0x450] sm:$0xff]
        %v1054 = vld [vmem:[%s525 + $0x458] sm:$0xff]
        %v1055 = vld [vmem:[%s525 + $0x460] sm:$0xff]
        %v1056 = vld [vmem:[%s525 + $0x468] sm:$0xff]
        %v1057 = vld [vmem:[%s525 + $0x470] sm:$0xff]
        %v1058 = vld [vmem:[%s525 + $0x478] sm:$0xff]
        %v1059 = vld [vmem:[%s525 + $0x480] sm:$0xff]
        %v1060 = vld [vmem:[%s525 + $0x488] sm:$0xff]
        %v1061 = vld [vmem:[%s525 + $0x490] sm:$0xff]
        %v1062 = vld [vmem:[%s525 + $0x498] sm:$0xff]
        %v1063 = vld [vmem:[%s525 + $0x4a0] sm:$0xff]
        %v1064 = vld [vmem:[%s525 + $0x4a8] sm:$0xff]
        %v1065 = vld [vmem:[%s525 + $0x4b0] sm:$0xff]
        %v1066 = vld [vmem:[%s525 + $0x4b8] sm:$0xff]
        %v1067 = vld [vmem:[%s525 + $0x4c0] sm:$0xff]
        %v1068 = vld [vmem:[%s525 + $0x4c8] sm:$0xff]
        %v1069 = vld [vmem:[%s525 + $0x4d0] sm:$0xff]
        %v1070 = vld [vmem:[%s525 + $0x4d8] sm:$0xff]
        %v1071 = vld [vmem:[%s525 + $0x4e0] sm:$0xff]
        %v1072 = vld [vmem:[%s525 + $0x4e8] sm:$0xff]
        %v1073 = vld [vmem:[%s525 + $0x4f0] sm:$0xff]
        %v1074 = vld [vmem:[%s525 + $0x4f8] sm:$0xff]
        %v1075 = vld [vmem:[%s525 + $0x500] sm:$0xff]
        %v1076 = vld [vmem:[%s525 + $0x508] sm:$0xff]
        %v1077 = vld [vmem:[%s525 + $0x510] sm:$0xff]
        %v1078 = vld [vmem:[%s525 + $0x518] sm:$0xff]
        %v1079 = vld [vmem:[%s525 + $0x520] sm:$0xff]
        %v1080 = vld [vmem:[%s525 + $0x528] sm:$0xff]
        %v1081 = vld [vmem:[%s525 + $0x530] sm:$0xff]
        %v1082 = vld [vmem:[%s525 + $0x538] sm:$0xff]
        %v1083 = vld [vmem:[%s525 + $0x540] sm:$0xff]
        %v1084 = vld [vmem:[%s525 + $0x548] sm:$0xff]
        %v1085 = vld [vmem:[%s525 + $0x550] sm:$0xff]
        %v1086 = vld [vmem:[%s525 + $0x558] sm:$0xff]
        %v1087 = vld [vmem:[%s525 + $0x560] sm:$0xff]
        %v1088 = vld [vmem:[%s525 + $0x568] sm:$0xff]
        %v1089 = vld [vmem:[%s525 + $0x570] sm:$0xff]
        %v1090 = vld [vmem:[%s525 + $0x578] sm:$0xff]
        %v1091 = vld [vmem:[%s525 + $0x580] sm:$0xff]
        %v1092 = vld [vmem:[%s525 + $0x588] sm:$0xff]
        %v1093 = vld [vmem:[%s525 + $0x590] sm:$0xff]
        %v1094 = vld [vmem:[%s525 + $0x598] sm:$0xff]
        %v1095 = vld [vmem:[%s525 + $0x5a0] sm:$0xff]
        %v1096 = vld [vmem:[%s525 + $0x5a8] sm:$0xff]
        %v1097 = vld [vmem:[%s525 + $0x5b0] sm:$0xff]
        %v1098 = vld [vmem:[%s525 + $0x5b8] sm:$0xff]
        %v1099 = vld [vmem:[%s525 + $0x5c0] sm:$0xff]
        %v1100 = vld [vmem:[%s525 + $0x5c8] sm:$0xff]
        %v1101 = vld [vmem:[%s525 + $0x5d0] sm:$0xff]
        %v1102 = vld [vmem:[%s525 + $0x5d8] sm:$0xff]
        %v1103 = vld [vmem:[%s525 + $0x5e0] sm:$0xff]
        %v1104 = vld [vmem:[%s525 + $0x5e8] sm:$0xff]
        %v1105 = vld [vmem:[%s525 + $0x5f0] sm:$0xff]
        %v1106 = vld [vmem:[%s525 + $0x5f8] sm:$0xff]
        %v1107 = vld [vmem:[%s525 + $0x600] sm:$0xff]
        %v1108 = vld [vmem:[%s525 + $0x608] sm:$0xff]
        %v1109 = vld [vmem:[%s525 + $0x610] sm:$0xff]
        %v1110 = vld [vmem:[%s525 + $0x618] sm:$0xff]
        %v1111 = vld [vmem:[%s525 + $0x620] sm:$0xff]
        %v1112 = vld [vmem:[%s525 + $0x628] sm:$0xff]
        %v1113 = vld [vmem:[%s525 + $0x630] sm:$0xff]
        %v1114 = vld [vmem:[%s525 + $0x638] sm:$0xff]
        %v1115 = vld [vmem:[%s525 + $0x640] sm:$0xff]
        %v1116 = vld [vmem:[%s525 + $0x648] sm:$0xff]
        %v1117 = vld [vmem:[%s525 + $0x650] sm:$0xff]
        %v1118 = vld [vmem:[%s525 + $0x658] sm:$0xff]
        %v1119 = vld [vmem:[%s525 + $0x660] sm:$0xff]
        %v1120 = vld [vmem:[%s525 + $0x668] sm:$0xff]
        %v1121 = vld [vmem:[%s525 + $0x670] sm:$0xff]
        %v1122 = vld [vmem:[%s525 + $0x678] sm:$0xff]
        %v1123 = vld [vmem:[%s525 + $0x680] sm:$0xff]
        %v1124 = vld [vmem:[%s525 + $0x688] sm:$0xff]
        %v1125 = vld [vmem:[%s525 + $0x690] sm:$0xff]
        %v1126 = vld [vmem:[%s525 + $0x698] sm:$0xff]
        %v1127 = vld [vmem:[%s525 + $0x6a0] sm:$0xff]
        %v1128 = vld [vmem:[%s525 + $0x6a8] sm:$0xff]
        %v1129 = vld [vmem:[%s525 + $0x6b0] sm:$0xff]
        %v1130 = vld [vmem:[%s525 + $0x6b8] sm:$0xff]
        %v1131 = vld [vmem:[%s525 + $0x6c0] sm:$0xff]
        %v1132 = vld [vmem:[%s525 + $0x6c8] sm:$0xff]
        %v1133 = vld [vmem:[%s525 + $0x6d0] sm:$0xff]
        %v1134 = vld [vmem:[%s525 + $0x6d8] sm:$0xff]
        %v1135 = vld [vmem:[%s525 + $0x6e0] sm:$0xff]
        %v1136 = vld [vmem:[%s525 + $0x6e8] sm:$0xff]
        %v1137 = vld [vmem:[%s525 + $0x6f0] sm:$0xff]
        %v1138 = vld [vmem:[%s525 + $0x6f8] sm:$0xff]
        %v1139 = vld [vmem:[%s525 + $0x700] sm:$0xff]
        %v1140 = vld [vmem:[%s525 + $0x708] sm:$0xff]
        %v1141 = vld [vmem:[%s525 + $0x710] sm:$0xff]
        %v1142 = vld [vmem:[%s525 + $0x718] sm:$0xff]
        %v1143 = vld [vmem:[%s525 + $0x720] sm:$0xff]
        %v1144 = vld [vmem:[%s525 + $0x728] sm:$0xff]
        %v1145 = vld [vmem:[%s525 + $0x730] sm:$0xff]
        %v1146 = vld [vmem:[%s525 + $0x738] sm:$0xff]
        %v1147 = vld [vmem:[%s525 + $0x740] sm:$0xff]
        %v1148 = vld [vmem:[%s525 + $0x748] sm:$0xff]
        %v1149 = vld [vmem:[%s525 + $0x750] sm:$0xff]
        %v1150 = vld [vmem:[%s525 + $0x758] sm:$0xff]
        %v1151 = vld [vmem:[%s525 + $0x760] sm:$0xff]
        %v1152 = vld [vmem:[%s525 + $0x768] sm:$0xff]
        %v1153 = vld [vmem:[%s525 + $0x770] sm:$0xff]
        %v1154 = vld [vmem:[%s525 + $0x778] sm:$0xff]
        %v1155 = vld [vmem:[%s525 + $0x780] sm:$0xff]
        %v1156 = vld [vmem:[%s525 + $0x788] sm:$0xff]
        %v1157 = vld [vmem:[%s525 + $0x790] sm:$0xff]
        %v1158 = vld [vmem:[%s525 + $0x798] sm:$0xff]
        %v1159 = vld [vmem:[%s525 + $0x7a0] sm:$0xff]
        %v1160 = vld [vmem:[%s525 + $0x7a8] sm:$0xff]
        %v1161 = vld [vmem:[%s525 + $0x7b0] sm:$0xff]
        %v1162 = vld [vmem:[%s525 + $0x7b8] sm:$0xff]
        %v1163 = vld [vmem:[%s525 + $0x7c0] sm:$0xff]
        %v1164 = vld [vmem:[%s525 + $0x7c8] sm:$0xff]
        %v1165 = vld [vmem:[%s525 + $0x7d0] sm:$0xff]
        %v1166 = vld [vmem:[%s525 + $0x7d8] sm:$0xff]
        %v1167 = vld [vmem:[%s525 + $0x7e0] sm:$0xff]
        %v1168 = vld [vmem:[%s525 + $0x7e8] sm:$0xff]
        %v1169 = vld [vmem:[%s525 + $0x7f0] sm:$0xff]
        %v1170 = vld [vmem:[%s525 + $0x7f8] sm:$0xff]
        %v1171 = vld [vmem:[%s525 + $0x800] sm:$0xff]
        %v1172 = vld [vmem:[%s525 + $0x808] sm:$0xff]
        %v1173 = vld [vmem:[%s525 + $0x810] sm:$0xff]
        %v1174 = vld [vmem:[%s525 + $0x818] sm:$0xff]
        %v1175 = vld [vmem:[%s525 + $0x820] sm:$0xff]
        %v1176 = vld [vmem:[%s525 + $0x828] sm:$0xff]
        %v1177 = vld [vmem:[%s525 + $0x830] sm:$0xff]
        %v1178 = vld [vmem:[%s525 + $0x838] sm:$0xff]
        %v1179 = vld [vmem:[%s525 + $0x840] sm:$0xff]
        %v1180 = vld [vmem:[%s525 + $0x848] sm:$0xff]
        %v1181 = vld [vmem:[%s525 + $0x850] sm:$0xff]
        %v1182 = vld [vmem:[%s525 + $0x858] sm:$0xff]
        %v1183 = vld [vmem:[%s525 + $0x860] sm:$0xff]
        %v1184 = vld [vmem:[%s525 + $0x868] sm:$0xff]
        %v1185 = vld [vmem:[%s525 + $0x870] sm:$0xff]
        %v1186 = vld [vmem:[%s525 + $0x878] sm:$0xff]
        %v1187 = vld [vmem:[%s525 + $0x880] sm:$0xff]
        %v1188 = vld [vmem:[%s525 + $0x888] sm:$0xff]
        %v1189 = vld [vmem:[%s525 + $0x890] sm:$0xff]
        %v1190 = vld [vmem:[%s525 + $0x898] sm:$0xff]
        %v1191 = vld [vmem:[%s525 + $0x8a0] sm:$0xff]
        %v1192 = vld [vmem:[%s525 + $0x8a8] sm:$0xff]
        %v1193 = vld [vmem:[%s525 + $0x8b0] sm:$0xff]
        %v1194 = vld [vmem:[%s525 + $0x8b8] sm:$0xff]
        %v1195 = vld [vmem:[%s525 + $0x8c0] sm:$0xff]
        %v1196 = vld [vmem:[%s525 + $0x8c8] sm:$0xff]
        %v1197 = vld [vmem:[%s525 + $0x8d0] sm:$0xff]
        %v1198 = vld [vmem:[%s525 + $0x8d8] sm:$0xff]
        %v1199 = vld [vmem:[%s525 + $0x8e0] sm:$0xff]
        %v1200 = vld [vmem:[%s525 + $0x8e8] sm:$0xff]
        %v1201 = vld [vmem:[%s525 + $0x8f0] sm:$0xff]
        %v1202 = vld [vmem:[%s525 + $0x8f8] sm:$0xff]
        %v1203 = vld [vmem:[%s525 + $0x900] sm:$0xff]
        %v1204 = vld [vmem:[%s525 + $0x908] sm:$0xff]
        %v1205 = vld [vmem:[%s525 + $0x910] sm:$0xff]
        %v1206 = vld [vmem:[%s525 + $0x918] sm:$0xff]
        %v1207 = vld [vmem:[%s525 + $0x920] sm:$0xff]
        %v1208 = vld [vmem:[%s525 + $0x928] sm:$0xff]
        %v1209 = vld [vmem:[%s525 + $0x930] sm:$0xff]
        %v1210 = vld [vmem:[%s525 + $0x938] sm:$0xff]
        %v1211 = vld [vmem:[%s525 + $0x940] sm:$0xff]
        %v1212 = vld [vmem:[%s525 + $0x948] sm:$0xff]
        %v1213 = vld [vmem:[%s525 + $0x950] sm:$0xff]
        %v1214 = vld [vmem:[%s525 + $0x958] sm:$0xff]
        %v1215 = vld [vmem:[%s525 + $0x960] sm:$0xff]
        %v1216 = vld [vmem:[%s525 + $0x968] sm:$0xff]
        %v1217 = vld [vmem:[%s525 + $0x970] sm:$0xff]
        %v1218 = vld [vmem:[%s525 + $0x978] sm:$0xff]
        %v1219 = vld [vmem:[%s525 + $0x980] sm:$0xff]
        %v1220 = vld [vmem:[%s525 + $0x988] sm:$0xff]
        %v1221 = vld [vmem:[%s525 + $0x990] sm:$0xff]
        %v1222 = vld [vmem:[%s525 + $0x998] sm:$0xff]
        %v1223 = vld [vmem:[%s525 + $0x9a0] sm:$0xff]
        %v1224 = vld [vmem:[%s525 + $0x9a8] sm:$0xff]
        %v1225 = vld [vmem:[%s525 + $0x9b0] sm:$0xff]
        %v1226 = vld [vmem:[%s525 + $0x9b8] sm:$0xff]
        %v1227 = vld [vmem:[%s525 + $0x9c0] sm:$0xff]
        %v1228 = vld [vmem:[%s525 + $0x9c8] sm:$0xff]
        %v1229 = vld [vmem:[%s525 + $0x9d0] sm:$0xff]
        %v1230 = vld [vmem:[%s525 + $0x9d8] sm:$0xff]
        %v1231 = vld [vmem:[%s525 + $0x9e0] sm:$0xff]
        %v1232 = vld [vmem:[%s525 + $0x9e8] sm:$0xff]
        %v1233 = vld [vmem:[%s525 + $0x9f0] sm:$0xff]
        %v1234 = vld [vmem:[%s525 + $0x9f8] sm:$0xff]
        %v1235 = vld [vmem:[%s534] sm:$0xff]
        %v1236 = vld [vmem:[%s534 + $0x8] sm:$0xff]
        %v1237 = vld [vmem:[%s534 + $0x10] sm:$0xff]
        %v1238 = vld [vmem:[%s534 + $0x18] sm:$0xff]
        %v1239 = vld [vmem:[%s534 + $0x20] sm:$0xff]
        %v1240 = vld [vmem:[%s534 + $0x28] sm:$0xff]
        %v1241 = vld [vmem:[%s534 + $0x30] sm:$0xff]
        %v1242 = vld [vmem:[%s534 + $0x38] sm:$0xff]
        %v1243 = vld [vmem:[%s534 + $0x40] sm:$0xff]
        %v1244 = vld [vmem:[%s534 + $0x48] sm:$0xff]
        %v1245 = vld [vmem:[%s534 + $0x50] sm:$0xff]
        %v1246 = vld [vmem:[%s534 + $0x58] sm:$0xff]
        %v1247 = vld [vmem:[%s534 + $0x60] sm:$0xff]
        %v1248 = vld [vmem:[%s534 + $0x68] sm:$0xff]
        %v1249 = vld [vmem:[%s534 + $0x70] sm:$0xff]
        %v1250 = vld [vmem:[%s534 + $0x78] sm:$0xff]
        %v1251 = vld [vmem:[%s534 + $0x80] sm:$0xff]
        %v1252 = vld [vmem:[%s534 + $0x88] sm:$0xff]
        %v1253 = vld [vmem:[%s534 + $0x90] sm:$0xff]
        %v1254 = vld [vmem:[%s534 + $0x98] sm:$0xff]
        %v1255 = vld [vmem:[%s534 + $0xa0] sm:$0xff]
        %v1256 = vld [vmem:[%s534 + $0xa8] sm:$0xff]
        %v1257 = vld [vmem:[%s534 + $0xb0] sm:$0xff]
        %v1258 = vld [vmem:[%s534 + $0xb8] sm:$0xff]
        %v1259 = vld [vmem:[%s534 + $0xc0] sm:$0xff]
        %v1260 = vld [vmem:[%s534 + $0xc8] sm:$0xff]
        %v1261 = vld [vmem:[%s534 + $0xd0] sm:$0xff]
        %v1262 = vld [vmem:[%s534 + $0xd8] sm:$0xff]
        %v1263 = vld [vmem:[%s534 + $0xe0] sm:$0xff]
        %v1264 = vld [vmem:[%s534 + $0xe8] sm:$0xff]
        %v1265 = vld [vmem:[%s534 + $0xf0] sm:$0xff]
        %v1266 = vld [vmem:[%s534 + $0xf8] sm:$0xff]
        %v1267 = vld [vmem:[%s534 + $0x100] sm:$0xff]
        %v1268 = vld [vmem:[%s534 + $0x108] sm:$0xff]
        %v1269 = vld [vmem:[%s534 + $0x110] sm:$0xff]
        %v1270 = vld [vmem:[%s534 + $0x118] sm:$0xff]
        %v1271 = vld [vmem:[%s534 + $0x120] sm:$0xff]
        %v1272 = vld [vmem:[%s534 + $0x128] sm:$0xff]
        %v1273 = vld [vmem:[%s534 + $0x130] sm:$0xff]
        %v1274 = vld [vmem:[%s534 + $0x138] sm:$0xff]
        %v1275 = vld [vmem:[%s534 + $0x140] sm:$0xff]
        %v1276 = vld [vmem:[%s534 + $0x148] sm:$0xff]
        %v1277 = vld [vmem:[%s534 + $0x150] sm:$0xff]
        %v1278 = vld [vmem:[%s534 + $0x158] sm:$0xff]
        %v1279 = vld [vmem:[%s534 + $0x160] sm:$0xff]
        %v1280 = vld [vmem:[%s534 + $0x168] sm:$0xff]
        %v1281 = vld [vmem:[%s534 + $0x170] sm:$0xff]
        %v1282 = vld [vmem:[%s534 + $0x178] sm:$0xff]
        %v1283 = vld [vmem:[%s534 + $0x180] sm:$0xff]
        %v1284 = vld [vmem:[%s534 + $0x188] sm:$0xff]
        %v1285 = vld [vmem:[%s534 + $0x190] sm:$0xff]
        %v1286 = vld [vmem:[%s534 + $0x198] sm:$0xff]
        %v1287 = vld [vmem:[%s534 + $0x1a0] sm:$0xff]
        %v1288 = vld [vmem:[%s534 + $0x1a8] sm:$0xff]
        %v1289 = vld [vmem:[%s534 + $0x1b0] sm:$0xff]
        %v1290 = vld [vmem:[%s534 + $0x1b8] sm:$0xff]
        %v1291 = vld [vmem:[%s534 + $0x1c0] sm:$0xff]
        %v1292 = vld [vmem:[%s534 + $0x1c8] sm:$0xff]
        %v1293 = vld [vmem:[%s534 + $0x1d0] sm:$0xff]
        %v1294 = vld [vmem:[%s534 + $0x1d8] sm:$0xff]
        %v1295 = vld [vmem:[%s534 + $0x1e0] sm:$0xff]
        %v1296 = vld [vmem:[%s534 + $0x1e8] sm:$0xff]
        %v1297 = vld [vmem:[%s534 + $0x1f0] sm:$0xff]
        %v1298 = vld [vmem:[%s534 + $0x1f8] sm:$0xff]
        %v1299 = vld [vmem:[%s534 + $0x200] sm:$0xff]
        %v1300 = vld [vmem:[%s534 + $0x208] sm:$0xff]
        %v1301 = vld [vmem:[%s534 + $0x210] sm:$0xff]
        %v1302 = vld [vmem:[%s534 + $0x218] sm:$0xff]
        %v1303 = vld [vmem:[%s534 + $0x220] sm:$0xff]
        %v1304 = vld [vmem:[%s534 + $0x228] sm:$0xff]
        %v1305 = vld [vmem:[%s534 + $0x230] sm:$0xff]
        %v1306 = vld [vmem:[%s534 + $0x238] sm:$0xff]
        %v1307 = vld [vmem:[%s534 + $0x240] sm:$0xff]
        %v1308 = vld [vmem:[%s534 + $0x248] sm:$0xff]
        %v1309 = vld [vmem:[%s534 + $0x250] sm:$0xff]
        %v1310 = vld [vmem:[%s534 + $0x258] sm:$0xff]
        %v1311 = vld [vmem:[%s534 + $0x260] sm:$0xff]
        %v1312 = vld [vmem:[%s534 + $0x268] sm:$0xff]
        %v1313 = vld [vmem:[%s534 + $0x270] sm:$0xff]
        %v1314 = vld [vmem:[%s534 + $0x278] sm:$0xff]
        %v1315 = vld [vmem:[%s534 + $0x280] sm:$0xff]
        %v1316 = vld [vmem:[%s534 + $0x288] sm:$0xff]
        %v1317 = vld [vmem:[%s534 + $0x290] sm:$0xff]
        %v1318 = vld [vmem:[%s534 + $0x298] sm:$0xff]
        %v1319 = vld [vmem:[%s534 + $0x2a0] sm:$0xff]
        %v1320 = vld [vmem:[%s534 + $0x2a8] sm:$0xff]
        %v1321 = vld [vmem:[%s534 + $0x2b0] sm:$0xff]
        %v1322 = vld [vmem:[%s534 + $0x2b8] sm:$0xff]
        %v1323 = vld [vmem:[%s534 + $0x2c0] sm:$0xff]
        %v1324 = vld [vmem:[%s534 + $0x2c8] sm:$0xff]
        %v1325 = vld [vmem:[%s534 + $0x2d0] sm:$0xff]
        %v1326 = vld [vmem:[%s534 + $0x2d8] sm:$0xff]
        %v1327 = vld [vmem:[%s534 + $0x2e0] sm:$0xff]
        %v1328 = vld [vmem:[%s534 + $0x2e8] sm:$0xff]
        %v1329 = vld [vmem:[%s534 + $0x2f0] sm:$0xff]
        %v1330 = vld [vmem:[%s534 + $0x2f8] sm:$0xff]
        %v1331 = vld [vmem:[%s534 + $0x300] sm:$0xff]
        %v1332 = vld [vmem:[%s534 + $0x308] sm:$0xff]
        %v1333 = vld [vmem:[%s534 + $0x310] sm:$0xff]
        %v1334 = vld [vmem:[%s534 + $0x318] sm:$0xff]
        %v1335 = vld [vmem:[%s534 + $0x320] sm:$0xff]
        %v1336 = vld [vmem:[%s534 + $0x328] sm:$0xff]
        %v1337 = vld [vmem:[%s534 + $0x330] sm:$0xff]
        %v1338 = vld [vmem:[%s534 + $0x338] sm:$0xff]
        %v1339 = vld [vmem:[%s534 + $0x340] sm:$0xff]
        %v1340 = vld [vmem:[%s534 + $0x348] sm:$0xff]
        %v1341 = vld [vmem:[%s534 + $0x350] sm:$0xff]
        %v1342 = vld [vmem:[%s534 + $0x358] sm:$0xff]
        %v1343 = vld [vmem:[%s534 + $0x360] sm:$0xff]
        %v1344 = vld [vmem:[%s534 + $0x368] sm:$0xff]
        %v1345 = vld [vmem:[%s534 + $0x370] sm:$0xff]
        %v1346 = vld [vmem:[%s534 + $0x378] sm:$0xff]
        %v1347 = vld [vmem:[%s534 + $0x380] sm:$0xff]
        %v1348 = vld [vmem:[%s534 + $0x388] sm:$0xff]
        %v1349 = vld [vmem:[%s534 + $0x390] sm:$0xff]
        %v1350 = vld [vmem:[%s534 + $0x398] sm:$0xff]
        %v1351 = vld [vmem:[%s534 + $0x3a0] sm:$0xff]
        %v1352 = vld [vmem:[%s534 + $0x3a8] sm:$0xff]
        %v1353 = vld [vmem:[%s534 + $0x3b0] sm:$0xff]
        %v1354 = vld [vmem:[%s534 + $0x3b8] sm:$0xff]
        %v1355 = vld [vmem:[%s534 + $0x3c0] sm:$0xff]
        %v1356 = vld [vmem:[%s534 + $0x3c8] sm:$0xff]
        %v1357 = vld [vmem:[%s534 + $0x3d0] sm:$0xff]
        %v1358 = vld [vmem:[%s534 + $0x3d8] sm:$0xff]
        %v1359 = vld [vmem:[%s534 + $0x3e0] sm:$0xff]
        %v1360 = vld [vmem:[%s534 + $0x3e8] sm:$0xff]
        %v1361 = vld [vmem:[%s534 + $0x3f0] sm:$0xff]
        %v1362 = vld [vmem:[%s534 + $0x3f8] sm:$0xff]
        %v1363 = vld [vmem:[%s534 + $0x400] sm:$0xff]
        %v1364 = vld [vmem:[%s534 + $0x408] sm:$0xff]
        %v1365 = vld [vmem:[%s534 + $0x410] sm:$0xff]
        %v1366 = vld [vmem:[%s534 + $0x418] sm:$0xff]
        %v1367 = vld [vmem:[%s534 + $0x420] sm:$0xff]
        %v1368 = vld [vmem:[%s534 + $0x428] sm:$0xff]
        %v1369 = vld [vmem:[%s534 + $0x430] sm:$0xff]
        %v1370 = vld [vmem:[%s534 + $0x438] sm:$0xff]
        %v1371 = vld [vmem:[%s534 + $0x440] sm:$0xff]
        %v1372 = vld [vmem:[%s534 + $0x448] sm:$0xff]
        %v1373 = vld [vmem:[%s534 + $0x450] sm:$0xff]
        %v1374 = vld [vmem:[%s534 + $0x458] sm:$0xff]
        %v1375 = vld [vmem:[%s534 + $0x460] sm:$0xff]
        %v1376 = vld [vmem:[%s534 + $0x468] sm:$0xff]
        %v1377 = vld [vmem:[%s534 + $0x470] sm:$0xff]
        %v1378 = vld [vmem:[%s534 + $0x478] sm:$0xff]
        %v1379 = vld [vmem:[%s534 + $0x480] sm:$0xff]
        %v1380 = vld [vmem:[%s534 + $0x488] sm:$0xff]
        %v1381 = vld [vmem:[%s534 + $0x490] sm:$0xff]
        %v1382 = vld [vmem:[%s534 + $0x498] sm:$0xff]
        %v1383 = vld [vmem:[%s534 + $0x4a0] sm:$0xff]
        %v1384 = vld [vmem:[%s534 + $0x4a8] sm:$0xff]
        %v1385 = vld [vmem:[%s534 + $0x4b0] sm:$0xff]
        %v1386 = vld [vmem:[%s534 + $0x4b8] sm:$0xff]
        %v1387 = vld [vmem:[%s534 + $0x4c0] sm:$0xff]
        %v1388 = vld [vmem:[%s534 + $0x4c8] sm:$0xff]
        %v1389 = vld [vmem:[%s534 + $0x4d0] sm:$0xff]
        %v1390 = vld [vmem:[%s534 + $0x4d8] sm:$0xff]
        %v1391 = vld [vmem:[%s534 + $0x4e0] sm:$0xff]
        %v1392 = vld [vmem:[%s534 + $0x4e8] sm:$0xff]
        %v1393 = vld [vmem:[%s534 + $0x4f0] sm:$0xff]
        %v1394 = vld [vmem:[%s534 + $0x4f8] sm:$0xff]
        %v1395 = vld [vmem:[%s543] sm:$0x3]
        %v1396 = vld [vmem:[%s552] sm:$0xf]
        %v1397 = vld [vmem:[#allocation2] sm:$0xff]
        %v1398 = vld [vmem:[#allocation2 + $0x8] sm:$0xff]
        %v1399 = vld [vmem:[#allocation2 + $0x10] sm:$0xff]
        %v1400 = vld [vmem:[#allocation2 + $0x18] sm:$0xff]
        %v1401 = vld [vmem:[#allocation2 + $0x20] sm:$0xff]
        %v1402 = vld [vmem:[#allocation2 + $0x28] sm:$0xff]
        %v1403 = vld [vmem:[#allocation2 + $0x30] sm:$0xff]
        %v1404 = vld [vmem:[#allocation2 + $0x38] sm:$0xff]
        %v1405 = vld [vmem:[#allocation2 + $0x40] sm:$0xff]
        %v1406 = vld [vmem:[#allocation2 + $0x48] sm:$0xff]
        %v1407 = vld [vmem:[#allocation2 + $0x50] sm:$0x7]
        %v1408 = vld [vmem:[#allocation2 + $0x58] sm:$0x7]
        %v1409 = vld [vmem:[#allocation2 + $0x60] sm:$0x7]
        %v1410 = vld [vmem:[#allocation2 + $0x68] sm:$0x7]
        %v1411 = vld [vmem:[#allocation2 + $0x70] sm:$0x7]
        %v1412 = vld [vmem:[#allocation2 + $0x78] sm:$0x7]
        %v1413 = vld [vmem:[#allocation2 + $0x80] sm:$0x7]
        %v1414 = vld [vmem:[#allocation2 + $0x88] sm:$0x7]
        %v1415 = vld [vmem:[#allocation2 + $0x90] sm:$0x7]
        %v1416 = vld [vmem:[#allocation2 + $0x98] sm:$0x7]
        %v1417 = vld [vmem:[#allocation4] sm:$0xff]
        %v1418 = vld [vmem:[#allocation4 + $0x8] sm:$0xff]
        %v1419 = vld [vmem:[#allocation4 + $0x10] sm:$0xff]
        %v1420 = vld [vmem:[#allocation4 + $0x18] sm:$0xff]
        %v1421 = vld [vmem:[#allocation4 + $0x20] sm:$0xff]
        %v1422 = vld [vmem:[#allocation4 + $0x28] sm:$0xff]
        %v1423 = vld [vmem:[#allocation4 + $0x30] sm:$0xff]
        %v1424 = vld [vmem:[#allocation4 + $0x38] sm:$0xff]
        %v1425 = vld [vmem:[#allocation4 + $0x40] sm:$0xff]
        %v1426 = vld [vmem:[#allocation4 + $0x48] sm:$0xff]
        %v1427 = vld [vmem:[#allocation4 + $0x50] sm:$0xff]
        %v1428 = vld [vmem:[#allocation4 + $0x58] sm:$0xff]
        %v1429 = vld [vmem:[#allocation4 + $0x60] sm:$0xff]
        %v1430 = vld [vmem:[#allocation4 + $0x68] sm:$0xff]
        %v1431 = vld [vmem:[#allocation4 + $0x70] sm:$0xff]
        %v1432 = vld [vmem:[#allocation4 + $0x78] sm:$0xff]
        %v1433 = vld [vmem:[#allocation4 + $0x80] sm:$0xff]
        %v1434 = vld [vmem:[#allocation4 + $0x88] sm:$0xff]
        %v1435 = vld [vmem:[#allocation4 + $0x90] sm:$0xff]
        %v1436 = vld [vmem:[#allocation4 + $0x98] sm:$0xff]
        %v1438 = vlaneseq
        %v1439 = vshrl.u32 %v1438, 7
        %v1440 = vsub.s32 0, %v1439
        %v1441 = vrot.slane %v1395, %v1440
        %v1442 = vlaneseq
        %v1443 = vshrl.u32 %v1442, 7
        %v1444 = vsub.s32 1, %v1443
        %v1445 = vrot.slane %v1395, %v1444
        %v1608 = vunpack.c.l.b16 %v755
        %v1609 = vunpack.c.h.b16 %v755
        %v1610 = vunpack.c.l.b16 %v756
        %v1611 = vunpack.c.h.b16 %v756
        %v1612 = vunpack.c.l.b16 %v757
        %v1613 = vunpack.c.h.b16 %v757
        %v1614 = vunpack.c.l.b16 %v758
        %v1615 = vunpack.c.h.b16 %v758
        %v1616 = vunpack.c.l.b16 %v759
        %v1617 = vunpack.c.h.b16 %v759
        %v1618 = vunpack.c.l.b16 %v760
        %v1619 = vunpack.c.h.b16 %v760
        %v1620 = vunpack.c.l.b16 %v761
        %v1621 = vunpack.c.h.b16 %v761
        %v1622 = vunpack.c.l.b16 %v762
        %v1623 = vunpack.c.h.b16 %v762
        %v1624 = vunpack.c.l.b16 %v763
        %v1625 = vunpack.c.h.b16 %v763
        %v1626 = vunpack.c.l.b16 %v764
        %v1627 = vunpack.c.h.b16 %v764
        %v1628 = vunpack.c.l.b16 %v765
        %v1629 = vunpack.c.h.b16 %v765
        %v1630 = vunpack.c.l.b16 %v766
        %v1631 = vunpack.c.h.b16 %v766
        %v1632 = vunpack.c.l.b16 %v767
        %v1633 = vunpack.c.h.b16 %v767
        %v1634 = vunpack.c.l.b16 %v768
        %v1635 = vunpack.c.h.b16 %v768
        %v1636 = vunpack.c.l.b16 %v769
        %v1637 = vunpack.c.h.b16 %v769
        %v1638 = vunpack.c.l.b16 %v770
        %v1639 = vunpack.c.h.b16 %v770
        %v1640 = vunpack.c.l.b16 %v771
        %v1641 = vunpack.c.h.b16 %v771
        %v1642 = vunpack.c.l.b16 %v772
        %v1643 = vunpack.c.h.b16 %v772
        %v1644 = vunpack.c.l.b16 %v773
        %v1645 = vunpack.c.h.b16 %v773
        %v1646 = vunpack.c.l.b16 %v774
        %v1647 = vunpack.c.h.b16 %v774
        %v1648 = vunpack.c.l.b16 %v775
        %v1649 = vunpack.c.h.b16 %v775
        %v1650 = vunpack.c.l.b16 %v776
        %v1651 = vunpack.c.h.b16 %v776
        %v1652 = vunpack.c.l.b16 %v777
        %v1653 = vunpack.c.h.b16 %v777
        %v1654 = vunpack.c.l.b16 %v778
        %v1655 = vunpack.c.h.b16 %v778
        %v1656 = vunpack.c.l.b16 %v779
        %v1657 = vunpack.c.h.b16 %v779
        %v1658 = vunpack.c.l.b16 %v780
        %v1659 = vunpack.c.h.b16 %v780
        %v1660 = vunpack.c.l.b16 %v781
        %v1661 = vunpack.c.h.b16 %v781
        %v1662 = vunpack.c.l.b16 %v782
        %v1663 = vunpack.c.h.b16 %v782
        %v1664 = vunpack.c.l.b16 %v783
        %v1665 = vunpack.c.h.b16 %v783
        %v1666 = vunpack.c.l.b16 %v784
        %v1667 = vunpack.c.h.b16 %v784
        %v1668 = vunpack.c.l.b16 %v785
        %v1669 = vunpack.c.h.b16 %v785
        %v1670 = vunpack.c.l.b16 %v786
        %v1671 = vunpack.c.h.b16 %v786
        %v1672 = vunpack.c.l.b16 %v787
        %v1673 = vunpack.c.h.b16 %v787
        %v1674 = vunpack.c.l.b16 %v788
        %v1675 = vunpack.c.h.b16 %v788
        %v1676 = vunpack.c.l.b16 %v789
        %v1677 = vunpack.c.h.b16 %v789
        %v1678 = vunpack.c.l.b16 %v790
        %v1679 = vunpack.c.h.b16 %v790
        %v1680 = vunpack.c.l.b16 %v791
        %v1681 = vunpack.c.h.b16 %v791
        %v1682 = vunpack.c.l.b16 %v792
        %v1683 = vunpack.c.h.b16 %v792
        %v1684 = vunpack.c.l.b16 %v793
        %v1685 = vunpack.c.h.b16 %v793
        %v1686 = vunpack.c.l.b16 %v794
        %v1687 = vunpack.c.h.b16 %v794
        %v1688 = vunpack.c.l.b16 %v795
        %v1689 = vunpack.c.h.b16 %v795
        %v1690 = vunpack.c.l.b16 %v796
        %v1691 = vunpack.c.h.b16 %v796
        %v1692 = vunpack.c.l.b16 %v797
        %v1693 = vunpack.c.h.b16 %v797
        %v1694 = vunpack.c.l.b16 %v798
        %v1695 = vunpack.c.h.b16 %v798
        %v1696 = vunpack.c.l.b16 %v799
        %v1697 = vunpack.c.h.b16 %v799
        %v1698 = vunpack.c.l.b16 %v800
        %v1699 = vunpack.c.h.b16 %v800
        %v1700 = vunpack.c.l.b16 %v801
        %v1701 = vunpack.c.h.b16 %v801
        %v1702 = vunpack.c.l.b16 %v802
        %v1703 = vunpack.c.h.b16 %v802
        %v1704 = vunpack.c.l.b16 %v803
        %v1705 = vunpack.c.h.b16 %v803
        %v1706 = vunpack.c.l.b16 %v804
        %v1707 = vunpack.c.h.b16 %v804
        %v1708 = vunpack.c.l.b16 %v805
        %v1709 = vunpack.c.h.b16 %v805
        %v1710 = vunpack.c.l.b16 %v806
        %v1711 = vunpack.c.h.b16 %v806
        %v1712 = vunpack.c.l.b16 %v807
        %v1713 = vunpack.c.h.b16 %v807
        %v1714 = vunpack.c.l.b16 %v808
        %v1715 = vunpack.c.h.b16 %v808
        %v1716 = vunpack.c.l.b16 %v809
        %v1717 = vunpack.c.h.b16 %v809
        %v1718 = vunpack.c.l.b16 %v810
        %v1719 = vunpack.c.h.b16 %v810
        %v1720 = vunpack.c.l.b16 %v811
        %v1721 = vunpack.c.h.b16 %v811
        %v1722 = vunpack.c.l.b16 %v812
        %v1723 = vunpack.c.h.b16 %v812
        %v1724 = vunpack.c.l.b16 %v813
        %v1725 = vunpack.c.h.b16 %v813
        %v1726 = vunpack.c.l.b16 %v814
        %v1727 = vunpack.c.h.b16 %v814
        %v1728 = vunpack.c.l.b16 %v815
        %v1729 = vunpack.c.h.b16 %v815
        %v1730 = vunpack.c.l.b16 %v816
        %v1731 = vunpack.c.h.b16 %v816
        %v1732 = vunpack.c.l.b16 %v817
        %v1733 = vunpack.c.h.b16 %v817
        %v1734 = vunpack.c.l.b16 %v818
        %v1735 = vunpack.c.h.b16 %v818
        %v1736 = vunpack.c.l.b16 %v819
        %v1737 = vunpack.c.h.b16 %v819
        %v1738 = vunpack.c.l.b16 %v820
        %v1739 = vunpack.c.h.b16 %v820
        %v1740 = vunpack.c.l.b16 %v821
        %v1741 = vunpack.c.h.b16 %v821
        %v1742 = vunpack.c.l.b16 %v822
        %v1743 = vunpack.c.h.b16 %v822
        %v1744 = vunpack.c.l.b16 %v823
        %v1745 = vunpack.c.h.b16 %v823
        %v1746 = vunpack.c.l.b16 %v824
        %v1747 = vunpack.c.h.b16 %v824
        %v1748 = vunpack.c.l.b16 %v825
        %v1749 = vunpack.c.h.b16 %v825
        %v1750 = vunpack.c.l.b16 %v826
        %v1751 = vunpack.c.h.b16 %v826
        %v1752 = vunpack.c.l.b16 %v827
        %v1753 = vunpack.c.h.b16 %v827
        %v1754 = vunpack.c.l.b16 %v828
        %v1755 = vunpack.c.h.b16 %v828
        %v1756 = vunpack.c.l.b16 %v829
        %v1757 = vunpack.c.h.b16 %v829
        %v1758 = vunpack.c.l.b16 %v830
        %v1759 = vunpack.c.h.b16 %v830
        %v1760 = vunpack.c.l.b16 %v831
        %v1761 = vunpack.c.h.b16 %v831
        %v1762 = vunpack.c.l.b16 %v832
        %v1763 = vunpack.c.h.b16 %v832
        %v1764 = vunpack.c.l.b16 %v833
        %v1765 = vunpack.c.h.b16 %v833
        %v1766 = vunpack.c.l.b16 %v834
        %v1767 = vunpack.c.h.b16 %v834
        %v1768 = vunpack.c.l.b16 %v835
        %v1769 = vunpack.c.h.b16 %v835
        %v1770 = vunpack.c.l.b16 %v836
        %v1771 = vunpack.c.h.b16 %v836
        %v1772 = vunpack.c.l.b16 %v837
        %v1773 = vunpack.c.h.b16 %v837
        %v1774 = vunpack.c.l.b16 %v838
        %v1775 = vunpack.c.h.b16 %v838
        %v1776 = vunpack.c.l.b16 %v839
        %v1777 = vunpack.c.h.b16 %v839
        %v1778 = vunpack.c.l.b16 %v840
        %v1779 = vunpack.c.h.b16 %v840
        %v1780 = vunpack.c.l.b16 %v841
        %v1781 = vunpack.c.h.b16 %v841
        %v1782 = vunpack.c.l.b16 %v842
        %v1783 = vunpack.c.h.b16 %v842
        %v1784 = vunpack.c.l.b16 %v843
        %v1785 = vunpack.c.h.b16 %v843
        %v1786 = vunpack.c.l.b16 %v844
        %v1787 = vunpack.c.h.b16 %v844
        %v1788 = vunpack.c.l.b16 %v845
        %v1789 = vunpack.c.h.b16 %v845
        %v1790 = vunpack.c.l.b16 %v846
        %v1791 = vunpack.c.h.b16 %v846
        %v1792 = vunpack.c.l.b16 %v847
        %v1793 = vunpack.c.h.b16 %v847
        %v1794 = vunpack.c.l.b16 %v848
        %v1795 = vunpack.c.h.b16 %v848
        %v1796 = vunpack.c.l.b16 %v849
        %v1797 = vunpack.c.h.b16 %v849
        %v1798 = vunpack.c.l.b16 %v850
        %v1799 = vunpack.c.h.b16 %v850
        %v1800 = vunpack.c.l.b16 %v851
        %v1801 = vunpack.c.h.b16 %v851
        %v1802 = vunpack.c.l.b16 %v852
        %v1803 = vunpack.c.h.b16 %v852
        %v1804 = vunpack.c.l.b16 %v853
        %v1805 = vunpack.c.h.b16 %v853
        %v1806 = vunpack.c.l.b16 %v854
        %v1807 = vunpack.c.h.b16 %v854
        %v1808 = vunpack.c.l.b16 %v855
        %v1809 = vunpack.c.h.b16 %v855
        %v1810 = vunpack.c.l.b16 %v856
        %v1811 = vunpack.c.h.b16 %v856
        %v1812 = vunpack.c.l.b16 %v857
        %v1813 = vunpack.c.h.b16 %v857
        %v1814 = vunpack.c.l.b16 %v858
        %v1815 = vunpack.c.h.b16 %v858
        %v1816 = vunpack.c.l.b16 %v859
        %v1817 = vunpack.c.h.b16 %v859
        %v1818 = vunpack.c.l.b16 %v860
        %v1819 = vunpack.c.h.b16 %v860
        %v1820 = vunpack.c.l.b16 %v861
        %v1821 = vunpack.c.h.b16 %v861
        %v1822 = vunpack.c.l.b16 %v862
        %v1823 = vunpack.c.h.b16 %v862
        %v1824 = vunpack.c.l.b16 %v863
        %v1825 = vunpack.c.h.b16 %v863
        %v1826 = vunpack.c.l.b16 %v864
        %v1827 = vunpack.c.h.b16 %v864
        %v1828 = vunpack.c.l.b16 %v865
        %v1829 = vunpack.c.h.b16 %v865
        %v1830 = vunpack.c.l.b16 %v866
        %v1831 = vunpack.c.h.b16 %v866
        %v1832 = vunpack.c.l.b16 %v867
        %v1833 = vunpack.c.h.b16 %v867
        %v1834 = vunpack.c.l.b16 %v868
        %v1835 = vunpack.c.h.b16 %v868
        %v1836 = vunpack.c.l.b16 %v869
        %v1837 = vunpack.c.h.b16 %v869
        %v1838 = vunpack.c.l.b16 %v870
        %v1839 = vunpack.c.h.b16 %v870
        %v1840 = vunpack.c.l.b16 %v871
        %v1841 = vunpack.c.h.b16 %v871
        %v1842 = vunpack.c.l.b16 %v872
        %v1843 = vunpack.c.h.b16 %v872
        %v1844 = vunpack.c.l.b16 %v873
        %v1845 = vunpack.c.h.b16 %v873
        %v1846 = vunpack.c.l.b16 %v874
        %v1847 = vunpack.c.h.b16 %v874
        %v1848 = vunpack.c.l.b16 %v875
        %v1849 = vunpack.c.h.b16 %v875
        %v1850 = vunpack.c.l.b16 %v876
        %v1851 = vunpack.c.h.b16 %v876
        %v1852 = vunpack.c.l.b16 %v877
        %v1853 = vunpack.c.h.b16 %v877
        %v1854 = vunpack.c.l.b16 %v878
        %v1855 = vunpack.c.h.b16 %v878
        %v1856 = vunpack.c.l.b16 %v879
        %v1857 = vunpack.c.h.b16 %v879
        %v1858 = vunpack.c.l.b16 %v880
        %v1859 = vunpack.c.h.b16 %v880
        %v1860 = vunpack.c.l.b16 %v881
        %v1861 = vunpack.c.h.b16 %v881
        %v1862 = vunpack.c.l.b16 %v882
        %v1863 = vunpack.c.h.b16 %v882
        %v1864 = vunpack.c.l.b16 %v883
        %v1865 = vunpack.c.h.b16 %v883
        %v1866 = vunpack.c.l.b16 %v884
        %v1867 = vunpack.c.h.b16 %v884
        %v1868 = vunpack.c.l.b16 %v885
        %v1869 = vunpack.c.h.b16 %v885
        %v1870 = vunpack.c.l.b16 %v886
        %v1871 = vunpack.c.h.b16 %v886
        %v1872 = vunpack.c.l.b16 %v887
        %v1873 = vunpack.c.h.b16 %v887
        %v1874 = vunpack.c.l.b16 %v888
        %v1875 = vunpack.c.h.b16 %v888
        %v1876 = vunpack.c.l.b16 %v889
        %v1877 = vunpack.c.h.b16 %v889
        %v1878 = vunpack.c.l.b16 %v890
        %v1879 = vunpack.c.h.b16 %v890
        %v1880 = vunpack.c.l.b16 %v891
        %v1881 = vunpack.c.h.b16 %v891
        %v1882 = vunpack.c.l.b16 %v892
        %v1883 = vunpack.c.h.b16 %v892
        %v1884 = vunpack.c.l.b16 %v893
        %v1885 = vunpack.c.h.b16 %v893
        %v1886 = vunpack.c.l.b16 %v894
        %v1887 = vunpack.c.h.b16 %v894
        %v1888 = vunpack.c.l.b16 %v895
        %v1889 = vunpack.c.h.b16 %v895
        %v1890 = vunpack.c.l.b16 %v896
        %v1891 = vunpack.c.h.b16 %v896
        %v1892 = vunpack.c.l.b16 %v897
        %v1893 = vunpack.c.h.b16 %v897
        %v1894 = vunpack.c.l.b16 %v898
        %v1895 = vunpack.c.h.b16 %v898
        %v1896 = vunpack.c.l.b16 %v899
        %v1897 = vunpack.c.h.b16 %v899
        %v1898 = vunpack.c.l.b16 %v900
        %v1899 = vunpack.c.h.b16 %v900
        %v1900 = vunpack.c.l.b16 %v901
        %v1901 = vunpack.c.h.b16 %v901
        %v1902 = vunpack.c.l.b16 %v902
        %v1903 = vunpack.c.h.b16 %v902
        %v1904 = vunpack.c.l.b16 %v903
        %v1905 = vunpack.c.h.b16 %v903
        %v1906 = vunpack.c.l.b16 %v904
        %v1907 = vunpack.c.h.b16 %v904
        %v1908 = vunpack.c.l.b16 %v905
        %v1909 = vunpack.c.h.b16 %v905
        %v1910 = vunpack.c.l.b16 %v906
        %v1911 = vunpack.c.h.b16 %v906
        %v1912 = vunpack.c.l.b16 %v907
        %v1913 = vunpack.c.h.b16 %v907
        %v1914 = vunpack.c.l.b16 %v908
        %v1915 = vunpack.c.h.b16 %v908
        %v1916 = vunpack.c.l.b16 %v909
        %v1917 = vunpack.c.h.b16 %v909
        %v1918 = vunpack.c.l.b16 %v910
        %v1919 = vunpack.c.h.b16 %v910
        %v1920 = vunpack.c.l.b16 %v911
        %v1921 = vunpack.c.h.b16 %v911
        %v1922 = vunpack.c.l.b16 %v912
        %v1923 = vunpack.c.h.b16 %v912
        %v1924 = vunpack.c.l.b16 %v913
        %v1925 = vunpack.c.h.b16 %v913
        %v1926 = vunpack.c.l.b16 %v914
        %v1927 = vunpack.c.h.b16 %v914
        %v1928 = vpack.c.b16 %v1610, %v1608
        %v1929 = vpack.c.b16 %v1611, %v1609
        %v1930 = vpack.c.b16 %v1614, %v1612
        %v1931 = vpack.c.b16 %v1615, %v1613
        %v1932 = vpack.c.b16 %v1618, %v1616
        %v1933 = vpack.c.b16 %v1619, %v1617
        %v1934 = vpack.c.b16 %v1622, %v1620
        %v1935 = vpack.c.b16 %v1623, %v1621
        %v1936 = vpack.c.b16 %v1626, %v1624
        %v1937 = vpack.c.b16 %v1627, %v1625
        %v1938 = vpack.c.b16 %v1630, %v1628
        %v1939 = vpack.c.b16 %v1631, %v1629
        %v1940 = vpack.c.b16 %v1634, %v1632
        %v1941 = vpack.c.b16 %v1635, %v1633
        %v1942 = vpack.c.b16 %v1638, %v1636
        %v1943 = vpack.c.b16 %v1639, %v1637
        %v1944 = vpack.c.b16 %v1642, %v1640
        %v1945 = vpack.c.b16 %v1643, %v1641
        %v1946 = vpack.c.b16 %v1646, %v1644
        %v1947 = vpack.c.b16 %v1647, %v1645
        %v1948 = vpack.c.b16 %v1650, %v1648
        %v1949 = vpack.c.b16 %v1651, %v1649
        %v1950 = vpack.c.b16 %v1654, %v1652
        %v1951 = vpack.c.b16 %v1655, %v1653
        %v1952 = vpack.c.b16 %v1658, %v1656
        %v1953 = vpack.c.b16 %v1659, %v1657
        %v1954 = vpack.c.b16 %v1662, %v1660
        %v1955 = vpack.c.b16 %v1663, %v1661
        %v1956 = vpack.c.b16 %v1666, %v1664
        %v1957 = vpack.c.b16 %v1667, %v1665
        %v1958 = vpack.c.b16 %v1670, %v1668
        %v1959 = vpack.c.b16 %v1671, %v1669
        %v1960 = vpack.c.b16 %v1674, %v1672
        %v1961 = vpack.c.b16 %v1675, %v1673
        %v1962 = vpack.c.b16 %v1678, %v1676
        %v1963 = vpack.c.b16 %v1679, %v1677
        %v1964 = vpack.c.b16 %v1682, %v1680
        %v1965 = vpack.c.b16 %v1683, %v1681
        %v1966 = vpack.c.b16 %v1686, %v1684
        %v1967 = vpack.c.b16 %v1687, %v1685
        %v1968 = vpack.c.b16 %v1690, %v1688
        %v1969 = vpack.c.b16 %v1691, %v1689
        %v1970 = vpack.c.b16 %v1694, %v1692
        %v1971 = vpack.c.b16 %v1695, %v1693
        %v1972 = vpack.c.b16 %v1698, %v1696
        %v1973 = vpack.c.b16 %v1699, %v1697
        %v1974 = vpack.c.b16 %v1702, %v1700
        %v1975 = vpack.c.b16 %v1703, %v1701
        %v1976 = vpack.c.b16 %v1706, %v1704
        %v1977 = vpack.c.b16 %v1707, %v1705
        %v1978 = vpack.c.b16 %v1710, %v1708
        %v1979 = vpack.c.b16 %v1711, %v1709
        %v1980 = vpack.c.b16 %v1714, %v1712
        %v1981 = vpack.c.b16 %v1715, %v1713
        %v1982 = vpack.c.b16 %v1718, %v1716
        %v1983 = vpack.c.b16 %v1719, %v1717
        %v1984 = vpack.c.b16 %v1722, %v1720
        %v1985 = vpack.c.b16 %v1723, %v1721
        %v1986 = vpack.c.b16 %v1726, %v1724
        %v1987 = vpack.c.b16 %v1727, %v1725
        %v1988 = vpack.c.b16 %v1730, %v1728
        %v1989 = vpack.c.b16 %v1731, %v1729
        %v1990 = vpack.c.b16 %v1734, %v1732
        %v1991 = vpack.c.b16 %v1735, %v1733
        %v1992 = vpack.c.b16 %v1738, %v1736
        %v1993 = vpack.c.b16 %v1739, %v1737
        %v1994 = vpack.c.b16 %v1742, %v1740
        %v1995 = vpack.c.b16 %v1743, %v1741
        %v1996 = vpack.c.b16 %v1746, %v1744
        %v1997 = vpack.c.b16 %v1747, %v1745
        %v1998 = vpack.c.b16 %v1750, %v1748
        %v1999 = vpack.c.b16 %v1751, %v1749
        %v2000 = vpack.c.b16 %v1754, %v1752
        %v2001 = vpack.c.b16 %v1755, %v1753
        %v2002 = vpack.c.b16 %v1758, %v1756
        %v2003 = vpack.c.b16 %v1759, %v1757
        %v2004 = vpack.c.b16 %v1762, %v1760
        %v2005 = vpack.c.b16 %v1763, %v1761
        %v2006 = vpack.c.b16 %v1766, %v1764
        %v2007 = vpack.c.b16 %v1767, %v1765
        %v2008 = vpack.c.b16 %v1770, %v1768
        %v2009 = vpack.c.b16 %v1771, %v1769
        %v2010 = vpack.c.b16 %v1774, %v1772
        %v2011 = vpack.c.b16 %v1775, %v1773
        %v2012 = vpack.c.b16 %v1778, %v1776
        %v2013 = vpack.c.b16 %v1779, %v1777
        %v2014 = vpack.c.b16 %v1782, %v1780
        %v2015 = vpack.c.b16 %v1783, %v1781
        %v2016 = vpack.c.b16 %v1786, %v1784
        %v2017 = vpack.c.b16 %v1787, %v1785
        %v2018 = vpack.c.b16 %v1790, %v1788
        %v2019 = vpack.c.b16 %v1791, %v1789
        %v2020 = vpack.c.b16 %v1794, %v1792
        %v2021 = vpack.c.b16 %v1795, %v1793
        %v2022 = vpack.c.b16 %v1798, %v1796
        %v2023 = vpack.c.b16 %v1799, %v1797
        %v2024 = vpack.c.b16 %v1802, %v1800
        %v2025 = vpack.c.b16 %v1803, %v1801
        %v2026 = vpack.c.b16 %v1806, %v1804
        %v2027 = vpack.c.b16 %v1807, %v1805
        %v2028 = vpack.c.b16 %v1810, %v1808
        %v2029 = vpack.c.b16 %v1811, %v1809
        %v2030 = vpack.c.b16 %v1814, %v1812
        %v2031 = vpack.c.b16 %v1815, %v1813
        %v2032 = vpack.c.b16 %v1818, %v1816
        %v2033 = vpack.c.b16 %v1819, %v1817
        %v2034 = vpack.c.b16 %v1822, %v1820
        %v2035 = vpack.c.b16 %v1823, %v1821
        %v2036 = vpack.c.b16 %v1826, %v1824
        %v2037 = vpack.c.b16 %v1827, %v1825
        %v2038 = vpack.c.b16 %v1830, %v1828
        %v2039 = vpack.c.b16 %v1831, %v1829
        %v2040 = vpack.c.b16 %v1834, %v1832
        %v2041 = vpack.c.b16 %v1835, %v1833
        %v2042 = vpack.c.b16 %v1838, %v1836
        %v2043 = vpack.c.b16 %v1839, %v1837
        %v2044 = vpack.c.b16 %v1842, %v1840
        %v2045 = vpack.c.b16 %v1843, %v1841
        %v2046 = vpack.c.b16 %v1846, %v1844
        %v2047 = vpack.c.b16 %v1847, %v1845
        %v2048 = vpack.c.b16 %v1850, %v1848
        %v2049 = vpack.c.b16 %v1851, %v1849
        %v2050 = vpack.c.b16 %v1854, %v1852
        %v2051 = vpack.c.b16 %v1855, %v1853
        %v2052 = vpack.c.b16 %v1858, %v1856
        %v2053 = vpack.c.b16 %v1859, %v1857
        %v2054 = vpack.c.b16 %v1862, %v1860
        %v2055 = vpack.c.b16 %v1863, %v1861
        %v2056 = vpack.c.b16 %v1866, %v1864
        %v2057 = vpack.c.b16 %v1867, %v1865
        %v2058 = vpack.c.b16 %v1870, %v1868
        %v2059 = vpack.c.b16 %v1871, %v1869
        %v2060 = vpack.c.b16 %v1874, %v1872
        %v2061 = vpack.c.b16 %v1875, %v1873
        %v2062 = vpack.c.b16 %v1878, %v1876
        %v2063 = vpack.c.b16 %v1879, %v1877
        %v2064 = vpack.c.b16 %v1882, %v1880
        %v2065 = vpack.c.b16 %v1883, %v1881
        %v2066 = vpack.c.b16 %v1886, %v1884
        %v2067 = vpack.c.b16 %v1887, %v1885
        %v2068 = vpack.c.b16 %v1890, %v1888
        %v2069 = vpack.c.b16 %v1891, %v1889
        %v2070 = vpack.c.b16 %v1894, %v1892
        %v2071 = vpack.c.b16 %v1895, %v1893
        %v2072 = vpack.c.b16 %v1898, %v1896
        %v2073 = vpack.c.b16 %v1899, %v1897
        %v2074 = vpack.c.b16 %v1902, %v1900
        %v2075 = vpack.c.b16 %v1903, %v1901
        %v2076 = vpack.c.b16 %v1906, %v1904
        %v2077 = vpack.c.b16 %v1907, %v1905
        %v2078 = vpack.c.b16 %v1910, %v1908
        %v2079 = vpack.c.b16 %v1911, %v1909
        %v2080 = vpack.c.b16 %v1914, %v1912
        %v2081 = vpack.c.b16 %v1915, %v1913
        %v2082 = vpack.c.b16 %v1918, %v1916
        %v2083 = vpack.c.b16 %v1919, %v1917
        %v2084 = vpack.c.b16 %v1922, %v1920
        %v2085 = vpack.c.b16 %v1923, %v1921
        %v2086 = vpack.c.b16 %v1926, %v1924
        %v2087 = vpack.c.b16 %v1927, %v1925
        %2248 = vmatprep.subr.bf16.mxu0 %v1929
        %2249 = vmatpush1.bf16.msra.mxu0 %v1928
        %2250 = vmatprep.subr.bf16.mxu0 %v1931
        %2251 = vmatpush1.bf16.msra.mxu0 %v1930
        %2252 = vmatprep.subr.bf16.mxu0 %v1933
        %2253 = vmatpush1.bf16.msra.mxu0 %v1932
        %2254 = vmatprep.subr.bf16.mxu0 %v1935
        %2255 = vmatpush1.bf16.msra.mxu0 %v1934
        %2256 = vmatprep.subr.bf16.mxu0 %v1937
        %2257 = vmatpush1.bf16.msra.mxu0 %v1936
        %2258 = vmatprep.subr.bf16.mxu0 %v1939
        %2259 = vmatpush1.bf16.msra.mxu0 %v1938
        %2260 = vmatprep.subr.bf16.mxu0 %v1941
        %2261 = vmatpush1.bf16.msra.mxu0 %v1940
        %2262 = vmatprep.subr.bf16.mxu0 %v1943
        %2263 = vmatpush1.bf16.msra.mxu0 %v1942
        %2264 = vmatprep.subr.bf16.mxu0 %v1945
        %2265 = vmatpush1.bf16.msra.mxu0 %v1944
        %2266 = vmatprep.subr.bf16.mxu0 %v1947
        %2267 = vmatpush1.bf16.msra.mxu0 %v1946
        %2268 = vmatprep.subr.bf16.mxu0 %v1949
        %2269 = vmatpush1.bf16.msra.mxu0 %v1948
        %2270 = vmatprep.subr.bf16.mxu0 %v1951
        %2271 = vmatpush1.bf16.msra.mxu0 %v1950
        %2272 = vmatprep.subr.bf16.mxu0 %v1953
        %2273 = vmatpush1.bf16.msra.mxu0 %v1952
        %2274 = vmatprep.subr.bf16.mxu0 %v1955
        %2275 = vmatpush1.bf16.msra.mxu0 %v1954
        %2276 = vmatprep.subr.bf16.mxu0 %v1957
        %2277 = vmatpush1.bf16.msra.mxu0 %v1956
        %2278 = vmatprep.subr.bf16.mxu0 %v1959
        %2279 = vmatpush1.bf16.msra.mxu0 %v1958
        %2280 = vmatprep.mubr.f32.mxu0 %v1398
        %2281 = vmatmul.mubr.f32.gmra.mrb[0].mxu0 %v1397
        %v2282 = vpop.f32.mrb[0].mxu0
        %v2283 = vadd.f32 %v1441, %v2282
        %v2284 = vpop.f32.mrb[0].mxu0
        %v2285 = vadd.f32 %v1445, %v2284
        %2286 = vmatprep.mubr.f32.mxu0 %v1408
        %2287 = vmatmul.mubr.f32.gmra.mrb[0].mxu0 %v1407
        %v2288 = vpop.f32.mrb[0].mxu0
        %v2289 = vadd.f32 %v1441, %v2288
        %v2290 = vpop.f32.mrb[0].mxu0
        %v2291 = vadd.f32 %v1445, %v2290
        %2292 = vdwg.mxu0
        %2293 = vmatprep.subr.bf16.mxu0 %v1961
        %2294 = vmatpush1.bf16.msra.mxu0 %v1960
        %2295 = vmatprep.subr.bf16.mxu0 %v1963
        %2296 = vmatpush1.bf16.msra.mxu0 %v1962
        %2297 = vmatprep.subr.bf16.mxu0 %v1965
        %2298 = vmatpush1.bf16.msra.mxu0 %v1964
        %2299 = vmatprep.subr.bf16.mxu0 %v1967
        %2300 = vmatpush1.bf16.msra.mxu0 %v1966
        %2301 = vmatprep.subr.bf16.mxu0 %v1969
        %2302 = vmatpush1.bf16.msra.mxu0 %v1968
        %2303 = vmatprep.subr.bf16.mxu0 %v1971
        %2304 = vmatpush1.bf16.msra.mxu0 %v1970
        %2305 = vmatprep.subr.bf16.mxu0 %v1973
        %2306 = vmatpush1.bf16.msra.mxu0 %v1972
        %2307 = vmatprep.subr.bf16.mxu0 %v1975
        %2308 = vmatpush1.bf16.msra.mxu0 %v1974
        %2309 = vmatprep.subr.bf16.mxu0 %v1977
        %2310 = vmatpush1.bf16.msra.mxu0 %v1976
        %2311 = vmatprep.subr.bf16.mxu0 %v1979
        %2312 = vmatpush1.bf16.msra.mxu0 %v1978
        %2313 = vmatprep.subr.bf16.mxu0 %v1981
        %2314 = vmatpush1.bf16.msra.mxu0 %v1980
        %2315 = vmatprep.subr.bf16.mxu0 %v1983
        %2316 = vmatpush1.bf16.msra.mxu0 %v1982
        %2317 = vmatprep.subr.bf16.mxu0 %v1985
        %2318 = vmatpush1.bf16.msra.mxu0 %v1984
        %2319 = vmatprep.subr.bf16.mxu0 %v1987
        %2320 = vmatpush1.bf16.msra.mxu0 %v1986
        %2321 = vmatprep.subr.bf16.mxu0 %v1989
        %2322 = vmatpush1.bf16.msra.mxu0 %v1988
        %2323 = vmatprep.subr.bf16.mxu0 %v1991
        %2324 = vmatpush1.bf16.msra.mxu0 %v1990
        %2325 = vmatprep.mubr.f32.mxu0 %v1400
        %2326 = vmatmul.mubr.f32.gmra.mrb[0].mxu0 %v1399
        %v2327 = vpop.f32.mrb[0].mxu0
        %v2328 = vadd.f32 %v2283, %v2327
        %v2329 = vpop.f32.mrb[0].mxu0
        %v2330 = vadd.f32 %v2285, %v2329
        %2331 = vmatprep.mubr.f32.mxu0 %v1410
        %2332 = vmatmul.mubr.f32.gmra.mrb[0].mxu0 %v1409
        %v2333 = vpop.f32.mrb[0].mxu0
        %v2334 = vadd.f32 %v2289, %v2333
        %v2335 = vpop.f32.mrb[0].mxu0
        %v2336 = vadd.f32 %v2291, %v2335
        %2337 = vdwg.mxu0
        %2338 = vmatprep.subr.bf16.mxu0 %v1993
        %2339 = vmatpush1.bf16.msra.mxu0 %v1992
        %2340 = vmatprep.subr.bf16.mxu0 %v1995
        %2341 = vmatpush1.bf16.msra.mxu0 %v1994
        %2342 = vmatprep.subr.bf16.mxu0 %v1997
        %2343 = vmatpush1.bf16.msra.mxu0 %v1996
        %2344 = vmatprep.subr.bf16.mxu0 %v1999
        %2345 = vmatpush1.bf16.msra.mxu0 %v1998
        %2346 = vmatprep.subr.bf16.mxu0 %v2001
        %2347 = vmatpush1.bf16.msra.mxu0 %v2000
        %2348 = vmatprep.subr.bf16.mxu0 %v2003
        %2349 = vmatpush1.bf16.msra.mxu0 %v2002
        %2350 = vmatprep.subr.bf16.mxu0 %v2005
        %2351 = vmatpush1.bf16.msra.mxu0 %v2004
        %2352 = vmatprep.subr.bf16.mxu0 %v2007
        %2353 = vmatpush1.bf16.msra.mxu0 %v2006
        %2354 = vmatprep.subr.bf16.mxu0 %v2009
        %2355 = vmatpush1.bf16.msra.mxu0 %v2008
        %2356 = vmatprep.subr.bf16.mxu0 %v2011
        %2357 = vmatpush1.bf16.msra.mxu0 %v2010
        %2358 = vmatprep.subr.bf16.mxu0 %v2013
        %2359 = vmatpush1.bf16.msra.mxu0 %v2012
        %2360 = vmatprep.subr.bf16.mxu0 %v2015
        %2361 = vmatpush1.bf16.msra.mxu0 %v2014
        %2362 = vmatprep.subr.bf16.mxu0 %v2017
        %2363 = vmatpush1.bf16.msra.mxu0 %v2016
        %2364 = vmatprep.subr.bf16.mxu0 %v2019
        %2365 = vmatpush1.bf16.msra.mxu0 %v2018
        %2366 = vmatprep.subr.bf16.mxu0 %v2021
        %2367 = vmatpush1.bf16.msra.mxu0 %v2020
        %2368 = vmatprep.subr.bf16.mxu0 %v2023
        %2369 = vmatpush1.bf16.msra.mxu0 %v2022
        %2370 = vmatprep.mubr.f32.mxu0 %v1402
        %2371 = vmatmul.mubr.f32.gmra.mrb[0].mxu0 %v1401
        %v2372 = vpop.f32.mrb[0].mxu0
        %v2373 = vadd.f32 %v2328, %v2372
        %v2374 = vpop.f32.mrb[0].mxu0
        %v2375 = vadd.f32 %v2330, %v2374
        %2376 = vmatprep.mubr.f32.mxu0 %v1412
        %2377 = vmatmul.mubr.f32.gmra.mrb[0].mxu0 %v1411
        %v2378 = vpop.f32.mrb[0].mxu0
        %v2379 = vadd.f32 %v2334, %v2378
        %v2380 = vpop.f32.mrb[0].mxu0
        %v2381 = vadd.f32 %v2336, %v2380
        %2382 = vdwg.mxu0
        %2383 = vmatprep.subr.bf16.mxu0 %v2025
        %2384 = vmatpush1.bf16.msra.mxu0 %v2024
        %2385 = vmatprep.subr.bf16.mxu0 %v2027
        %2386 = vmatpush1.bf16.msra.mxu0 %v2026
        %2387 = vmatprep.subr.bf16.mxu0 %v2029
        %2388 = vmatpush1.bf16.msra.mxu0 %v2028
        %2389 = vmatprep.subr.bf16.mxu0 %v2031
        %2390 = vmatpush1.bf16.msra.mxu0 %v2030
        %2391 = vmatprep.subr.bf16.mxu0 %v2033
        %2392 = vmatpush1.bf16.msra.mxu0 %v2032
        %2393 = vmatprep.subr.bf16.mxu0 %v2035
        %2394 = vmatpush1.bf16.msra.mxu0 %v2034
        %2395 = vmatprep.subr.bf16.mxu0 %v2037
        %2396 = vmatpush1.bf16.msra.mxu0 %v2036
        %2397 = vmatprep.subr.bf16.mxu0 %v2039
        %2398 = vmatpush1.bf16.msra.mxu0 %v2038
        %2399 = vmatprep.subr.bf16.mxu0 %v2041
        %2400 = vmatpush1.bf16.msra.mxu0 %v2040
        %2401 = vmatprep.subr.bf16.mxu0 %v2043
        %2402 = vmatpush1.bf16.msra.mxu0 %v2042
        %2403 = vmatprep.subr.bf16.mxu0 %v2045
        %2404 = vmatpush1.bf16.msra.mxu0 %v2044
        %2405 = vmatprep.subr.bf16.mxu0 %v2047
        %2406 = vmatpush1.bf16.msra.mxu0 %v2046
        %2407 = vmatprep.subr.bf16.mxu0 %v2049
        %2408 = vmatpush1.bf16.msra.mxu0 %v2048
        %2409 = vmatprep.subr.bf16.mxu0 %v2051
        %2410 = vmatpush1.bf16.msra.mxu0 %v2050
        %2411 = vmatprep.subr.bf16.mxu0 %v2053
        %2412 = vmatpush1.bf16.msra.mxu0 %v2052
        %2413 = vmatprep.subr.bf16.mxu0 %v2055
        %2414 = vmatpush1.bf16.msra.mxu0 %v2054
        %2415 = vmatprep.mubr.f32.mxu0 %v1404
        %2416 = vmatmul.mubr.f32.gmra.mrb[0].mxu0 %v1403
        %v2417 = vpop.f32.mrb[0].mxu0
        %v2418 = vadd.f32 %v2373, %v2417
        %v2419 = vpop.f32.mrb[0].mxu0
        %v2420 = vadd.f32 %v2375, %v2419
        %2421 = vmatprep.mubr.f32.mxu0 %v1414
        %2422 = vmatmul.mubr.f32.gmra.mrb[0].mxu0 %v1413
        %v2423 = vpop.f32.mrb[0].mxu0
        %v2424 = vadd.f32 %v2379, %v2423
        %v2425 = vpop.f32.mrb[0].mxu0
        %v2426 = vadd.f32 %v2381, %v2425
        %2427 = vdwg.mxu0
        %2428 = vmatprep.subr.bf16.mxu0 %v2057
        %2429 = vmatpush1.bf16.msra.mxu0 %v2056
        %2430 = vmatprep.subr.bf16.mxu0 %v2059
        %2431 = vmatpush1.bf16.msra.mxu0 %v2058
        %2432 = vmatprep.subr.bf16.mxu0 %v2061
        %2433 = vmatpush1.bf16.msra.mxu0 %v2060
        %2434 = vmatprep.subr.bf16.mxu0 %v2063
        %2435 = vmatpush1.bf16.msra.mxu0 %v2062
        %2436 = vmatprep.subr.bf16.mxu0 %v2065
        %2437 = vmatpush1.bf16.msra.mxu0 %v2064
        %2438 = vmatprep.subr.bf16.mxu0 %v2067
        %2439 = vmatpush1.bf16.msra.mxu0 %v2066
        %2440 = vmatprep.subr.bf16.mxu0 %v2069
        %2441 = vmatpush1.bf16.msra.mxu0 %v2068
        %2442 = vmatprep.subr.bf16.mxu0 %v2071
        %2443 = vmatpush1.bf16.msra.mxu0 %v2070
        %2444 = vmatprep.subr.bf16.mxu0 %v2073
        %2445 = vmatpush1.bf16.msra.mxu0 %v2072
        %2446 = vmatprep.subr.bf16.mxu0 %v2075
        %2447 = vmatpush1.bf16.msra.mxu0 %v2074
        %2448 = vmatprep.subr.bf16.mxu0 %v2077
        %2449 = vmatpush1.bf16.msra.mxu0 %v2076
        %2450 = vmatprep.subr.bf16.mxu0 %v2079
        %2451 = vmatpush1.bf16.msra.mxu0 %v2078
        %2452 = vmatprep.subr.bf16.mxu0 %v2081
        %2453 = vmatpush1.bf16.msra.mxu0 %v2080
        %2454 = vmatprep.subr.bf16.mxu0 %v2083
        %2455 = vmatpush1.bf16.msra.mxu0 %v2082
        %2456 = vmatprep.subr.bf16.mxu0 %v2085
        %2457 = vmatpush1.bf16.msra.mxu0 %v2084
        %2458 = vmatprep.subr.bf16.mxu0 %v2087
        %2459 = vmatpush1.bf16.msra.mxu0 %v2086
        %2460 = vmatprep.mubr.f32.mxu0 %v1406
        %2461 = vmatmul.mubr.f32.gmra.mrb[0].mxu0 %v1405
        %v2462 = vpop.f32.mrb[0].mxu0
        %v2463 = vadd.f32 %v2418, %v2462
        %v2464 = vpop.f32.mrb[0].mxu0
        %v2465 = vadd.f32 %v2420, %v2464
        %2466 = vmatprep.mubr.f32.mxu0 %v1416
        %2467 = vmatmul.mubr.f32.gmra.mrb[0].mxu0 %v1415
        %v2468 = vpop.f32.mrb[0].mxu0
        %v2469 = vadd.f32 %v2424, %v2468
        %v2470 = vpop.f32.mrb[0].mxu0
        %v2471 = vadd.f32 %v2426, %v2470
        %2472 = vdwg.mxu0
        %v2474 = vlaneseq
        %v2475 = vshrl.u32 %v2474, 7
        %v2476 = vsub.s32 0, %v2475
        %v2477 = vrot.slane %v1396, %v2476
        %v2478 = vlaneseq
        %v2479 = vshrl.u32 %v2478, 7
        %v2480 = vsub.s32 1, %v2479
        %v2481 = vrot.slane %v1396, %v2480
        %v2482 = vlaneseq
        %v2483 = vshrl.u32 %v2482, 7
        %v2484 = vsub.s32 2, %v2483
        %v2485 = vrot.slane %v1396, %v2484
        %v2486 = vlaneseq
        %v2487 = vshrl.u32 %v2486, 7
        %v2488 = vsub.s32 3, %v2487
        %v2489 = vrot.slane %v1396, %v2488
        %v2814 = vunpack.c.l.b16 %v915
        %v2815 = vunpack.c.h.b16 %v915
        %v2816 = vunpack.c.l.b16 %v916
        %v2817 = vunpack.c.h.b16 %v916
        %v2818 = vunpack.c.l.b16 %v917
        %v2819 = vunpack.c.h.b16 %v917
        %v2820 = vunpack.c.l.b16 %v918
        %v2821 = vunpack.c.h.b16 %v918
        %v2822 = vunpack.c.l.b16 %v919
        %v2823 = vunpack.c.h.b16 %v919
        %v2824 = vunpack.c.l.b16 %v920
        %v2825 = vunpack.c.h.b16 %v920
        %v2826 = vunpack.c.l.b16 %v921
        %v2827 = vunpack.c.h.b16 %v921
        %v2828 = vunpack.c.l.b16 %v922
        %v2829 = vunpack.c.h.b16 %v922
        %v2830 = vunpack.c.l.b16 %v923
        %v2831 = vunpack.c.h.b16 %v923
        %v2832 = vunpack.c.l.b16 %v924
        %v2833 = vunpack.c.h.b16 %v924
        %v2834 = vunpack.c.l.b16 %v925
        %v2835 = vunpack.c.h.b16 %v925
        %v2836 = vunpack.c.l.b16 %v926
        %v2837 = vunpack.c.h.b16 %v926
        %v2838 = vunpack.c.l.b16 %v927
        %v2839 = vunpack.c.h.b16 %v927
        %v2840 = vunpack.c.l.b16 %v928
        %v2841 = vunpack.c.h.b16 %v928
        %v2842 = vunpack.c.l.b16 %v929
        %v2843 = vunpack.c.h.b16 %v929
        %v2844 = vunpack.c.l.b16 %v930
        %v2845 = vunpack.c.h.b16 %v930
        %v2846 = vunpack.c.l.b16 %v931
        %v2847 = vunpack.c.h.b16 %v931
        %v2848 = vunpack.c.l.b16 %v932
        %v2849 = vunpack.c.h.b16 %v932
        %v2850 = vunpack.c.l.b16 %v933
        %v2851 = vunpack.c.h.b16 %v933
        %v2852 = vunpack.c.l.b16 %v934
        %v2853 = vunpack.c.h.b16 %v934
        %v2854 = vunpack.c.l.b16 %v935
        %v2855 = vunpack.c.h.b16 %v935
        %v2856 = vunpack.c.l.b16 %v936
        %v2857 = vunpack.c.h.b16 %v936
        %v2858 = vunpack.c.l.b16 %v937
        %v2859 = vunpack.c.h.b16 %v937
        %v2860 = vunpack.c.l.b16 %v938
        %v2861 = vunpack.c.h.b16 %v938
        %v2862 = vunpack.c.l.b16 %v939
        %v2863 = vunpack.c.h.b16 %v939
        %v2864 = vunpack.c.l.b16 %v940
        %v2865 = vunpack.c.h.b16 %v940
        %v2866 = vunpack.c.l.b16 %v941
        %v2867 = vunpack.c.h.b16 %v941
        %v2868 = vunpack.c.l.b16 %v942
        %v2869 = vunpack.c.h.b16 %v942
        %v2870 = vunpack.c.l.b16 %v943
        %v2871 = vunpack.c.h.b16 %v943
        %v2872 = vunpack.c.l.b16 %v944
        %v2873 = vunpack.c.h.b16 %v944
        %v2874 = vunpack.c.l.b16 %v945
        %v2875 = vunpack.c.h.b16 %v945
        %v2876 = vunpack.c.l.b16 %v946
        %v2877 = vunpack.c.h.b16 %v946
        %v2878 = vunpack.c.l.b16 %v947
        %v2879 = vunpack.c.h.b16 %v947
        %v2880 = vunpack.c.l.b16 %v948
        %v2881 = vunpack.c.h.b16 %v948
        %v2882 = vunpack.c.l.b16 %v949
        %v2883 = vunpack.c.h.b16 %v949
        %v2884 = vunpack.c.l.b16 %v950
        %v2885 = vunpack.c.h.b16 %v950
        %v2886 = vunpack.c.l.b16 %v951
        %v2887 = vunpack.c.h.b16 %v951
        %v2888 = vunpack.c.l.b16 %v952
        %v2889 = vunpack.c.h.b16 %v952
        %v2890 = vunpack.c.l.b16 %v953
        %v2891 = vunpack.c.h.b16 %v953
        %v2892 = vunpack.c.l.b16 %v954
        %v2893 = vunpack.c.h.b16 %v954
        %v2894 = vunpack.c.l.b16 %v955
        %v2895 = vunpack.c.h.b16 %v955
        %v2896 = vunpack.c.l.b16 %v956
        %v2897 = vunpack.c.h.b16 %v956
        %v2898 = vunpack.c.l.b16 %v957
        %v2899 = vunpack.c.h.b16 %v957
        %v2900 = vunpack.c.l.b16 %v958
        %v2901 = vunpack.c.h.b16 %v958
        %v2902 = vunpack.c.l.b16 %v959
        %v2903 = vunpack.c.h.b16 %v959
        %v2904 = vunpack.c.l.b16 %v960
        %v2905 = vunpack.c.h.b16 %v960
        %v2906 = vunpack.c.l.b16 %v961
        %v2907 = vunpack.c.h.b16 %v961
        %v2908 = vunpack.c.l.b16 %v962
        %v2909 = vunpack.c.h.b16 %v962
        %v2910 = vunpack.c.l.b16 %v963
        %v2911 = vunpack.c.h.b16 %v963
        %v2912 = vunpack.c.l.b16 %v964
        %v2913 = vunpack.c.h.b16 %v964
        %v2914 = vunpack.c.l.b16 %v965
        %v2915 = vunpack.c.h.b16 %v965
        %v2916 = vunpack.c.l.b16 %v966
        %v2917 = vunpack.c.h.b16 %v966
        %v2918 = vunpack.c.l.b16 %v967
        %v2919 = vunpack.c.h.b16 %v967
        %v2920 = vunpack.c.l.b16 %v968
        %v2921 = vunpack.c.h.b16 %v968
        %v2922 = vunpack.c.l.b16 %v969
        %v2923 = vunpack.c.h.b16 %v969
        %v2924 = vunpack.c.l.b16 %v970
        %v2925 = vunpack.c.h.b16 %v970
        %v2926 = vunpack.c.l.b16 %v971
        %v2927 = vunpack.c.h.b16 %v971
        %v2928 = vunpack.c.l.b16 %v972
        %v2929 = vunpack.c.h.b16 %v972
        %v2930 = vunpack.c.l.b16 %v973
        %v2931 = vunpack.c.h.b16 %v973
        %v2932 = vunpack.c.l.b16 %v974
        %v2933 = vunpack.c.h.b16 %v974
        %v2934 = vunpack.c.l.b16 %v975
        %v2935 = vunpack.c.h.b16 %v975
        %v2936 = vunpack.c.l.b16 %v976
        %v2937 = vunpack.c.h.b16 %v976
        %v2938 = vunpack.c.l.b16 %v977
        %v2939 = vunpack.c.h.b16 %v977
        %v2940 = vunpack.c.l.b16 %v978
        %v2941 = vunpack.c.h.b16 %v978
        %v2942 = vunpack.c.l.b16 %v979
        %v2943 = vunpack.c.h.b16 %v979
        %v2944 = vunpack.c.l.b16 %v980
        %v2945 = vunpack.c.h.b16 %v980
        %v2946 = vunpack.c.l.b16 %v981
        %v2947 = vunpack.c.h.b16 %v981
        %v2948 = vunpack.c.l.b16 %v982
        %v2949 = vunpack.c.h.b16 %v982
        %v2950 = vunpack.c.l.b16 %v983
        %v2951 = vunpack.c.h.b16 %v983
        %v2952 = vunpack.c.l.b16 %v984
        %v2953 = vunpack.c.h.b16 %v984
        %v2954 = vunpack.c.l.b16 %v985
        %v2955 = vunpack.c.h.b16 %v985
        %v2956 = vunpack.c.l.b16 %v986
        %v2957 = vunpack.c.h.b16 %v986
        %v2958 = vunpack.c.l.b16 %v987
        %v2959 = vunpack.c.h.b16 %v987
        %v2960 = vunpack.c.l.b16 %v988
        %v2961 = vunpack.c.h.b16 %v988
        %v2962 = vunpack.c.l.b16 %v989
        %v2963 = vunpack.c.h.b16 %v989
        %v2964 = vunpack.c.l.b16 %v990
        %v2965 = vunpack.c.h.b16 %v990
        %v2966 = vunpack.c.l.b16 %v991
        %v2967 = vunpack.c.h.b16 %v991
        %v2968 = vunpack.c.l.b16 %v992
        %v2969 = vunpack.c.h.b16 %v992
        %v2970 = vunpack.c.l.b16 %v993
        %v2971 = vunpack.c.h.b16 %v993
        %v2972 = vunpack.c.l.b16 %v994
        %v2973 = vunpack.c.h.b16 %v994
        %v2974 = vunpack.c.l.b16 %v995
        %v2975 = vunpack.c.h.b16 %v995
        %v2976 = vunpack.c.l.b16 %v996
        %v2977 = vunpack.c.h.b16 %v996
        %v2978 = vunpack.c.l.b16 %v997
        %v2979 = vunpack.c.h.b16 %v997
        %v2980 = vunpack.c.l.b16 %v998
        %v2981 = vunpack.c.h.b16 %v998
        %v2982 = vunpack.c.l.b16 %v999
        %v2983 = vunpack.c.h.b16 %v999
        %v2984 = vunpack.c.l.b16 %v1000
        %v2985 = vunpack.c.h.b16 %v1000
        %v2986 = vunpack.c.l.b16 %v1001
        %v2987 = vunpack.c.h.b16 %v1001
        %v2988 = vunpack.c.l.b16 %v1002
        %v2989 = vunpack.c.h.b16 %v1002
        %v2990 = vunpack.c.l.b16 %v1003
        %v2991 = vunpack.c.h.b16 %v1003
        %v2992 = vunpack.c.l.b16 %v1004
        %v2993 = vunpack.c.h.b16 %v1004
        %v2994 = vunpack.c.l.b16 %v1005
        %v2995 = vunpack.c.h.b16 %v1005
        %v2996 = vunpack.c.l.b16 %v1006
        %v2997 = vunpack.c.h.b16 %v1006
        %v2998 = vunpack.c.l.b16 %v1007
        %v2999 = vunpack.c.h.b16 %v1007
        %v3000 = vunpack.c.l.b16 %v1008
        %v3001 = vunpack.c.h.b16 %v1008
        %v3002 = vunpack.c.l.b16 %v1009
        %v3003 = vunpack.c.h.b16 %v1009
        %v3004 = vunpack.c.l.b16 %v1010
        %v3005 = vunpack.c.h.b16 %v1010
        %v3006 = vunpack.c.l.b16 %v1011
        %v3007 = vunpack.c.h.b16 %v1011
        %v3008 = vunpack.c.l.b16 %v1012
        %v3009 = vunpack.c.h.b16 %v1012
        %v3010 = vunpack.c.l.b16 %v1013
        %v3011 = vunpack.c.h.b16 %v1013
        %v3012 = vunpack.c.l.b16 %v1014
        %v3013 = vunpack.c.h.b16 %v1014
        %v3014 = vunpack.c.l.b16 %v1015
        %v3015 = vunpack.c.h.b16 %v1015
        %v3016 = vunpack.c.l.b16 %v1016
        %v3017 = vunpack.c.h.b16 %v1016
        %v3018 = vunpack.c.l.b16 %v1017
        %v3019 = vunpack.c.h.b16 %v1017
        %v3020 = vunpack.c.l.b16 %v1018
        %v3021 = vunpack.c.h.b16 %v1018
        %v3022 = vunpack.c.l.b16 %v1019
        %v3023 = vunpack.c.h.b16 %v1019
        %v3024 = vunpack.c.l.b16 %v1020
        %v3025 = vunpack.c.h.b16 %v1020
        %v3026 = vunpack.c.l.b16 %v1021
        %v3027 = vunpack.c.h.b16 %v1021
        %v3028 = vunpack.c.l.b16 %v1022
        %v3029 = vunpack.c.h.b16 %v1022
        %v3030 = vunpack.c.l.b16 %v1023
        %v3031 = vunpack.c.h.b16 %v1023
        %v3032 = vunpack.c.l.b16 %v1024
        %v3033 = vunpack.c.h.b16 %v1024
        %v3034 = vunpack.c.l.b16 %v1025
        %v3035 = vunpack.c.h.b16 %v1025
        %v3036 = vunpack.c.l.b16 %v1026
        %v3037 = vunpack.c.h.b16 %v1026
        %v3038 = vunpack.c.l.b16 %v1027
        %v3039 = vunpack.c.h.b16 %v1027
        %v3040 = vunpack.c.l.b16 %v1028
        %v3041 = vunpack.c.h.b16 %v1028
        %v3042 = vunpack.c.l.b16 %v1029
        %v3043 = vunpack.c.h.b16 %v1029
        %v3044 = vunpack.c.l.b16 %v1030
        %v3045 = vunpack.c.h.b16 %v1030
        %v3046 = vunpack.c.l.b16 %v1031
        %v3047 = vunpack.c.h.b16 %v1031
        %v3048 = vunpack.c.l.b16 %v1032
        %v3049 = vunpack.c.h.b16 %v1032
        %v3050 = vunpack.c.l.b16 %v1033
        %v3051 = vunpack.c.h.b16 %v1033
        %v3052 = vunpack.c.l.b16 %v1034
        %v3053 = vunpack.c.h.b16 %v1034
        %v3054 = vunpack.c.l.b16 %v1035
        %v3055 = vunpack.c.h.b16 %v1035
        %v3056 = vunpack.c.l.b16 %v1036
        %v3057 = vunpack.c.h.b16 %v1036
        %v3058 = vunpack.c.l.b16 %v1037
        %v3059 = vunpack.c.h.b16 %v1037
        %v3060 = vunpack.c.l.b16 %v1038
        %v3061 = vunpack.c.h.b16 %v1038
        %v3062 = vunpack.c.l.b16 %v1039
        %v3063 = vunpack.c.h.b16 %v1039
        %v3064 = vunpack.c.l.b16 %v1040
        %v3065 = vunpack.c.h.b16 %v1040
        %v3066 = vunpack.c.l.b16 %v1041
        %v3067 = vunpack.c.h.b16 %v1041
        %v3068 = vunpack.c.l.b16 %v1042
        %v3069 = vunpack.c.h.b16 %v1042
        %v3070 = vunpack.c.l.b16 %v1043
        %v3071 = vunpack.c.h.b16 %v1043
        %v3072 = vunpack.c.l.b16 %v1044
        %v3073 = vunpack.c.h.b16 %v1044
        %v3074 = vunpack.c.l.b16 %v1045
        %v3075 = vunpack.c.h.b16 %v1045
        %v3076 = vunpack.c.l.b16 %v1046
        %v3077 = vunpack.c.h.b16 %v1046
        %v3078 = vunpack.c.l.b16 %v1047
        %v3079 = vunpack.c.h.b16 %v1047
        %v3080 = vunpack.c.l.b16 %v1048
        %v3081 = vunpack.c.h.b16 %v1048
        %v3082 = vunpack.c.l.b16 %v1049
        %v3083 = vunpack.c.h.b16 %v1049
        %v3084 = vunpack.c.l.b16 %v1050
        %v3085 = vunpack.c.h.b16 %v1050
        %v3086 = vunpack.c.l.b16 %v1051
        %v3087 = vunpack.c.h.b16 %v1051
        %v3088 = vunpack.c.l.b16 %v1052
        %v3089 = vunpack.c.h.b16 %v1052
        %v3090 = vunpack.c.l.b16 %v1053
        %v3091 = vunpack.c.h.b16 %v1053
        %v3092 = vunpack.c.l.b16 %v1054
        %v3093 = vunpack.c.h.b16 %v1054
        %v3094 = vunpack.c.l.b16 %v1055
        %v3095 = vunpack.c.h.b16 %v1055
        %v3096 = vunpack.c.l.b16 %v1056
        %v3097 = vunpack.c.h.b16 %v1056
        %v3098 = vunpack.c.l.b16 %v1057
        %v3099 = vunpack.c.h.b16 %v1057
        %v3100 = vunpack.c.l.b16 %v1058
        %v3101 = vunpack.c.h.b16 %v1058
        %v3102 = vunpack.c.l.b16 %v1059
        %v3103 = vunpack.c.h.b16 %v1059
        %v3104 = vunpack.c.l.b16 %v1060
        %v3105 = vunpack.c.h.b16 %v1060
        %v3106 = vunpack.c.l.b16 %v1061
        %v3107 = vunpack.c.h.b16 %v1061
        %v3108 = vunpack.c.l.b16 %v1062
        %v3109 = vunpack.c.h.b16 %v1062
        %v3110 = vunpack.c.l.b16 %v1063
        %v3111 = vunpack.c.h.b16 %v1063
        %v3112 = vunpack.c.l.b16 %v1064
        %v3113 = vunpack.c.h.b16 %v1064
        %v3114 = vunpack.c.l.b16 %v1065
        %v3115 = vunpack.c.h.b16 %v1065
        %v3116 = vunpack.c.l.b16 %v1066
        %v3117 = vunpack.c.h.b16 %v1066
        %v3118 = vunpack.c.l.b16 %v1067
        %v3119 = vunpack.c.h.b16 %v1067
        %v3120 = vunpack.c.l.b16 %v1068
        %v3121 = vunpack.c.h.b16 %v1068
        %v3122 = vunpack.c.l.b16 %v1069
        %v3123 = vunpack.c.h.b16 %v1069
        %v3124 = vunpack.c.l.b16 %v1070
        %v3125 = vunpack.c.h.b16 %v1070
        %v3126 = vunpack.c.l.b16 %v1071
        %v3127 = vunpack.c.h.b16 %v1071
        %v3128 = vunpack.c.l.b16 %v1072
        %v3129 = vunpack.c.h.b16 %v1072
        %v3130 = vunpack.c.l.b16 %v1073
        %v3131 = vunpack.c.h.b16 %v1073
        %v3132 = vunpack.c.l.b16 %v1074
        %v3133 = vunpack.c.h.b16 %v1074
        %v3134 = vunpack.c.l.b16 %v1075
        %v3135 = vunpack.c.h.b16 %v1075
        %v3136 = vunpack.c.l.b16 %v1076
        %v3137 = vunpack.c.h.b16 %v1076
        %v3138 = vunpack.c.l.b16 %v1077
        %v3139 = vunpack.c.h.b16 %v1077
        %v3140 = vunpack.c.l.b16 %v1078
        %v3141 = vunpack.c.h.b16 %v1078
        %v3142 = vunpack.c.l.b16 %v1079
        %v3143 = vunpack.c.h.b16 %v1079
        %v3144 = vunpack.c.l.b16 %v1080
        %v3145 = vunpack.c.h.b16 %v1080
        %v3146 = vunpack.c.l.b16 %v1081
        %v3147 = vunpack.c.h.b16 %v1081
        %v3148 = vunpack.c.l.b16 %v1082
        %v3149 = vunpack.c.h.b16 %v1082
        %v3150 = vunpack.c.l.b16 %v1083
        %v3151 = vunpack.c.h.b16 %v1083
        %v3152 = vunpack.c.l.b16 %v1084
        %v3153 = vunpack.c.h.b16 %v1084
        %v3154 = vunpack.c.l.b16 %v1085
        %v3155 = vunpack.c.h.b16 %v1085
        %v3156 = vunpack.c.l.b16 %v1086
        %v3157 = vunpack.c.h.b16 %v1086
        %v3158 = vunpack.c.l.b16 %v1087
        %v3159 = vunpack.c.h.b16 %v1087
        %v3160 = vunpack.c.l.b16 %v1088
        %v3161 = vunpack.c.h.b16 %v1088
        %v3162 = vunpack.c.l.b16 %v1089
        %v3163 = vunpack.c.h.b16 %v1089
        %v3164 = vunpack.c.l.b16 %v1090
        %v3165 = vunpack.c.h.b16 %v1090
        %v3166 = vunpack.c.l.b16 %v1091
        %v3167 = vunpack.c.h.b16 %v1091
        %v3168 = vunpack.c.l.b16 %v1092
        %v3169 = vunpack.c.h.b16 %v1092
        %v3170 = vunpack.c.l.b16 %v1093
        %v3171 = vunpack.c.h.b16 %v1093
        %v3172 = vunpack.c.l.b16 %v1094
        %v3173 = vunpack.c.h.b16 %v1094
        %v3174 = vunpack.c.l.b16 %v1095
        %v3175 = vunpack.c.h.b16 %v1095
        %v3176 = vunpack.c.l.b16 %v1096
        %v3177 = vunpack.c.h.b16 %v1096
        %v3178 = vunpack.c.l.b16 %v1097
        %v3179 = vunpack.c.h.b16 %v1097
        %v3180 = vunpack.c.l.b16 %v1098
        %v3181 = vunpack.c.h.b16 %v1098
        %v3182 = vunpack.c.l.b16 %v1099
        %v3183 = vunpack.c.h.b16 %v1099
        %v3184 = vunpack.c.l.b16 %v1100
        %v3185 = vunpack.c.h.b16 %v1100
        %v3186 = vunpack.c.l.b16 %v1101
        %v3187 = vunpack.c.h.b16 %v1101
        %v3188 = vunpack.c.l.b16 %v1102
        %v3189 = vunpack.c.h.b16 %v1102
        %v3190 = vunpack.c.l.b16 %v1103
        %v3191 = vunpack.c.h.b16 %v1103
        %v3192 = vunpack.c.l.b16 %v1104
        %v3193 = vunpack.c.h.b16 %v1104
        %v3194 = vunpack.c.l.b16 %v1105
        %v3195 = vunpack.c.h.b16 %v1105
        %v3196 = vunpack.c.l.b16 %v1106
        %v3197 = vunpack.c.h.b16 %v1106
        %v3198 = vunpack.c.l.b16 %v1107
        %v3199 = vunpack.c.h.b16 %v1107
        %v3200 = vunpack.c.l.b16 %v1108
        %v3201 = vunpack.c.h.b16 %v1108
        %v3202 = vunpack.c.l.b16 %v1109
        %v3203 = vunpack.c.h.b16 %v1109
        %v3204 = vunpack.c.l.b16 %v1110
        %v3205 = vunpack.c.h.b16 %v1110
        %v3206 = vunpack.c.l.b16 %v1111
        %v3207 = vunpack.c.h.b16 %v1111
        %v3208 = vunpack.c.l.b16 %v1112
        %v3209 = vunpack.c.h.b16 %v1112
        %v3210 = vunpack.c.l.b16 %v1113
        %v3211 = vunpack.c.h.b16 %v1113
        %v3212 = vunpack.c.l.b16 %v1114
        %v3213 = vunpack.c.h.b16 %v1114
        %v3214 = vunpack.c.l.b16 %v1115
        %v3215 = vunpack.c.h.b16 %v1115
        %v3216 = vunpack.c.l.b16 %v1116
        %v3217 = vunpack.c.h.b16 %v1116
        %v3218 = vunpack.c.l.b16 %v1117
        %v3219 = vunpack.c.h.b16 %v1117
        %v3220 = vunpack.c.l.b16 %v1118
        %v3221 = vunpack.c.h.b16 %v1118
        %v3222 = vunpack.c.l.b16 %v1119
        %v3223 = vunpack.c.h.b16 %v1119
        %v3224 = vunpack.c.l.b16 %v1120
        %v3225 = vunpack.c.h.b16 %v1120
        %v3226 = vunpack.c.l.b16 %v1121
        %v3227 = vunpack.c.h.b16 %v1121
        %v3228 = vunpack.c.l.b16 %v1122
        %v3229 = vunpack.c.h.b16 %v1122
        %v3230 = vunpack.c.l.b16 %v1123
        %v3231 = vunpack.c.h.b16 %v1123
        %v3232 = vunpack.c.l.b16 %v1124
        %v3233 = vunpack.c.h.b16 %v1124
        %v3234 = vunpack.c.l.b16 %v1125
        %v3235 = vunpack.c.h.b16 %v1125
        %v3236 = vunpack.c.l.b16 %v1126
        %v3237 = vunpack.c.h.b16 %v1126
        %v3238 = vunpack.c.l.b16 %v1127
        %v3239 = vunpack.c.h.b16 %v1127
        %v3240 = vunpack.c.l.b16 %v1128
        %v3241 = vunpack.c.h.b16 %v1128
        %v3242 = vunpack.c.l.b16 %v1129
        %v3243 = vunpack.c.h.b16 %v1129
        %v3244 = vunpack.c.l.b16 %v1130
        %v3245 = vunpack.c.h.b16 %v1130
        %v3246 = vunpack.c.l.b16 %v1131
        %v3247 = vunpack.c.h.b16 %v1131
        %v3248 = vunpack.c.l.b16 %v1132
        %v3249 = vunpack.c.h.b16 %v1132
        %v3250 = vunpack.c.l.b16 %v1133
        %v3251 = vunpack.c.h.b16 %v1133
        %v3252 = vunpack.c.l.b16 %v1134
        %v3253 = vunpack.c.h.b16 %v1134
        %v3254 = vunpack.c.l.b16 %v1135
        %v3255 = vunpack.c.h.b16 %v1135
        %v3256 = vunpack.c.l.b16 %v1136
        %v3257 = vunpack.c.h.b16 %v1136
        %v3258 = vunpack.c.l.b16 %v1137
        %v3259 = vunpack.c.h.b16 %v1137
        %v3260 = vunpack.c.l.b16 %v1138
        %v3261 = vunpack.c.h.b16 %v1138
        %v3262 = vunpack.c.l.b16 %v1139
        %v3263 = vunpack.c.h.b16 %v1139
        %v3264 = vunpack.c.l.b16 %v1140
        %v3265 = vunpack.c.h.b16 %v1140
        %v3266 = vunpack.c.l.b16 %v1141
        %v3267 = vunpack.c.h.b16 %v1141
        %v3268 = vunpack.c.l.b16 %v1142
        %v3269 = vunpack.c.h.b16 %v1142
        %v3270 = vunpack.c.l.b16 %v1143
        %v3271 = vunpack.c.h.b16 %v1143
        %v3272 = vunpack.c.l.b16 %v1144
        %v3273 = vunpack.c.h.b16 %v1144
        %v3274 = vunpack.c.l.b16 %v1145
        %v3275 = vunpack.c.h.b16 %v1145
        %v3276 = vunpack.c.l.b16 %v1146
        %v3277 = vunpack.c.h.b16 %v1146
        %v3278 = vunpack.c.l.b16 %v1147
        %v3279 = vunpack.c.h.b16 %v1147
        %v3280 = vunpack.c.l.b16 %v1148
        %v3281 = vunpack.c.h.b16 %v1148
        %v3282 = vunpack.c.l.b16 %v1149
        %v3283 = vunpack.c.h.b16 %v1149
        %v3284 = vunpack.c.l.b16 %v1150
        %v3285 = vunpack.c.h.b16 %v1150
        %v3286 = vunpack.c.l.b16 %v1151
        %v3287 = vunpack.c.h.b16 %v1151
        %v3288 = vunpack.c.l.b16 %v1152
        %v3289 = vunpack.c.h.b16 %v1152
        %v3290 = vunpack.c.l.b16 %v1153
        %v3291 = vunpack.c.h.b16 %v1153
        %v3292 = vunpack.c.l.b16 %v1154
        %v3293 = vunpack.c.h.b16 %v1154
        %v3294 = vunpack.c.l.b16 %v1155
        %v3295 = vunpack.c.h.b16 %v1155
        %v3296 = vunpack.c.l.b16 %v1156
        %v3297 = vunpack.c.h.b16 %v1156
        %v3298 = vunpack.c.l.b16 %v1157
        %v3299 = vunpack.c.h.b16 %v1157
        %v3300 = vunpack.c.l.b16 %v1158
        %v3301 = vunpack.c.h.b16 %v1158
        %v3302 = vunpack.c.l.b16 %v1159
        %v3303 = vunpack.c.h.b16 %v1159
        %v3304 = vunpack.c.l.b16 %v1160
        %v3305 = vunpack.c.h.b16 %v1160
        %v3306 = vunpack.c.l.b16 %v1161
        %v3307 = vunpack.c.h.b16 %v1161
        %v3308 = vunpack.c.l.b16 %v1162
        %v3309 = vunpack.c.h.b16 %v1162
        %v3310 = vunpack.c.l.b16 %v1163
        %v3311 = vunpack.c.h.b16 %v1163
        %v3312 = vunpack.c.l.b16 %v1164
        %v3313 = vunpack.c.h.b16 %v1164
        %v3314 = vunpack.c.l.b16 %v1165
        %v3315 = vunpack.c.h.b16 %v1165
        %v3316 = vunpack.c.l.b16 %v1166
        %v3317 = vunpack.c.h.b16 %v1166
        %v3318 = vunpack.c.l.b16 %v1167
        %v3319 = vunpack.c.h.b16 %v1167
        %v3320 = vunpack.c.l.b16 %v1168
        %v3321 = vunpack.c.h.b16 %v1168
        %v3322 = vunpack.c.l.b16 %v1169
        %v3323 = vunpack.c.h.b16 %v1169
        %v3324 = vunpack.c.l.b16 %v1170
        %v3325 = vunpack.c.h.b16 %v1170
        %v3326 = vunpack.c.l.b16 %v1171
        %v3327 = vunpack.c.h.b16 %v1171
        %v3328 = vunpack.c.l.b16 %v1172
        %v3329 = vunpack.c.h.b16 %v1172
        %v3330 = vunpack.c.l.b16 %v1173
        %v3331 = vunpack.c.h.b16 %v1173
        %v3332 = vunpack.c.l.b16 %v1174
        %v3333 = vunpack.c.h.b16 %v1174
        %v3334 = vunpack.c.l.b16 %v1175
        %v3335 = vunpack.c.h.b16 %v1175
        %v3336 = vunpack.c.l.b16 %v1176
        %v3337 = vunpack.c.h.b16 %v1176
        %v3338 = vunpack.c.l.b16 %v1177
        %v3339 = vunpack.c.h.b16 %v1177
        %v3340 = vunpack.c.l.b16 %v1178
        %v3341 = vunpack.c.h.b16 %v1178
        %v3342 = vunpack.c.l.b16 %v1179
        %v3343 = vunpack.c.h.b16 %v1179
        %v3344 = vunpack.c.l.b16 %v1180
        %v3345 = vunpack.c.h.b16 %v1180
        %v3346 = vunpack.c.l.b16 %v1181
        %v3347 = vunpack.c.h.b16 %v1181
        %v3348 = vunpack.c.l.b16 %v1182
        %v3349 = vunpack.c.h.b16 %v1182
        %v3350 = vunpack.c.l.b16 %v1183
        %v3351 = vunpack.c.h.b16 %v1183
        %v3352 = vunpack.c.l.b16 %v1184
        %v3353 = vunpack.c.h.b16 %v1184
        %v3354 = vunpack.c.l.b16 %v1185
        %v3355 = vunpack.c.h.b16 %v1185
        %v3356 = vunpack.c.l.b16 %v1186
        %v3357 = vunpack.c.h.b16 %v1186
        %v3358 = vunpack.c.l.b16 %v1187
        %v3359 = vunpack.c.h.b16 %v1187
        %v3360 = vunpack.c.l.b16 %v1188
        %v3361 = vunpack.c.h.b16 %v1188
        %v3362 = vunpack.c.l.b16 %v1189
        %v3363 = vunpack.c.h.b16 %v1189
        %v3364 = vunpack.c.l.b16 %v1190
        %v3365 = vunpack.c.h.b16 %v1190
        %v3366 = vunpack.c.l.b16 %v1191
        %v3367 = vunpack.c.h.b16 %v1191
        %v3368 = vunpack.c.l.b16 %v1192
        %v3369 = vunpack.c.h.b16 %v1192
        %v3370 = vunpack.c.l.b16 %v1193
        %v3371 = vunpack.c.h.b16 %v1193
        %v3372 = vunpack.c.l.b16 %v1194
        %v3373 = vunpack.c.h.b16 %v1194
        %v3374 = vunpack.c.l.b16 %v1195
        %v3375 = vunpack.c.h.b16 %v1195
        %v3376 = vunpack.c.l.b16 %v1196
        %v3377 = vunpack.c.h.b16 %v1196
        %v3378 = vunpack.c.l.b16 %v1197
        %v3379 = vunpack.c.h.b16 %v1197
        %v3380 = vunpack.c.l.b16 %v1198
        %v3381 = vunpack.c.h.b16 %v1198
        %v3382 = vunpack.c.l.b16 %v1199
        %v3383 = vunpack.c.h.b16 %v1199
        %v3384 = vunpack.c.l.b16 %v1200
        %v3385 = vunpack.c.h.b16 %v1200
        %v3386 = vunpack.c.l.b16 %v1201
        %v3387 = vunpack.c.h.b16 %v1201
        %v3388 = vunpack.c.l.b16 %v1202
        %v3389 = vunpack.c.h.b16 %v1202
        %v3390 = vunpack.c.l.b16 %v1203
        %v3391 = vunpack.c.h.b16 %v1203
        %v3392 = vunpack.c.l.b16 %v1204
        %v3393 = vunpack.c.h.b16 %v1204
        %v3394 = vunpack.c.l.b16 %v1205
        %v3395 = vunpack.c.h.b16 %v1205
        %v3396 = vunpack.c.l.b16 %v1206
        %v3397 = vunpack.c.h.b16 %v1206
        %v3398 = vunpack.c.l.b16 %v1207
        %v3399 = vunpack.c.h.b16 %v1207
        %v3400 = vunpack.c.l.b16 %v1208
        %v3401 = vunpack.c.h.b16 %v1208
        %v3402 = vunpack.c.l.b16 %v1209
        %v3403 = vunpack.c.h.b16 %v1209
        %v3404 = vunpack.c.l.b16 %v1210
        %v3405 = vunpack.c.h.b16 %v1210
        %v3406 = vunpack.c.l.b16 %v1211
        %v3407 = vunpack.c.h.b16 %v1211
        %v3408 = vunpack.c.l.b16 %v1212
        %v3409 = vunpack.c.h.b16 %v1212
        %v3410 = vunpack.c.l.b16 %v1213
        %v3411 = vunpack.c.h.b16 %v1213
        %v3412 = vunpack.c.l.b16 %v1214
        %v3413 = vunpack.c.h.b16 %v1214
        %v3414 = vunpack.c.l.b16 %v1215
        %v3415 = vunpack.c.h.b16 %v1215
        %v3416 = vunpack.c.l.b16 %v1216
        %v3417 = vunpack.c.h.b16 %v1216
        %v3418 = vunpack.c.l.b16 %v1217
        %v3419 = vunpack.c.h.b16 %v1217
        %v3420 = vunpack.c.l.b16 %v1218
        %v3421 = vunpack.c.h.b16 %v1218
        %v3422 = vunpack.c.l.b16 %v1219
        %v3423 = vunpack.c.h.b16 %v1219
        %v3424 = vunpack.c.l.b16 %v1220
        %v3425 = vunpack.c.h.b16 %v1220
        %v3426 = vunpack.c.l.b16 %v1221
        %v3427 = vunpack.c.h.b16 %v1221
        %v3428 = vunpack.c.l.b16 %v1222
        %v3429 = vunpack.c.h.b16 %v1222
        %v3430 = vunpack.c.l.b16 %v1223
        %v3431 = vunpack.c.h.b16 %v1223
        %v3432 = vunpack.c.l.b16 %v1224
        %v3433 = vunpack.c.h.b16 %v1224
        %v3434 = vunpack.c.l.b16 %v1225
        %v3435 = vunpack.c.h.b16 %v1225
        %v3436 = vunpack.c.l.b16 %v1226
        %v3437 = vunpack.c.h.b16 %v1226
        %v3438 = vunpack.c.l.b16 %v1227
        %v3439 = vunpack.c.h.b16 %v1227
        %v3440 = vunpack.c.l.b16 %v1228
        %v3441 = vunpack.c.h.b16 %v1228
        %v3442 = vunpack.c.l.b16 %v1229
        %v3443 = vunpack.c.h.b16 %v1229
        %v3444 = vunpack.c.l.b16 %v1230
        %v3445 = vunpack.c.h.b16 %v1230
        %v3446 = vunpack.c.l.b16 %v1231
        %v3447 = vunpack.c.h.b16 %v1231
        %v3448 = vunpack.c.l.b16 %v1232
        %v3449 = vunpack.c.h.b16 %v1232
        %v3450 = vunpack.c.l.b16 %v1233
        %v3451 = vunpack.c.h.b16 %v1233
        %v3452 = vunpack.c.l.b16 %v1234
        %v3453 = vunpack.c.h.b16 %v1234
        %v3454 = vpack.c.b16 %v2818, %v2814
        %v3455 = vpack.c.b16 %v2819, %v2815
        %v3456 = vpack.c.b16 %v2820, %v2816
        %v3457 = vpack.c.b16 %v2821, %v2817
        %v3458 = vpack.c.b16 %v2826, %v2822
        %v3459 = vpack.c.b16 %v2827, %v2823
        %v3460 = vpack.c.b16 %v2828, %v2824
        %v3461 = vpack.c.b16 %v2829, %v2825
        %v3462 = vpack.c.b16 %v2834, %v2830
        %v3463 = vpack.c.b16 %v2835, %v2831
        %v3464 = vpack.c.b16 %v2836, %v2832
        %v3465 = vpack.c.b16 %v2837, %v2833
        %v3466 = vpack.c.b16 %v2842, %v2838
        %v3467 = vpack.c.b16 %v2843, %v2839
        %v3468 = vpack.c.b16 %v2844, %v2840
        %v3469 = vpack.c.b16 %v2845, %v2841
        %v3470 = vpack.c.b16 %v2850, %v2846
        %v3471 = vpack.c.b16 %v2851, %v2847
        %v3472 = vpack.c.b16 %v2852, %v2848
        %v3473 = vpack.c.b16 %v2853, %v2849
        %v3474 = vpack.c.b16 %v2858, %v2854
        %v3475 = vpack.c.b16 %v2859, %v2855
        %v3476 = vpack.c.b16 %v2860, %v2856
        %v3477 = vpack.c.b16 %v2861, %v2857
        %v3478 = vpack.c.b16 %v2866, %v2862
        %v3479 = vpack.c.b16 %v2867, %v2863
        %v3480 = vpack.c.b16 %v2868, %v2864
        %v3481 = vpack.c.b16 %v2869, %v2865
        %v3482 = vpack.c.b16 %v2874, %v2870
        %v3483 = vpack.c.b16 %v2875, %v2871
        %v3484 = vpack.c.b16 %v2876, %v2872
        %v3485 = vpack.c.b16 %v2877, %v2873
        %v3486 = vpack.c.b16 %v2882, %v2878
        %v3487 = vpack.c.b16 %v2883, %v2879
        %v3488 = vpack.c.b16 %v2884, %v2880
        %v3489 = vpack.c.b16 %v2885, %v2881
        %v3490 = vpack.c.b16 %v2890, %v2886
        %v3491 = vpack.c.b16 %v2891, %v2887
        %v3492 = vpack.c.b16 %v2892, %v2888
        %v3493 = vpack.c.b16 %v2893, %v2889
        %v3494 = vpack.c.b16 %v2898, %v2894
        %v3495 = vpack.c.b16 %v2899, %v2895
        %v3496 = vpack.c.b16 %v2900, %v2896
        %v3497 = vpack.c.b16 %v2901, %v2897
        %v3498 = vpack.c.b16 %v2906, %v2902
        %v3499 = vpack.c.b16 %v2907, %v2903
        %v3500 = vpack.c.b16 %v2908, %v2904
        %v3501 = vpack.c.b16 %v2909, %v2905
        %v3502 = vpack.c.b16 %v2914, %v2910
        %v3503 = vpack.c.b16 %v2915, %v2911
        %v3504 = vpack.c.b16 %v2916, %v2912
        %v3505 = vpack.c.b16 %v2917, %v2913
        %v3506 = vpack.c.b16 %v2922, %v2918
        %v3507 = vpack.c.b16 %v2923, %v2919
        %v3508 = vpack.c.b16 %v2924, %v2920
        %v3509 = vpack.c.b16 %v2925, %v2921
        %v3510 = vpack.c.b16 %v2930, %v2926
        %v3511 = vpack.c.b16 %v2931, %v2927
        %v3512 = vpack.c.b16 %v2932, %v2928
        %v3513 = vpack.c.b16 %v2933, %v2929
        %v3514 = vpack.c.b16 %v2938, %v2934
        %v3515 = vpack.c.b16 %v2939, %v2935
        %v3516 = vpack.c.b16 %v2940, %v2936
        %v3517 = vpack.c.b16 %v2941, %v2937
        %v3518 = vpack.c.b16 %v2946, %v2942
        %v3519 = vpack.c.b16 %v2947, %v2943
        %v3520 = vpack.c.b16 %v2948, %v2944
        %v3521 = vpack.c.b16 %v2949, %v2945
        %v3522 = vpack.c.b16 %v2954, %v2950
        %v3523 = vpack.c.b16 %v2955, %v2951
        %v3524 = vpack.c.b16 %v2956, %v2952
        %v3525 = vpack.c.b16 %v2957, %v2953
        %v3526 = vpack.c.b16 %v2962, %v2958
        %v3527 = vpack.c.b16 %v2963, %v2959
        %v3528 = vpack.c.b16 %v2964, %v2960
        %v3529 = vpack.c.b16 %v2965, %v2961
        %v3530 = vpack.c.b16 %v2970, %v2966
        %v3531 = vpack.c.b16 %v2971, %v2967
        %v3532 = vpack.c.b16 %v2972, %v2968
        %v3533 = vpack.c.b16 %v2973, %v2969
        %v3534 = vpack.c.b16 %v2978, %v2974
        %v3535 = vpack.c.b16 %v2979, %v2975
        %v3536 = vpack.c.b16 %v2980, %v2976
        %v3537 = vpack.c.b16 %v2981, %v2977
        %v3538 = vpack.c.b16 %v2986, %v2982
        %v3539 = vpack.c.b16 %v2987, %v2983
        %v3540 = vpack.c.b16 %v2988, %v2984
        %v3541 = vpack.c.b16 %v2989, %v2985
        %v3542 = vpack.c.b16 %v2994, %v2990
        %v3543 = vpack.c.b16 %v2995, %v2991
        %v3544 = vpack.c.b16 %v2996, %v2992
        %v3545 = vpack.c.b16 %v2997, %v2993
        %v3546 = vpack.c.b16 %v3002, %v2998
        %v3547 = vpack.c.b16 %v3003, %v2999
        %v3548 = vpack.c.b16 %v3004, %v3000
        %v3549 = vpack.c.b16 %v3005, %v3001
        %v3550 = vpack.c.b16 %v3010, %v3006
        %v3551 = vpack.c.b16 %v3011, %v3007
        %v3552 = vpack.c.b16 %v3012, %v3008
        %v3553 = vpack.c.b16 %v3013, %v3009
        %v3554 = vpack.c.b16 %v3018, %v3014
        %v3555 = vpack.c.b16 %v3019, %v3015
        %v3556 = vpack.c.b16 %v3020, %v3016
        %v3557 = vpack.c.b16 %v3021, %v3017
        %v3558 = vpack.c.b16 %v3026, %v3022
        %v3559 = vpack.c.b16 %v3027, %v3023
        %v3560 = vpack.c.b16 %v3028, %v3024
        %v3561 = vpack.c.b16 %v3029, %v3025
        %v3562 = vpack.c.b16 %v3034, %v3030
        %v3563 = vpack.c.b16 %v3035, %v3031
        %v3564 = vpack.c.b16 %v3036, %v3032
        %v3565 = vpack.c.b16 %v3037, %v3033
        %v3566 = vpack.c.b16 %v3042, %v3038
        %v3567 = vpack.c.b16 %v3043, %v3039
        %v3568 = vpack.c.b16 %v3044, %v3040
        %v3569 = vpack.c.b16 %v3045, %v3041
        %v3570 = vpack.c.b16 %v3050, %v3046
        %v3571 = vpack.c.b16 %v3051, %v3047
        %v3572 = vpack.c.b16 %v3052, %v3048
        %v3573 = vpack.c.b16 %v3053, %v3049
        %v3574 = vpack.c.b16 %v3058, %v3054
        %v3575 = vpack.c.b16 %v3059, %v3055
        %v3576 = vpack.c.b16 %v3060, %v3056
        %v3577 = vpack.c.b16 %v3061, %v3057
        %v3578 = vpack.c.b16 %v3066, %v3062
        %v3579 = vpack.c.b16 %v3067, %v3063
        %v3580 = vpack.c.b16 %v3068, %v3064
        %v3581 = vpack.c.b16 %v3069, %v3065
        %v3582 = vpack.c.b16 %v3074, %v3070
        %v3583 = vpack.c.b16 %v3075, %v3071
        %v3584 = vpack.c.b16 %v3076, %v3072
        %v3585 = vpack.c.b16 %v3077, %v3073
        %v3586 = vpack.c.b16 %v3082, %v3078
        %v3587 = vpack.c.b16 %v3083, %v3079
        %v3588 = vpack.c.b16 %v3084, %v3080
        %v3589 = vpack.c.b16 %v3085, %v3081
        %v3590 = vpack.c.b16 %v3090, %v3086
        %v3591 = vpack.c.b16 %v3091, %v3087
        %v3592 = vpack.c.b16 %v3092, %v3088
        %v3593 = vpack.c.b16 %v3093, %v3089
        %v3594 = vpack.c.b16 %v3098, %v3094
        %v3595 = vpack.c.b16 %v3099, %v3095
        %v3596 = vpack.c.b16 %v3100, %v3096
        %v3597 = vpack.c.b16 %v3101, %v3097
        %v3598 = vpack.c.b16 %v3106, %v3102
        %v3599 = vpack.c.b16 %v3107, %v3103
        %v3600 = vpack.c.b16 %v3108, %v3104
        %v3601 = vpack.c.b16 %v3109, %v3105
        %v3602 = vpack.c.b16 %v3114, %v3110
        %v3603 = vpack.c.b16 %v3115, %v3111
        %v3604 = vpack.c.b16 %v3116, %v3112
        %v3605 = vpack.c.b16 %v3117, %v3113
        %v3606 = vpack.c.b16 %v3122, %v3118
        %v3607 = vpack.c.b16 %v3123, %v3119
        %v3608 = vpack.c.b16 %v3124, %v3120
        %v3609 = vpack.c.b16 %v3125, %v3121
        %v3610 = vpack.c.b16 %v3130, %v3126
        %v3611 = vpack.c.b16 %v3131, %v3127
        %v3612 = vpack.c.b16 %v3132, %v3128
        %v3613 = vpack.c.b16 %v3133, %v3129
        %v3614 = vpack.c.b16 %v3138, %v3134
        %v3615 = vpack.c.b16 %v3139, %v3135
        %v3616 = vpack.c.b16 %v3140, %v3136
        %v3617 = vpack.c.b16 %v3141, %v3137
        %v3618 = vpack.c.b16 %v3146, %v3142
        %v3619 = vpack.c.b16 %v3147, %v3143
        %v3620 = vpack.c.b16 %v3148, %v3144
        %v3621 = vpack.c.b16 %v3149, %v3145
        %v3622 = vpack.c.b16 %v3154, %v3150
        %v3623 = vpack.c.b16 %v3155, %v3151
        %v3624 = vpack.c.b16 %v3156, %v3152
        %v3625 = vpack.c.b16 %v3157, %v3153
        %v3626 = vpack.c.b16 %v3162, %v3158
        %v3627 = vpack.c.b16 %v3163, %v3159
        %v3628 = vpack.c.b16 %v3164, %v3160
        %v3629 = vpack.c.b16 %v3165, %v3161
        %v3630 = vpack.c.b16 %v3170, %v3166
        %v3631 = vpack.c.b16 %v3171, %v3167
        %v3632 = vpack.c.b16 %v3172, %v3168
        %v3633 = vpack.c.b16 %v3173, %v3169
        %v3634 = vpack.c.b16 %v3178, %v3174
        %v3635 = vpack.c.b16 %v3179, %v3175
        %v3636 = vpack.c.b16 %v3180, %v3176
        %v3637 = vpack.c.b16 %v3181, %v3177
        %v3638 = vpack.c.b16 %v3186, %v3182
        %v3639 = vpack.c.b16 %v3187, %v3183
        %v3640 = vpack.c.b16 %v3188, %v3184
        %v3641 = vpack.c.b16 %v3189, %v3185
        %v3642 = vpack.c.b16 %v3194, %v3190
        %v3643 = vpack.c.b16 %v3195, %v3191
        %v3644 = vpack.c.b16 %v3196, %v3192
        %v3645 = vpack.c.b16 %v3197, %v3193
        %v3646 = vpack.c.b16 %v3202, %v3198
        %v3647 = vpack.c.b16 %v3203, %v3199
        %v3648 = vpack.c.b16 %v3204, %v3200
        %v3649 = vpack.c.b16 %v3205, %v3201
        %v3650 = vpack.c.b16 %v3210, %v3206
        %v3651 = vpack.c.b16 %v3211, %v3207
        %v3652 = vpack.c.b16 %v3212, %v3208
        %v3653 = vpack.c.b16 %v3213, %v3209
        %v3654 = vpack.c.b16 %v3218, %v3214
        %v3655 = vpack.c.b16 %v3219, %v3215
        %v3656 = vpack.c.b16 %v3220, %v3216
        %v3657 = vpack.c.b16 %v3221, %v3217
        %v3658 = vpack.c.b16 %v3226, %v3222
        %v3659 = vpack.c.b16 %v3227, %v3223
        %v3660 = vpack.c.b16 %v3228, %v3224
        %v3661 = vpack.c.b16 %v3229, %v3225
        %v3662 = vpack.c.b16 %v3234, %v3230
        %v3663 = vpack.c.b16 %v3235, %v3231
        %v3664 = vpack.c.b16 %v3236, %v3232
        %v3665 = vpack.c.b16 %v3237, %v3233
        %v3666 = vpack.c.b16 %v3242, %v3238
        %v3667 = vpack.c.b16 %v3243, %v3239
        %v3668 = vpack.c.b16 %v3244, %v3240
        %v3669 = vpack.c.b16 %v3245, %v3241
        %v3670 = vpack.c.b16 %v3250, %v3246
        %v3671 = vpack.c.b16 %v3251, %v3247
        %v3672 = vpack.c.b16 %v3252, %v3248
        %v3673 = vpack.c.b16 %v3253, %v3249
        %v3674 = vpack.c.b16 %v3258, %v3254
        %v3675 = vpack.c.b16 %v3259, %v3255
        %v3676 = vpack.c.b16 %v3260, %v3256
        %v3677 = vpack.c.b16 %v3261, %v3257
        %v3678 = vpack.c.b16 %v3266, %v3262
        %v3679 = vpack.c.b16 %v3267, %v3263
        %v3680 = vpack.c.b16 %v3268, %v3264
        %v3681 = vpack.c.b16 %v3269, %v3265
        %v3682 = vpack.c.b16 %v3274, %v3270
        %v3683 = vpack.c.b16 %v3275, %v3271
        %v3684 = vpack.c.b16 %v3276, %v3272
        %v3685 = vpack.c.b16 %v3277, %v3273
        %v3686 = vpack.c.b16 %v3282, %v3278
        %v3687 = vpack.c.b16 %v3283, %v3279
        %v3688 = vpack.c.b16 %v3284, %v3280
        %v3689 = vpack.c.b16 %v3285, %v3281
        %v3690 = vpack.c.b16 %v3290, %v3286
        %v3691 = vpack.c.b16 %v3291, %v3287
        %v3692 = vpack.c.b16 %v3292, %v3288
        %v3693 = vpack.c.b16 %v3293, %v3289
        %v3694 = vpack.c.b16 %v3298, %v3294
        %v3695 = vpack.c.b16 %v3299, %v3295
        %v3696 = vpack.c.b16 %v3300, %v3296
        %v3697 = vpack.c.b16 %v3301, %v3297
        %v3698 = vpack.c.b16 %v3306, %v3302
        %v3699 = vpack.c.b16 %v3307, %v3303
        %v3700 = vpack.c.b16 %v3308, %v3304
        %v3701 = vpack.c.b16 %v3309, %v3305
        %v3702 = vpack.c.b16 %v3314, %v3310
        %v3703 = vpack.c.b16 %v3315, %v3311
        %v3704 = vpack.c.b16 %v3316, %v3312
        %v3705 = vpack.c.b16 %v3317, %v3313
        %v3706 = vpack.c.b16 %v3322, %v3318
        %v3707 = vpack.c.b16 %v3323, %v3319
        %v3708 = vpack.c.b16 %v3324, %v3320
        %v3709 = vpack.c.b16 %v3325, %v3321
        %v3710 = vpack.c.b16 %v3330, %v3326
        %v3711 = vpack.c.b16 %v3331, %v3327
        %v3712 = vpack.c.b16 %v3332, %v3328
        %v3713 = vpack.c.b16 %v3333, %v3329
        %v3714 = vpack.c.b16 %v3338, %v3334
        %v3715 = vpack.c.b16 %v3339, %v3335
        %v3716 = vpack.c.b16 %v3340, %v3336
        %v3717 = vpack.c.b16 %v3341, %v3337
        %v3718 = vpack.c.b16 %v3346, %v3342
        %v3719 = vpack.c.b16 %v3347, %v3343
        %v3720 = vpack.c.b16 %v3348, %v3344
        %v3721 = vpack.c.b16 %v3349, %v3345
        %v3722 = vpack.c.b16 %v3354, %v3350
        %v3723 = vpack.c.b16 %v3355, %v3351
        %v3724 = vpack.c.b16 %v3356, %v3352
        %v3725 = vpack.c.b16 %v3357, %v3353
        %v3726 = vpack.c.b16 %v3362, %v3358
        %v3727 = vpack.c.b16 %v3363, %v3359
        %v3728 = vpack.c.b16 %v3364, %v3360
        %v3729 = vpack.c.b16 %v3365, %v3361
        %v3730 = vpack.c.b16 %v3370, %v3366
        %v3731 = vpack.c.b16 %v3371, %v3367
        %v3732 = vpack.c.b16 %v3372, %v3368
        %v3733 = vpack.c.b16 %v3373, %v3369
        %v3734 = vpack.c.b16 %v3378, %v3374
        %v3735 = vpack.c.b16 %v3379, %v3375
        %v3736 = vpack.c.b16 %v3380, %v3376
        %v3737 = vpack.c.b16 %v3381, %v3377
        %v3738 = vpack.c.b16 %v3386, %v3382
        %v3739 = vpack.c.b16 %v3387, %v3383
        %v3740 = vpack.c.b16 %v3388, %v3384
        %v3741 = vpack.c.b16 %v3389, %v3385
        %v3742 = vpack.c.b16 %v3394, %v3390
        %v3743 = vpack.c.b16 %v3395, %v3391
        %v3744 = vpack.c.b16 %v3396, %v3392
        %v3745 = vpack.c.b16 %v3397, %v3393
        %v3746 = vpack.c.b16 %v3402, %v3398
        %v3747 = vpack.c.b16 %v3403, %v3399
        %v3748 = vpack.c.b16 %v3404, %v3400
        %v3749 = vpack.c.b16 %v3405, %v3401
        %v3750 = vpack.c.b16 %v3410, %v3406
        %v3751 = vpack.c.b16 %v3411, %v3407
        %v3752 = vpack.c.b16 %v3412, %v3408
        %v3753 = vpack.c.b16 %v3413, %v3409
        %v3754 = vpack.c.b16 %v3418, %v3414
        %v3755 = vpack.c.b16 %v3419, %v3415
        %v3756 = vpack.c.b16 %v3420, %v3416
        %v3757 = vpack.c.b16 %v3421, %v3417
        %v3758 = vpack.c.b16 %v3426, %v3422
        %v3759 = vpack.c.b16 %v3427, %v3423
        %v3760 = vpack.c.b16 %v3428, %v3424
        %v3761 = vpack.c.b16 %v3429, %v3425
        %v3762 = vpack.c.b16 %v3434, %v3430
        %v3763 = vpack.c.b16 %v3435, %v3431
        %v3764 = vpack.c.b16 %v3436, %v3432
        %v3765 = vpack.c.b16 %v3437, %v3433
        %v3766 = vpack.c.b16 %v3442, %v3438
        %v3767 = vpack.c.b16 %v3443, %v3439
        %v3768 = vpack.c.b16 %v3444, %v3440
        %v3769 = vpack.c.b16 %v3445, %v3441
        %v3770 = vpack.c.b16 %v3450, %v3446
        %v3771 = vpack.c.b16 %v3451, %v3447
        %v3772 = vpack.c.b16 %v3452, %v3448
        %v3773 = vpack.c.b16 %v3453, %v3449
        %4094 = vmatprep.subr.bf16.mxu0 %v3455
        %4095 = vmatpush1.bf16.msra.mxu0 %v3454
        %4096 = vmatprep.subr.bf16.mxu0 %v3459
        %4097 = vmatpush1.bf16.msra.mxu0 %v3458
        %4098 = vmatprep.subr.bf16.mxu0 %v3463
        %4099 = vmatpush1.bf16.msra.mxu0 %v3462
        %4100 = vmatprep.subr.bf16.mxu0 %v3467
        %4101 = vmatpush1.bf16.msra.mxu0 %v3466
        %4102 = vmatprep.subr.bf16.mxu0 %v3471
        %4103 = vmatpush1.bf16.msra.mxu0 %v3470
        %4104 = vmatprep.subr.bf16.mxu0 %v3475
        %4105 = vmatpush1.bf16.msra.mxu0 %v3474
        %4106 = vmatprep.subr.bf16.mxu0 %v3479
        %4107 = vmatpush1.bf16.msra.mxu0 %v3478
        %4108 = vmatprep.subr.bf16.mxu0 %v3483
        %4109 = vmatpush1.bf16.msra.mxu0 %v3482
        %4110 = vmatprep.subr.bf16.mxu0 %v3487
        %4111 = vmatpush1.bf16.msra.mxu0 %v3486
        %4112 = vmatprep.subr.bf16.mxu0 %v3491
        %4113 = vmatpush1.bf16.msra.mxu0 %v3490
        %4114 = vmatprep.subr.bf16.mxu0 %v3495
        %4115 = vmatpush1.bf16.msra.mxu0 %v3494
        %4116 = vmatprep.subr.bf16.mxu0 %v3499
        %4117 = vmatpush1.bf16.msra.mxu0 %v3498
        %4118 = vmatprep.subr.bf16.mxu0 %v3503
        %4119 = vmatpush1.bf16.msra.mxu0 %v3502
        %4120 = vmatprep.subr.bf16.mxu0 %v3507
        %4121 = vmatpush1.bf16.msra.mxu0 %v3506
        %4122 = vmatprep.subr.bf16.mxu0 %v3511
        %4123 = vmatpush1.bf16.msra.mxu0 %v3510
        %4124 = vmatprep.subr.bf16.mxu0 %v3515
        %4125 = vmatpush1.bf16.msra.mxu0 %v3514
        %4126 = vmatprep.mubr.f32.mxu0 %v1418
        %4127 = vmatmul.mubr.f32.gmra.mrb[0].mxu0 %v1417
        %v4128 = vpop.f32.mrb[0].mxu0
        %v4129 = vadd.f32 %v2477, %v4128
        %v4130 = vpop.f32.mrb[0].mxu0
        %v4131 = vadd.f32 %v2481, %v4130
        %4132 = vmatprep.mubr.f32.mxu0 %v1428
        %4133 = vmatmul.mubr.f32.gmra.mrb[0].mxu0 %v1427
        %v4134 = vpop.f32.mrb[0].mxu0
        %v4135 = vadd.f32 %v2477, %v4134
        %v4136 = vpop.f32.mrb[0].mxu0
        %v4137 = vadd.f32 %v2481, %v4136
        %4138 = vdwg.mxu0
        %4139 = vmatprep.subr.bf16.mxu0 %v3519
        %4140 = vmatpush1.bf16.msra.mxu0 %v3518
        %4141 = vmatprep.subr.bf16.mxu0 %v3523
        %4142 = vmatpush1.bf16.msra.mxu0 %v3522
        %4143 = vmatprep.subr.bf16.mxu0 %v3527
        %4144 = vmatpush1.bf16.msra.mxu0 %v3526
        %4145 = vmatprep.subr.bf16.mxu0 %v3531
        %4146 = vmatpush1.bf16.msra.mxu0 %v3530
        %4147 = vmatprep.subr.bf16.mxu0 %v3535
        %4148 = vmatpush1.bf16.msra.mxu0 %v3534
        %4149 = vmatprep.subr.bf16.mxu0 %v3539
        %4150 = vmatpush1.bf16.msra.mxu0 %v3538
        %4151 = vmatprep.subr.bf16.mxu0 %v3543
        %4152 = vmatpush1.bf16.msra.mxu0 %v3542
        %4153 = vmatprep.subr.bf16.mxu0 %v3547
        %4154 = vmatpush1.bf16.msra.mxu0 %v3546
        %4155 = vmatprep.subr.bf16.mxu0 %v3551
        %4156 = vmatpush1.bf16.msra.mxu0 %v3550
        %4157 = vmatprep.subr.bf16.mxu0 %v3555
        %4158 = vmatpush1.bf16.msra.mxu0 %v3554
        %4159 = vmatprep.subr.bf16.mxu0 %v3559
        %4160 = vmatpush1.bf16.msra.mxu0 %v3558
        %4161 = vmatprep.subr.bf16.mxu0 %v3563
        %4162 = vmatpush1.bf16.msra.mxu0 %v3562
        %4163 = vmatprep.subr.bf16.mxu0 %v3567
        %4164 = vmatpush1.bf16.msra.mxu0 %v3566
        %4165 = vmatprep.subr.bf16.mxu0 %v3571
        %4166 = vmatpush1.bf16.msra.mxu0 %v3570
        %4167 = vmatprep.subr.bf16.mxu0 %v3575
        %4168 = vmatpush1.bf16.msra.mxu0 %v3574
        %4169 = vmatprep.subr.bf16.mxu0 %v3579
        %4170 = vmatpush1.bf16.msra.mxu0 %v3578
        %4171 = vmatprep.mubr.f32.mxu0 %v1420
        %4172 = vmatmul.mubr.f32.gmra.mrb[0].mxu0 %v1419
        %v4173 = vpop.f32.mrb[0].mxu0
        %v4174 = vadd.f32 %v4129, %v4173
        %v4175 = vpop.f32.mrb[0].mxu0
        %v4176 = vadd.f32 %v4131, %v4175
        %4177 = vmatprep.mubr.f32.mxu0 %v1430
        %4178 = vmatmul.mubr.f32.gmra.mrb[0].mxu0 %v1429
        %v4179 = vpop.f32.mrb[0].mxu0
        %v4180 = vadd.f32 %v4135, %v4179
        %v4181 = vpop.f32.mrb[0].mxu0
        %v4182 = vadd.f32 %v4137, %v4181
        %4183 = vdwg.mxu0
        %4184 = vmatprep.subr.bf16.mxu0 %v3583
        %4185 = vmatpush1.bf16.msra.mxu0 %v3582
        %4186 = vmatprep.subr.bf16.mxu0 %v3587
        %4187 = vmatpush1.bf16.msra.mxu0 %v3586
        %4188 = vmatprep.subr.bf16.mxu0 %v3591
        %4189 = vmatpush1.bf16.msra.mxu0 %v3590
        %4190 = vmatprep.subr.bf16.mxu0 %v3595
        %4191 = vmatpush1.bf16.msra.mxu0 %v3594
        %4192 = vmatprep.subr.bf16.mxu0 %v3599
        %4193 = vmatpush1.bf16.msra.mxu0 %v3598
        %4194 = vmatprep.subr.bf16.mxu0 %v3603
        %4195 = vmatpush1.bf16.msra.mxu0 %v3602
        %4196 = vmatprep.subr.bf16.mxu0 %v3607
        %4197 = vmatpush1.bf16.msra.mxu0 %v3606
        %4198 = vmatprep.subr.bf16.mxu0 %v3611
        %4199 = vmatpush1.bf16.msra.mxu0 %v3610
        %4200 = vmatprep.subr.bf16.mxu0 %v3615
        %4201 = vmatpush1.bf16.msra.mxu0 %v3614
        %4202 = vmatprep.subr.bf16.mxu0 %v3619
        %4203 = vmatpush1.bf16.msra.mxu0 %v3618
        %4204 = vmatprep.subr.bf16.mxu0 %v3623
        %4205 = vmatpush1.bf16.msra.mxu0 %v3622
        %4206 = vmatprep.subr.bf16.mxu0 %v3627
        %4207 = vmatpush1.bf16.msra.mxu0 %v3626
        %4208 = vmatprep.subr.bf16.mxu0 %v3631
        %4209 = vmatpush1.bf16.msra.mxu0 %v3630
        %4210 = vmatprep.subr.bf16.mxu0 %v3635
        %4211 = vmatpush1.bf16.msra.mxu0 %v3634
        %4212 = vmatprep.subr.bf16.mxu0 %v3639
        %4213 = vmatpush1.bf16.msra.mxu0 %v3638
        %4214 = vmatprep.subr.bf16.mxu0 %v3643
        %4215 = vmatpush1.bf16.msra.mxu0 %v3642
        %4216 = vmatprep.mubr.f32.mxu0 %v1422
        %4217 = vmatmul.mubr.f32.gmra.mrb[0].mxu0 %v1421
        %v4218 = vpop.f32.mrb[0].mxu0
        %v4219 = vadd.f32 %v4174, %v4218
        %v4220 = vpop.f32.mrb[0].mxu0
        %v4221 = vadd.f32 %v4176, %v4220
        %4222 = vmatprep.mubr.f32.mxu0 %v1432
        %4223 = vmatmul.mubr.f32.gmra.mrb[0].mxu0 %v1431
        %v4224 = vpop.f32.mrb[0].mxu0
        %v4225 = vadd.f32 %v4180, %v4224
        %v4226 = vpop.f32.mrb[0].mxu0
        %v4227 = vadd.f32 %v4182, %v4226
        %4228 = vdwg.mxu0
        %4229 = vmatprep.subr.bf16.mxu0 %v3647
        %4230 = vmatpush1.bf16.msra.mxu0 %v3646
        %4231 = vmatprep.subr.bf16.mxu0 %v3651
        %4232 = vmatpush1.bf16.msra.mxu0 %v3650
        %4233 = vmatprep.subr.bf16.mxu0 %v3655
        %4234 = vmatpush1.bf16.msra.mxu0 %v3654
        %4235 = vmatprep.subr.bf16.mxu0 %v3659
        %4236 = vmatpush1.bf16.msra.mxu0 %v3658
        %4237 = vmatprep.subr.bf16.mxu0 %v3663
        %4238 = vmatpush1.bf16.msra.mxu0 %v3662
        %4239 = vmatprep.subr.bf16.mxu0 %v3667
        %4240 = vmatpush1.bf16.msra.mxu0 %v3666
        %4241 = vmatprep.subr.bf16.mxu0 %v3671
        %4242 = vmatpush1.bf16.msra.mxu0 %v3670
        %4243 = vmatprep.subr.bf16.mxu0 %v3675
        %4244 = vmatpush1.bf16.msra.mxu0 %v3674
        %4245 = vmatprep.subr.bf16.mxu0 %v3679
        %4246 = vmatpush1.bf16.msra.mxu0 %v3678
        %4247 = vmatprep.subr.bf16.mxu0 %v3683
        %4248 = vmatpush1.bf16.msra.mxu0 %v3682
        %4249 = vmatprep.subr.bf16.mxu0 %v3687
        %4250 = vmatpush1.bf16.msra.mxu0 %v3686
        %4251 = vmatprep.subr.bf16.mxu0 %v3691
        %4252 = vmatpush1.bf16.msra.mxu0 %v3690
        %4253 = vmatprep.subr.bf16.mxu0 %v3695
        %4254 = vmatpush1.bf16.msra.mxu0 %v3694
        %4255 = vmatprep.subr.bf16.mxu0 %v3699
        %4256 = vmatpush1.bf16.msra.mxu0 %v3698
        %4257 = vmatprep.subr.bf16.mxu0 %v3703
        %4258 = vmatpush1.bf16.msra.mxu0 %v3702
        %4259 = vmatprep.subr.bf16.mxu0 %v3707
        %4260 = vmatpush1.bf16.msra.mxu0 %v3706
        %4261 = vmatprep.mubr.f32.mxu0 %v1424
        %4262 = vmatmul.mubr.f32.gmra.mrb[0].mxu0 %v1423
        %v4263 = vpop.f32.mrb[0].mxu0
        %v4264 = vadd.f32 %v4219, %v4263
        %v4265 = vpop.f32.mrb[0].mxu0
        %v4266 = vadd.f32 %v4221, %v4265
        %4267 = vmatprep.mubr.f32.mxu0 %v1434
        %4268 = vmatmul.mubr.f32.gmra.mrb[0].mxu0 %v1433
        %v4269 = vpop.f32.mrb[0].mxu0
        %v4270 = vadd.f32 %v4225, %v4269
        %v4271 = vpop.f32.mrb[0].mxu0
        %v4272 = vadd.f32 %v4227, %v4271
        %4273 = vdwg.mxu0
        %4274 = vmatprep.subr.bf16.mxu0 %v3711
        %4275 = vmatpush1.bf16.msra.mxu0 %v3710
        %4276 = vmatprep.subr.bf16.mxu0 %v3715
        %4277 = vmatpush1.bf16.msra.mxu0 %v3714
        %4278 = vmatprep.subr.bf16.mxu0 %v3719
        %4279 = vmatpush1.bf16.msra.mxu0 %v3718
        %4280 = vmatprep.subr.bf16.mxu0 %v3723
        %4281 = vmatpush1.bf16.msra.mxu0 %v3722
        %4282 = vmatprep.subr.bf16.mxu0 %v3727
        %4283 = vmatpush1.bf16.msra.mxu0 %v3726
        %4284 = vmatprep.subr.bf16.mxu0 %v3731
        %4285 = vmatpush1.bf16.msra.mxu0 %v3730
        %4286 = vmatprep.subr.bf16.mxu0 %v3735
        %4287 = vmatpush1.bf16.msra.mxu0 %v3734
        %4288 = vmatprep.subr.bf16.mxu0 %v3739
        %4289 = vmatpush1.bf16.msra.mxu0 %v3738
        %4290 = vmatprep.subr.bf16.mxu0 %v3743
        %4291 = vmatpush1.bf16.msra.mxu0 %v3742
        %4292 = vmatprep.subr.bf16.mxu0 %v3747
        %4293 = vmatpush1.bf16.msra.mxu0 %v3746
        %4294 = vmatprep.subr.bf16.mxu0 %v3751
        %4295 = vmatpush1.bf16.msra.mxu0 %v3750
        %4296 = vmatprep.subr.bf16.mxu0 %v3755
        %4297 = vmatpush1.bf16.msra.mxu0 %v3754
        %4298 = vmatprep.subr.bf16.mxu0 %v3759
        %4299 = vmatpush1.bf16.msra.mxu0 %v3758
        %4300 = vmatprep.subr.bf16.mxu0 %v3763
        %4301 = vmatpush1.bf16.msra.mxu0 %v3762
        %4302 = vmatprep.subr.bf16.mxu0 %v3767
        %4303 = vmatpush1.bf16.msra.mxu0 %v3766
        %4304 = vmatprep.subr.bf16.mxu0 %v3771
        %4305 = vmatpush1.bf16.msra.mxu0 %v3770
        %4306 = vmatprep.mubr.f32.mxu0 %v1426
        %4307 = vmatmul.mubr.f32.gmra.mrb[0].mxu0 %v1425
        %v4308 = vpop.f32.mrb[0].mxu0
        %v4309 = vadd.f32 %v4264, %v4308
        %v4310 = vpop.f32.mrb[0].mxu0
        %v4311 = vadd.f32 %v4266, %v4310
        %4312 = vmatprep.mubr.f32.mxu0 %v1436
        %4313 = vmatmul.mubr.f32.gmra.mrb[0].mxu0 %v1435
        %v4314 = vpop.f32.mrb[0].mxu0
        %v4315 = vadd.f32 %v4270, %v4314
        %v4316 = vpop.f32.mrb[0].mxu0
        %v4317 = vadd.f32 %v4272, %v4316
        %4318 = vdwg.mxu0
        %4319 = vmatprep.subr.bf16.mxu0 %v3457
        %4320 = vmatpush1.bf16.msra.mxu0 %v3456
        %4321 = vmatprep.subr.bf16.mxu0 %v3461
        %4322 = vmatpush1.bf16.msra.mxu0 %v3460
        %4323 = vmatprep.subr.bf16.mxu0 %v3465
        %4324 = vmatpush1.bf16.msra.mxu0 %v3464
        %4325 = vmatprep.subr.bf16.mxu0 %v3469
        %4326 = vmatpush1.bf16.msra.mxu0 %v3468
        %4327 = vmatprep.subr.bf16.mxu0 %v3473
        %4328 = vmatpush1.bf16.msra.mxu0 %v3472
        %4329 = vmatprep.subr.bf16.mxu0 %v3477
        %4330 = vmatpush1.bf16.msra.mxu0 %v3476
        %4331 = vmatprep.subr.bf16.mxu0 %v3481
        %4332 = vmatpush1.bf16.msra.mxu0 %v3480
        %4333 = vmatprep.subr.bf16.mxu0 %v3485
        %4334 = vmatpush1.bf16.msra.mxu0 %v3484
        %4335 = vmatprep.subr.bf16.mxu0 %v3489
        %4336 = vmatpush1.bf16.msra.mxu0 %v3488
        %4337 = vmatprep.subr.bf16.mxu0 %v3493
        %4338 = vmatpush1.bf16.msra.mxu0 %v3492
        %4339 = vmatprep.subr.bf16.mxu0 %v3497
        %4340 = vmatpush1.bf16.msra.mxu0 %v3496
        %4341 = vmatprep.subr.bf16.mxu0 %v3501
        %4342 = vmatpush1.bf16.msra.mxu0 %v3500
        %4343 = vmatprep.subr.bf16.mxu0 %v3505
        %4344 = vmatpush1.bf16.msra.mxu0 %v3504
        %4345 = vmatprep.subr.bf16.mxu0 %v3509
        %4346 = vmatpush1.bf16.msra.mxu0 %v3508
        %4347 = vmatprep.subr.bf16.mxu0 %v3513
        %4348 = vmatpush1.bf16.msra.mxu0 %v3512
        %4349 = vmatprep.subr.bf16.mxu0 %v3517
        %4350 = vmatpush1.bf16.msra.mxu0 %v3516
        %4351 = vmatprep.mubr.f32.mxu0 %v1418
        %4352 = vmatmul.mubr.f32.gmra.mrb[0].mxu0 %v1417
        %v4353 = vpop.f32.mrb[0].mxu0
        %v4354 = vadd.f32 %v2485, %v4353
        %v4355 = vpop.f32.mrb[0].mxu0
        %v4356 = vadd.f32 %v2489, %v4355
        %4357 = vmatprep.mubr.f32.mxu0 %v1428
        %4358 = vmatmul.mubr.f32.gmra.mrb[0].mxu0 %v1427
        %v4359 = vpop.f32.mrb[0].mxu0
        %v4360 = vadd.f32 %v2485, %v4359
        %v4361 = vpop.f32.mrb[0].mxu0
        %v4362 = vadd.f32 %v2489, %v4361
        %4363 = vdwg.mxu0
        %4364 = vmatprep.subr.bf16.mxu0 %v3521
        %4365 = vmatpush1.bf16.msra.mxu0 %v3520
        %4366 = vmatprep.subr.bf16.mxu0 %v3525
        %4367 = vmatpush1.bf16.msra.mxu0 %v3524
        %4368 = vmatprep.subr.bf16.mxu0 %v3529
        %4369 = vmatpush1.bf16.msra.mxu0 %v3528
        %4370 = vmatprep.subr.bf16.mxu0 %v3533
        %4371 = vmatpush1.bf16.msra.mxu0 %v3532
        %4372 = vmatprep.subr.bf16.mxu0 %v3537
        %4373 = vmatpush1.bf16.msra.mxu0 %v3536
        %4374 = vmatprep.subr.bf16.mxu0 %v3541
        %4375 = vmatpush1.bf16.msra.mxu0 %v3540
        %4376 = vmatprep.subr.bf16.mxu0 %v3545
        %4377 = vmatpush1.bf16.msra.mxu0 %v3544
        %4378 = vmatprep.subr.bf16.mxu0 %v3549
        %4379 = vmatpush1.bf16.msra.mxu0 %v3548
        %4380 = vmatprep.subr.bf16.mxu0 %v3553
        %4381 = vmatpush1.bf16.msra.mxu0 %v3552
        %4382 = vmatprep.subr.bf16.mxu0 %v3557
        %4383 = vmatpush1.bf16.msra.mxu0 %v3556
        %4384 = vmatprep.subr.bf16.mxu0 %v3561
        %4385 = vmatpush1.bf16.msra.mxu0 %v3560
        %4386 = vmatprep.subr.bf16.mxu0 %v3565
        %4387 = vmatpush1.bf16.msra.mxu0 %v3564
        %4388 = vmatprep.subr.bf16.mxu0 %v3569
        %4389 = vmatpush1.bf16.msra.mxu0 %v3568
        %4390 = vmatprep.subr.bf16.mxu0 %v3573
        %4391 = vmatpush1.bf16.msra.mxu0 %v3572
        %4392 = vmatprep.subr.bf16.mxu0 %v3577
        %4393 = vmatpush1.bf16.msra.mxu0 %v3576
        %4394 = vmatprep.subr.bf16.mxu0 %v3581
        %4395 = vmatpush1.bf16.msra.mxu0 %v3580
        %4396 = vmatprep.mubr.f32.mxu0 %v1420
        %4397 = vmatmul.mubr.f32.gmra.mrb[0].mxu0 %v1419
        %v4398 = vpop.f32.mrb[0].mxu0
        %v4399 = vadd.f32 %v4354, %v4398
        %v4400 = vpop.f32.mrb[0].mxu0
        %v4401 = vadd.f32 %v4356, %v4400
        %4402 = vmatprep.mubr.f32.mxu0 %v1430
        %4403 = vmatmul.mubr.f32.gmra.mrb[0].mxu0 %v1429
        %v4404 = vpop.f32.mrb[0].mxu0
        %v4405 = vadd.f32 %v4360, %v4404
        %v4406 = vpop.f32.mrb[0].mxu0
        %v4407 = vadd.f32 %v4362, %v4406
        %4408 = vdwg.mxu0
        %4409 = vmatprep.subr.bf16.mxu0 %v3585
        %4410 = vmatpush1.bf16.msra.mxu0 %v3584
        %4411 = vmatprep.subr.bf16.mxu0 %v3589
        %4412 = vmatpush1.bf16.msra.mxu0 %v3588
        %4413 = vmatprep.subr.bf16.mxu0 %v3593
        %4414 = vmatpush1.bf16.msra.mxu0 %v3592
        %4415 = vmatprep.subr.bf16.mxu0 %v3597
        %4416 = vmatpush1.bf16.msra.mxu0 %v3596
        %4417 = vmatprep.subr.bf16.mxu0 %v3601
        %4418 = vmatpush1.bf16.msra.mxu0 %v3600
        %4419 = vmatprep.subr.bf16.mxu0 %v3605
        %4420 = vmatpush1.bf16.msra.mxu0 %v3604
        %4421 = vmatprep.subr.bf16.mxu0 %v3609
        %4422 = vmatpush1.bf16.msra.mxu0 %v3608
        %4423 = vmatprep.subr.bf16.mxu0 %v3613
        %4424 = vmatpush1.bf16.msra.mxu0 %v3612
        %4425 = vmatprep.subr.bf16.mxu0 %v3617
        %4426 = vmatpush1.bf16.msra.mxu0 %v3616
        %4427 = vmatprep.subr.bf16.mxu0 %v3621
        %4428 = vmatpush1.bf16.msra.mxu0 %v3620
        %4429 = vmatprep.subr.bf16.mxu0 %v3625
        %4430 = vmatpush1.bf16.msra.mxu0 %v3624
        %4431 = vmatprep.subr.bf16.mxu0 %v3629
        %4432 = vmatpush1.bf16.msra.mxu0 %v3628
        %4433 = vmatprep.subr.bf16.mxu0 %v3633
        %4434 = vmatpush1.bf16.msra.mxu0 %v3632
        %4435 = vmatprep.subr.bf16.mxu0 %v3637
        %4436 = vmatpush1.bf16.msra.mxu0 %v3636
        %4437 = vmatprep.subr.bf16.mxu0 %v3641
        %4438 = vmatpush1.bf16.msra.mxu0 %v3640
        %4439 = vmatprep.subr.bf16.mxu0 %v3645
        %4440 = vmatpush1.bf16.msra.mxu0 %v3644
        %4441 = vmatprep.mubr.f32.mxu0 %v1422
        %4442 = vmatmul.mubr.f32.gmra.mrb[0].mxu0 %v1421
        %v4443 = vpop.f32.mrb[0].mxu0
        %v4444 = vadd.f32 %v4399, %v4443
        %v4445 = vpop.f32.mrb[0].mxu0
        %v4446 = vadd.f32 %v4401, %v4445
        %4447 = vmatprep.mubr.f32.mxu0 %v1432
        %4448 = vmatmul.mubr.f32.gmra.mrb[0].mxu0 %v1431
        %v4449 = vpop.f32.mrb[0].mxu0
        %v4450 = vadd.f32 %v4405, %v4449
        %v4451 = vpop.f32.mrb[0].mxu0
        %v4452 = vadd.f32 %v4407, %v4451
        %4453 = vdwg.mxu0
        %4454 = vmatprep.subr.bf16.mxu0 %v3649
        %4455 = vmatpush1.bf16.msra.mxu0 %v3648
        %4456 = vmatprep.subr.bf16.mxu0 %v3653
        %4457 = vmatpush1.bf16.msra.mxu0 %v3652
        %4458 = vmatprep.subr.bf16.mxu0 %v3657
        %4459 = vmatpush1.bf16.msra.mxu0 %v3656
        %4460 = vmatprep.subr.bf16.mxu0 %v3661
        %4461 = vmatpush1.bf16.msra.mxu0 %v3660
        %4462 = vmatprep.subr.bf16.mxu0 %v3665
        %4463 = vmatpush1.bf16.msra.mxu0 %v3664
        %4464 = vmatprep.subr.bf16.mxu0 %v3669
        %4465 = vmatpush1.bf16.msra.mxu0 %v3668
        %4466 = vmatprep.subr.bf16.mxu0 %v3673
        %4467 = vmatpush1.bf16.msra.mxu0 %v3672
        %4468 = vmatprep.subr.bf16.mxu0 %v3677
        %4469 = vmatpush1.bf16.msra.mxu0 %v3676
        %4470 = vmatprep.subr.bf16.mxu0 %v3681
        %4471 = vmatpush1.bf16.msra.mxu0 %v3680
        %4472 = vmatprep.subr.bf16.mxu0 %v3685
        %4473 = vmatpush1.bf16.msra.mxu0 %v3684
        %4474 = vmatprep.subr.bf16.mxu0 %v3689
        %4475 = vmatpush1.bf16.msra.mxu0 %v3688
        %4476 = vmatprep.subr.bf16.mxu0 %v3693
        %4477 = vmatpush1.bf16.msra.mxu0 %v3692
        %4478 = vmatprep.subr.bf16.mxu0 %v3697
        %4479 = vmatpush1.bf16.msra.mxu0 %v3696
        %4480 = vmatprep.subr.bf16.mxu0 %v3701
        %4481 = vmatpush1.bf16.msra.mxu0 %v3700
        %4482 = vmatprep.subr.bf16.mxu0 %v3705
        %4483 = vmatpush1.bf16.msra.mxu0 %v3704
        %4484 = vmatprep.subr.bf16.mxu0 %v3709
        %4485 = vmatpush1.bf16.msra.mxu0 %v3708
        %4486 = vmatprep.mubr.f32.mxu0 %v1424
        %4487 = vmatmul.mubr.f32.gmra.mrb[0].mxu0 %v1423
        %v4488 = vpop.f32.mrb[0].mxu0
        %v4489 = vadd.f32 %v4444, %v4488
        %v4490 = vpop.f32.mrb[0].mxu0
        %v4491 = vadd.f32 %v4446, %v4490
        %4492 = vmatprep.mubr.f32.mxu0 %v1434
        %4493 = vmatmul.mubr.f32.gmra.mrb[0].mxu0 %v1433
        %v4494 = vpop.f32.mrb[0].mxu0
        %v4495 = vadd.f32 %v4450, %v4494
        %v4496 = vpop.f32.mrb[0].mxu0
        %v4497 = vadd.f32 %v4452, %v4496
        %4498 = vdwg.mxu0
        %4499 = vmatprep.subr.bf16.mxu0 %v3713
        %4500 = vmatpush1.bf16.msra.mxu0 %v3712
        %4501 = vmatprep.subr.bf16.mxu0 %v3717
        %4502 = vmatpush1.bf16.msra.mxu0 %v3716
        %4503 = vmatprep.subr.bf16.mxu0 %v3721
        %4504 = vmatpush1.bf16.msra.mxu0 %v3720
        %4505 = vmatprep.subr.bf16.mxu0 %v3725
        %4506 = vmatpush1.bf16.msra.mxu0 %v3724
        %4507 = vmatprep.subr.bf16.mxu0 %v3729
        %4508 = vmatpush1.bf16.msra.mxu0 %v3728
        %4509 = vmatprep.subr.bf16.mxu0 %v3733
        %4510 = vmatpush1.bf16.msra.mxu0 %v3732
        %4511 = vmatprep.subr.bf16.mxu0 %v3737
        %4512 = vmatpush1.bf16.msra.mxu0 %v3736
        %4513 = vmatprep.subr.bf16.mxu0 %v3741
        %4514 = vmatpush1.bf16.msra.mxu0 %v3740
        %4515 = vmatprep.subr.bf16.mxu0 %v3745
        %4516 = vmatpush1.bf16.msra.mxu0 %v3744
        %4517 = vmatprep.subr.bf16.mxu0 %v3749
        %4518 = vmatpush1.bf16.msra.mxu0 %v3748
        %4519 = vmatprep.subr.bf16.mxu0 %v3753
        %4520 = vmatpush1.bf16.msra.mxu0 %v3752
        %4521 = vmatprep.subr.bf16.mxu0 %v3757
        %4522 = vmatpush1.bf16.msra.mxu0 %v3756
        %4523 = vmatprep.subr.bf16.mxu0 %v3761
        %4524 = vmatpush1.bf16.msra.mxu0 %v3760
        %4525 = vmatprep.subr.bf16.mxu0 %v3765
        %4526 = vmatpush1.bf16.msra.mxu0 %v3764
        %4527 = vmatprep.subr.bf16.mxu0 %v3769
        %4528 = vmatpush1.bf16.msra.mxu0 %v3768
        %4529 = vmatprep.subr.bf16.mxu0 %v3773
        %4530 = vmatpush1.bf16.msra.mxu0 %v3772
        %4531 = vmatprep.mubr.f32.mxu0 %v1426
        %4532 = vmatmul.mubr.f32.gmra.mrb[0].mxu0 %v1425
        %v4533 = vpop.f32.mrb[0].mxu0
        %v4534 = vadd.f32 %v4489, %v4533
        %v4535 = vpop.f32.mrb[0].mxu0
        %v4536 = vadd.f32 %v4491, %v4535
        %4537 = vmatprep.mubr.f32.mxu0 %v1436
        %4538 = vmatmul.mubr.f32.gmra.mrb[0].mxu0 %v1435
        %v4539 = vpop.f32.mrb[0].mxu0
        %v4540 = vadd.f32 %v4495, %v4539
        %v4541 = vpop.f32.mrb[0].mxu0
        %v4542 = vadd.f32 %v4497, %v4541
        %4543 = vdwg.mxu0
        %4544 = vmatprep.subr.mxu0 %v4311
        %4545 = vmatpush1.xpose.msra.mxu0 %v4309
        %4546 = vmatprep.subr.mxu0 %v4317
        %4547 = vmatpush1.xpose.msra.mxu0 %v4315
        %4548 = vmatprep.subr.mxu0 0.0
        %4549 = vmatpush1.xpose.msra.mxu0 0.0
        %4550 = vmatprep.subr.mxu0 0.0
        %4551 = vmatpush1.xpose.msra.mxu0 0.0
        %4552 = vmatprep.subr.mxu0 0.0
        %4553 = vmatpush1.xpose.msra.mxu0 0.0
        %4554 = vmatprep.subr.mxu0 0.0
        %4555 = vmatpush1.xpose.msra.mxu0 0.0
        %4556 = vmatprep.subr.mxu0 0.0
        %4557 = vmatpush1.xpose.msra.mxu0 0.0
        %4558 = vmatprep.subr.mxu0 0.0
        %4559 = vmatpush1.xpose.msra.mxu0 0.0
        %4560 = vmatprep.subr.mxu0 0.0
        %4561 = vmatpush1.xpose.msra.mxu0 0.0
        %4562 = vmatprep.subr.mxu0 0.0
        %4563 = vmatpush1.xpose.msra.mxu0 0.0
        %4564 = vmatprep.subr.mxu0 0.0
        %4565 = vmatpush1.xpose.msra.mxu0 0.0
        %4566 = vmatprep.subr.mxu0 0.0
        %4567 = vmatpush1.xpose.msra.mxu0 0.0
        %4568 = vmatprep.subr.mxu0 0.0
        %4569 = vmatpush1.xpose.msra.mxu0 0.0
        %4570 = vmatprep.subr.mxu0 0.0
        %4571 = vmatpush1.xpose.msra.mxu0 0.0
        %4572 = vmatprep.subr.mxu0 0.0
        %4573 = vmatpush1.xpose.msra.mxu0 0.0
        %4574 = vmatprep.subr.mxu0 0.0
        %4575 = vmatpush1.xpose.msra.mxu0 0.0
        %4576 = vmatprep.subr.mxu0 0.0
        %4577 = vmatpush1.xpose.msra.mxu0 0.0
        %4578 = vmatprep.subr.mxu0 0.0
        %4579 = vmatpush1.xpose.msra.mxu0 0.0
        %4580 = vmatprep.subr.mxu0 0.0
        %4581 = vmatpush1.xpose.msra.mxu0 0.0
        %4582 = vmatprep.subr.mxu0 0.0
        %4583 = vmatpush1.xpose.msra.mxu0 0.0
        %4584 = vmatprep.subr.mxu0 0.0
        %4585 = vmatpush1.xpose.msra.mxu0 0.0
        %4586 = vmatprep.subr.mxu0 0.0
        %4587 = vmatpush1.xpose.msra.mxu0 0.0
        %4588 = vmatprep.subr.mxu0 0.0
        %4589 = vmatpush1.xpose.msra.mxu0 0.0
        %4590 = vmatprep.subr.mxu0 0.0
        %4591 = vmatpush1.xpose.msra.mxu0 0.0
        %4592 = vmatprep.subr.mxu0 0.0
        %4593 = vmatpush1.xpose.msra.mxu0 0.0
        %4594 = vmatprep.subr.mxu0 0.0
        %4595 = vmatpush1.xpose.msra.mxu0 0.0
        %4596 = vmatprep.subr.mxu0 0.0
        %4597 = vmatpush1.xpose.msra.mxu0 0.0
        %4598 = vmatprep.subr.mxu0 0.0
        %4599 = vmatpush1.xpose.msra.mxu0 0.0
        %4600 = vmatprep.subr.mxu0 0.0
        %4601 = vmatpush1.xpose.msra.mxu0 0.0
        %4602 = vmatprep.subr.mxu0 0.0
        %4603 = vmatpush1.xpose.msra.mxu0 0.0
        %4604 = vmatprep.subr.mxu0 0.0
        %4605 = vmatpush1.xpose.msra.mxu0 0.0
        %4606 = vmatprep.subr.mxu0 0.0
        %4607 = vmatpush1.xpose.msra.mxu0 0.0
        %4608 = vmatprep.mubr.f32.mxu0 %v2465
        %4609 = vmatmul.mubr.f32.gmra.mrb[0].mxu0 %v2463
        %v4610 = vpop.f32.mrb[0].mxu0
        %v4611 = vadd.f32 0.0, %v4610
        %v4612 = vpop.f32.mrb[0].mxu0
        %4613 = vmatprep.mubr.f32.mxu0 %v2471
        %4614 = vmatmul.mubr.f32.gmra.mrb[0].mxu0 %v2469
        %v4615 = vpop.f32.mrb[0].mxu0
        %v4616 = vadd.f32 0.0, %v4615
        %v4617 = vpop.f32.mrb[0].mxu0
        %4618 = vdwg.mxu0
        %v4619 = vmul.f32 %v4611, 0.0625
        %v4620 = vmul.f32 %v4616, 0.0625
        %vm4621 = vcmask 130048
        %v4622 = vsel %vm4621, %v4619, -inf
        %4623 = vmax.xlane.f32.xlu0 %v4622
        %v4624 = vpop.xlane.xlu0 %4623
        %vm4625 = vcmask 124928
        %v4626 = vsel %vm4625, %v4620, -inf
        %4627 = vmax.xlane.f32.xlu0 %v4626
        %v4628 = vpop.xlane.xlu0 %4627
        %v4629 = vsub.f32 %v4619, %v4624
        %v4630 = vsub.f32 %v4620, %v4628
        %v4631 = vmul.f32 %v4629, 1.442695
        %v4632 = vpow.pop %v4631
        %v4633 = vmul.f32 %v4630, 1.442695
        %v4634 = vpow.pop %v4633
        %v4635 = vsel %vm4621, %v4632, 0.0
        %4636 = vadd.xlane.f32.xlu0 %v4635
        %v4637 = vpop.xlane.xlu0 %4636
        %v4638 = vsel %vm4625, %v4634, 0.0
        %4639 = vadd.xlane.f32.xlu0 %v4638
        %v4640 = vpop.xlane.xlu0 %4639
        %v4641 = vrcp.pop %v4637
        %v4642 = vrcp.pop %v4640
        %v4643 = vmul.f32 %v4632, %v4641
        %v4644 = vmul.f32 %v4634, %v4642
        %v4646 = vsel %vm4621, %v4643, 0
        %v4649 = vsel %vm4621, %v4644, 0
        %4651 = vmatprep.subr.mxu0 %v4536
        %4652 = vmatpush1.msra.mxu0 %v4534
        %4653 = vmatprep.subr.mxu0 %v4542
        %4654 = vmatpush1.msra.mxu0 %v4540
        %4655 = vmatprep.subr.mxu0 0.0
        %4656 = vmatpush1.msra.mxu0 0.0
        %4657 = vmatprep.subr.mxu0 0.0
        %4658 = vmatpush1.msra.mxu0 0.0
        %4659 = vmatprep.subr.mxu0 0.0
        %4660 = vmatpush1.msra.mxu0 0.0
        %4661 = vmatprep.subr.mxu0 0.0
        %4662 = vmatpush1.msra.mxu0 0.0
        %4663 = vmatprep.subr.mxu0 0.0
        %4664 = vmatpush1.msra.mxu0 0.0
        %4665 = vmatprep.subr.mxu0 0.0
        %4666 = vmatpush1.msra.mxu0 0.0
        %4667 = vmatprep.subr.mxu0 0.0
        %4668 = vmatpush1.msra.mxu0 0.0
        %4669 = vmatprep.subr.mxu0 0.0
        %4670 = vmatpush1.msra.mxu0 0.0
        %4671 = vmatprep.subr.mxu0 0.0
        %4672 = vmatpush1.msra.mxu0 0.0
        %4673 = vmatprep.subr.mxu0 0.0
        %4674 = vmatpush1.msra.mxu0 0.0
        %4675 = vmatprep.subr.mxu0 0.0
        %4676 = vmatpush1.msra.mxu0 0.0
        %4677 = vmatprep.subr.mxu0 0.0
        %4678 = vmatpush1.msra.mxu0 0.0
        %4679 = vmatprep.subr.mxu0 0.0
        %4680 = vmatpush1.msra.mxu0 0.0
        %4681 = vmatprep.subr.mxu0 0.0
        %4682 = vmatpush1.msra.mxu0 0.0
        %4683 = vmatprep.subr.mxu0 0.0
        %4684 = vmatpush1.msra.mxu0 0.0
        %4685 = vmatprep.subr.mxu0 0.0
        %4686 = vmatpush1.msra.mxu0 0.0
        %4687 = vmatprep.subr.mxu0 0.0
        %4688 = vmatpush1.msra.mxu0 0.0
        %4689 = vmatprep.subr.mxu0 0.0
        %4690 = vmatpush1.msra.mxu0 0.0
        %4691 = vmatprep.subr.mxu0 0.0
        %4692 = vmatpush1.msra.mxu0 0.0
        %4693 = vmatprep.subr.mxu0 0.0
        %4694 = vmatpush1.msra.mxu0 0.0
        %4695 = vmatprep.subr.mxu0 0.0
        %4696 = vmatpush1.msra.mxu0 0.0
        %4697 = vmatprep.subr.mxu0 0.0
        %4698 = vmatpush1.msra.mxu0 0.0
        %4699 = vmatprep.subr.mxu0 0.0
        %4700 = vmatpush1.msra.mxu0 0.0
        %4701 = vmatprep.subr.mxu0 0.0
        %4702 = vmatpush1.msra.mxu0 0.0
        %4703 = vmatprep.subr.mxu0 0.0
        %4704 = vmatpush1.msra.mxu0 0.0
        %4705 = vmatprep.subr.mxu0 0.0
        %4706 = vmatpush1.msra.mxu0 0.0
        %4707 = vmatprep.subr.mxu0 0.0
        %4708 = vmatpush1.msra.mxu0 0.0
        %4709 = vmatprep.subr.mxu0 0.0
        %4710 = vmatpush1.msra.mxu0 0.0
        %4711 = vmatprep.subr.mxu0 0.0
        %4712 = vmatpush1.msra.mxu0 0.0
        %4713 = vmatprep.subr.mxu0 0.0
        %4714 = vmatpush1.msra.mxu0 0.0
        %4715 = vmatprep.mubr.f32.mxu0 0.0
        %4716 = vmatmul.mubr.f32.gmra.mrb[0].mxu0 %v4646
        %v4717 = vpop.f32.mrb[0].mxu0
        %v4718 = vadd.f32 0.0, %v4717
        %v4719 = vpop.f32.mrb[0].mxu0
        %v4720 = vadd.f32 0.0, %v4719
        %4721 = vmatprep.mubr.f32.mxu0 0.0
        %4722 = vmatmul.mubr.f32.gmra.mrb[0].mxu0 %v4649
        %v4723 = vpop.f32.mrb[0].mxu0
        %v4724 = vadd.f32 0.0, %v4723
        %v4725 = vpop.f32.mrb[0].mxu0
        %v4726 = vadd.f32 0.0, %v4725
        %4727 = vdwg.mxu0
        %v4728 = vld [vmem:[#allocation3] sm:$0xff]
        %v4729 = vld [vmem:[#allocation3 + $0x8] sm:$0xff]
        %v4730 = vld [vmem:[#allocation3 + $0x10] sm:$0xff]
        %v4731 = vld [vmem:[#allocation3 + $0x18] sm:$0xff]
        %v4732 = vld [vmem:[#allocation3 + $0x20] sm:$0xff]
        %v4733 = vld [vmem:[#allocation3 + $0x28] sm:$0xff]
        %v4734 = vld [vmem:[#allocation3 + $0x30] sm:$0xff]
        %v4735 = vld [vmem:[#allocation3 + $0x38] sm:$0xff]
        %v4736 = vld [vmem:[#allocation3 + $0x40] sm:$0xff]
        %v4737 = vld [vmem:[#allocation3 + $0x48] sm:$0xff]
        %v4738 = vld [vmem:[#allocation3 + $0x50] sm:$0x7]
        %v4739 = vld [vmem:[#allocation3 + $0x58] sm:$0x7]
        %v4740 = vld [vmem:[#allocation3 + $0x60] sm:$0x7]
        %v4741 = vld [vmem:[#allocation3 + $0x68] sm:$0x7]
        %v4742 = vld [vmem:[#allocation3 + $0x70] sm:$0x7]
        %v4743 = vld [vmem:[#allocation3 + $0x78] sm:$0x7]
        %v4744 = vld [vmem:[#allocation3 + $0x80] sm:$0x7]
        %v4745 = vld [vmem:[#allocation3 + $0x88] sm:$0x7]
        %v4746 = vld [vmem:[#allocation3 + $0x90] sm:$0x7]
        %v4747 = vld [vmem:[#allocation3 + $0x98] sm:$0x7]
        %v4908 = vunpack.c.l.b16 %v1235
        %v4909 = vunpack.c.h.b16 %v1235
        %v4910 = vunpack.c.l.b16 %v1236
        %v4911 = vunpack.c.h.b16 %v1236
        %v4912 = vunpack.c.l.b16 %v1237
        %v4913 = vunpack.c.h.b16 %v1237
        %v4914 = vunpack.c.l.b16 %v1238
        %v4915 = vunpack.c.h.b16 %v1238
        %v4916 = vunpack.c.l.b16 %v1239
        %v4917 = vunpack.c.h.b16 %v1239
        %v4918 = vunpack.c.l.b16 %v1240
        %v4919 = vunpack.c.h.b16 %v1240
        %v4920 = vunpack.c.l.b16 %v1241
        %v4921 = vunpack.c.h.b16 %v1241
        %v4922 = vunpack.c.l.b16 %v1242
        %v4923 = vunpack.c.h.b16 %v1242
        %v4924 = vunpack.c.l.b16 %v1243
        %v4925 = vunpack.c.h.b16 %v1243
        %v4926 = vunpack.c.l.b16 %v1244
        %v4927 = vunpack.c.h.b16 %v1244
        %v4928 = vunpack.c.l.b16 %v1245
        %v4929 = vunpack.c.h.b16 %v1245
        %v4930 = vunpack.c.l.b16 %v1246
        %v4931 = vunpack.c.h.b16 %v1246
        %v4932 = vunpack.c.l.b16 %v1247
        %v4933 = vunpack.c.h.b16 %v1247
        %v4934 = vunpack.c.l.b16 %v1248
        %v4935 = vunpack.c.h.b16 %v1248
        %v4936 = vunpack.c.l.b16 %v1249
        %v4937 = vunpack.c.h.b16 %v1249
        %v4938 = vunpack.c.l.b16 %v1250
        %v4939 = vunpack.c.h.b16 %v1250
        %v4940 = vunpack.c.l.b16 %v1251
        %v4941 = vunpack.c.h.b16 %v1251
        %v4942 = vunpack.c.l.b16 %v1252
        %v4943 = vunpack.c.h.b16 %v1252
        %v4944 = vunpack.c.l.b16 %v1253
        %v4945 = vunpack.c.h.b16 %v1253
        %v4946 = vunpack.c.l.b16 %v1254
        %v4947 = vunpack.c.h.b16 %v1254
        %v4948 = vunpack.c.l.b16 %v1255
        %v4949 = vunpack.c.h.b16 %v1255
        %v4950 = vunpack.c.l.b16 %v1256
        %v4951 = vunpack.c.h.b16 %v1256
        %v4952 = vunpack.c.l.b16 %v1257
        %v4953 = vunpack.c.h.b16 %v1257
        %v4954 = vunpack.c.l.b16 %v1258
        %v4955 = vunpack.c.h.b16 %v1258
        %v4956 = vunpack.c.l.b16 %v1259
        %v4957 = vunpack.c.h.b16 %v1259
        %v4958 = vunpack.c.l.b16 %v1260
        %v4959 = vunpack.c.h.b16 %v1260
        %v4960 = vunpack.c.l.b16 %v1261
        %v4961 = vunpack.c.h.b16 %v1261
        %v4962 = vunpack.c.l.b16 %v1262
        %v4963 = vunpack.c.h.b16 %v1262
        %v4964 = vunpack.c.l.b16 %v1263
        %v4965 = vunpack.c.h.b16 %v1263
        %v4966 = vunpack.c.l.b16 %v1264
        %v4967 = vunpack.c.h.b16 %v1264
        %v4968 = vunpack.c.l.b16 %v1265
        %v4969 = vunpack.c.h.b16 %v1265
        %v4970 = vunpack.c.l.b16 %v1266
        %v4971 = vunpack.c.h.b16 %v1266
        %v4972 = vunpack.c.l.b16 %v1267
        %v4973 = vunpack.c.h.b16 %v1267
        %v4974 = vunpack.c.l.b16 %v1268
        %v4975 = vunpack.c.h.b16 %v1268
        %v4976 = vunpack.c.l.b16 %v1269
        %v4977 = vunpack.c.h.b16 %v1269
        %v4978 = vunpack.c.l.b16 %v1270
        %v4979 = vunpack.c.h.b16 %v1270
        %v4980 = vunpack.c.l.b16 %v1271
        %v4981 = vunpack.c.h.b16 %v1271
        %v4982 = vunpack.c.l.b16 %v1272
        %v4983 = vunpack.c.h.b16 %v1272
        %v4984 = vunpack.c.l.b16 %v1273
        %v4985 = vunpack.c.h.b16 %v1273
        %v4986 = vunpack.c.l.b16 %v1274
        %v4987 = vunpack.c.h.b16 %v1274
        %v4988 = vunpack.c.l.b16 %v1275
        %v4989 = vunpack.c.h.b16 %v1275
        %v4990 = vunpack.c.l.b16 %v1276
        %v4991 = vunpack.c.h.b16 %v1276
        %v4992 = vunpack.c.l.b16 %v1277
        %v4993 = vunpack.c.h.b16 %v1277
        %v4994 = vunpack.c.l.b16 %v1278
        %v4995 = vunpack.c.h.b16 %v1278
        %v4996 = vunpack.c.l.b16 %v1279
        %v4997 = vunpack.c.h.b16 %v1279
        %v4998 = vunpack.c.l.b16 %v1280
        %v4999 = vunpack.c.h.b16 %v1280
        %v5000 = vunpack.c.l.b16 %v1281
        %v5001 = vunpack.c.h.b16 %v1281
        %v5002 = vunpack.c.l.b16 %v1282
        %v5003 = vunpack.c.h.b16 %v1282
        %v5004 = vunpack.c.l.b16 %v1283
        %v5005 = vunpack.c.h.b16 %v1283
        %v5006 = vunpack.c.l.b16 %v1284
        %v5007 = vunpack.c.h.b16 %v1284
        %v5008 = vunpack.c.l.b16 %v1285
        %v5009 = vunpack.c.h.b16 %v1285
        %v5010 = vunpack.c.l.b16 %v1286
        %v5011 = vunpack.c.h.b16 %v1286
        %v5012 = vunpack.c.l.b16 %v1287
        %v5013 = vunpack.c.h.b16 %v1287
        %v5014 = vunpack.c.l.b16 %v1288
        %v5015 = vunpack.c.h.b16 %v1288
        %v5016 = vunpack.c.l.b16 %v1289
        %v5017 = vunpack.c.h.b16 %v1289
        %v5018 = vunpack.c.l.b16 %v1290
        %v5019 = vunpack.c.h.b16 %v1290
        %v5020 = vunpack.c.l.b16 %v1291
        %v5021 = vunpack.c.h.b16 %v1291
        %v5022 = vunpack.c.l.b16 %v1292
        %v5023 = vunpack.c.h.b16 %v1292
        %v5024 = vunpack.c.l.b16 %v1293
        %v5025 = vunpack.c.h.b16 %v1293
        %v5026 = vunpack.c.l.b16 %v1294
        %v5027 = vunpack.c.h.b16 %v1294
        %v5028 = vunpack.c.l.b16 %v1295
        %v5029 = vunpack.c.h.b16 %v1295
        %v5030 = vunpack.c.l.b16 %v1296
        %v5031 = vunpack.c.h.b16 %v1296
        %v5032 = vunpack.c.l.b16 %v1297
        %v5033 = vunpack.c.h.b16 %v1297
        %v5034 = vunpack.c.l.b16 %v1298
        %v5035 = vunpack.c.h.b16 %v1298
        %v5036 = vunpack.c.l.b16 %v1299
        %v5037 = vunpack.c.h.b16 %v1299
        %v5038 = vunpack.c.l.b16 %v1300
        %v5039 = vunpack.c.h.b16 %v1300
        %v5040 = vunpack.c.l.b16 %v1301
        %v5041 = vunpack.c.h.b16 %v1301
        %v5042 = vunpack.c.l.b16 %v1302
        %v5043 = vunpack.c.h.b16 %v1302
        %v5044 = vunpack.c.l.b16 %v1303
        %v5045 = vunpack.c.h.b16 %v1303
        %v5046 = vunpack.c.l.b16 %v1304
        %v5047 = vunpack.c.h.b16 %v1304
        %v5048 = vunpack.c.l.b16 %v1305
        %v5049 = vunpack.c.h.b16 %v1305
        %v5050 = vunpack.c.l.b16 %v1306
        %v5051 = vunpack.c.h.b16 %v1306
        %v5052 = vunpack.c.l.b16 %v1307
        %v5053 = vunpack.c.h.b16 %v1307
        %v5054 = vunpack.c.l.b16 %v1308
        %v5055 = vunpack.c.h.b16 %v1308
        %v5056 = vunpack.c.l.b16 %v1309
        %v5057 = vunpack.c.h.b16 %v1309
        %v5058 = vunpack.c.l.b16 %v1310
        %v5059 = vunpack.c.h.b16 %v1310
        %v5060 = vunpack.c.l.b16 %v1311
        %v5061 = vunpack.c.h.b16 %v1311
        %v5062 = vunpack.c.l.b16 %v1312
        %v5063 = vunpack.c.h.b16 %v1312
        %v5064 = vunpack.c.l.b16 %v1313
        %v5065 = vunpack.c.h.b16 %v1313
        %v5066 = vunpack.c.l.b16 %v1314
        %v5067 = vunpack.c.h.b16 %v1314
        %v5068 = vunpack.c.l.b16 %v1315
        %v5069 = vunpack.c.h.b16 %v1315
        %v5070 = vunpack.c.l.b16 %v1316
        %v5071 = vunpack.c.h.b16 %v1316
        %v5072 = vunpack.c.l.b16 %v1317
        %v5073 = vunpack.c.h.b16 %v1317
        %v5074 = vunpack.c.l.b16 %v1318
        %v5075 = vunpack.c.h.b16 %v1318
        %v5076 = vunpack.c.l.b16 %v1319
        %v5077 = vunpack.c.h.b16 %v1319
        %v5078 = vunpack.c.l.b16 %v1320
        %v5079 = vunpack.c.h.b16 %v1320
        %v5080 = vunpack.c.l.b16 %v1321
        %v5081 = vunpack.c.h.b16 %v1321
        %v5082 = vunpack.c.l.b16 %v1322
        %v5083 = vunpack.c.h.b16 %v1322
        %v5084 = vunpack.c.l.b16 %v1323
        %v5085 = vunpack.c.h.b16 %v1323
        %v5086 = vunpack.c.l.b16 %v1324
        %v5087 = vunpack.c.h.b16 %v1324
        %v5088 = vunpack.c.l.b16 %v1325
        %v5089 = vunpack.c.h.b16 %v1325
        %v5090 = vunpack.c.l.b16 %v1326
        %v5091 = vunpack.c.h.b16 %v1326
        %v5092 = vunpack.c.l.b16 %v1327
        %v5093 = vunpack.c.h.b16 %v1327
        %v5094 = vunpack.c.l.b16 %v1328
        %v5095 = vunpack.c.h.b16 %v1328
        %v5096 = vunpack.c.l.b16 %v1329
        %v5097 = vunpack.c.h.b16 %v1329
        %v5098 = vunpack.c.l.b16 %v1330
        %v5099 = vunpack.c.h.b16 %v1330
        %v5100 = vunpack.c.l.b16 %v1331
        %v5101 = vunpack.c.h.b16 %v1331
        %v5102 = vunpack.c.l.b16 %v1332
        %v5103 = vunpack.c.h.b16 %v1332
        %v5104 = vunpack.c.l.b16 %v1333
        %v5105 = vunpack.c.h.b16 %v1333
        %v5106 = vunpack.c.l.b16 %v1334
        %v5107 = vunpack.c.h.b16 %v1334
        %v5108 = vunpack.c.l.b16 %v1335
        %v5109 = vunpack.c.h.b16 %v1335
        %v5110 = vunpack.c.l.b16 %v1336
        %v5111 = vunpack.c.h.b16 %v1336
        %v5112 = vunpack.c.l.b16 %v1337
        %v5113 = vunpack.c.h.b16 %v1337
        %v5114 = vunpack.c.l.b16 %v1338
        %v5115 = vunpack.c.h.b16 %v1338
        %v5116 = vunpack.c.l.b16 %v1339
        %v5117 = vunpack.c.h.b16 %v1339
        %v5118 = vunpack.c.l.b16 %v1340
        %v5119 = vunpack.c.h.b16 %v1340
        %v5120 = vunpack.c.l.b16 %v1341
        %v5121 = vunpack.c.h.b16 %v1341
        %v5122 = vunpack.c.l.b16 %v1342
        %v5123 = vunpack.c.h.b16 %v1342
        %v5124 = vunpack.c.l.b16 %v1343
        %v5125 = vunpack.c.h.b16 %v1343
        %v5126 = vunpack.c.l.b16 %v1344
        %v5127 = vunpack.c.h.b16 %v1344
        %v5128 = vunpack.c.l.b16 %v1345
        %v5129 = vunpack.c.h.b16 %v1345
        %v5130 = vunpack.c.l.b16 %v1346
        %v5131 = vunpack.c.h.b16 %v1346
        %v5132 = vunpack.c.l.b16 %v1347
        %v5133 = vunpack.c.h.b16 %v1347
        %v5134 = vunpack.c.l.b16 %v1348
        %v5135 = vunpack.c.h.b16 %v1348
        %v5136 = vunpack.c.l.b16 %v1349
        %v5137 = vunpack.c.h.b16 %v1349
        %v5138 = vunpack.c.l.b16 %v1350
        %v5139 = vunpack.c.h.b16 %v1350
        %v5140 = vunpack.c.l.b16 %v1351
        %v5141 = vunpack.c.h.b16 %v1351
        %v5142 = vunpack.c.l.b16 %v1352
        %v5143 = vunpack.c.h.b16 %v1352
        %v5144 = vunpack.c.l.b16 %v1353
        %v5145 = vunpack.c.h.b16 %v1353
        %v5146 = vunpack.c.l.b16 %v1354
        %v5147 = vunpack.c.h.b16 %v1354
        %v5148 = vunpack.c.l.b16 %v1355
        %v5149 = vunpack.c.h.b16 %v1355
        %v5150 = vunpack.c.l.b16 %v1356
        %v5151 = vunpack.c.h.b16 %v1356
        %v5152 = vunpack.c.l.b16 %v1357
        %v5153 = vunpack.c.h.b16 %v1357
        %v5154 = vunpack.c.l.b16 %v1358
        %v5155 = vunpack.c.h.b16 %v1358
        %v5156 = vunpack.c.l.b16 %v1359
        %v5157 = vunpack.c.h.b16 %v1359
        %v5158 = vunpack.c.l.b16 %v1360
        %v5159 = vunpack.c.h.b16 %v1360
        %v5160 = vunpack.c.l.b16 %v1361
        %v5161 = vunpack.c.h.b16 %v1361
        %v5162 = vunpack.c.l.b16 %v1362
        %v5163 = vunpack.c.h.b16 %v1362
        %v5164 = vunpack.c.l.b16 %v1363
        %v5165 = vunpack.c.h.b16 %v1363
        %v5166 = vunpack.c.l.b16 %v1364
        %v5167 = vunpack.c.h.b16 %v1364
        %v5168 = vunpack.c.l.b16 %v1365
        %v5169 = vunpack.c.h.b16 %v1365
        %v5170 = vunpack.c.l.b16 %v1366
        %v5171 = vunpack.c.h.b16 %v1366
        %v5172 = vunpack.c.l.b16 %v1367
        %v5173 = vunpack.c.h.b16 %v1367
        %v5174 = vunpack.c.l.b16 %v1368
        %v5175 = vunpack.c.h.b16 %v1368
        %v5176 = vunpack.c.l.b16 %v1369
        %v5177 = vunpack.c.h.b16 %v1369
        %v5178 = vunpack.c.l.b16 %v1370
        %v5179 = vunpack.c.h.b16 %v1370
        %v5180 = vunpack.c.l.b16 %v1371
        %v5181 = vunpack.c.h.b16 %v1371
        %v5182 = vunpack.c.l.b16 %v1372
        %v5183 = vunpack.c.h.b16 %v1372
        %v5184 = vunpack.c.l.b16 %v1373
        %v5185 = vunpack.c.h.b16 %v1373
        %v5186 = vunpack.c.l.b16 %v1374
        %v5187 = vunpack.c.h.b16 %v1374
        %v5188 = vunpack.c.l.b16 %v1375
        %v5189 = vunpack.c.h.b16 %v1375
        %v5190 = vunpack.c.l.b16 %v1376
        %v5191 = vunpack.c.h.b16 %v1376
        %v5192 = vunpack.c.l.b16 %v1377
        %v5193 = vunpack.c.h.b16 %v1377
        %v5194 = vunpack.c.l.b16 %v1378
        %v5195 = vunpack.c.h.b16 %v1378
        %v5196 = vunpack.c.l.b16 %v1379
        %v5197 = vunpack.c.h.b16 %v1379
        %v5198 = vunpack.c.l.b16 %v1380
        %v5199 = vunpack.c.h.b16 %v1380
        %v5200 = vunpack.c.l.b16 %v1381
        %v5201 = vunpack.c.h.b16 %v1381
        %v5202 = vunpack.c.l.b16 %v1382
        %v5203 = vunpack.c.h.b16 %v1382
        %v5204 = vunpack.c.l.b16 %v1383
        %v5205 = vunpack.c.h.b16 %v1383
        %v5206 = vunpack.c.l.b16 %v1384
        %v5207 = vunpack.c.h.b16 %v1384
        %v5208 = vunpack.c.l.b16 %v1385
        %v5209 = vunpack.c.h.b16 %v1385
        %v5210 = vunpack.c.l.b16 %v1386
        %v5211 = vunpack.c.h.b16 %v1386
        %v5212 = vunpack.c.l.b16 %v1387
        %v5213 = vunpack.c.h.b16 %v1387
        %v5214 = vunpack.c.l.b16 %v1388
        %v5215 = vunpack.c.h.b16 %v1388
        %v5216 = vunpack.c.l.b16 %v1389
        %v5217 = vunpack.c.h.b16 %v1389
        %v5218 = vunpack.c.l.b16 %v1390
        %v5219 = vunpack.c.h.b16 %v1390
        %v5220 = vunpack.c.l.b16 %v1391
        %v5221 = vunpack.c.h.b16 %v1391
        %v5222 = vunpack.c.l.b16 %v1392
        %v5223 = vunpack.c.h.b16 %v1392
        %v5224 = vunpack.c.l.b16 %v1393
        %v5225 = vunpack.c.h.b16 %v1393
        %v5226 = vunpack.c.l.b16 %v1394
        %v5227 = vunpack.c.h.b16 %v1394
        %v5228 = vpack.c.b16 %v4918, %v4908
        %v5229 = vpack.c.b16 %v4919, %v4909
        %v5230 = vpack.c.b16 %v4920, %v4910
        %v5231 = vpack.c.b16 %v4921, %v4911
        %v5232 = vpack.c.b16 %v4922, %v4912
        %v5233 = vpack.c.b16 %v4923, %v4913
        %v5234 = vpack.c.b16 %v4924, %v4914
        %v5235 = vpack.c.b16 %v4925, %v4915
        %v5236 = vpack.c.b16 %v4926, %v4916
        %v5237 = vpack.c.b16 %v4927, %v4917
        %v5238 = vpack.c.b16 %v4938, %v4928
        %v5239 = vpack.c.b16 %v4939, %v4929
        %v5240 = vpack.c.b16 %v4940, %v4930
        %v5241 = vpack.c.b16 %v4941, %v4931
        %v5242 = vpack.c.b16 %v4942, %v4932
        %v5243 = vpack.c.b16 %v4943, %v4933
        %v5244 = vpack.c.b16 %v4944, %v4934
        %v5245 = vpack.c.b16 %v4945, %v4935
        %v5246 = vpack.c.b16 %v4946, %v4936
        %v5247 = vpack.c.b16 %v4947, %v4937
        %v5248 = vpack.c.b16 %v4958, %v4948
        %v5249 = vpack.c.b16 %v4959, %v4949
        %v5250 = vpack.c.b16 %v4960, %v4950
        %v5251 = vpack.c.b16 %v4961, %v4951
        %v5252 = vpack.c.b16 %v4962, %v4952
        %v5253 = vpack.c.b16 %v4963, %v4953
        %v5254 = vpack.c.b16 %v4964, %v4954
        %v5255 = vpack.c.b16 %v4965, %v4955
        %v5256 = vpack.c.b16 %v4966, %v4956
        %v5257 = vpack.c.b16 %v4967, %v4957
        %v5258 = vpack.c.b16 %v4978, %v4968
        %v5259 = vpack.c.b16 %v4979, %v4969
        %v5260 = vpack.c.b16 %v4980, %v4970
        %v5261 = vpack.c.b16 %v4981, %v4971
        %v5262 = vpack.c.b16 %v4982, %v4972
        %v5263 = vpack.c.b16 %v4983, %v4973
        %v5264 = vpack.c.b16 %v4984, %v4974
        %v5265 = vpack.c.b16 %v4985, %v4975
        %v5266 = vpack.c.b16 %v4986, %v4976
        %v5267 = vpack.c.b16 %v4987, %v4977
        %v5268 = vpack.c.b16 %v4998, %v4988
        %v5269 = vpack.c.b16 %v4999, %v4989
        %v5270 = vpack.c.b16 %v5000, %v4990
        %v5271 = vpack.c.b16 %v5001, %v4991
        %v5272 = vpack.c.b16 %v5002, %v4992
        %v5273 = vpack.c.b16 %v5003, %v4993
        %v5274 = vpack.c.b16 %v5004, %v4994
        %v5275 = vpack.c.b16 %v5005, %v4995
        %v5276 = vpack.c.b16 %v5006, %v4996
        %v5277 = vpack.c.b16 %v5007, %v4997
        %v5278 = vpack.c.b16 %v5018, %v5008
        %v5279 = vpack.c.b16 %v5019, %v5009
        %v5280 = vpack.c.b16 %v5020, %v5010
        %v5281 = vpack.c.b16 %v5021, %v5011
        %v5282 = vpack.c.b16 %v5022, %v5012
        %v5283 = vpack.c.b16 %v5023, %v5013
        %v5284 = vpack.c.b16 %v5024, %v5014
        %v5285 = vpack.c.b16 %v5025, %v5015
        %v5286 = vpack.c.b16 %v5026, %v5016
        %v5287 = vpack.c.b16 %v5027, %v5017
        %v5288 = vpack.c.b16 %v5038, %v5028
        %v5289 = vpack.c.b16 %v5039, %v5029
        %v5290 = vpack.c.b16 %v5040, %v5030
        %v5291 = vpack.c.b16 %v5041, %v5031
        %v5292 = vpack.c.b16 %v5042, %v5032
        %v5293 = vpack.c.b16 %v5043, %v5033
        %v5294 = vpack.c.b16 %v5044, %v5034
        %v5295 = vpack.c.b16 %v5045, %v5035
        %v5296 = vpack.c.b16 %v5046, %v5036
        %v5297 = vpack.c.b16 %v5047, %v5037
        %v5298 = vpack.c.b16 %v5058, %v5048
        %v5299 = vpack.c.b16 %v5059, %v5049
        %v5300 = vpack.c.b16 %v5060, %v5050
        %v5301 = vpack.c.b16 %v5061, %v5051
        %v5302 = vpack.c.b16 %v5062, %v5052
        %v5303 = vpack.c.b16 %v5063, %v5053
        %v5304 = vpack.c.b16 %v5064, %v5054
        %v5305 = vpack.c.b16 %v5065, %v5055
        %v5306 = vpack.c.b16 %v5066, %v5056
        %v5307 = vpack.c.b16 %v5067, %v5057
        %v5308 = vpack.c.b16 %v5078, %v5068
        %v5309 = vpack.c.b16 %v5079, %v5069
        %v5310 = vpack.c.b16 %v5080, %v5070
        %v5311 = vpack.c.b16 %v5081, %v5071
        %v5312 = vpack.c.b16 %v5082, %v5072
        %v5313 = vpack.c.b16 %v5083, %v5073
        %v5314 = vpack.c.b16 %v5084, %v5074
        %v5315 = vpack.c.b16 %v5085, %v5075
        %v5316 = vpack.c.b16 %v5086, %v5076
        %v5317 = vpack.c.b16 %v5087, %v5077
        %v5318 = vpack.c.b16 %v5098, %v5088
        %v5319 = vpack.c.b16 %v5099, %v5089
        %v5320 = vpack.c.b16 %v5100, %v5090
        %v5321 = vpack.c.b16 %v5101, %v5091
        %v5322 = vpack.c.b16 %v5102, %v5092
        %v5323 = vpack.c.b16 %v5103, %v5093
        %v5324 = vpack.c.b16 %v5104, %v5094
        %v5325 = vpack.c.b16 %v5105, %v5095
        %v5326 = vpack.c.b16 %v5106, %v5096
        %v5327 = vpack.c.b16 %v5107, %v5097
        %v5328 = vpack.c.b16 %v5118, %v5108
        %v5329 = vpack.c.b16 %v5119, %v5109
        %v5330 = vpack.c.b16 %v5120, %v5110
        %v5331 = vpack.c.b16 %v5121, %v5111
        %v5332 = vpack.c.b16 %v5122, %v5112
        %v5333 = vpack.c.b16 %v5123, %v5113
        %v5334 = vpack.c.b16 %v5124, %v5114
        %v5335 = vpack.c.b16 %v5125, %v5115
        %v5336 = vpack.c.b16 %v5126, %v5116
        %v5337 = vpack.c.b16 %v5127, %v5117
        %v5338 = vpack.c.b16 %v5138, %v5128
        %v5339 = vpack.c.b16 %v5139, %v5129
        %v5340 = vpack.c.b16 %v5140, %v5130
        %v5341 = vpack.c.b16 %v5141, %v5131
        %v5342 = vpack.c.b16 %v5142, %v5132
        %v5343 = vpack.c.b16 %v5143, %v5133
        %v5344 = vpack.c.b16 %v5144, %v5134
        %v5345 = vpack.c.b16 %v5145, %v5135
        %v5346 = vpack.c.b16 %v5146, %v5136
        %v5347 = vpack.c.b16 %v5147, %v5137
        %v5348 = vpack.c.b16 %v5158, %v5148
        %v5349 = vpack.c.b16 %v5159, %v5149
        %v5350 = vpack.c.b16 %v5160, %v5150
        %v5351 = vpack.c.b16 %v5161, %v5151
        %v5352 = vpack.c.b16 %v5162, %v5152
        %v5353 = vpack.c.b16 %v5163, %v5153
        %v5354 = vpack.c.b16 %v5164, %v5154
        %v5355 = vpack.c.b16 %v5165, %v5155
        %v5356 = vpack.c.b16 %v5166, %v5156
        %v5357 = vpack.c.b16 %v5167, %v5157
        %v5358 = vpack.c.b16 %v5178, %v5168
        %v5359 = vpack.c.b16 %v5179, %v5169
        %v5360 = vpack.c.b16 %v5180, %v5170
        %v5361 = vpack.c.b16 %v5181, %v5171
        %v5362 = vpack.c.b16 %v5182, %v5172
        %v5363 = vpack.c.b16 %v5183, %v5173
        %v5364 = vpack.c.b16 %v5184, %v5174
        %v5365 = vpack.c.b16 %v5185, %v5175
        %v5366 = vpack.c.b16 %v5186, %v5176
        %v5367 = vpack.c.b16 %v5187, %v5177
        %v5368 = vpack.c.b16 %v5198, %v5188
        %v5369 = vpack.c.b16 %v5199, %v5189
        %v5370 = vpack.c.b16 %v5200, %v5190
        %v5371 = vpack.c.b16 %v5201, %v5191
        %v5372 = vpack.c.b16 %v5202, %v5192
        %v5373 = vpack.c.b16 %v5203, %v5193
        %v5374 = vpack.c.b16 %v5204, %v5194
        %v5375 = vpack.c.b16 %v5205, %v5195
        %v5376 = vpack.c.b16 %v5206, %v5196
        %v5377 = vpack.c.b16 %v5207, %v5197
        %v5378 = vpack.c.b16 %v5218, %v5208
        %v5379 = vpack.c.b16 %v5219, %v5209
        %v5380 = vpack.c.b16 %v5220, %v5210
        %v5381 = vpack.c.b16 %v5221, %v5211
        %v5382 = vpack.c.b16 %v5222, %v5212
        %v5383 = vpack.c.b16 %v5223, %v5213
        %v5384 = vpack.c.b16 %v5224, %v5214
        %v5385 = vpack.c.b16 %v5225, %v5215
        %v5386 = vpack.c.b16 %v5226, %v5216
        %v5387 = vpack.c.b16 %v5227, %v5217
        %5548 = vmatprep.subr.bf16.mxu0 %v5229
        %5549 = vmatpush1.bf16.msra.mxu0 %v5228
        %5550 = vmatprep.subr.bf16.mxu0 %v5239
        %5551 = vmatpush1.bf16.msra.mxu0 %v5238
        %5552 = vmatprep.subr.bf16.mxu0 %v5249
        %5553 = vmatpush1.bf16.msra.mxu0 %v5248
        %5554 = vmatprep.subr.bf16.mxu0 %v5259
        %5555 = vmatpush1.bf16.msra.mxu0 %v5258
        %5556 = vmatprep.subr.bf16.mxu0 %v5269
        %5557 = vmatpush1.bf16.msra.mxu0 %v5268
        %5558 = vmatprep.subr.bf16.mxu0 %v5279
        %5559 = vmatpush1.bf16.msra.mxu0 %v5278
        %5560 = vmatprep.subr.bf16.mxu0 %v5289
        %5561 = vmatpush1.bf16.msra.mxu0 %v5288
        %5562 = vmatprep.subr.bf16.mxu0 %v5299
        %5563 = vmatpush1.bf16.msra.mxu0 %v5298
        %5564 = vmatprep.subr.bf16.mxu0 %v5309
        %5565 = vmatpush1.bf16.msra.mxu0 %v5308
        %5566 = vmatprep.subr.bf16.mxu0 %v5319
        %5567 = vmatpush1.bf16.msra.mxu0 %v5318
        %5568 = vmatprep.subr.bf16.mxu0 %v5329
        %5569 = vmatpush1.bf16.msra.mxu0 %v5328
        %5570 = vmatprep.subr.bf16.mxu0 %v5339
        %5571 = vmatpush1.bf16.msra.mxu0 %v5338
        %5572 = vmatprep.subr.bf16.mxu0 %v5349
        %5573 = vmatpush1.bf16.msra.mxu0 %v5348
        %5574 = vmatprep.subr.bf16.mxu0 %v5359
        %5575 = vmatpush1.bf16.msra.mxu0 %v5358
        %5576 = vmatprep.subr.bf16.mxu0 %v5369
        %5577 = vmatpush1.bf16.msra.mxu0 %v5368
        %5578 = vmatprep.subr.bf16.mxu0 %v5379
        %5579 = vmatpush1.bf16.msra.mxu0 %v5378
        %5580 = vmatprep.mubr.f32.mxu0 %v4720
        %5581 = vmatmul.mubr.f32.gmra.mrb[0].mxu0 %v4718
        %v5582 = vpop.f32.mrb[0].mxu0
        %v5583 = vadd.f32 0.0, %v5582
        %v5584 = vpop.f32.mrb[0].mxu0
        %v5585 = vadd.f32 0.0, %v5584
        %5586 = vmatprep.mubr.f32.mxu0 %v4726
        %5587 = vmatmul.mubr.f32.gmra.mrb[0].mxu0 %v4724
        %v5588 = vpop.f32.mrb[0].mxu0
        %v5589 = vadd.f32 0.0, %v5588
        %v5590 = vpop.f32.mrb[0].mxu0
        %v5591 = vadd.f32 0.0, %v5590
        %5592 = vdwg.mxu0
        %5593 = vmatprep.subr.bf16.mxu0 %v5231
        %5594 = vmatpush1.bf16.msra.mxu0 %v5230
        %5595 = vmatprep.subr.bf16.mxu0 %v5241
        %5596 = vmatpush1.bf16.msra.mxu0 %v5240
        %5597 = vmatprep.subr.bf16.mxu0 %v5251
        %5598 = vmatpush1.bf16.msra.mxu0 %v5250
        %5599 = vmatprep.subr.bf16.mxu0 %v5261
        %5600 = vmatpush1.bf16.msra.mxu0 %v5260
        %5601 = vmatprep.subr.bf16.mxu0 %v5271
        %5602 = vmatpush1.bf16.msra.mxu0 %v5270
        %5603 = vmatprep.subr.bf16.mxu0 %v5281
        %5604 = vmatpush1.bf16.msra.mxu0 %v5280
        %5605 = vmatprep.subr.bf16.mxu0 %v5291
        %5606 = vmatpush1.bf16.msra.mxu0 %v5290
        %5607 = vmatprep.subr.bf16.mxu0 %v5301
        %5608 = vmatpush1.bf16.msra.mxu0 %v5300
        %5609 = vmatprep.subr.bf16.mxu0 %v5311
        %5610 = vmatpush1.bf16.msra.mxu0 %v5310
        %5611 = vmatprep.subr.bf16.mxu0 %v5321
        %5612 = vmatpush1.bf16.msra.mxu0 %v5320
        %5613 = vmatprep.subr.bf16.mxu0 %v5331
        %5614 = vmatpush1.bf16.msra.mxu0 %v5330
        %5615 = vmatprep.subr.bf16.mxu0 %v5341
        %5616 = vmatpush1.bf16.msra.mxu0 %v5340
        %5617 = vmatprep.subr.bf16.mxu0 %v5351
        %5618 = vmatpush1.bf16.msra.mxu0 %v5350
        %5619 = vmatprep.subr.bf16.mxu0 %v5361
        %5620 = vmatpush1.bf16.msra.mxu0 %v5360
        %5621 = vmatprep.subr.bf16.mxu0 %v5371
        %5622 = vmatpush1.bf16.msra.mxu0 %v5370
        %5623 = vmatprep.subr.bf16.mxu0 %v5381
        %5624 = vmatpush1.bf16.msra.mxu0 %v5380
        %5625 = vmatprep.mubr.f32.mxu0 %v4720
        %5626 = vmatmul.mubr.f32.gmra.mrb[0].mxu0 %v4718
        %v5627 = vpop.f32.mrb[0].mxu0
        %v5628 = vadd.f32 0.0, %v5627
        %v5629 = vpop.f32.mrb[0].mxu0
        %v5630 = vadd.f32 0.0, %v5629
        %5631 = vmatprep.mubr.f32.mxu0 %v4726
        %5632 = vmatmul.mubr.f32.gmra.mrb[0].mxu0 %v4724
        %v5633 = vpop.f32.mrb[0].mxu0
        %v5634 = vadd.f32 0.0, %v5633
        %v5635 = vpop.f32.mrb[0].mxu0
        %v5636 = vadd.f32 0.0, %v5635
        %5637 = vdwg.mxu0
        %5638 = vmatprep.subr.bf16.mxu0 %v5233
        %5639 = vmatpush1.bf16.msra.mxu0 %v5232
        %5640 = vmatprep.subr.bf16.mxu0 %v5243
        %5641 = vmatpush1.bf16.msra.mxu0 %v5242
        %5642 = vmatprep.subr.bf16.mxu0 %v5253
        %5643 = vmatpush1.bf16.msra.mxu0 %v5252
        %5644 = vmatprep.subr.bf16.mxu0 %v5263
        %5645 = vmatpush1.bf16.msra.mxu0 %v5262
        %5646 = vmatprep.subr.bf16.mxu0 %v5273
        %5647 = vmatpush1.bf16.msra.mxu0 %v5272
        %5648 = vmatprep.subr.bf16.mxu0 %v5283
        %5649 = vmatpush1.bf16.msra.mxu0 %v5282
        %5650 = vmatprep.subr.bf16.mxu0 %v5293
        %5651 = vmatpush1.bf16.msra.mxu0 %v5292
        %5652 = vmatprep.subr.bf16.mxu0 %v5303
        %5653 = vmatpush1.bf16.msra.mxu0 %v5302
        %5654 = vmatprep.subr.bf16.mxu0 %v5313
        %5655 = vmatpush1.bf16.msra.mxu0 %v5312
        %5656 = vmatprep.subr.bf16.mxu0 %v5323
        %5657 = vmatpush1.bf16.msra.mxu0 %v5322
        %5658 = vmatprep.subr.bf16.mxu0 %v5333
        %5659 = vmatpush1.bf16.msra.mxu0 %v5332
        %5660 = vmatprep.subr.bf16.mxu0 %v5343
        %5661 = vmatpush1.bf16.msra.mxu0 %v5342
        %5662 = vmatprep.subr.bf16.mxu0 %v5353
        %5663 = vmatpush1.bf16.msra.mxu0 %v5352
        %5664 = vmatprep.subr.bf16.mxu0 %v5363
        %5665 = vmatpush1.bf16.msra.mxu0 %v5362
        %5666 = vmatprep.subr.bf16.mxu0 %v5373
        %5667 = vmatpush1.bf16.msra.mxu0 %v5372
        %5668 = vmatprep.subr.bf16.mxu0 %v5383
        %5669 = vmatpush1.bf16.msra.mxu0 %v5382
        %5670 = vmatprep.mubr.f32.mxu0 %v4720
        %5671 = vmatmul.mubr.f32.gmra.mrb[0].mxu0 %v4718
        %v5672 = vpop.f32.mrb[0].mxu0
        %v5673 = vadd.f32 0.0, %v5672
        %v5674 = vpop.f32.mrb[0].mxu0
        %v5675 = vadd.f32 0.0, %v5674
        %5676 = vmatprep.mubr.f32.mxu0 %v4726
        %5677 = vmatmul.mubr.f32.gmra.mrb[0].mxu0 %v4724
        %v5678 = vpop.f32.mrb[0].mxu0
        %v5679 = vadd.f32 0.0, %v5678
        %v5680 = vpop.f32.mrb[0].mxu0
        %v5681 = vadd.f32 0.0, %v5680
        %5682 = vdwg.mxu0
        %5683 = vmatprep.subr.bf16.mxu0 %v5235
        %5684 = vmatpush1.bf16.msra.mxu0 %v5234
        %5685 = vmatprep.subr.bf16.mxu0 %v5245
        %5686 = vmatpush1.bf16.msra.mxu0 %v5244
        %5687 = vmatprep.subr.bf16.mxu0 %v5255
        %5688 = vmatpush1.bf16.msra.mxu0 %v5254
        %5689 = vmatprep.subr.bf16.mxu0 %v5265
        %5690 = vmatpush1.bf16.msra.mxu0 %v5264
        %5691 = vmatprep.subr.bf16.mxu0 %v5275
        %5692 = vmatpush1.bf16.msra.mxu0 %v5274
        %5693 = vmatprep.subr.bf16.mxu0 %v5285
        %5694 = vmatpush1.bf16.msra.mxu0 %v5284
        %5695 = vmatprep.subr.bf16.mxu0 %v5295
        %5696 = vmatpush1.bf16.msra.mxu0 %v5294
        %5697 = vmatprep.subr.bf16.mxu0 %v5305
        %5698 = vmatpush1.bf16.msra.mxu0 %v5304
        %5699 = vmatprep.subr.bf16.mxu0 %v5315
        %5700 = vmatpush1.bf16.msra.mxu0 %v5314
        %5701 = vmatprep.subr.bf16.mxu0 %v5325
        %5702 = vmatpush1.bf16.msra.mxu0 %v5324
        %5703 = vmatprep.subr.bf16.mxu0 %v5335
        %5704 = vmatpush1.bf16.msra.mxu0 %v5334
        %5705 = vmatprep.subr.bf16.mxu0 %v5345
        %5706 = vmatpush1.bf16.msra.mxu0 %v5344
        %5707 = vmatprep.subr.bf16.mxu0 %v5355
        %5708 = vmatpush1.bf16.msra.mxu0 %v5354
        %5709 = vmatprep.subr.bf16.mxu0 %v5365
        %5710 = vmatpush1.bf16.msra.mxu0 %v5364
        %5711 = vmatprep.subr.bf16.mxu0 %v5375
        %5712 = vmatpush1.bf16.msra.mxu0 %v5374
        %5713 = vmatprep.subr.bf16.mxu0 %v5385
        %5714 = vmatpush1.bf16.msra.mxu0 %v5384
        %5715 = vmatprep.mubr.f32.mxu0 %v4720
        %5716 = vmatmul.mubr.f32.gmra.mrb[0].mxu0 %v4718
        %v5717 = vpop.f32.mrb[0].mxu0
        %v5718 = vadd.f32 0.0, %v5717
        %v5719 = vpop.f32.mrb[0].mxu0
        %v5720 = vadd.f32 0.0, %v5719
        %5721 = vmatprep.mubr.f32.mxu0 %v4726
        %5722 = vmatmul.mubr.f32.gmra.mrb[0].mxu0 %v4724
        %v5723 = vpop.f32.mrb[0].mxu0
        %v5724 = vadd.f32 0.0, %v5723
        %v5725 = vpop.f32.mrb[0].mxu0
        %v5726 = vadd.f32 0.0, %v5725
        %5727 = vdwg.mxu0
        %5728 = vmatprep.subr.bf16.mxu0 %v5237
        %5729 = vmatpush1.bf16.msra.mxu0 %v5236
        %5730 = vmatprep.subr.bf16.mxu0 %v5247
        %5731 = vmatpush1.bf16.msra.mxu0 %v5246
        %5732 = vmatprep.subr.bf16.mxu0 %v5257
        %5733 = vmatpush1.bf16.msra.mxu0 %v5256
        %5734 = vmatprep.subr.bf16.mxu0 %v5267
        %5735 = vmatpush1.bf16.msra.mxu0 %v5266
        %5736 = vmatprep.subr.bf16.mxu0 %v5277
        %5737 = vmatpush1.bf16.msra.mxu0 %v5276
        %5738 = vmatprep.subr.bf16.mxu0 %v5287
        %5739 = vmatpush1.bf16.msra.mxu0 %v5286
        %5740 = vmatprep.subr.bf16.mxu0 %v5297
        %5741 = vmatpush1.bf16.msra.mxu0 %v5296
        %5742 = vmatprep.subr.bf16.mxu0 %v5307
        %5743 = vmatpush1.bf16.msra.mxu0 %v5306
        %5744 = vmatprep.subr.bf16.mxu0 %v5317
        %5745 = vmatpush1.bf16.msra.mxu0 %v5316
        %5746 = vmatprep.subr.bf16.mxu0 %v5327
        %5747 = vmatpush1.bf16.msra.mxu0 %v5326
        %5748 = vmatprep.subr.bf16.mxu0 %v5337
        %5749 = vmatpush1.bf16.msra.mxu0 %v5336
        %5750 = vmatprep.subr.bf16.mxu0 %v5347
        %5751 = vmatpush1.bf16.msra.mxu0 %v5346
        %5752 = vmatprep.subr.bf16.mxu0 %v5357
        %5753 = vmatpush1.bf16.msra.mxu0 %v5356
        %5754 = vmatprep.subr.bf16.mxu0 %v5367
        %5755 = vmatpush1.bf16.msra.mxu0 %v5366
        %5756 = vmatprep.subr.bf16.mxu0 %v5377
        %5757 = vmatpush1.bf16.msra.mxu0 %v5376
        %5758 = vmatprep.subr.bf16.mxu0 %v5387
        %5759 = vmatpush1.bf16.msra.mxu0 %v5386
        %5760 = vmatprep.mubr.f32.mxu0 %v4720
        %5761 = vmatmul.mubr.f32.gmra.mrb[0].mxu0 %v4718
        %v5762 = vpop.f32.mrb[0].mxu0
        %v5763 = vadd.f32 0.0, %v5762
        %v5764 = vpop.f32.mrb[0].mxu0
        %v5765 = vadd.f32 0.0, %v5764
        %5766 = vmatprep.mubr.f32.mxu0 %v4726
        %5767 = vmatmul.mubr.f32.gmra.mrb[0].mxu0 %v4724
        %v5768 = vpop.f32.mrb[0].mxu0
        %v5769 = vadd.f32 0.0, %v5768
        %v5770 = vpop.f32.mrb[0].mxu0
        %v5771 = vadd.f32 0.0, %v5770
        %5772 = vdwg.mxu0
        %v5773 = vadd.f32 %v4728, %v5583
        %v5774 = vadd.f32 %v4729, %v5585
        %v5775 = vadd.f32 %v4730, %v5628
        %v5776 = vadd.f32 %v4731, %v5630
        %v5777 = vadd.f32 %v4732, %v5673
        %v5778 = vadd.f32 %v4733, %v5675
        %v5779 = vadd.f32 %v4734, %v5718
        %v5780 = vadd.f32 %v4735, %v5720
        %v5781 = vadd.f32 %v4736, %v5763
        %v5782 = vadd.f32 %v4737, %v5765
        %v5783 = vadd.f32 %v4738, %v5589
        %v5784 = vadd.f32 %v4739, %v5591
        %v5785 = vadd.f32 %v4740, %v5634
        %v5786 = vadd.f32 %v4741, %v5636
        %v5787 = vadd.f32 %v4742, %v5679
        %v5788 = vadd.f32 %v4743, %v5681
        %v5789 = vadd.f32 %v4744, %v5724
        %v5790 = vadd.f32 %v4745, %v5726
        %v5791 = vadd.f32 %v4746, %v5769
        %v5792 = vadd.f32 %v4747, %v5771
        %5793 = vst [vmem:[#allocation3] sm:$0xff] %v5773
        %5794 = vst [vmem:[#allocation3 + $0x8] sm:$0xff] %v5774
        %5795 = vst [vmem:[#allocation3 + $0x10] sm:$0xff] %v5775
        %5796 = vst [vmem:[#allocation3 + $0x18] sm:$0xff] %v5776
        %5797 = vst [vmem:[#allocation3 + $0x20] sm:$0xff] %v5777
        %5798 = vst [vmem:[#allocation3 + $0x28] sm:$0xff] %v5778
        %5799 = vst [vmem:[#allocation3 + $0x30] sm:$0xff] %v5779
        %5800 = vst [vmem:[#allocation3 + $0x38] sm:$0xff] %v5780
        %5801 = vst [vmem:[#allocation3 + $0x40] sm:$0xff] %v5781
        %5802 = vst [vmem:[#allocation3 + $0x48] sm:$0xff] %v5782
        %5803 = vst [vmem:[#allocation3 + $0x50] sm:$0x7] %v5783
        %5804 = vst [vmem:[#allocation3 + $0x58] sm:$0x7] %v5784
        %5805 = vst [vmem:[#allocation3 + $0x60] sm:$0x7] %v5785
        %5806 = vst [vmem:[#allocation3 + $0x68] sm:$0x7] %v5786
        %5807 = vst [vmem:[#allocation3 + $0x70] sm:$0x7] %v5787
        %5808 = vst [vmem:[#allocation3 + $0x78] sm:$0x7] %v5788
        %5809 = vst [vmem:[#allocation3 + $0x80] sm:$0x7] %v5789
        %5810 = vst [vmem:[#allocation3 + $0x88] sm:$0x7] %v5790
        %5811 = vst [vmem:[#allocation3 + $0x90] sm:$0x7] %v5791
        %5812 = vst [vmem:[#allocation3 + $0x98] sm:$0x7] %v5792
        %s5813 = scalar_lea.vmem [#allocation2], 160
        %v5814 = vld [vmem:[%s5813] sm:$0xff]
        %v5815 = vld [vmem:[%s5813 + $0x8] sm:$0xff]
        %v5816 = vld [vmem:[%s5813 + $0x10] sm:$0xff]
        %v5817 = vld [vmem:[%s5813 + $0x18] sm:$0xff]
        %v5818 = vld [vmem:[%s5813 + $0x20] sm:$0xff]
        %v5819 = vld [vmem:[%s5813 + $0x28] sm:$0xff]
        %v5820 = vld [vmem:[%s5813 + $0x30] sm:$0xff]
        %v5821 = vld [vmem:[%s5813 + $0x38] sm:$0xff]
        %v5822 = vld [vmem:[%s5813 + $0x40] sm:$0xff]
        %v5823 = vld [vmem:[%s5813 + $0x48] sm:$0xff]
        %v5824 = vld [vmem:[%s5813 + $0x50] sm:$0x7]
        %v5825 = vld [vmem:[%s5813 + $0x58] sm:$0x7]
        %v5826 = vld [vmem:[%s5813 + $0x60] sm:$0x7]
        %v5827 = vld [vmem:[%s5813 + $0x68] sm:$0x7]
        %v5828 = vld [vmem:[%s5813 + $0x70] sm:$0x7]
        %v5829 = vld [vmem:[%s5813 + $0x78] sm:$0x7]
        %v5830 = vld [vmem:[%s5813 + $0x80] sm:$0x7]
        %v5831 = vld [vmem:[%s5813 + $0x88] sm:$0x7]
        %v5832 = vld [vmem:[%s5813 + $0x90] sm:$0x7]
        %v5833 = vld [vmem:[%s5813 + $0x98] sm:$0x7]
        %s5834 = scalar_lea.vmem [#allocation4], 160
        %v5835 = vld [vmem:[%s5834] sm:$0xff]
        %v5836 = vld [vmem:[%s5834 + $0x8] sm:$0xff]
        %v5837 = vld [vmem:[%s5834 + $0x10] sm:$0xff]
        %v5838 = vld [vmem:[%s5834 + $0x18] sm:$0xff]
        %v5839 = vld [vmem:[%s5834 + $0x20] sm:$0xff]
        %v5840 = vld [vmem:[%s5834 + $0x28] sm:$0xff]
        %v5841 = vld [vmem:[%s5834 + $0x30] sm:$0xff]
        %v5842 = vld [vmem:[%s5834 + $0x38] sm:$0xff]
        %v5843 = vld [vmem:[%s5834 + $0x40] sm:$0xff]
        %v5844 = vld [vmem:[%s5834 + $0x48] sm:$0xff]
        %v5845 = vld [vmem:[%s5834 + $0x50] sm:$0xff]
        %v5846 = vld [vmem:[%s5834 + $0x58] sm:$0xff]
        %v5847 = vld [vmem:[%s5834 + $0x60] sm:$0xff]
        %v5848 = vld [vmem:[%s5834 + $0x68] sm:$0xff]
        %v5849 = vld [vmem:[%s5834 + $0x70] sm:$0xff]
        %v5850 = vld [vmem:[%s5834 + $0x78] sm:$0xff]
        %v5851 = vld [vmem:[%s5834 + $0x80] sm:$0xff]
        %v5852 = vld [vmem:[%s5834 + $0x88] sm:$0xff]
        %v5853 = vld [vmem:[%s5834 + $0x90] sm:$0xff]
        %v5854 = vld [vmem:[%s5834 + $0x98] sm:$0xff]
        %5855 = vmatprep.subr.bf16.mxu0 %v1929
        %5856 = vmatpush1.bf16.msra.mxu0 %v1928
        %5857 = vmatprep.subr.bf16.mxu0 %v1931
        %5858 = vmatpush1.bf16.msra.mxu0 %v1930
        %5859 = vmatprep.subr.bf16.mxu0 %v1933
        %5860 = vmatpush1.bf16.msra.mxu0 %v1932
        %5861 = vmatprep.subr.bf16.mxu0 %v1935
        %5862 = vmatpush1.bf16.msra.mxu0 %v1934
        %5863 = vmatprep.subr.bf16.mxu0 %v1937
        %5864 = vmatpush1.bf16.msra.mxu0 %v1936
        %5865 = vmatprep.subr.bf16.mxu0 %v1939
        %5866 = vmatpush1.bf16.msra.mxu0 %v1938
        %5867 = vmatprep.subr.bf16.mxu0 %v1941
        %5868 = vmatpush1.bf16.msra.mxu0 %v1940
        %5869 = vmatprep.subr.bf16.mxu0 %v1943
        %5870 = vmatpush1.bf16.msra.mxu0 %v1942
        %5871 = vmatprep.subr.bf16.mxu0 %v1945
        %5872 = vmatpush1.bf16.msra.mxu0 %v1944
        %5873 = vmatprep.subr.bf16.mxu0 %v1947
        %5874 = vmatpush1.bf16.msra.mxu0 %v1946
        %5875 = vmatprep.subr.bf16.mxu0 %v1949
        %5876 = vmatpush1.bf16.msra.mxu0 %v1948
        %5877 = vmatprep.subr.bf16.mxu0 %v1951
        %5878 = vmatpush1.bf16.msra.mxu0 %v1950
        %5879 = vmatprep.subr.bf16.mxu0 %v1953
        %5880 = vmatpush1.bf16.msra.mxu0 %v1952
        %5881 = vmatprep.subr.bf16.mxu0 %v1955
        %5882 = vmatpush1.bf16.msra.mxu0 %v1954
        %5883 = vmatprep.subr.bf16.mxu0 %v1957
        %5884 = vmatpush1.bf16.msra.mxu0 %v1956
        %5885 = vmatprep.subr.bf16.mxu0 %v1959
        %5886 = vmatpush1.bf16.msra.mxu0 %v1958
        %5887 = vmatprep.mubr.f32.mxu0 %v5815
        %5888 = vmatmul.mubr.f32.gmra.mrb[0].mxu0 %v5814
        %v5889 = vpop.f32.mrb[0].mxu0
        %v5890 = vadd.f32 %v1441, %v5889
        %v5891 = vpop.f32.mrb[0].mxu0
        %v5892 = vadd.f32 %v1445, %v5891
        %5893 = vmatprep.mubr.f32.mxu0 %v5825
        %5894 = vmatmul.mubr.f32.gmra.mrb[0].mxu0 %v5824
        %v5895 = vpop.f32.mrb[0].mxu0
        %v5896 = vadd.f32 %v1441, %v5895
        %v5897 = vpop.f32.mrb[0].mxu0
        %v5898 = vadd.f32 %v1445, %v5897
        %5899 = vdwg.mxu0
        %5900 = vmatprep.subr.bf16.mxu0 %v1961
        %5901 = vmatpush1.bf16.msra.mxu0 %v1960
        %5902 = vmatprep.subr.bf16.mxu0 %v1963
        %5903 = vmatpush1.bf16.msra.mxu0 %v1962
        %5904 = vmatprep.subr.bf16.mxu0 %v1965
        %5905 = vmatpush1.bf16.msra.mxu0 %v1964
        %5906 = vmatprep.subr.bf16.mxu0 %v1967
        %5907 = vmatpush1.bf16.msra.mxu0 %v1966
        %5908 = vmatprep.subr.bf16.mxu0 %v1969
        %5909 = vmatpush1.bf16.msra.mxu0 %v1968
        %5910 = vmatprep.subr.bf16.mxu0 %v1971
        %5911 = vmatpush1.bf16.msra.mxu0 %v1970
        %5912 = vmatprep.subr.bf16.mxu0 %v1973
        %5913 = vmatpush1.bf16.msra.mxu0 %v1972
        %5914 = vmatprep.subr.bf16.mxu0 %v1975
        %5915 = vmatpush1.bf16.msra.mxu0 %v1974
        %5916 = vmatprep.subr.bf16.mxu0 %v1977
        %5917 = vmatpush1.bf16.msra.mxu0 %v1976
        %5918 = vmatprep.subr.bf16.mxu0 %v1979
        %5919 = vmatpush1.bf16.msra.mxu0 %v1978
        %5920 = vmatprep.subr.bf16.mxu0 %v1981
        %5921 = vmatpush1.bf16.msra.mxu0 %v1980
        %5922 = vmatprep.subr.bf16.mxu0 %v1983
        %5923 = vmatpush1.bf16.msra.mxu0 %v1982
        %5924 = vmatprep.subr.bf16.mxu0 %v1985
        %5925 = vmatpush1.bf16.msra.mxu0 %v1984
        %5926 = vmatprep.subr.bf16.mxu0 %v1987
        %5927 = vmatpush1.bf16.msra.mxu0 %v1986
        %5928 = vmatprep.subr.bf16.mxu0 %v1989
        %5929 = vmatpush1.bf16.msra.mxu0 %v1988
        %5930 = vmatprep.subr.bf16.mxu0 %v1991
        %5931 = vmatpush1.bf16.msra.mxu0 %v1990
        %5932 = vmatprep.mubr.f32.mxu0 %v5817
        %5933 = vmatmul.mubr.f32.gmra.mrb[0].mxu0 %v5816
        %v5934 = vpop.f32.mrb[0].mxu0
        %v5935 = vadd.f32 %v5890, %v5934
        %v5936 = vpop.f32.mrb[0].mxu0
        %v5937 = vadd.f32 %v5892, %v5936
        %5938 = vmatprep.mubr.f32.mxu0 %v5827
        %5939 = vmatmul.mubr.f32.gmra.mrb[0].mxu0 %v5826
        %v5940 = vpop.f32.mrb[0].mxu0
        %v5941 = vadd.f32 %v5896, %v5940
        %v5942 = vpop.f32.mrb[0].mxu0
        %v5943 = vadd.f32 %v5898, %v5942
        %5944 = vdwg.mxu0
        %5945 = vmatprep.subr.bf16.mxu0 %v1993
        %5946 = vmatpush1.bf16.msra.mxu0 %v1992
        %5947 = vmatprep.subr.bf16.mxu0 %v1995
        %5948 = vmatpush1.bf16.msra.mxu0 %v1994
        %5949 = vmatprep.subr.bf16.mxu0 %v1997
        %5950 = vmatpush1.bf16.msra.mxu0 %v1996
        %5951 = vmatprep.subr.bf16.mxu0 %v1999
        %5952 = vmatpush1.bf16.msra.mxu0 %v1998
        %5953 = vmatprep.subr.bf16.mxu0 %v2001
        %5954 = vmatpush1.bf16.msra.mxu0 %v2000
        %5955 = vmatprep.subr.bf16.mxu0 %v2003
        %5956 = vmatpush1.bf16.msra.mxu0 %v2002
        %5957 = vmatprep.subr.bf16.mxu0 %v2005
        %5958 = vmatpush1.bf16.msra.mxu0 %v2004
        %5959 = vmatprep.subr.bf16.mxu0 %v2007
        %5960 = vmatpush1.bf16.msra.mxu0 %v2006
        %5961 = vmatprep.subr.bf16.mxu0 %v2009
        %5962 = vmatpush1.bf16.msra.mxu0 %v2008
        %5963 = vmatprep.subr.bf16.mxu0 %v2011
        %5964 = vmatpush1.bf16.msra.mxu0 %v2010
        %5965 = vmatprep.subr.bf16.mxu0 %v2013
        %5966 = vmatpush1.bf16.msra.mxu0 %v2012
        %5967 = vmatprep.subr.bf16.mxu0 %v2015
        %5968 = vmatpush1.bf16.msra.mxu0 %v2014
        %5969 = vmatprep.subr.bf16.mxu0 %v2017
        %5970 = vmatpush1.bf16.msra.mxu0 %v2016
        %5971 = vmatprep.subr.bf16.mxu0 %v2019
        %5972 = vmatpush1.bf16.msra.mxu0 %v2018
        %5973 = vmatprep.subr.bf16.mxu0 %v2021
        %5974 = vmatpush1.bf16.msra.mxu0 %v2020
        %5975 = vmatprep.subr.bf16.mxu0 %v2023
        %5976 = vmatpush1.bf16.msra.mxu0 %v2022
        %5977 = vmatprep.mubr.f32.mxu0 %v5819
        %5978 = vmatmul.mubr.f32.gmra.mrb[0].mxu0 %v5818
        %v5979 = vpop.f32.mrb[0].mxu0
        %v5980 = vadd.f32 %v5935, %v5979
        %v5981 = vpop.f32.mrb[0].mxu0
        %v5982 = vadd.f32 %v5937, %v5981
        %5983 = vmatprep.mubr.f32.mxu0 %v5829
        %5984 = vmatmul.mubr.f32.gmra.mrb[0].mxu0 %v5828
        %v5985 = vpop.f32.mrb[0].mxu0
        %v5986 = vadd.f32 %v5941, %v5985
        %v5987 = vpop.f32.mrb[0].mxu0
        %v5988 = vadd.f32 %v5943, %v5987
        %5989 = vdwg.mxu0
        %5990 = vmatprep.subr.bf16.mxu0 %v2025
        %5991 = vmatpush1.bf16.msra.mxu0 %v2024
        %5992 = vmatprep.subr.bf16.mxu0 %v2027
        %5993 = vmatpush1.bf16.msra.mxu0 %v2026
        %5994 = vmatprep.subr.bf16.mxu0 %v2029
        %5995 = vmatpush1.bf16.msra.mxu0 %v2028
        %5996 = vmatprep.subr.bf16.mxu0 %v2031
        %5997 = vmatpush1.bf16.msra.mxu0 %v2030
        %5998 = vmatprep.subr.bf16.mxu0 %v2033
        %5999 = vmatpush1.bf16.msra.mxu0 %v2032
        %6000 = vmatprep.subr.bf16.mxu0 %v2035
        %6001 = vmatpush1.bf16.msra.mxu0 %v2034
        %6002 = vmatprep.subr.bf16.mxu0 %v2037
        %6003 = vmatpush1.bf16.msra.mxu0 %v2036
        %6004 = vmatprep.subr.bf16.mxu0 %v2039
        %6005 = vmatpush1.bf16.msra.mxu0 %v2038
        %6006 = vmatprep.subr.bf16.mxu0 %v2041
        %6007 = vmatpush1.bf16.msra.mxu0 %v2040
        %6008 = vmatprep.subr.bf16.mxu0 %v2043
        %6009 = vmatpush1.bf16.msra.mxu0 %v2042
        %6010 = vmatprep.subr.bf16.mxu0 %v2045
        %6011 = vmatpush1.bf16.msra.mxu0 %v2044
        %6012 = vmatprep.subr.bf16.mxu0 %v2047
        %6013 = vmatpush1.bf16.msra.mxu0 %v2046
        %6014 = vmatprep.subr.bf16.mxu0 %v2049
        %6015 = vmatpush1.bf16.msra.mxu0 %v2048
        %6016 = vmatprep.subr.bf16.mxu0 %v2051
        %6017 = vmatpush1.bf16.msra.mxu0 %v2050
        %6018 = vmatprep.subr.bf16.mxu0 %v2053
        %6019 = vmatpush1.bf16.msra.mxu0 %v2052
        %6020 = vmatprep.subr.bf16.mxu0 %v2055
        %6021 = vmatpush1.bf16.msra.mxu0 %v2054
        %6022 = vmatprep.mubr.f32.mxu0 %v5821
        %6023 = vmatmul.mubr.f32.gmra.mrb[0].mxu0 %v5820
        %v6024 = vpop.f32.mrb[0].mxu0
        %v6025 = vadd.f32 %v5980, %v6024
        %v6026 = vpop.f32.mrb[0].mxu0
        %v6027 = vadd.f32 %v5982, %v6026
        %6028 = vmatprep.mubr.f32.mxu0 %v5831
        %6029 = vmatmul.mubr.f32.gmra.mrb[0].mxu0 %v5830
        %v6030 = vpop.f32.mrb[0].mxu0
        %v6031 = vadd.f32 %v5986, %v6030
        %v6032 = vpop.f32.mrb[0].mxu0
        %v6033 = vadd.f32 %v5988, %v6032
        %6034 = vdwg.mxu0
        %6035 = vmatprep.subr.bf16.mxu0 %v2057
        %6036 = vmatpush1.bf16.msra.mxu0 %v2056
        %6037 = vmatprep.subr.bf16.mxu0 %v2059
        %6038 = vmatpush1.bf16.msra.mxu0 %v2058
        %6039 = vmatprep.subr.bf16.mxu0 %v2061
        %6040 = vmatpush1.bf16.msra.mxu0 %v2060
        %6041 = vmatprep.subr.bf16.mxu0 %v2063
        %6042 = vmatpush1.bf16.msra.mxu0 %v2062
        %6043 = vmatprep.subr.bf16.mxu0 %v2065
        %6044 = vmatpush1.bf16.msra.mxu0 %v2064
        %6045 = vmatprep.subr.bf16.mxu0 %v2067
        %6046 = vmatpush1.bf16.msra.mxu0 %v2066
        %6047 = vmatprep.subr.bf16.mxu0 %v2069
        %6048 = vmatpush1.bf16.msra.mxu0 %v2068
        %6049 = vmatprep.subr.bf16.mxu0 %v2071
        %6050 = vmatpush1.bf16.msra.mxu0 %v2070
        %6051 = vmatprep.subr.bf16.mxu0 %v2073
        %6052 = vmatpush1.bf16.msra.mxu0 %v2072
        %6053 = vmatprep.subr.bf16.mxu0 %v2075
        %6054 = vmatpush1.bf16.msra.mxu0 %v2074
        %6055 = vmatprep.subr.bf16.mxu0 %v2077
        %6056 = vmatpush1.bf16.msra.mxu0 %v2076
        %6057 = vmatprep.subr.bf16.mxu0 %v2079
        %6058 = vmatpush1.bf16.msra.mxu0 %v2078
        %6059 = vmatprep.subr.bf16.mxu0 %v2081
        %6060 = vmatpush1.bf16.msra.mxu0 %v2080
        %6061 = vmatprep.subr.bf16.mxu0 %v2083
        %6062 = vmatpush1.bf16.msra.mxu0 %v2082
        %6063 = vmatprep.subr.bf16.mxu0 %v2085
        %6064 = vmatpush1.bf16.msra.mxu0 %v2084
        %6065 = vmatprep.subr.bf16.mxu0 %v2087
        %6066 = vmatpush1.bf16.msra.mxu0 %v2086
        %6067 = vmatprep.mubr.f32.mxu0 %v5823
        %6068 = vmatmul.mubr.f32.gmra.mrb[0].mxu0 %v5822
        %v6069 = vpop.f32.mrb[0].mxu0
        %v6070 = vadd.f32 %v6025, %v6069
        %v6071 = vpop.f32.mrb[0].mxu0
        %v6072 = vadd.f32 %v6027, %v6071
        %6073 = vmatprep.mubr.f32.mxu0 %v5833
        %6074 = vmatmul.mubr.f32.gmra.mrb[0].mxu0 %v5832
        %v6075 = vpop.f32.mrb[0].mxu0
        %v6076 = vadd.f32 %v6031, %v6075
        %v6077 = vpop.f32.mrb[0].mxu0
        %v6078 = vadd.f32 %v6033, %v6077
        %6079 = vdwg.mxu0
        %6080 = vmatprep.subr.bf16.mxu0 %v3455
        %6081 = vmatpush1.bf16.msra.mxu0 %v3454
        %6082 = vmatprep.subr.bf16.mxu0 %v3459
        %6083 = vmatpush1.bf16.msra.mxu0 %v3458
        %6084 = vmatprep.subr.bf16.mxu0 %v3463
        %6085 = vmatpush1.bf16.msra.mxu0 %v3462
        %6086 = vmatprep.subr.bf16.mxu0 %v3467
        %6087 = vmatpush1.bf16.msra.mxu0 %v3466
        %6088 = vmatprep.subr.bf16.mxu0 %v3471
        %6089 = vmatpush1.bf16.msra.mxu0 %v3470
        %6090 = vmatprep.subr.bf16.mxu0 %v3475
        %6091 = vmatpush1.bf16.msra.mxu0 %v3474
        %6092 = vmatprep.subr.bf16.mxu0 %v3479
        %6093 = vmatpush1.bf16.msra.mxu0 %v3478
        %6094 = vmatprep.subr.bf16.mxu0 %v3483
        %6095 = vmatpush1.bf16.msra.mxu0 %v3482
        %6096 = vmatprep.subr.bf16.mxu0 %v3487
        %6097 = vmatpush1.bf16.msra.mxu0 %v3486
        %6098 = vmatprep.subr.bf16.mxu0 %v3491
        %6099 = vmatpush1.bf16.msra.mxu0 %v3490
        %6100 = vmatprep.subr.bf16.mxu0 %v3495
        %6101 = vmatpush1.bf16.msra.mxu0 %v3494
        %6102 = vmatprep.subr.bf16.mxu0 %v3499
        %6103 = vmatpush1.bf16.msra.mxu0 %v3498
        %6104 = vmatprep.subr.bf16.mxu0 %v3503
        %6105 = vmatpush1.bf16.msra.mxu0 %v3502
        %6106 = vmatprep.subr.bf16.mxu0 %v3507
        %6107 = vmatpush1.bf16.msra.mxu0 %v3506
        %6108 = vmatprep.subr.bf16.mxu0 %v3511
        %6109 = vmatpush1.bf16.msra.mxu0 %v3510
        %6110 = vmatprep.subr.bf16.mxu0 %v3515
        %6111 = vmatpush1.bf16.msra.mxu0 %v3514
        %6112 = vmatprep.mubr.f32.mxu0 %v5836
        %6113 = vmatmul.mubr.f32.gmra.mrb[0].mxu0 %v5835
        %v6114 = vpop.f32.mrb[0].mxu0
        %v6115 = vadd.f32 %v2477, %v6114
        %v6116 = vpop.f32.mrb[0].mxu0
        %v6117 = vadd.f32 %v2481, %v6116
        %6118 = vmatprep.mubr.f32.mxu0 %v5846
        %6119 = vmatmul.mubr.f32.gmra.mrb[0].mxu0 %v5845
        %v6120 = vpop.f32.mrb[0].mxu0
        %v6121 = vadd.f32 %v2477, %v6120
        %v6122 = vpop.f32.mrb[0].mxu0
        %v6123 = vadd.f32 %v2481, %v6122
        %6124 = vdwg.mxu0
        %6125 = vmatprep.subr.bf16.mxu0 %v3519
        %6126 = vmatpush1.bf16.msra.mxu0 %v3518
        %6127 = vmatprep.subr.bf16.mxu0 %v3523
        %6128 = vmatpush1.bf16.msra.mxu0 %v3522
        %6129 = vmatprep.subr.bf16.mxu0 %v3527
        %6130 = vmatpush1.bf16.msra.mxu0 %v3526
        %6131 = vmatprep.subr.bf16.mxu0 %v3531
        %6132 = vmatpush1.bf16.msra.mxu0 %v3530
        %6133 = vmatprep.subr.bf16.mxu0 %v3535
        %6134 = vmatpush1.bf16.msra.mxu0 %v3534
        %6135 = vmatprep.subr.bf16.mxu0 %v3539
        %6136 = vmatpush1.bf16.msra.mxu0 %v3538
        %6137 = vmatprep.subr.bf16.mxu0 %v3543
        %6138 = vmatpush1.bf16.msra.mxu0 %v3542
        %6139 = vmatprep.subr.bf16.mxu0 %v3547
        %6140 = vmatpush1.bf16.msra.mxu0 %v3546
        %6141 = vmatprep.subr.bf16.mxu0 %v3551
        %6142 = vmatpush1.bf16.msra.mxu0 %v3550
        %6143 = vmatprep.subr.bf16.mxu0 %v3555
        %6144 = vmatpush1.bf16.msra.mxu0 %v3554
        %6145 = vmatprep.subr.bf16.mxu0 %v3559
        %6146 = vmatpush1.bf16.msra.mxu0 %v3558
        %6147 = vmatprep.subr.bf16.mxu0 %v3563
        %6148 = vmatpush1.bf16.msra.mxu0 %v3562
        %6149 = vmatprep.subr.bf16.mxu0 %v3567
        %6150 = vmatpush1.bf16.msra.mxu0 %v3566
        %6151 = vmatprep.subr.bf16.mxu0 %v3571
        %6152 = vmatpush1.bf16.msra.mxu0 %v3570
        %6153 = vmatprep.subr.bf16.mxu0 %v3575
        %6154 = vmatpush1.bf16.msra.mxu0 %v3574
        %6155 = vmatprep.subr.bf16.mxu0 %v3579
        %6156 = vmatpush1.bf16.msra.mxu0 %v3578
        %6157 = vmatprep.mubr.f32.mxu0 %v5838
        %6158 = vmatmul.mubr.f32.gmra.mrb[0].mxu0 %v5837
        %v6159 = vpop.f32.mrb[0].mxu0
        %v6160 = vadd.f32 %v6115, %v6159
        %v6161 = vpop.f32.mrb[0].mxu0
        %v6162 = vadd.f32 %v6117, %v6161
        %6163 = vmatprep.mubr.f32.mxu0 %v5848
        %6164 = vmatmul.mubr.f32.gmra.mrb[0].mxu0 %v5847
        %v6165 = vpop.f32.mrb[0].mxu0
        %v6166 = vadd.f32 %v6121, %v6165
        %v6167 = vpop.f32.mrb[0].mxu0
        %v6168 = vadd.f32 %v6123, %v6167
        %6169 = vdwg.mxu0
        %6170 = vmatprep.subr.bf16.mxu0 %v3583
        %6171 = vmatpush1.bf16.msra.mxu0 %v3582
        %6172 = vmatprep.subr.bf16.mxu0 %v3587
        %6173 = vmatpush1.bf16.msra.mxu0 %v3586
        %6174 = vmatprep.subr.bf16.mxu0 %v3591
        %6175 = vmatpush1.bf16.msra.mxu0 %v3590
        %6176 = vmatprep.subr.bf16.mxu0 %v3595
        %6177 = vmatpush1.bf16.msra.mxu0 %v3594
        %6178 = vmatprep.subr.bf16.mxu0 %v3599
        %6179 = vmatpush1.bf16.msra.mxu0 %v3598
        %6180 = vmatprep.subr.bf16.mxu0 %v3603
        %6181 = vmatpush1.bf16.msra.mxu0 %v3602
        %6182 = vmatprep.subr.bf16.mxu0 %v3607
        %6183 = vmatpush1.bf16.msra.mxu0 %v3606
        %6184 = vmatprep.subr.bf16.mxu0 %v3611
        %6185 = vmatpush1.bf16.msra.mxu0 %v3610
        %6186 = vmatprep.subr.bf16.mxu0 %v3615
        %6187 = vmatpush1.bf16.msra.mxu0 %v3614
        %6188 = vmatprep.subr.bf16.mxu0 %v3619
        %6189 = vmatpush1.bf16.msra.mxu0 %v3618
        %6190 = vmatprep.subr.bf16.mxu0 %v3623
        %6191 = vmatpush1.bf16.msra.mxu0 %v3622
        %6192 = vmatprep.subr.bf16.mxu0 %v3627
        %6193 = vmatpush1.bf16.msra.mxu0 %v3626
        %6194 = vmatprep.subr.bf16.mxu0 %v3631
        %6195 = vmatpush1.bf16.msra.mxu0 %v3630
        %6196 = vmatprep.subr.bf16.mxu0 %v3635
        %6197 = vmatpush1.bf16.msra.mxu0 %v3634
        %6198 = vmatprep.subr.bf16.mxu0 %v3639
        %6199 = vmatpush1.bf16.msra.mxu0 %v3638
        %6200 = vmatprep.subr.bf16.mxu0 %v3643
        %6201 = vmatpush1.bf16.msra.mxu0 %v3642
        %6202 = vmatprep.mubr.f32.mxu0 %v5840
        %6203 = vmatmul.mubr.f32.gmra.mrb[0].mxu0 %v5839
        %v6204 = vpop.f32.mrb[0].mxu0
        %v6205 = vadd.f32 %v6160, %v6204
        %v6206 = vpop.f32.mrb[0].mxu0
        %v6207 = vadd.f32 %v6162, %v6206
        %6208 = vmatprep.mubr.f32.mxu0 %v5850
        %6209 = vmatmul.mubr.f32.gmra.mrb[0].mxu0 %v5849
        %v6210 = vpop.f32.mrb[0].mxu0
        %v6211 = vadd.f32 %v6166, %v6210
        %v6212 = vpop.f32.mrb[0].mxu0
        %v6213 = vadd.f32 %v6168, %v6212
        %6214 = vdwg.mxu0
        %6215 = vmatprep.subr.bf16.mxu0 %v3647
        %6216 = vmatpush1.bf16.msra.mxu0 %v3646
        %6217 = vmatprep.subr.bf16.mxu0 %v3651
        %6218 = vmatpush1.bf16.msra.mxu0 %v3650
        %6219 = vmatprep.subr.bf16.mxu0 %v3655
        %6220 = vmatpush1.bf16.msra.mxu0 %v3654
        %6221 = vmatprep.subr.bf16.mxu0 %v3659
        %6222 = vmatpush1.bf16.msra.mxu0 %v3658
        %6223 = vmatprep.subr.bf16.mxu0 %v3663
        %6224 = vmatpush1.bf16.msra.mxu0 %v3662
        %6225 = vmatprep.subr.bf16.mxu0 %v3667
        %6226 = vmatpush1.bf16.msra.mxu0 %v3666
        %6227 = vmatprep.subr.bf16.mxu0 %v3671
        %6228 = vmatpush1.bf16.msra.mxu0 %v3670
        %6229 = vmatprep.subr.bf16.mxu0 %v3675
        %6230 = vmatpush1.bf16.msra.mxu0 %v3674
        %6231 = vmatprep.subr.bf16.mxu0 %v3679
        %6232 = vmatpush1.bf16.msra.mxu0 %v3678
        %6233 = vmatprep.subr.bf16.mxu0 %v3683
        %6234 = vmatpush1.bf16.msra.mxu0 %v3682
        %6235 = vmatprep.subr.bf16.mxu0 %v3687
        %6236 = vmatpush1.bf16.msra.mxu0 %v3686
        %6237 = vmatprep.subr.bf16.mxu0 %v3691
        %6238 = vmatpush1.bf16.msra.mxu0 %v3690
        %6239 = vmatprep.subr.bf16.mxu0 %v3695
        %6240 = vmatpush1.bf16.msra.mxu0 %v3694
        %6241 = vmatprep.subr.bf16.mxu0 %v3699
        %6242 = vmatpush1.bf16.msra.mxu0 %v3698
        %6243 = vmatprep.subr.bf16.mxu0 %v3703
        %6244 = vmatpush1.bf16.msra.mxu0 %v3702
        %6245 = vmatprep.subr.bf16.mxu0 %v3707
        %6246 = vmatpush1.bf16.msra.mxu0 %v3706
        %6247 = vmatprep.mubr.f32.mxu0 %v5842
        %6248 = vmatmul.mubr.f32.gmra.mrb[0].mxu0 %v5841
        %v6249 = vpop.f32.mrb[0].mxu0
        %v6250 = vadd.f32 %v6205, %v6249
        %v6251 = vpop.f32.mrb[0].mxu0
        %v6252 = vadd.f32 %v6207, %v6251
        %6253 = vmatprep.mubr.f32.mxu0 %v5852
        %6254 = vmatmul.mubr.f32.gmra.mrb[0].mxu0 %v5851
        %v6255 = vpop.f32.mrb[0].mxu0
        %v6256 = vadd.f32 %v6211, %v6255
        %v6257 = vpop.f32.mrb[0].mxu0
        %v6258 = vadd.f32 %v6213, %v6257
        %6259 = vdwg.mxu0
        %6260 = vmatprep.subr.bf16.mxu0 %v3711
        %6261 = vmatpush1.bf16.msra.mxu0 %v3710
        %6262 = vmatprep.subr.bf16.mxu0 %v3715
        %6263 = vmatpush1.bf16.msra.mxu0 %v3714
        %6264 = vmatprep.subr.bf16.mxu0 %v3719
        %6265 = vmatpush1.bf16.msra.mxu0 %v3718
        %6266 = vmatprep.subr.bf16.mxu0 %v3723
        %6267 = vmatpush1.bf16.msra.mxu0 %v3722
        %6268 = vmatprep.subr.bf16.mxu0 %v3727
        %6269 = vmatpush1.bf16.msra.mxu0 %v3726
        %6270 = vmatprep.subr.bf16.mxu0 %v3731
        %6271 = vmatpush1.bf16.msra.mxu0 %v3730
        %6272 = vmatprep.subr.bf16.mxu0 %v3735
        %6273 = vmatpush1.bf16.msra.mxu0 %v3734
        %6274 = vmatprep.subr.bf16.mxu0 %v3739
        %6275 = vmatpush1.bf16.msra.mxu0 %v3738
        %6276 = vmatprep.subr.bf16.mxu0 %v3743
        %6277 = vmatpush1.bf16.msra.mxu0 %v3742
        %6278 = vmatprep.subr.bf16.mxu0 %v3747
        %6279 = vmatpush1.bf16.msra.mxu0 %v3746
        %6280 = vmatprep.subr.bf16.mxu0 %v3751
        %6281 = vmatpush1.bf16.msra.mxu0 %v3750
        %6282 = vmatprep.subr.bf16.mxu0 %v3755
        %6283 = vmatpush1.bf16.msra.mxu0 %v3754
        %6284 = vmatprep.subr.bf16.mxu0 %v3759
        %6285 = vmatpush1.bf16.msra.mxu0 %v3758
        %6286 = vmatprep.subr.bf16.mxu0 %v3763
        %6287 = vmatpush1.bf16.msra.mxu0 %v3762
        %6288 = vmatprep.subr.bf16.mxu0 %v3767
        %6289 = vmatpush1.bf16.msra.mxu0 %v3766
        %6290 = vmatprep.subr.bf16.mxu0 %v3771
        %6291 = vmatpush1.bf16.msra.mxu0 %v3770
        %6292 = vmatprep.mubr.f32.mxu0 %v5844
        %6293 = vmatmul.mubr.f32.gmra.mrb[0].mxu0 %v5843
        %v6294 = vpop.f32.mrb[0].mxu0
        %v6295 = vadd.f32 %v6250, %v6294
        %v6296 = vpop.f32.mrb[0].mxu0
        %v6297 = vadd.f32 %v6252, %v6296
        %6298 = vmatprep.mubr.f32.mxu0 %v5854
        %6299 = vmatmul.mubr.f32.gmra.mrb[0].mxu0 %v5853
        %v6300 = vpop.f32.mrb[0].mxu0
        %v6301 = vadd.f32 %v6256, %v6300
        %v6302 = vpop.f32.mrb[0].mxu0
        %v6303 = vadd.f32 %v6258, %v6302
        %6304 = vdwg.mxu0
        %6305 = vmatprep.subr.bf16.mxu0 %v3457
        %6306 = vmatpush1.bf16.msra.mxu0 %v3456
        %6307 = vmatprep.subr.bf16.mxu0 %v3461
        %6308 = vmatpush1.bf16.msra.mxu0 %v3460
        %6309 = vmatprep.subr.bf16.mxu0 %v3465
        %6310 = vmatpush1.bf16.msra.mxu0 %v3464
        %6311 = vmatprep.subr.bf16.mxu0 %v3469
        %6312 = vmatpush1.bf16.msra.mxu0 %v3468
        %6313 = vmatprep.subr.bf16.mxu0 %v3473
        %6314 = vmatpush1.bf16.msra.mxu0 %v3472
        %6315 = vmatprep.subr.bf16.mxu0 %v3477
        %6316 = vmatpush1.bf16.msra.mxu0 %v3476
        %6317 = vmatprep.subr.bf16.mxu0 %v3481
        %6318 = vmatpush1.bf16.msra.mxu0 %v3480
        %6319 = vmatprep.subr.bf16.mxu0 %v3485
        %6320 = vmatpush1.bf16.msra.mxu0 %v3484
        %6321 = vmatprep.subr.bf16.mxu0 %v3489
        %6322 = vmatpush1.bf16.msra.mxu0 %v3488
        %6323 = vmatprep.subr.bf16.mxu0 %v3493
        %6324 = vmatpush1.bf16.msra.mxu0 %v3492
        %6325 = vmatprep.subr.bf16.mxu0 %v3497
        %6326 = vmatpush1.bf16.msra.mxu0 %v3496
        %6327 = vmatprep.subr.bf16.mxu0 %v3501
        %6328 = vmatpush1.bf16.msra.mxu0 %v3500
        %6329 = vmatprep.subr.bf16.mxu0 %v3505
        %6330 = vmatpush1.bf16.msra.mxu0 %v3504
        %6331 = vmatprep.subr.bf16.mxu0 %v3509
        %6332 = vmatpush1.bf16.msra.mxu0 %v3508
        %6333 = vmatprep.subr.bf16.mxu0 %v3513
        %6334 = vmatpush1.bf16.msra.mxu0 %v3512
        %6335 = vmatprep.subr.bf16.mxu0 %v3517
        %6336 = vmatpush1.bf16.msra.mxu0 %v3516
        %6337 = vmatprep.mubr.f32.mxu0 %v5836
        %6338 = vmatmul.mubr.f32.gmra.mrb[0].mxu0 %v5835
        %v6339 = vpop.f32.mrb[0].mxu0
        %v6340 = vadd.f32 %v2485, %v6339
        %v6341 = vpop.f32.mrb[0].mxu0
        %v6342 = vadd.f32 %v2489, %v6341
        %6343 = vmatprep.mubr.f32.mxu0 %v5846
        %6344 = vmatmul.mubr.f32.gmra.mrb[0].mxu0 %v5845
        %v6345 = vpop.f32.mrb[0].mxu0
        %v6346 = vadd.f32 %v2485, %v6345
        %v6347 = vpop.f32.mrb[0].mxu0
        %v6348 = vadd.f32 %v2489, %v6347
        %6349 = vdwg.mxu0
        %6350 = vmatprep.subr.bf16.mxu0 %v3521
        %6351 = vmatpush1.bf16.msra.mxu0 %v3520
        %6352 = vmatprep.subr.bf16.mxu0 %v3525
        %6353 = vmatpush1.bf16.msra.mxu0 %v3524
        %6354 = vmatprep.subr.bf16.mxu0 %v3529
        %6355 = vmatpush1.bf16.msra.mxu0 %v3528
        %6356 = vmatprep.subr.bf16.mxu0 %v3533
        %6357 = vmatpush1.bf16.msra.mxu0 %v3532
        %6358 = vmatprep.subr.bf16.mxu0 %v3537
        %6359 = vmatpush1.bf16.msra.mxu0 %v3536
        %6360 = vmatprep.subr.bf16.mxu0 %v3541
        %6361 = vmatpush1.bf16.msra.mxu0 %v3540
        %6362 = vmatprep.subr.bf16.mxu0 %v3545
        %6363 = vmatpush1.bf16.msra.mxu0 %v3544
        %6364 = vmatprep.subr.bf16.mxu0 %v3549
        %6365 = vmatpush1.bf16.msra.mxu0 %v3548
        %6366 = vmatprep.subr.bf16.mxu0 %v3553
        %6367 = vmatpush1.bf16.msra.mxu0 %v3552
        %6368 = vmatprep.subr.bf16.mxu0 %v3557
        %6369 = vmatpush1.bf16.msra.mxu0 %v3556
        %6370 = vmatprep.subr.bf16.mxu0 %v3561
        %6371 = vmatpush1.bf16.msra.mxu0 %v3560
        %6372 = vmatprep.subr.bf16.mxu0 %v3565
        %6373 = vmatpush1.bf16.msra.mxu0 %v3564
        %6374 = vmatprep.subr.bf16.mxu0 %v3569
        %6375 = vmatpush1.bf16.msra.mxu0 %v3568
        %6376 = vmatprep.subr.bf16.mxu0 %v3573
        %6377 = vmatpush1.bf16.msra.mxu0 %v3572
        %6378 = vmatprep.subr.bf16.mxu0 %v3577
        %6379 = vmatpush1.bf16.msra.mxu0 %v3576
        %6380 = vmatprep.subr.bf16.mxu0 %v3581
        %6381 = vmatpush1.bf16.msra.mxu0 %v3580
        %6382 = vmatprep.mubr.f32.mxu0 %v5838
        %6383 = vmatmul.mubr.f32.gmra.mrb[0].mxu0 %v5837
        %v6384 = vpop.f32.mrb[0].mxu0
        %v6385 = vadd.f32 %v6340, %v6384
        %v6386 = vpop.f32.mrb[0].mxu0
        %v6387 = vadd.f32 %v6342, %v6386
        %6388 = vmatprep.mubr.f32.mxu0 %v5848
        %6389 = vmatmul.mubr.f32.gmra.mrb[0].mxu0 %v5847
        %v6390 = vpop.f32.mrb[0].mxu0
        %v6391 = vadd.f32 %v6346, %v6390
        %v6392 = vpop.f32.mrb[0].mxu0
        %v6393 = vadd.f32 %v6348, %v6392
        %6394 = vdwg.mxu0
        %6395 = vmatprep.subr.bf16.mxu0 %v3585
        %6396 = vmatpush1.bf16.msra.mxu0 %v3584
        %6397 = vmatprep.subr.bf16.mxu0 %v3589
        %6398 = vmatpush1.bf16.msra.mxu0 %v3588
        %6399 = vmatprep.subr.bf16.mxu0 %v3593
        %6400 = vmatpush1.bf16.msra.mxu0 %v3592
        %6401 = vmatprep.subr.bf16.mxu0 %v3597
        %6402 = vmatpush1.bf16.msra.mxu0 %v3596
        %6403 = vmatprep.subr.bf16.mxu0 %v3601
        %6404 = vmatpush1.bf16.msra.mxu0 %v3600
        %6405 = vmatprep.subr.bf16.mxu0 %v3605
        %6406 = vmatpush1.bf16.msra.mxu0 %v3604
        %6407 = vmatprep.subr.bf16.mxu0 %v3609
        %6408 = vmatpush1.bf16.msra.mxu0 %v3608
        %6409 = vmatprep.subr.bf16.mxu0 %v3613
        %6410 = vmatpush1.bf16.msra.mxu0 %v3612
        %6411 = vmatprep.subr.bf16.mxu0 %v3617
        %6412 = vmatpush1.bf16.msra.mxu0 %v3616
        %6413 = vmatprep.subr.bf16.mxu0 %v3621
        %6414 = vmatpush1.bf16.msra.mxu0 %v3620
        %6415 = vmatprep.subr.bf16.mxu0 %v3625
        %6416 = vmatpush1.bf16.msra.mxu0 %v3624
        %6417 = vmatprep.subr.bf16.mxu0 %v3629
        %6418 = vmatpush1.bf16.msra.mxu0 %v3628
        %6419 = vmatprep.subr.bf16.mxu0 %v3633
        %6420 = vmatpush1.bf16.msra.mxu0 %v3632
        %6421 = vmatprep.subr.bf16.mxu0 %v3637
        %6422 = vmatpush1.bf16.msra.mxu0 %v3636
        %6423 = vmatprep.subr.bf16.mxu0 %v3641
        %6424 = vmatpush1.bf16.msra.mxu0 %v3640
        %6425 = vmatprep.subr.bf16.mxu0 %v3645
        %6426 = vmatpush1.bf16.msra.mxu0 %v3644
        %6427 = vmatprep.mubr.f32.mxu0 %v5840
        %6428 = vmatmul.mubr.f32.gmra.mrb[0].mxu0 %v5839
        %v6429 = vpop.f32.mrb[0].mxu0
        %v6430 = vadd.f32 %v6385, %v6429
        %v6431 = vpop.f32.mrb[0].mxu0
        %v6432 = vadd.f32 %v6387, %v6431
        %6433 = vmatprep.mubr.f32.mxu0 %v5850
        %6434 = vmatmul.mubr.f32.gmra.mrb[0].mxu0 %v5849
        %v6435 = vpop.f32.mrb[0].mxu0
        %v6436 = vadd.f32 %v6391, %v6435
        %v6437 = vpop.f32.mrb[0].mxu0
        %v6438 = vadd.f32 %v6393, %v6437
        %6439 = vdwg.mxu0
        %6440 = vmatprep.subr.bf16.mxu0 %v3649
        %6441 = vmatpush1.bf16.msra.mxu0 %v3648
        %6442 = vmatprep.subr.bf16.mxu0 %v3653
        %6443 = vmatpush1.bf16.msra.mxu0 %v3652
        %6444 = vmatprep.subr.bf16.mxu0 %v3657
        %6445 = vmatpush1.bf16.msra.mxu0 %v3656
        %6446 = vmatprep.subr.bf16.mxu0 %v3661
        %6447 = vmatpush1.bf16.msra.mxu0 %v3660
        %6448 = vmatprep.subr.bf16.mxu0 %v3665
        %6449 = vmatpush1.bf16.msra.mxu0 %v3664
        %6450 = vmatprep.subr.bf16.mxu0 %v3669
        %6451 = vmatpush1.bf16.msra.mxu0 %v3668
        %6452 = vmatprep.subr.bf16.mxu0 %v3673
        %6453 = vmatpush1.bf16.msra.mxu0 %v3672
        %6454 = vmatprep.subr.bf16.mxu0 %v3677
        %6455 = vmatpush1.bf16.msra.mxu0 %v3676
        %6456 = vmatprep.subr.bf16.mxu0 %v3681
        %6457 = vmatpush1.bf16.msra.mxu0 %v3680
        %6458 = vmatprep.subr.bf16.mxu0 %v3685
        %6459 = vmatpush1.bf16.msra.mxu0 %v3684
        %6460 = vmatprep.subr.bf16.mxu0 %v3689
        %6461 = vmatpush1.bf16.msra.mxu0 %v3688
        %6462 = vmatprep.subr.bf16.mxu0 %v3693
        %6463 = vmatpush1.bf16.msra.mxu0 %v3692
        %6464 = vmatprep.subr.bf16.mxu0 %v3697
        %6465 = vmatpush1.bf16.msra.mxu0 %v3696
        %6466 = vmatprep.subr.bf16.mxu0 %v3701
        %6467 = vmatpush1.bf16.msra.mxu0 %v3700
        %6468 = vmatprep.subr.bf16.mxu0 %v3705
        %6469 = vmatpush1.bf16.msra.mxu0 %v3704
        %6470 = vmatprep.subr.bf16.mxu0 %v3709
        %6471 = vmatpush1.bf16.msra.mxu0 %v3708
        %6472 = vmatprep.mubr.f32.mxu0 %v5842
        %6473 = vmatmul.mubr.f32.gmra.mrb[0].mxu0 %v5841
        %v6474 = vpop.f32.mrb[0].mxu0
        %v6475 = vadd.f32 %v6430, %v6474
        %v6476 = vpop.f32.mrb[0].mxu0
        %v6477 = vadd.f32 %v6432, %v6476
        %6478 = vmatprep.mubr.f32.mxu0 %v5852
        %6479 = vmatmul.mubr.f32.gmra.mrb[0].mxu0 %v5851
        %v6480 = vpop.f32.mrb[0].mxu0
        %v6481 = vadd.f32 %v6436, %v6480
        %v6482 = vpop.f32.mrb[0].mxu0
        %v6483 = vadd.f32 %v6438, %v6482
        %6484 = vdwg.mxu0
        %6485 = vmatprep.subr.bf16.mxu0 %v3713
        %6486 = vmatpush1.bf16.msra.mxu0 %v3712
        %6487 = vmatprep.subr.bf16.mxu0 %v3717
        %6488 = vmatpush1.bf16.msra.mxu0 %v3716
        %6489 = vmatprep.subr.bf16.mxu0 %v3721
        %6490 = vmatpush1.bf16.msra.mxu0 %v3720
        %6491 = vmatprep.subr.bf16.mxu0 %v3725
        %6492 = vmatpush1.bf16.msra.mxu0 %v3724
        %6493 = vmatprep.subr.bf16.mxu0 %v3729
        %6494 = vmatpush1.bf16.msra.mxu0 %v3728
        %6495 = vmatprep.subr.bf16.mxu0 %v3733
        %6496 = vmatpush1.bf16.msra.mxu0 %v3732
        %6497 = vmatprep.subr.bf16.mxu0 %v3737
        %6498 = vmatpush1.bf16.msra.mxu0 %v3736
        %6499 = vmatprep.subr.bf16.mxu0 %v3741
        %6500 = vmatpush1.bf16.msra.mxu0 %v3740
        %6501 = vmatprep.subr.bf16.mxu0 %v3745
        %6502 = vmatpush1.bf16.msra.mxu0 %v3744
        %6503 = vmatprep.subr.bf16.mxu0 %v3749
        %6504 = vmatpush1.bf16.msra.mxu0 %v3748
        %6505 = vmatprep.subr.bf16.mxu0 %v3753
        %6506 = vmatpush1.bf16.msra.mxu0 %v3752
        %6507 = vmatprep.subr.bf16.mxu0 %v3757
        %6508 = vmatpush1.bf16.msra.mxu0 %v3756
        %6509 = vmatprep.subr.bf16.mxu0 %v3761
        %6510 = vmatpush1.bf16.msra.mxu0 %v3760
        %6511 = vmatprep.subr.bf16.mxu0 %v3765
        %6512 = vmatpush1.bf16.msra.mxu0 %v3764
        %6513 = vmatprep.subr.bf16.mxu0 %v3769
        %6514 = vmatpush1.bf16.msra.mxu0 %v3768
        %6515 = vmatprep.subr.bf16.mxu0 %v3773
        %6516 = vmatpush1.bf16.msra.mxu0 %v3772
        %6517 = vmatprep.mubr.f32.mxu0 %v5844
        %6518 = vmatmul.mubr.f32.gmra.mrb[0].mxu0 %v5843
        %v6519 = vpop.f32.mrb[0].mxu0
        %v6520 = vadd.f32 %v6475, %v6519
        %v6521 = vpop.f32.mrb[0].mxu0
        %v6522 = vadd.f32 %v6477, %v6521
        %6523 = vmatprep.mubr.f32.mxu0 %v5854
        %6524 = vmatmul.mubr.f32.gmra.mrb[0].mxu0 %v5853
        %v6525 = vpop.f32.mrb[0].mxu0
        %v6526 = vadd.f32 %v6481, %v6525
        %v6527 = vpop.f32.mrb[0].mxu0
        %v6528 = vadd.f32 %v6483, %v6527
        %6529 = vdwg.mxu0
        %6530 = vmatprep.subr.mxu0 %v6297
        %6531 = vmatpush1.xpose.msra.mxu0 %v6295
        %6532 = vmatprep.subr.mxu0 %v6303
        %6533 = vmatpush1.xpose.msra.mxu0 %v6301
        %6534 = vmatprep.subr.mxu0 0.0
        %6535 = vmatpush1.xpose.msra.mxu0 0.0
        %6536 = vmatprep.subr.mxu0 0.0
        %6537 = vmatpush1.xpose.msra.mxu0 0.0
        %6538 = vmatprep.subr.mxu0 0.0
        %6539 = vmatpush1.xpose.msra.mxu0 0.0
        %6540 = vmatprep.subr.mxu0 0.0
        %6541 = vmatpush1.xpose.msra.mxu0 0.0
        %6542 = vmatprep.subr.mxu0 0.0
        %6543 = vmatpush1.xpose.msra.mxu0 0.0
        %6544 = vmatprep.subr.mxu0 0.0
        %6545 = vmatpush1.xpose.msra.mxu0 0.0
        %6546 = vmatprep.subr.mxu0 0.0
        %6547 = vmatpush1.xpose.msra.mxu0 0.0
        %6548 = vmatprep.subr.mxu0 0.0
        %6549 = vmatpush1.xpose.msra.mxu0 0.0
        %6550 = vmatprep.subr.mxu0 0.0
        %6551 = vmatpush1.xpose.msra.mxu0 0.0
        %6552 = vmatprep.subr.mxu0 0.0
        %6553 = vmatpush1.xpose.msra.mxu0 0.0
        %6554 = vmatprep.subr.mxu0 0.0
        %6555 = vmatpush1.xpose.msra.mxu0 0.0
        %6556 = vmatprep.subr.mxu0 0.0
        %6557 = vmatpush1.xpose.msra.mxu0 0.0
        %6558 = vmatprep.subr.mxu0 0.0
        %6559 = vmatpush1.xpose.msra.mxu0 0.0
        %6560 = vmatprep.subr.mxu0 0.0
        %6561 = vmatpush1.xpose.msra.mxu0 0.0
        %6562 = vmatprep.subr.mxu0 0.0
        %6563 = vmatpush1.xpose.msra.mxu0 0.0
        %6564 = vmatprep.subr.mxu0 0.0
        %6565 = vmatpush1.xpose.msra.mxu0 0.0
        %6566 = vmatprep.subr.mxu0 0.0
        %6567 = vmatpush1.xpose.msra.mxu0 0.0
        %6568 = vmatprep.subr.mxu0 0.0
        %6569 = vmatpush1.xpose.msra.mxu0 0.0
        %6570 = vmatprep.subr.mxu0 0.0
        %6571 = vmatpush1.xpose.msra.mxu0 0.0
        %6572 = vmatprep.subr.mxu0 0.0
        %6573 = vmatpush1.xpose.msra.mxu0 0.0
        %6574 = vmatprep.subr.mxu0 0.0
        %6575 = vmatpush1.xpose.msra.mxu0 0.0
        %6576 = vmatprep.subr.mxu0 0.0
        %6577 = vmatpush1.xpose.msra.mxu0 0.0
        %6578 = vmatprep.subr.mxu0 0.0
        %6579 = vmatpush1.xpose.msra.mxu0 0.0
        %6580 = vmatprep.subr.mxu0 0.0
        %6581 = vmatpush1.xpose.msra.mxu0 0.0
        %6582 = vmatprep.subr.mxu0 0.0
        %6583 = vmatpush1.xpose.msra.mxu0 0.0
        %6584 = vmatprep.subr.mxu0 0.0
        %6585 = vmatpush1.xpose.msra.mxu0 0.0
        %6586 = vmatprep.subr.mxu0 0.0
        %6587 = vmatpush1.xpose.msra.mxu0 0.0
        %6588 = vmatprep.subr.mxu0 0.0
        %6589 = vmatpush1.xpose.msra.mxu0 0.0
        %6590 = vmatprep.subr.mxu0 0.0
        %6591 = vmatpush1.xpose.msra.mxu0 0.0
        %6592 = vmatprep.subr.mxu0 0.0
        %6593 = vmatpush1.xpose.msra.mxu0 0.0
        %6594 = vmatprep.mubr.f32.mxu0 %v6072
        %6595 = vmatmul.mubr.f32.gmra.mrb[0].mxu0 %v6070
        %v6596 = vpop.f32.mrb[0].mxu0
        %v6597 = vadd.f32 0.0, %v6596
        %v6598 = vpop.f32.mrb[0].mxu0
        %6599 = vmatprep.mubr.f32.mxu0 %v6078
        %6600 = vmatmul.mubr.f32.gmra.mrb[0].mxu0 %v6076
        %v6601 = vpop.f32.mrb[0].mxu0
        %v6602 = vadd.f32 0.0, %v6601
        %v6603 = vpop.f32.mrb[0].mxu0
        %6604 = vdwg.mxu0
        %v6605 = vmul.f32 %v6597, 0.0625
        %v6606 = vmul.f32 %v6602, 0.0625
        %v6607 = vsel %vm4621, %v6605, -inf
        %6608 = vmax.xlane.f32.xlu0 %v6607
        %v6609 = vpop.xlane.xlu0 %6608
        %v6610 = vsel %vm4625, %v6606, -inf
        %6611 = vmax.xlane.f32.xlu0 %v6610
        %v6612 = vpop.xlane.xlu0 %6611
        %v6613 = vsub.f32 %v6605, %v6609
        %v6614 = vsub.f32 %v6606, %v6612
        %v6615 = vmul.f32 %v6613, 1.442695
        %v6616 = vpow.pop %v6615
        %v6617 = vmul.f32 %v6614, 1.442695
        %v6618 = vpow.pop %v6617
        %v6619 = vsel %vm4621, %v6616, 0.0
        %6620 = vadd.xlane.f32.xlu0 %v6619
        %v6621 = vpop.xlane.xlu0 %6620
        %v6622 = vsel %vm4625, %v6618, 0.0
        %6623 = vadd.xlane.f32.xlu0 %v6622
        %v6624 = vpop.xlane.xlu0 %6623
        %v6625 = vrcp.pop %v6621
        %v6626 = vrcp.pop %v6624
        %v6627 = vmul.f32 %v6616, %v6625
        %v6628 = vmul.f32 %v6618, %v6626
        %v6630 = vsel %vm4621, %v6627, 0
        %v6633 = vsel %vm4621, %v6628, 0
        %6635 = vmatprep.subr.mxu0 %v6522
        %6636 = vmatpush1.msra.mxu0 %v6520
        %6637 = vmatprep.subr.mxu0 %v6528
        %6638 = vmatpush1.msra.mxu0 %v6526
        %6639 = vmatprep.subr.mxu0 0.0
        %6640 = vmatpush1.msra.mxu0 0.0
        %6641 = vmatprep.subr.mxu0 0.0
        %6642 = vmatpush1.msra.mxu0 0.0
        %6643 = vmatprep.subr.mxu0 0.0
        %6644 = vmatpush1.msra.mxu0 0.0
        %6645 = vmatprep.subr.mxu0 0.0
        %6646 = vmatpush1.msra.mxu0 0.0
        %6647 = vmatprep.subr.mxu0 0.0
        %6648 = vmatpush1.msra.mxu0 0.0
        %6649 = vmatprep.subr.mxu0 0.0
        %6650 = vmatpush1.msra.mxu0 0.0
        %6651 = vmatprep.subr.mxu0 0.0
        %6652 = vmatpush1.msra.mxu0 0.0
        %6653 = vmatprep.subr.mxu0 0.0
        %6654 = vmatpush1.msra.mxu0 0.0
        %6655 = vmatprep.subr.mxu0 0.0
        %6656 = vmatpush1.msra.mxu0 0.0
        %6657 = vmatprep.subr.mxu0 0.0
        %6658 = vmatpush1.msra.mxu0 0.0
        %6659 = vmatprep.subr.mxu0 0.0
        %6660 = vmatpush1.msra.mxu0 0.0
        %6661 = vmatprep.subr.mxu0 0.0
        %6662 = vmatpush1.msra.mxu0 0.0
        %6663 = vmatprep.subr.mxu0 0.0
        %6664 = vmatpush1.msra.mxu0 0.0
        %6665 = vmatprep.subr.mxu0 0.0
        %6666 = vmatpush1.msra.mxu0 0.0
        %6667 = vmatprep.subr.mxu0 0.0
        %6668 = vmatpush1.msra.mxu0 0.0
        %6669 = vmatprep.subr.mxu0 0.0
        %6670 = vmatpush1.msra.mxu0 0.0
        %6671 = vmatprep.subr.mxu0 0.0
        %6672 = vmatpush1.msra.mxu0 0.0
        %6673 = vmatprep.subr.mxu0 0.0
        %6674 = vmatpush1.msra.mxu0 0.0
        %6675 = vmatprep.subr.mxu0 0.0
        %6676 = vmatpush1.msra.mxu0 0.0
        %6677 = vmatprep.subr.mxu0 0.0
        %6678 = vmatpush1.msra.mxu0 0.0
        %6679 = vmatprep.subr.mxu0 0.0
        %6680 = vmatpush1.msra.mxu0 0.0
        %6681 = vmatprep.subr.mxu0 0.0
        %6682 = vmatpush1.msra.mxu0 0.0
        %6683 = vmatprep.subr.mxu0 0.0
        %6684 = vmatpush1.msra.mxu0 0.0
        %6685 = vmatprep.subr.mxu0 0.0
        %6686 = vmatpush1.msra.mxu0 0.0
        %6687 = vmatprep.subr.mxu0 0.0
        %6688 = vmatpush1.msra.mxu0 0.0
        %6689 = vmatprep.subr.mxu0 0.0
        %6690 = vmatpush1.msra.mxu0 0.0
        %6691 = vmatprep.subr.mxu0 0.0
        %6692 = vmatpush1.msra.mxu0 0.0
        %6693 = vmatprep.subr.mxu0 0.0
        %6694 = vmatpush1.msra.mxu0 0.0
        %6695 = vmatprep.subr.mxu0 0.0
        %6696 = vmatpush1.msra.mxu0 0.0
        %6697 = vmatprep.subr.mxu0 0.0
        %6698 = vmatpush1.msra.mxu0 0.0
        %6699 = vmatprep.mubr.f32.mxu0 0.0
        %6700 = vmatmul.mubr.f32.gmra.mrb[0].mxu0 %v6630
        %v6701 = vpop.f32.mrb[0].mxu0
        %v6702 = vadd.f32 0.0, %v6701
        %v6703 = vpop.f32.mrb[0].mxu0
        %v6704 = vadd.f32 0.0, %v6703
        %6705 = vmatprep.mubr.f32.mxu0 0.0
        %6706 = vmatmul.mubr.f32.gmra.mrb[0].mxu0 %v6633
        %v6707 = vpop.f32.mrb[0].mxu0
        %v6708 = vadd.f32 0.0, %v6707
        %v6709 = vpop.f32.mrb[0].mxu0
        %v6710 = vadd.f32 0.0, %v6709
        %6711 = vdwg.mxu0
        %s6712 = scalar_lea.vmem [#allocation3], 160
        %v6713 = vld [vmem:[%s6712] sm:$0xff]
        %v6714 = vld [vmem:[%s6712 + $0x8] sm:$0xff]
        %v6715 = vld [vmem:[%s6712 + $0x10] sm:$0xff]
        %v6716 = vld [vmem:[%s6712 + $0x18] sm:$0xff]
        %v6717 = vld [vmem:[%s6712 + $0x20] sm:$0xff]
        %v6718 = vld [vmem:[%s6712 + $0x28] sm:$0xff]
        %v6719 = vld [vmem:[%s6712 + $0x30] sm:$0xff]
        %v6720 = vld [vmem:[%s6712 + $0x38] sm:$0xff]
        %v6721 = vld [vmem:[%s6712 + $0x40] sm:$0xff]
        %v6722 = vld [vmem:[%s6712 + $0x48] sm:$0xff]
        %v6723 = vld [vmem:[%s6712 + $0x50] sm:$0x7]
        %v6724 = vld [vmem:[%s6712 + $0x58] sm:$0x7]
        %v6725 = vld [vmem:[%s6712 + $0x60] sm:$0x7]
        %v6726 = vld [vmem:[%s6712 + $0x68] sm:$0x7]
        %v6727 = vld [vmem:[%s6712 + $0x70] sm:$0x7]
        %v6728 = vld [vmem:[%s6712 + $0x78] sm:$0x7]
        %v6729 = vld [vmem:[%s6712 + $0x80] sm:$0x7]
        %v6730 = vld [vmem:[%s6712 + $0x88] sm:$0x7]
        %v6731 = vld [vmem:[%s6712 + $0x90] sm:$0x7]
        %v6732 = vld [vmem:[%s6712 + $0x98] sm:$0x7]
        %6733 = vmatprep.subr.bf16.mxu0 %v5229
        %6734 = vmatpush1.bf16.msra.mxu0 %v5228
        %6735 = vmatprep.subr.bf16.mxu0 %v5239
        %6736 = vmatpush1.bf16.msra.mxu0 %v5238
        %6737 = vmatprep.subr.bf16.mxu0 %v5249
        %6738 = vmatpush1.bf16.msra.mxu0 %v5248
        %6739 = vmatprep.subr.bf16.mxu0 %v5259
        %6740 = vmatpush1.bf16.msra.mxu0 %v5258
        %6741 = vmatprep.subr.bf16.mxu0 %v5269
        %6742 = vmatpush1.bf16.msra.mxu0 %v5268
        %6743 = vmatprep.subr.bf16.mxu0 %v5279
        %6744 = vmatpush1.bf16.msra.mxu0 %v5278
        %6745 = vmatprep.subr.bf16.mxu0 %v5289
        %6746 = vmatpush1.bf16.msra.mxu0 %v5288
        %6747 = vmatprep.subr.bf16.mxu0 %v5299
        %6748 = vmatpush1.bf16.msra.mxu0 %v5298
        %6749 = vmatprep.subr.bf16.mxu0 %v5309
        %6750 = vmatpush1.bf16.msra.mxu0 %v5308
        %6751 = vmatprep.subr.bf16.mxu0 %v5319
        %6752 = vmatpush1.bf16.msra.mxu0 %v5318
        %6753 = vmatprep.subr.bf16.mxu0 %v5329
        %6754 = vmatpush1.bf16.msra.mxu0 %v5328
        %6755 = vmatprep.subr.bf16.mxu0 %v5339
        %6756 = vmatpush1.bf16.msra.mxu0 %v5338
        %6757 = vmatprep.subr.bf16.mxu0 %v5349
        %6758 = vmatpush1.bf16.msra.mxu0 %v5348
        %6759 = vmatprep.subr.bf16.mxu0 %v5359
        %6760 = vmatpush1.bf16.msra.mxu0 %v5358
        %6761 = vmatprep.subr.bf16.mxu0 %v5369
        %6762 = vmatpush1.bf16.msra.mxu0 %v5368
        %6763 = vmatprep.subr.bf16.mxu0 %v5379
        %6764 = vmatpush1.bf16.msra.mxu0 %v5378
        %6765 = vmatprep.mubr.f32.mxu0 %v6704
        %6766 = vmatmul.mubr.f32.gmra.mrb[0].mxu0 %v6702
        %v6767 = vpop.f32.mrb[0].mxu0
        %v6768 = vadd.f32 0.0, %v6767
        %v6769 = vpop.f32.mrb[0].mxu0
        %v6770 = vadd.f32 0.0, %v6769
        %6771 = vmatprep.mubr.f32.mxu0 %v6710
        %6772 = vmatmul.mubr.f32.gmra.mrb[0].mxu0 %v6708
        %v6773 = vpop.f32.mrb[0].mxu0
        %v6774 = vadd.f32 0.0, %v6773
        %v6775 = vpop.f32.mrb[0].mxu0
        %v6776 = vadd.f32 0.0, %v6775
        %6777 = vdwg.mxu0
        %6778 = vmatprep.subr.bf16.mxu0 %v5231
        %6779 = vmatpush1.bf16.msra.mxu0 %v5230
        %6780 = vmatprep.subr.bf16.mxu0 %v5241
        %6781 = vmatpush1.bf16.msra.mxu0 %v5240
        %6782 = vmatprep.subr.bf16.mxu0 %v5251
        %6783 = vmatpush1.bf16.msra.mxu0 %v5250
        %6784 = vmatprep.subr.bf16.mxu0 %v5261
        %6785 = vmatpush1.bf16.msra.mxu0 %v5260
        %6786 = vmatprep.subr.bf16.mxu0 %v5271
        %6787 = vmatpush1.bf16.msra.mxu0 %v5270
        %6788 = vmatprep.subr.bf16.mxu0 %v5281
        %6789 = vmatpush1.bf16.msra.mxu0 %v5280
        %6790 = vmatprep.subr.bf16.mxu0 %v5291
        %6791 = vmatpush1.bf16.msra.mxu0 %v5290
        %6792 = vmatprep.subr.bf16.mxu0 %v5301
        %6793 = vmatpush1.bf16.msra.mxu0 %v5300
        %6794 = vmatprep.subr.bf16.mxu0 %v5311
        %6795 = vmatpush1.bf16.msra.mxu0 %v5310
        %6796 = vmatprep.subr.bf16.mxu0 %v5321
        %6797 = vmatpush1.bf16.msra.mxu0 %v5320
        %6798 = vmatprep.subr.bf16.mxu0 %v5331
        %6799 = vmatpush1.bf16.msra.mxu0 %v5330
        %6800 = vmatprep.subr.bf16.mxu0 %v5341
        %6801 = vmatpush1.bf16.msra.mxu0 %v5340
        %6802 = vmatprep.subr.bf16.mxu0 %v5351
        %6803 = vmatpush1.bf16.msra.mxu0 %v5350
        %6804 = vmatprep.subr.bf16.mxu0 %v5361
        %6805 = vmatpush1.bf16.msra.mxu0 %v5360
        %6806 = vmatprep.subr.bf16.mxu0 %v5371
        %6807 = vmatpush1.bf16.msra.mxu0 %v5370
        %6808 = vmatprep.subr.bf16.mxu0 %v5381
        %6809 = vmatpush1.bf16.msra.mxu0 %v5380
        %6810 = vmatprep.mubr.f32.mxu0 %v6704
        %6811 = vmatmul.mubr.f32.gmra.mrb[0].mxu0 %v6702
        %v6812 = vpop.f32.mrb[0].mxu0
        %v6813 = vadd.f32 0.0, %v6812
        %v6814 = vpop.f32.mrb[0].mxu0
        %v6815 = vadd.f32 0.0, %v6814
        %6816 = vmatprep.mubr.f32.mxu0 %v6710
        %6817 = vmatmul.mubr.f32.gmra.mrb[0].mxu0 %v6708
        %v6818 = vpop.f32.mrb[0].mxu0
        %v6819 = vadd.f32 0.0, %v6818
        %v6820 = vpop.f32.mrb[0].mxu0
        %v6821 = vadd.f32 0.0, %v6820
        %6822 = vdwg.mxu0
        %6823 = vmatprep.subr.bf16.mxu0 %v5233
        %6824 = vmatpush1.bf16.msra.mxu0 %v5232
        %6825 = vmatprep.subr.bf16.mxu0 %v5243
        %6826 = vmatpush1.bf16.msra.mxu0 %v5242
        %6827 = vmatprep.subr.bf16.mxu0 %v5253
        %6828 = vmatpush1.bf16.msra.mxu0 %v5252
        %6829 = vmatprep.subr.bf16.mxu0 %v5263
        %6830 = vmatpush1.bf16.msra.mxu0 %v5262
        %6831 = vmatprep.subr.bf16.mxu0 %v5273
        %6832 = vmatpush1.bf16.msra.mxu0 %v5272
        %6833 = vmatprep.subr.bf16.mxu0 %v5283
        %6834 = vmatpush1.bf16.msra.mxu0 %v5282
        %6835 = vmatprep.subr.bf16.mxu0 %v5293
        %6836 = vmatpush1.bf16.msra.mxu0 %v5292
        %6837 = vmatprep.subr.bf16.mxu0 %v5303
        %6838 = vmatpush1.bf16.msra.mxu0 %v5302
        %6839 = vmatprep.subr.bf16.mxu0 %v5313
        %6840 = vmatpush1.bf16.msra.mxu0 %v5312
        %6841 = vmatprep.subr.bf16.mxu0 %v5323
        %6842 = vmatpush1.bf16.msra.mxu0 %v5322
        %6843 = vmatprep.subr.bf16.mxu0 %v5333
        %6844 = vmatpush1.bf16.msra.mxu0 %v5332
        %6845 = vmatprep.subr.bf16.mxu0 %v5343
        %6846 = vmatpush1.bf16.msra.mxu0 %v5342
        %6847 = vmatprep.subr.bf16.mxu0 %v5353
        %6848 = vmatpush1.bf16.msra.mxu0 %v5352
        %6849 = vmatprep.subr.bf16.mxu0 %v5363
        %6850 = vmatpush1.bf16.msra.mxu0 %v5362
        %6851 = vmatprep.subr.bf16.mxu0 %v5373
        %6852 = vmatpush1.bf16.msra.mxu0 %v5372
        %6853 = vmatprep.subr.bf16.mxu0 %v5383
        %6854 = vmatpush1.bf16.msra.mxu0 %v5382
        %6855 = vmatprep.mubr.f32.mxu0 %v6704
        %6856 = vmatmul.mubr.f32.gmra.mrb[0].mxu0 %v6702
        %v6857 = vpop.f32.mrb[0].mxu0
        %v6858 = vadd.f32 0.0, %v6857
        %v6859 = vpop.f32.mrb[0].mxu0
        %v6860 = vadd.f32 0.0, %v6859
        %6861 = vmatprep.mubr.f32.mxu0 %v6710
        %6862 = vmatmul.mubr.f32.gmra.mrb[0].mxu0 %v6708
        %v6863 = vpop.f32.mrb[0].mxu0
        %v6864 = vadd.f32 0.0, %v6863
        %v6865 = vpop.f32.mrb[0].mxu0
        %v6866 = vadd.f32 0.0, %v6865
        %6867 = vdwg.mxu0
        %6868 = vmatprep.subr.bf16.mxu0 %v5235
        %6869 = vmatpush1.bf16.msra.mxu0 %v5234
        %6870 = vmatprep.subr.bf16.mxu0 %v5245
        %6871 = vmatpush1.bf16.msra.mxu0 %v5244
        %6872 = vmatprep.subr.bf16.mxu0 %v5255
        %6873 = vmatpush1.bf16.msra.mxu0 %v5254
        %6874 = vmatprep.subr.bf16.mxu0 %v5265
        %6875 = vmatpush1.bf16.msra.mxu0 %v5264
        %6876 = vmatprep.subr.bf16.mxu0 %v5275
        %6877 = vmatpush1.bf16.msra.mxu0 %v5274
        %6878 = vmatprep.subr.bf16.mxu0 %v5285
        %6879 = vmatpush1.bf16.msra.mxu0 %v5284
        %6880 = vmatprep.subr.bf16.mxu0 %v5295
        %6881 = vmatpush1.bf16.msra.mxu0 %v5294
        %6882 = vmatprep.subr.bf16.mxu0 %v5305
        %6883 = vmatpush1.bf16.msra.mxu0 %v5304
        %6884 = vmatprep.subr.bf16.mxu0 %v5315
        %6885 = vmatpush1.bf16.msra.mxu0 %v5314
        %6886 = vmatprep.subr.bf16.mxu0 %v5325
        %6887 = vmatpush1.bf16.msra.mxu0 %v5324
        %6888 = vmatprep.subr.bf16.mxu0 %v5335
        %6889 = vmatpush1.bf16.msra.mxu0 %v5334
        %6890 = vmatprep.subr.bf16.mxu0 %v5345
        %6891 = vmatpush1.bf16.msra.mxu0 %v5344
        %6892 = vmatprep.subr.bf16.mxu0 %v5355
        %6893 = vmatpush1.bf16.msra.mxu0 %v5354
        %6894 = vmatprep.subr.bf16.mxu0 %v5365
        %6895 = vmatpush1.bf16.msra.mxu0 %v5364
        %6896 = vmatprep.subr.bf16.mxu0 %v5375
        %6897 = vmatpush1.bf16.msra.mxu0 %v5374
        %6898 = vmatprep.subr.bf16.mxu0 %v5385
        %6899 = vmatpush1.bf16.msra.mxu0 %v5384
        %6900 = vmatprep.mubr.f32.mxu0 %v6704
        %6901 = vmatmul.mubr.f32.gmra.mrb[0].mxu0 %v6702
        %v6902 = vpop.f32.mrb[0].mxu0
        %v6903 = vadd.f32 0.0, %v6902
        %v6904 = vpop.f32.mrb[0].mxu0
        %v6905 = vadd.f32 0.0, %v6904
        %6906 = vmatprep.mubr.f32.mxu0 %v6710
        %6907 = vmatmul.mubr.f32.gmra.mrb[0].mxu0 %v6708
        %v6908 = vpop.f32.mrb[0].mxu0
        %v6909 = vadd.f32 0.0, %v6908
        %v6910 = vpop.f32.mrb[0].mxu0
        %v6911 = vadd.f32 0.0, %v6910
        %6912 = vdwg.mxu0
        %6913 = vmatprep.subr.bf16.mxu0 %v5237
        %6914 = vmatpush1.bf16.msra.mxu0 %v5236
        %6915 = vmatprep.subr.bf16.mxu0 %v5247
        %6916 = vmatpush1.bf16.msra.mxu0 %v5246
        %6917 = vmatprep.subr.bf16.mxu0 %v5257
        %6918 = vmatpush1.bf16.msra.mxu0 %v5256
        %6919 = vmatprep.subr.bf16.mxu0 %v5267
        %6920 = vmatpush1.bf16.msra.mxu0 %v5266
        %6921 = vmatprep.subr.bf16.mxu0 %v5277
        %6922 = vmatpush1.bf16.msra.mxu0 %v5276
        %6923 = vmatprep.subr.bf16.mxu0 %v5287
        %6924 = vmatpush1.bf16.msra.mxu0 %v5286
        %6925 = vmatprep.subr.bf16.mxu0 %v5297
        %6926 = vmatpush1.bf16.msra.mxu0 %v5296
        %6927 = vmatprep.subr.bf16.mxu0 %v5307
        %6928 = vmatpush1.bf16.msra.mxu0 %v5306
        %6929 = vmatprep.subr.bf16.mxu0 %v5317
        %6930 = vmatpush1.bf16.msra.mxu0 %v5316
        %6931 = vmatprep.subr.bf16.mxu0 %v5327
        %6932 = vmatpush1.bf16.msra.mxu0 %v5326
        %6933 = vmatprep.subr.bf16.mxu0 %v5337
        %6934 = vmatpush1.bf16.msra.mxu0 %v5336
        %6935 = vmatprep.subr.bf16.mxu0 %v5347
        %6936 = vmatpush1.bf16.msra.mxu0 %v5346
        %6937 = vmatprep.subr.bf16.mxu0 %v5357
        %6938 = vmatpush1.bf16.msra.mxu0 %v5356
        %6939 = vmatprep.subr.bf16.mxu0 %v5367
        %6940 = vmatpush1.bf16.msra.mxu0 %v5366
        %6941 = vmatprep.subr.bf16.mxu0 %v5377
        %6942 = vmatpush1.bf16.msra.mxu0 %v5376
        %6943 = vmatprep.subr.bf16.mxu0 %v5387
        %6944 = vmatpush1.bf16.msra.mxu0 %v5386
        %6945 = vmatprep.mubr.f32.mxu0 %v6704
        %6946 = vmatmul.mubr.f32.gmra.mrb[0].mxu0 %v6702
        %v6947 = vpop.f32.mrb[0].mxu0
        %v6948 = vadd.f32 0.0, %v6947
        %v6949 = vpop.f32.mrb[0].mxu0
        %v6950 = vadd.f32 0.0, %v6949
        %6951 = vmatprep.mubr.f32.mxu0 %v6710
        %6952 = vmatmul.mubr.f32.gmra.mrb[0].mxu0 %v6708
        %v6953 = vpop.f32.mrb[0].mxu0
        %v6954 = vadd.f32 0.0, %v6953
        %v6955 = vpop.f32.mrb[0].mxu0
        %v6956 = vadd.f32 0.0, %v6955
        %6957 = vdwg.mxu0
        %v6958 = vadd.f32 %v6713, %v6768
        %v6959 = vadd.f32 %v6714, %v6770
        %v6960 = vadd.f32 %v6715, %v6813
        %v6961 = vadd.f32 %v6716, %v6815
        %v6962 = vadd.f32 %v6717, %v6858
        %v6963 = vadd.f32 %v6718, %v6860
        %v6964 = vadd.f32 %v6719, %v6903
        %v6965 = vadd.f32 %v6720, %v6905
        %v6966 = vadd.f32 %v6721, %v6948
        %v6967 = vadd.f32 %v6722, %v6950
        %v6968 = vadd.f32 %v6723, %v6774
        %v6969 = vadd.f32 %v6724, %v6776
        %v6970 = vadd.f32 %v6725, %v6819
        %v6971 = vadd.f32 %v6726, %v6821
        %v6972 = vadd.f32 %v6727, %v6864
        %v6973 = vadd.f32 %v6728, %v6866
        %v6974 = vadd.f32 %v6729, %v6909
        %v6975 = vadd.f32 %v6730, %v6911
        %v6976 = vadd.f32 %v6731, %v6954
        %v6977 = vadd.f32 %v6732, %v6956
        %6978 = vst [vmem:[%s6712] sm:$0xff] %v6958
        %6979 = vst [vmem:[%s6712 + $0x8] sm:$0xff] %v6959
        %6980 = vst [vmem:[%s6712 + $0x10] sm:$0xff] %v6960
        %6981 = vst [vmem:[%s6712 + $0x18] sm:$0xff] %v6961
        %6982 = vst [vmem:[%s6712 + $0x20] sm:$0xff] %v6962
        %6983 = vst [vmem:[%s6712 + $0x28] sm:$0xff] %v6963
        %6984 = vst [vmem:[%s6712 + $0x30] sm:$0xff] %v6964
        %6985 = vst [vmem:[%s6712 + $0x38] sm:$0xff] %v6965
        %6986 = vst [vmem:[%s6712 + $0x40] sm:$0xff] %v6966
        %6987 = vst [vmem:[%s6712 + $0x48] sm:$0xff] %v6967
        %6988 = vst [vmem:[%s6712 + $0x50] sm:$0x7] %v6968
        %6989 = vst [vmem:[%s6712 + $0x58] sm:$0x7] %v6969
        %6990 = vst [vmem:[%s6712 + $0x60] sm:$0x7] %v6970
        %6991 = vst [vmem:[%s6712 + $0x68] sm:$0x7] %v6971
        %6992 = vst [vmem:[%s6712 + $0x70] sm:$0x7] %v6972
        %6993 = vst [vmem:[%s6712 + $0x78] sm:$0x7] %v6973
        %6994 = vst [vmem:[%s6712 + $0x80] sm:$0x7] %v6974
        %6995 = vst [vmem:[%s6712 + $0x88] sm:$0x7] %v6975
        %6996 = vst [vmem:[%s6712 + $0x90] sm:$0x7] %v6976
        %6997 = vst [vmem:[%s6712 + $0x98] sm:$0x7] %v6977
        %p6998 = scmp.eq.s32.totalorder %s37, 4
        // Predicated region
        $region105: #{tpu_custom_call.1} parent=59 // pred_check
          %p6999 = pneg %p6998
        $region106: #{tpu_custom_call.1} parent=59 // pred_check_branch
          %7001 = sbr.rel (%p6999) target = $region108
        $region107: #{tpu_custom_call.1} parent=59 // pred_region
          %v7002 = vld [vmem:[#allocation2] sm:$0xff]
          %v7003 = vld [vmem:[#allocation2 + $0x8] sm:$0xff]
          %v7004 = vld [vmem:[#allocation2 + $0x10] sm:$0xff]
          %v7005 = vld [vmem:[#allocation2 + $0x18] sm:$0xff]
          %v7006 = vld [vmem:[#allocation2 + $0x20] sm:$0xff]
          %v7007 = vld [vmem:[#allocation2 + $0x28] sm:$0xff]
          %v7008 = vld [vmem:[#allocation2 + $0x30] sm:$0xff]
          %v7009 = vld [vmem:[#allocation2 + $0x38] sm:$0xff]
          %v7010 = vld [vmem:[#allocation2 + $0x40] sm:$0xff]
          %v7011 = vld [vmem:[#allocation2 + $0x48] sm:$0xff]
          %v7012 = vld [vmem:[#allocation2 + $0x50] sm:$0x7]
          %v7013 = vld [vmem:[#allocation2 + $0x58] sm:$0x7]
          %v7014 = vld [vmem:[#allocation2 + $0x60] sm:$0x7]
          %v7015 = vld [vmem:[#allocation2 + $0x68] sm:$0x7]
          %v7016 = vld [vmem:[#allocation2 + $0x70] sm:$0x7]
          %v7017 = vld [vmem:[#allocation2 + $0x78] sm:$0x7]
          %v7018 = vld [vmem:[#allocation2 + $0x80] sm:$0x7]
          %v7019 = vld [vmem:[#allocation2 + $0x88] sm:$0x7]
          %v7020 = vld [vmem:[#allocation2 + $0x90] sm:$0x7]
          %v7021 = vld [vmem:[#allocation2 + $0x98] sm:$0x7]
          %v7022 = vld [vmem:[#allocation3] sm:$0xff]
          %v7023 = vld [vmem:[#allocation3 + $0x8] sm:$0xff]
          %v7024 = vld [vmem:[#allocation3 + $0x10] sm:$0xff]
          %v7025 = vld [vmem:[#allocation3 + $0x18] sm:$0xff]
          %v7026 = vld [vmem:[#allocation3 + $0x20] sm:$0xff]
          %v7027 = vld [vmem:[#allocation3 + $0x28] sm:$0xff]
          %v7028 = vld [vmem:[#allocation3 + $0x30] sm:$0xff]
          %v7029 = vld [vmem:[#allocation3 + $0x38] sm:$0xff]
          %v7030 = vld [vmem:[#allocation3 + $0x40] sm:$0xff]
          %v7031 = vld [vmem:[#allocation3 + $0x48] sm:$0xff]
          %v7032 = vld [vmem:[#allocation3 + $0x50] sm:$0x7]
          %v7033 = vld [vmem:[#allocation3 + $0x58] sm:$0x7]
          %v7034 = vld [vmem:[#allocation3 + $0x60] sm:$0x7]
          %v7035 = vld [vmem:[#allocation3 + $0x68] sm:$0x7]
          %v7036 = vld [vmem:[#allocation3 + $0x70] sm:$0x7]
          %v7037 = vld [vmem:[#allocation3 + $0x78] sm:$0x7]
          %v7038 = vld [vmem:[#allocation3 + $0x80] sm:$0x7]
          %v7039 = vld [vmem:[#allocation3 + $0x88] sm:$0x7]
          %v7040 = vld [vmem:[#allocation3 + $0x90] sm:$0x7]
          %v7041 = vld [vmem:[#allocation3 + $0x98] sm:$0x7]
          %v7042 = vadd.f32 %v7002, %v7022
          %v7043 = vadd.f32 %v7003, %v7023
          %v7044 = vadd.f32 %v7004, %v7024
          %v7045 = vadd.f32 %v7005, %v7025
          %v7046 = vadd.f32 %v7006, %v7026
          %v7047 = vadd.f32 %v7007, %v7027
          %v7048 = vadd.f32 %v7008, %v7028
          %v7049 = vadd.f32 %v7009, %v7029
          %v7050 = vadd.f32 %v7010, %v7030
          %v7051 = vadd.f32 %v7011, %v7031
          %v7052 = vadd.f32 %v7012, %v7032
          %v7053 = vadd.f32 %v7013, %v7033
          %v7054 = vadd.f32 %v7014, %v7034
          %v7055 = vadd.f32 %v7015, %v7035
          %v7056 = vadd.f32 %v7016, %v7036
          %v7057 = vadd.f32 %v7017, %v7037
          %v7058 = vadd.f32 %v7018, %v7038
          %v7059 = vadd.f32 %v7019, %v7039
          %v7060 = vadd.f32 %v7020, %v7040
          %v7061 = vadd.f32 %v7021, %v7041
          %v7062 = vld [vmem:[%s561] sm:$0xff]
          %v7063 = vld [vmem:[%s561 + $0x8] sm:$0x3]
          %v7066 = vlaneseq
          %v7067 = vshrl.u32 %v7066, 7
          %v7068 = vsub.s32 0, %v7067
          %v7069 = vrot.slane %v7062, %v7068
          %v7070 = vlaneseq
          %v7071 = vshrl.u32 %v7070, 7
          %v7072 = vsub.s32 1, %v7071
          %v7073 = vrot.slane %v7062, %v7072
          %v7074 = vlaneseq
          %v7075 = vshrl.u32 %v7074, 7
          %v7076 = vsub.s32 2, %v7075
          %v7077 = vrot.slane %v7062, %v7076
          %v7078 = vlaneseq
          %v7079 = vshrl.u32 %v7078, 7
          %v7080 = vsub.s32 3, %v7079
          %v7081 = vrot.slane %v7062, %v7080
          %v7082 = vlaneseq
          %v7083 = vshrl.u32 %v7082, 7
          %v7084 = vsub.s32 4, %v7083
          %v7085 = vrot.slane %v7062, %v7084
          %v7086 = vlaneseq
          %v7087 = vshrl.u32 %v7086, 7
          %v7088 = vsub.s32 5, %v7087
          %v7089 = vrot.slane %v7062, %v7088
          %v7090 = vlaneseq
          %v7091 = vshrl.u32 %v7090, 7
          %v7092 = vsub.s32 6, %v7091
          %v7093 = vrot.slane %v7062, %v7092
          %v7094 = vlaneseq
          %v7095 = vshrl.u32 %v7094, 7
          %v7096 = vsub.s32 7, %v7095
          %v7097 = vrot.slane %v7062, %v7096
          %v7098 = vlaneseq
          %v7099 = vshrl.u32 %v7098, 7
          %v7100 = vsub.s32 0, %v7099
          %v7101 = vrot.slane %v7063, %v7100
          %v7102 = vlaneseq
          %v7103 = vshrl.u32 %v7102, 7
          %v7104 = vsub.s32 1, %v7103
          %v7105 = vrot.slane %v7063, %v7104
          %v7116 = vadd.f32 %v7042, %v7069
          %v7117 = vadd.f32 %v7043, %v7073
          %v7118 = vadd.f32 %v7044, %v7077
          %v7119 = vadd.f32 %v7045, %v7081
          %v7120 = vadd.f32 %v7046, %v7085
          %v7121 = vadd.f32 %v7047, %v7089
          %v7122 = vadd.f32 %v7048, %v7093
          %v7123 = vadd.f32 %v7049, %v7097
          %v7124 = vadd.f32 %v7050, %v7101
          %v7125 = vadd.f32 %v7051, %v7105
          %v7126 = vadd.f32 %v7052, %v7069
          %v7127 = vadd.f32 %v7053, %v7073
          %v7128 = vadd.f32 %v7054, %v7077
          %v7129 = vadd.f32 %v7055, %v7081
          %v7130 = vadd.f32 %v7056, %v7085
          %v7131 = vadd.f32 %v7057, %v7089
          %v7132 = vadd.f32 %v7058, %v7093
          %v7133 = vadd.f32 %v7059, %v7097
          %v7134 = vadd.f32 %v7060, %v7101
          %v7135 = vadd.f32 %v7061, %v7105
          %v7136 = vadd.f32 %v7116, %v7117
          %v7137 = vadd.f32 %v7136, %v7118
          %v7138 = vadd.f32 %v7137, %v7119
          %v7139 = vadd.f32 %v7138, %v7120
          %v7140 = vadd.f32 %v7139, %v7121
          %v7141 = vadd.f32 %v7140, %v7122
          %v7142 = vadd.f32 %v7141, %v7123
          %v7143 = vadd.f32 %v7142, %v7124
          %v7144 = vadd.f32 %v7143, %v7125
          %vm7145 = vcmask 1042432
          %v7146 = vsel %vm7145, %v7126, 0.0
          %v7147 = vadd.f32 %v7144, %v7146
          %v7148 = vsel %vm7145, %v7127, 0.0
          %v7149 = vadd.f32 %v7147, %v7148
          %v7150 = vsel %vm7145, %v7128, 0.0
          %v7151 = vadd.f32 %v7149, %v7150
          %v7152 = vsel %vm7145, %v7129, 0.0
          %v7153 = vadd.f32 %v7151, %v7152
          %v7154 = vsel %vm7145, %v7130, 0.0
          %v7155 = vadd.f32 %v7153, %v7154
          %v7156 = vsel %vm7145, %v7131, 0.0
          %v7157 = vadd.f32 %v7155, %v7156
          %v7158 = vsel %vm7145, %v7132, 0.0
          %v7159 = vadd.f32 %v7157, %v7158
          %v7160 = vsel %vm7145, %v7133, 0.0
          %v7161 = vadd.f32 %v7159, %v7160
          %v7162 = vsel %vm7145, %v7134, 0.0
          %v7163 = vadd.f32 %v7161, %v7162
          %v7164 = vsel %vm7145, %v7135, 0.0
          %v7165 = vadd.f32 %v7163, %v7164
          %7166 = vadd.xlane.f32.xlu0 %v7165
          %v7167 = vpop.xlane.xlu0 %7166
          %v7168 = vrot.slane %v7167, 4
          %v7169 = vadd.f32 %v7167, %v7168
          %v7170 = vrot.slane %v7169, 2
          %v7171 = vadd.f32 %v7169, %v7170
          %v7172 = vrot.slane %v7171, 1
          %v7173 = vadd.f32 %v7171, %v7172
          %s7174 = vtos %v7173
          %v7175 = vrcp.pop 14080.0
          %s7176 = vtos %v7175
          %s7177 = smul.f32 %s7174, %s7176
          %v7178 = vstv %s7177
          %v7179 = vsub.f32 %v7116, %v7178
          %v7180 = vsub.f32 %v7117, %v7178
          %v7181 = vsub.f32 %v7118, %v7178
          %v7182 = vsub.f32 %v7119, %v7178
          %v7183 = vsub.f32 %v7120, %v7178
          %v7184 = vsub.f32 %v7121, %v7178
          %v7185 = vsub.f32 %v7122, %v7178
          %v7186 = vsub.f32 %v7123, %v7178
          %v7187 = vsub.f32 %v7124, %v7178
          %v7188 = vsub.f32 %v7125, %v7178
          %v7189 = vsub.f32 %v7126, %v7178
          %v7190 = vsub.f32 %v7127, %v7178
          %v7191 = vsub.f32 %v7128, %v7178
          %v7192 = vsub.f32 %v7129, %v7178
          %v7193 = vsub.f32 %v7130, %v7178
          %v7194 = vsub.f32 %v7131, %v7178
          %v7195 = vsub.f32 %v7132, %v7178
          %v7196 = vsub.f32 %v7133, %v7178
          %v7197 = vsub.f32 %v7134, %v7178
          %v7198 = vsub.f32 %v7135, %v7178
          %v7199 = vmul.f32 %v7179, %v7179
          %v7200 = vmul.f32 %v7180, %v7180
          %v7201 = vmul.f32 %v7181, %v7181
          %v7202 = vmul.f32 %v7182, %v7182
          %v7203 = vmul.f32 %v7183, %v7183
          %v7204 = vmul.f32 %v7184, %v7184
          %v7205 = vmul.f32 %v7185, %v7185
          %v7206 = vmul.f32 %v7186, %v7186
          %v7207 = vmul.f32 %v7187, %v7187
          %v7208 = vmul.f32 %v7188, %v7188
          %v7209 = vmul.f32 %v7189, %v7189
          %v7210 = vmul.f32 %v7190, %v7190
          %v7211 = vmul.f32 %v7191, %v7191
          %v7212 = vmul.f32 %v7192, %v7192
          %v7213 = vmul.f32 %v7193, %v7193
          %v7214 = vmul.f32 %v7194, %v7194
          %v7215 = vmul.f32 %v7195, %v7195
          %v7216 = vmul.f32 %v7196, %v7196
          %v7217 = vmul.f32 %v7197, %v7197
          %v7218 = vmul.f32 %v7198, %v7198
          %v7219 = vadd.f32 %v7199, %v7200
          %v7220 = vadd.f32 %v7219, %v7201
          %v7221 = vadd.f32 %v7220, %v7202
          %v7222 = vadd.f32 %v7221, %v7203
          %v7223 = vadd.f32 %v7222, %v7204
          %v7224 = vadd.f32 %v7223, %v7205
          %v7225 = vadd.f32 %v7224, %v7206
          %v7226 = vadd.f32 %v7225, %v7207
          %v7227 = vadd.f32 %v7226, %v7208
          %v7228 = vsel %vm7145, %v7209, 0.0
          %v7229 = vadd.f32 %v7227, %v7228
          %v7230 = vsel %vm7145, %v7210, 0.0
          %v7231 = vadd.f32 %v7229, %v7230
          %v7232 = vsel %vm7145, %v7211, 0.0
          %v7233 = vadd.f32 %v7231, %v7232
          %v7234 = vsel %vm7145, %v7212, 0.0
          %v7235 = vadd.f32 %v7233, %v7234
          %v7236 = vsel %vm7145, %v7213, 0.0
          %v7237 = vadd.f32 %v7235, %v7236
          %v7238 = vsel %vm7145, %v7214, 0.0
          %v7239 = vadd.f32 %v7237, %v7238
          %v7240 = vsel %vm7145, %v7215, 0.0
          %v7241 = vadd.f32 %v7239, %v7240
          %v7242 = vsel %vm7145, %v7216, 0.0
          %v7243 = vadd.f32 %v7241, %v7242
          %v7244 = vsel %vm7145, %v7217, 0.0
          %v7245 = vadd.f32 %v7243, %v7244
          %v7246 = vsel %vm7145, %v7218, 0.0
          %v7247 = vadd.f32 %v7245, %v7246
          %7248 = vadd.xlane.f32.xlu0 %v7247
          %v7249 = vpop.xlane.xlu0 %7248
          %v7250 = vrot.slane %v7249, 4
          %v7251 = vadd.f32 %v7249, %v7250
          %v7252 = vrot.slane %v7251, 2
          %v7253 = vadd.f32 %v7251, %v7252
          %v7254 = vrot.slane %v7253, 1
          %v7255 = vadd.f32 %v7253, %v7254
          %s7256 = vtos %v7255
          %v7257 = vrcp.pop 14080.0
          %s7258 = vtos %v7257
          %s7259 = smul.f32 %s7256, %s7258
          %s7260 = sadd.f32 %s7259, 1e-05
          %v7261 = vstv %s7260
          %v7262 = vrsqrt.pop %v7261
          %s7263 = vtos %v7262
          %v7264 = vstv %s7263
          %v7265 = vmul.f32 %v7179, %v7264
          %v7266 = vmul.f32 %v7180, %v7264
          %v7267 = vmul.f32 %v7181, %v7264
          %v7268 = vmul.f32 %v7182, %v7264
          %v7269 = vmul.f32 %v7183, %v7264
          %v7270 = vmul.f32 %v7184, %v7264
          %v7271 = vmul.f32 %v7185, %v7264
          %v7272 = vmul.f32 %v7186, %v7264
          %v7273 = vmul.f32 %v7187, %v7264
          %v7274 = vmul.f32 %v7188, %v7264
          %v7275 = vmul.f32 %v7189, %v7264
          %v7276 = vmul.f32 %v7190, %v7264
          %v7277 = vmul.f32 %v7191, %v7264
          %v7278 = vmul.f32 %v7192, %v7264
          %v7279 = vmul.f32 %v7193, %v7264
          %v7280 = vmul.f32 %v7194, %v7264
          %v7281 = vmul.f32 %v7195, %v7264
          %v7282 = vmul.f32 %v7196, %v7264
          %v7283 = vmul.f32 %v7197, %v7264
          %v7284 = vmul.f32 %v7198, %v7264
          %v7285 = vld [vmem:[#allocation15] sm:$0xff]
          %v7286 = vld [vmem:[#allocation15 + $0x8] sm:$0xff]
          %v7287 = vld [vmem:[#allocation15 + $0x10] sm:$0xff]
          %v7288 = vld [vmem:[#allocation15 + $0x18] sm:$0xff]
          %v7289 = vld [vmem:[#allocation15 + $0x20] sm:$0xff]
          %v7290 = vld [vmem:[#allocation15 + $0x28] sm:$0xff]
          %v7291 = vld [vmem:[#allocation15 + $0x30] sm:$0xff]
          %v7292 = vld [vmem:[#allocation15 + $0x38] sm:$0xff]
          %v7293 = vld [vmem:[#allocation15 + $0x40] sm:$0xff]
          %v7294 = vld [vmem:[#allocation15 + $0x48] sm:$0xff]
          %v7295 = vld [vmem:[#allocation15 + $0x50] sm:$0x7]
          %v7296 = vld [vmem:[#allocation15 + $0x58] sm:$0x7]
          %v7297 = vld [vmem:[#allocation15 + $0x60] sm:$0x7]
          %v7298 = vld [vmem:[#allocation15 + $0x68] sm:$0x7]
          %v7299 = vld [vmem:[#allocation15 + $0x70] sm:$0x7]
          %v7300 = vld [vmem:[#allocation15 + $0x78] sm:$0x7]
          %v7301 = vld [vmem:[#allocation15 + $0x80] sm:$0x7]
          %v7302 = vld [vmem:[#allocation15 + $0x88] sm:$0x7]
          %v7303 = vld [vmem:[#allocation15 + $0x90] sm:$0x7]
          %v7304 = vld [vmem:[#allocation15 + $0x98] sm:$0x7]
          %v7305 = vmul.f32 %v7265, %v7285
          %v7306 = vmul.f32 %v7266, %v7286
          %v7307 = vmul.f32 %v7267, %v7287
          %v7308 = vmul.f32 %v7268, %v7288
          %v7309 = vmul.f32 %v7269, %v7289
          %v7310 = vmul.f32 %v7270, %v7290
          %v7311 = vmul.f32 %v7271, %v7291
          %v7312 = vmul.f32 %v7272, %v7292
          %v7313 = vmul.f32 %v7273, %v7293
          %v7314 = vmul.f32 %v7274, %v7294
          %v7315 = vmul.f32 %v7275, %v7295
          %v7316 = vmul.f32 %v7276, %v7296
          %v7317 = vmul.f32 %v7277, %v7297
          %v7318 = vmul.f32 %v7278, %v7298
          %v7319 = vmul.f32 %v7279, %v7299
          %v7320 = vmul.f32 %v7280, %v7300
          %v7321 = vmul.f32 %v7281, %v7301
          %v7322 = vmul.f32 %v7282, %v7302
          %v7323 = vmul.f32 %v7283, %v7303
          %v7324 = vmul.f32 %v7284, %v7304
          %v7325 = vld [vmem:[#allocation17] sm:$0xff]
          %v7326 = vld [vmem:[#allocation17 + $0x8] sm:$0xff]
          %v7327 = vld [vmem:[#allocation17 + $0x10] sm:$0xff]
          %v7328 = vld [vmem:[#allocation17 + $0x18] sm:$0xff]
          %v7329 = vld [vmem:[#allocation17 + $0x20] sm:$0xff]
          %v7330 = vld [vmem:[#allocation17 + $0x28] sm:$0xff]
          %v7331 = vld [vmem:[#allocation17 + $0x30] sm:$0xff]
          %v7332 = vld [vmem:[#allocation17 + $0x38] sm:$0xff]
          %v7333 = vld [vmem:[#allocation17 + $0x40] sm:$0xff]
          %v7334 = vld [vmem:[#allocation17 + $0x48] sm:$0xff]
          %v7335 = vld [vmem:[#allocation17 + $0x50] sm:$0x7]
          %v7336 = vld [vmem:[#allocation17 + $0x58] sm:$0x7]
          %v7337 = vld [vmem:[#allocation17 + $0x60] sm:$0x7]
          %v7338 = vld [vmem:[#allocation17 + $0x68] sm:$0x7]
          %v7339 = vld [vmem:[#allocation17 + $0x70] sm:$0x7]
          %v7340 = vld [vmem:[#allocation17 + $0x78] sm:$0x7]
          %v7341 = vld [vmem:[#allocation17 + $0x80] sm:$0x7]
          %v7342 = vld [vmem:[#allocation17 + $0x88] sm:$0x7]
          %v7343 = vld [vmem:[#allocation17 + $0x90] sm:$0x7]
          %v7344 = vld [vmem:[#allocation17 + $0x98] sm:$0x7]
          %v7345 = vadd.f32 %v7305, %v7325
          %v7346 = vadd.f32 %v7306, %v7326
          %v7347 = vadd.f32 %v7307, %v7327
          %v7348 = vadd.f32 %v7308, %v7328
          %v7349 = vadd.f32 %v7309, %v7329
          %v7350 = vadd.f32 %v7310, %v7330
          %v7351 = vadd.f32 %v7311, %v7331
          %v7352 = vadd.f32 %v7312, %v7332
          %v7353 = vadd.f32 %v7313, %v7333
          %v7354 = vadd.f32 %v7314, %v7334
          %v7355 = vadd.f32 %v7315, %v7335
          %v7356 = vadd.f32 %v7316, %v7336
          %v7357 = vadd.f32 %v7317, %v7337
          %v7358 = vadd.f32 %v7318, %v7338
          %v7359 = vadd.f32 %v7319, %v7339
          %v7360 = vadd.f32 %v7320, %v7340
          %v7361 = vadd.f32 %v7321, %v7341
          %v7362 = vadd.f32 %v7322, %v7342
          %v7363 = vadd.f32 %v7323, %v7343
          %v7364 = vadd.f32 %v7324, %v7344
          %7365 = vst [vmem:[#allocation2] sm:$0xff] %v7345
          %7366 = vst [vmem:[#allocation2 + $0x8] sm:$0xff] %v7346
          %7367 = vst [vmem:[#allocation2 + $0x10] sm:$0xff] %v7347
          %7368 = vst [vmem:[#allocation2 + $0x18] sm:$0xff] %v7348
          %7369 = vst [vmem:[#allocation2 + $0x20] sm:$0xff] %v7349
          %7370 = vst [vmem:[#allocation2 + $0x28] sm:$0xff] %v7350
          %7371 = vst [vmem:[#allocation2 + $0x30] sm:$0xff] %v7351
          %7372 = vst [vmem:[#allocation2 + $0x38] sm:$0xff] %v7352
          %7373 = vst [vmem:[#allocation2 + $0x40] sm:$0xff] %v7353
          %7374 = vst [vmem:[#allocation2 + $0x48] sm:$0xff] %v7354
          %7375 = vst [vmem:[#allocation2 + $0x50] sm:$0x7] %v7355
          %7376 = vst [vmem:[#allocation2 + $0x58] sm:$0x7] %v7356
          %7377 = vst [vmem:[#allocation2 + $0x60] sm:$0x7] %v7357
          %7378 = vst [vmem:[#allocation2 + $0x68] sm:$0x7] %v7358
          %7379 = vst [vmem:[#allocation2 + $0x70] sm:$0x7] %v7359
          %7380 = vst [vmem:[#allocation2 + $0x78] sm:$0x7] %v7360
          %7381 = vst [vmem:[#allocation2 + $0x80] sm:$0x7] %v7361
          %7382 = vst [vmem:[#allocation2 + $0x88] sm:$0x7] %v7362
          %7383 = vst [vmem:[#allocation2 + $0x90] sm:$0x7] %v7363
          %7384 = vst [vmem:[#allocation2 + $0x98] sm:$0x7] %v7364
          %7385 = vst [vmem:[%s10] sm:$0xff] %v7345
          %7386 = vst [vmem:[%s10 + $0x8] sm:$0xff] %v7346
          %7387 = vst [vmem:[%s10 + $0x10] sm:$0xff] %v7347
          %7388 = vst [vmem:[%s10 + $0x18] sm:$0xff] %v7348
          %7389 = vst [vmem:[%s10 + $0x20] sm:$0xff] %v7349
          %7390 = vst [vmem:[%s10 + $0x28] sm:$0xff] %v7350
          %7391 = vst [vmem:[%s10 + $0x30] sm:$0xff] %v7351
          %7392 = vst [vmem:[%s10 + $0x38] sm:$0xff] %v7352
          %7393 = vst [vmem:[%s10 + $0x40] sm:$0xff] %v7353
          %7394 = vst [vmem:[%s10 + $0x48] sm:$0xff] %v7354
          %7395 = vst [vmem:[%s10 + $0x50] sm:$0x7] %v7355
          %7396 = vst [vmem:[%s10 + $0x58] sm:$0x7] %v7356
          %7397 = vst [vmem:[%s10 + $0x60] sm:$0x7] %v7357
          %7398 = vst [vmem:[%s10 + $0x68] sm:$0x7] %v7358
          %7399 = vst [vmem:[%s10 + $0x70] sm:$0x7] %v7359
          %7400 = vst [vmem:[%s10 + $0x78] sm:$0x7] %v7360
          %7401 = vst [vmem:[%s10 + $0x80] sm:$0x7] %v7361
          %7402 = vst [vmem:[%s10 + $0x88] sm:$0x7] %v7362
          %7403 = vst [vmem:[%s10 + $0x90] sm:$0x7] %v7363
          %7404 = vst [vmem:[%s10 + $0x98] sm:$0x7] %v7364
          %v7405 = vld [vmem:[%s5813] sm:$0xff]
          %v7406 = vld [vmem:[%s5813 + $0x8] sm:$0xff]
          %v7407 = vld [vmem:[%s5813 + $0x10] sm:$0xff]
          %v7408 = vld [vmem:[%s5813 + $0x18] sm:$0xff]
          %v7409 = vld [vmem:[%s5813 + $0x20] sm:$0xff]
          %v7410 = vld [vmem:[%s5813 + $0x28] sm:$0xff]
          %v7411 = vld [vmem:[%s5813 + $0x30] sm:$0xff]
          %v7412 = vld [vmem:[%s5813 + $0x38] sm:$0xff]
          %v7413 = vld [vmem:[%s5813 + $0x40] sm:$0xff]
          %v7414 = vld [vmem:[%s5813 + $0x48] sm:$0xff]
          %v7415 = vld [vmem:[%s5813 + $0x50] sm:$0x7]
          %v7416 = vld [vmem:[%s5813 + $0x58] sm:$0x7]
          %v7417 = vld [vmem:[%s5813 + $0x60] sm:$0x7]
          %v7418 = vld [vmem:[%s5813 + $0x68] sm:$0x7]
          %v7419 = vld [vmem:[%s5813 + $0x70] sm:$0x7]
          %v7420 = vld [vmem:[%s5813 + $0x78] sm:$0x7]
          %v7421 = vld [vmem:[%s5813 + $0x80] sm:$0x7]
          %v7422 = vld [vmem:[%s5813 + $0x88] sm:$0x7]
          %v7423 = vld [vmem:[%s5813 + $0x90] sm:$0x7]
          %v7424 = vld [vmem:[%s5813 + $0x98] sm:$0x7]
          %v7425 = vld [vmem:[%s6712] sm:$0xff]
          %v7426 = vld [vmem:[%s6712 + $0x8] sm:$0xff]
          %v7427 = vld [vmem:[%s6712 + $0x10] sm:$0xff]
          %v7428 = vld [vmem:[%s6712 + $0x18] sm:$0xff]
          %v7429 = vld [vmem:[%s6712 + $0x20] sm:$0xff]
          %v7430 = vld [vmem:[%s6712 + $0x28] sm:$0xff]
          %v7431 = vld [vmem:[%s6712 + $0x30] sm:$0xff]
          %v7432 = vld [vmem:[%s6712 + $0x38] sm:$0xff]
          %v7433 = vld [vmem:[%s6712 + $0x40] sm:$0xff]
          %v7434 = vld [vmem:[%s6712 + $0x48] sm:$0xff]
          %v7435 = vld [vmem:[%s6712 + $0x50] sm:$0x7]
          %v7436 = vld [vmem:[%s6712 + $0x58] sm:$0x7]
          %v7437 = vld [vmem:[%s6712 + $0x60] sm:$0x7]
          %v7438 = vld [vmem:[%s6712 + $0x68] sm:$0x7]
          %v7439 = vld [vmem:[%s6712 + $0x70] sm:$0x7]
          %v7440 = vld [vmem:[%s6712 + $0x78] sm:$0x7]
          %v7441 = vld [vmem:[%s6712 + $0x80] sm:$0x7]
          %v7442 = vld [vmem:[%s6712 + $0x88] sm:$0x7]
          %v7443 = vld [vmem:[%s6712 + $0x90] sm:$0x7]
          %v7444 = vld [vmem:[%s6712 + $0x98] sm:$0x7]
          %v7445 = vadd.f32 %v7405, %v7425
          %v7446 = vadd.f32 %v7406, %v7426
          %v7447 = vadd.f32 %v7407, %v7427
          %v7448 = vadd.f32 %v7408, %v7428
          %v7449 = vadd.f32 %v7409, %v7429
          %v7450 = vadd.f32 %v7410, %v7430
          %v7451 = vadd.f32 %v7411, %v7431
          %v7452 = vadd.f32 %v7412, %v7432
          %v7453 = vadd.f32 %v7413, %v7433
          %v7454 = vadd.f32 %v7414, %v7434
          %v7455 = vadd.f32 %v7415, %v7435
          %v7456 = vadd.f32 %v7416, %v7436
          %v7457 = vadd.f32 %v7417, %v7437
          %v7458 = vadd.f32 %v7418, %v7438
          %v7459 = vadd.f32 %v7419, %v7439
          %v7460 = vadd.f32 %v7420, %v7440
          %v7461 = vadd.f32 %v7421, %v7441
          %v7462 = vadd.f32 %v7422, %v7442
          %v7463 = vadd.f32 %v7423, %v7443
          %v7464 = vadd.f32 %v7424, %v7444
          %v7465 = vld [vmem:[%s561] sm:$0xff]
          %v7466 = vld [vmem:[%s561 + $0x8] sm:$0x3]
          %v7469 = vlaneseq
          %v7470 = vshrl.u32 %v7469, 7
          %v7471 = vsub.s32 0, %v7470
          %v7472 = vrot.slane %v7465, %v7471
          %v7473 = vlaneseq
          %v7474 = vshrl.u32 %v7473, 7
          %v7475 = vsub.s32 1, %v7474
          %v7476 = vrot.slane %v7465, %v7475
          %v7477 = vlaneseq
          %v7478 = vshrl.u32 %v7477, 7
          %v7479 = vsub.s32 2, %v7478
          %v7480 = vrot.slane %v7465, %v7479
          %v7481 = vlaneseq
          %v7482 = vshrl.u32 %v7481, 7
          %v7483 = vsub.s32 3, %v7482
          %v7484 = vrot.slane %v7465, %v7483
          %v7485 = vlaneseq
          %v7486 = vshrl.u32 %v7485, 7
          %v7487 = vsub.s32 4, %v7486
          %v7488 = vrot.slane %v7465, %v7487
          %v7489 = vlaneseq
          %v7490 = vshrl.u32 %v7489, 7
          %v7491 = vsub.s32 5, %v7490
          %v7492 = vrot.slane %v7465, %v7491
          %v7493 = vlaneseq
          %v7494 = vshrl.u32 %v7493, 7
          %v7495 = vsub.s32 6, %v7494
          %v7496 = vrot.slane %v7465, %v7495
          %v7497 = vlaneseq
          %v7498 = vshrl.u32 %v7497, 7
          %v7499 = vsub.s32 7, %v7498
          %v7500 = vrot.slane %v7465, %v7499
          %v7501 = vlaneseq
          %v7502 = vshrl.u32 %v7501, 7
          %v7503 = vsub.s32 0, %v7502
          %v7504 = vrot.slane %v7466, %v7503
          %v7505 = vlaneseq
          %v7506 = vshrl.u32 %v7505, 7
          %v7507 = vsub.s32 1, %v7506
          %v7508 = vrot.slane %v7466, %v7507
          %v7519 = vadd.f32 %v7445, %v7472
          %v7520 = vadd.f32 %v7446, %v7476
          %v7521 = vadd.f32 %v7447, %v7480
          %v7522 = vadd.f32 %v7448, %v7484
          %v7523 = vadd.f32 %v7449, %v7488
          %v7524 = vadd.f32 %v7450, %v7492
          %v7525 = vadd.f32 %v7451, %v7496
          %v7526 = vadd.f32 %v7452, %v7500
          %v7527 = vadd.f32 %v7453, %v7504
          %v7528 = vadd.f32 %v7454, %v7508
          %v7529 = vadd.f32 %v7455, %v7472
          %v7530 = vadd.f32 %v7456, %v7476
          %v7531 = vadd.f32 %v7457, %v7480
          %v7532 = vadd.f32 %v7458, %v7484
          %v7533 = vadd.f32 %v7459, %v7488
          %v7534 = vadd.f32 %v7460, %v7492
          %v7535 = vadd.f32 %v7461, %v7496
          %v7536 = vadd.f32 %v7462, %v7500
          %v7537 = vadd.f32 %v7463, %v7504
          %v7538 = vadd.f32 %v7464, %v7508
          %v7539 = vadd.f32 %v7519, %v7520
          %v7540 = vadd.f32 %v7539, %v7521
          %v7541 = vadd.f32 %v7540, %v7522
          %v7542 = vadd.f32 %v7541, %v7523
          %v7543 = vadd.f32 %v7542, %v7524
          %v7544 = vadd.f32 %v7543, %v7525
          %v7545 = vadd.f32 %v7544, %v7526
          %v7546 = vadd.f32 %v7545, %v7527
          %v7547 = vadd.f32 %v7546, %v7528
          %v7548 = vsel %vm7145, %v7529, 0.0
          %v7549 = vadd.f32 %v7547, %v7548
          %v7550 = vsel %vm7145, %v7530, 0.0
          %v7551 = vadd.f32 %v7549, %v7550
          %v7552 = vsel %vm7145, %v7531, 0.0
          %v7553 = vadd.f32 %v7551, %v7552
          %v7554 = vsel %vm7145, %v7532, 0.0
          %v7555 = vadd.f32 %v7553, %v7554
          %v7556 = vsel %vm7145, %v7533, 0.0
          %v7557 = vadd.f32 %v7555, %v7556
          %v7558 = vsel %vm7145, %v7534, 0.0
          %v7559 = vadd.f32 %v7557, %v7558
          %v7560 = vsel %vm7145, %v7535, 0.0
          %v7561 = vadd.f32 %v7559, %v7560
          %v7562 = vsel %vm7145, %v7536, 0.0
          %v7563 = vadd.f32 %v7561, %v7562
          %v7564 = vsel %vm7145, %v7537, 0.0
          %v7565 = vadd.f32 %v7563, %v7564
          %v7566 = vsel %vm7145, %v7538, 0.0
          %v7567 = vadd.f32 %v7565, %v7566
          %7568 = vadd.xlane.f32.xlu0 %v7567
          %v7569 = vpop.xlane.xlu0 %7568
          %v7570 = vrot.slane %v7569, 4
          %v7571 = vadd.f32 %v7569, %v7570
          %v7572 = vrot.slane %v7571, 2
          %v7573 = vadd.f32 %v7571, %v7572
          %v7574 = vrot.slane %v7573, 1
          %v7575 = vadd.f32 %v7573, %v7574
          %s7576 = vtos %v7575
          %v7577 = vrcp.pop 14080.0
          %s7578 = vtos %v7577
          %s7579 = smul.f32 %s7576, %s7578
          %v7580 = vstv %s7579
          %v7581 = vsub.f32 %v7519, %v7580
          %v7582 = vsub.f32 %v7520, %v7580
          %v7583 = vsub.f32 %v7521, %v7580
          %v7584 = vsub.f32 %v7522, %v7580
          %v7585 = vsub.f32 %v7523, %v7580
          %v7586 = vsub.f32 %v7524, %v7580
          %v7587 = vsub.f32 %v7525, %v7580
          %v7588 = vsub.f32 %v7526, %v7580
          %v7589 = vsub.f32 %v7527, %v7580
          %v7590 = vsub.f32 %v7528, %v7580
          %v7591 = vsub.f32 %v7529, %v7580
          %v7592 = vsub.f32 %v7530, %v7580
          %v7593 = vsub.f32 %v7531, %v7580
          %v7594 = vsub.f32 %v7532, %v7580
          %v7595 = vsub.f32 %v7533, %v7580
          %v7596 = vsub.f32 %v7534, %v7580
          %v7597 = vsub.f32 %v7535, %v7580
          %v7598 = vsub.f32 %v7536, %v7580
          %v7599 = vsub.f32 %v7537, %v7580
          %v7600 = vsub.f32 %v7538, %v7580
          %v7601 = vmul.f32 %v7581, %v7581
          %v7602 = vmul.f32 %v7582, %v7582
          %v7603 = vmul.f32 %v7583, %v7583
          %v7604 = vmul.f32 %v7584, %v7584
          %v7605 = vmul.f32 %v7585, %v7585
          %v7606 = vmul.f32 %v7586, %v7586
          %v7607 = vmul.f32 %v7587, %v7587
          %v7608 = vmul.f32 %v7588, %v7588
          %v7609 = vmul.f32 %v7589, %v7589
          %v7610 = vmul.f32 %v7590, %v7590
          %v7611 = vmul.f32 %v7591, %v7591
          %v7612 = vmul.f32 %v7592, %v7592
          %v7613 = vmul.f32 %v7593, %v7593
          %v7614 = vmul.f32 %v7594, %v7594
          %v7615 = vmul.f32 %v7595, %v7595
          %v7616 = vmul.f32 %v7596, %v7596
          %v7617 = vmul.f32 %v7597, %v7597
          %v7618 = vmul.f32 %v7598, %v7598
          %v7619 = vmul.f32 %v7599, %v7599
          %v7620 = vmul.f32 %v7600, %v7600
          %v7621 = vadd.f32 %v7601, %v7602
          %v7622 = vadd.f32 %v7621, %v7603
          %v7623 = vadd.f32 %v7622, %v7604
          %v7624 = vadd.f32 %v7623, %v7605
          %v7625 = vadd.f32 %v7624, %v7606
          %v7626 = vadd.f32 %v7625, %v7607
          %v7627 = vadd.f32 %v7626, %v7608
          %v7628 = vadd.f32 %v7627, %v7609
          %v7629 = vadd.f32 %v7628, %v7610
          %v7630 = vsel %vm7145, %v7611, 0.0
          %v7631 = vadd.f32 %v7629, %v7630
          %v7632 = vsel %vm7145, %v7612, 0.0
          %v7633 = vadd.f32 %v7631, %v7632
          %v7634 = vsel %vm7145, %v7613, 0.0
          %v7635 = vadd.f32 %v7633, %v7634
          %v7636 = vsel %vm7145, %v7614, 0.0
          %v7637 = vadd.f32 %v7635, %v7636
          %v7638 = vsel %vm7145, %v7615, 0.0
          %v7639 = vadd.f32 %v7637, %v7638
          %v7640 = vsel %vm7145, %v7616, 0.0
          %v7641 = vadd.f32 %v7639, %v7640
          %v7642 = vsel %vm7145, %v7617, 0.0
          %v7643 = vadd.f32 %v7641, %v7642
          %v7644 = vsel %vm7145, %v7618, 0.0
          %v7645 = vadd.f32 %v7643, %v7644
          %v7646 = vsel %vm7145, %v7619, 0.0
          %v7647 = vadd.f32 %v7645, %v7646
          %v7648 = vsel %vm7145, %v7620, 0.0
          %v7649 = vadd.f32 %v7647, %v7648
          %7650 = vadd.xlane.f32.xlu0 %v7649
          %v7651 = vpop.xlane.xlu0 %7650
          %v7652 = vrot.slane %v7651, 4
          %v7653 = vadd.f32 %v7651, %v7652
          %v7654 = vrot.slane %v7653, 2
          %v7655 = vadd.f32 %v7653, %v7654
          %v7656 = vrot.slane %v7655, 1
          %v7657 = vadd.f32 %v7655, %v7656
          %s7658 = vtos %v7657
          %v7659 = vrcp.pop 14080.0
          %s7660 = vtos %v7659
          %s7661 = smul.f32 %s7658, %s7660
          %s7662 = sadd.f32 %s7661, 1e-05
          %v7663 = vstv %s7662
          %v7664 = vrsqrt.pop %v7663
          %s7665 = vtos %v7664
          %v7666 = vstv %s7665
          %v7667 = vmul.f32 %v7581, %v7666
          %v7668 = vmul.f32 %v7582, %v7666
          %v7669 = vmul.f32 %v7583, %v7666
          %v7670 = vmul.f32 %v7584, %v7666
          %v7671 = vmul.f32 %v7585, %v7666
          %v7672 = vmul.f32 %v7586, %v7666
          %v7673 = vmul.f32 %v7587, %v7666
          %v7674 = vmul.f32 %v7588, %v7666
          %v7675 = vmul.f32 %v7589, %v7666
          %v7676 = vmul.f32 %v7590, %v7666
          %v7677 = vmul.f32 %v7591, %v7666
          %v7678 = vmul.f32 %v7592, %v7666
          %v7679 = vmul.f32 %v7593, %v7666
          %v7680 = vmul.f32 %v7594, %v7666
          %v7681 = vmul.f32 %v7595, %v7666
          %v7682 = vmul.f32 %v7596, %v7666
          %v7683 = vmul.f32 %v7597, %v7666
          %v7684 = vmul.f32 %v7598, %v7666
          %v7685 = vmul.f32 %v7599, %v7666
          %v7686 = vmul.f32 %v7600, %v7666
          %v7687 = vld [vmem:[#allocation15] sm:$0xff]
          %v7688 = vld [vmem:[#allocation15 + $0x8] sm:$0xff]
          %v7689 = vld [vmem:[#allocation15 + $0x10] sm:$0xff]
          %v7690 = vld [vmem:[#allocation15 + $0x18] sm:$0xff]
          %v7691 = vld [vmem:[#allocation15 + $0x20] sm:$0xff]
          %v7692 = vld [vmem:[#allocation15 + $0x28] sm:$0xff]
          %v7693 = vld [vmem:[#allocation15 + $0x30] sm:$0xff]
          %v7694 = vld [vmem:[#allocation15 + $0x38] sm:$0xff]
          %v7695 = vld [vmem:[#allocation15 + $0x40] sm:$0xff]
          %v7696 = vld [vmem:[#allocation15 + $0x48] sm:$0xff]
          %v7697 = vld [vmem:[#allocation15 + $0x50] sm:$0x7]
          %v7698 = vld [vmem:[#allocation15 + $0x58] sm:$0x7]
          %v7699 = vld [vmem:[#allocation15 + $0x60] sm:$0x7]
          %v7700 = vld [vmem:[#allocation15 + $0x68] sm:$0x7]
          %v7701 = vld [vmem:[#allocation15 + $0x70] sm:$0x7]
          %v7702 = vld [vmem:[#allocation15 + $0x78] sm:$0x7]
          %v7703 = vld [vmem:[#allocation15 + $0x80] sm:$0x7]
          %v7704 = vld [vmem:[#allocation15 + $0x88] sm:$0x7]
          %v7705 = vld [vmem:[#allocation15 + $0x90] sm:$0x7]
          %v7706 = vld [vmem:[#allocation15 + $0x98] sm:$0x7]
          %v7707 = vmul.f32 %v7667, %v7687
          %v7708 = vmul.f32 %v7668, %v7688
          %v7709 = vmul.f32 %v7669, %v7689
          %v7710 = vmul.f32 %v7670, %v7690
          %v7711 = vmul.f32 %v7671, %v7691
          %v7712 = vmul.f32 %v7672, %v7692
          %v7713 = vmul.f32 %v7673, %v7693
          %v7714 = vmul.f32 %v7674, %v7694
          %v7715 = vmul.f32 %v7675, %v7695
          %v7716 = vmul.f32 %v7676, %v7696
          %v7717 = vmul.f32 %v7677, %v7697
          %v7718 = vmul.f32 %v7678, %v7698
          %v7719 = vmul.f32 %v7679, %v7699
          %v7720 = vmul.f32 %v7680, %v7700
          %v7721 = vmul.f32 %v7681, %v7701
          %v7722 = vmul.f32 %v7682, %v7702
          %v7723 = vmul.f32 %v7683, %v7703
          %v7724 = vmul.f32 %v7684, %v7704
          %v7725 = vmul.f32 %v7685, %v7705
          %v7726 = vmul.f32 %v7686, %v7706
          %v7727 = vld [vmem:[#allocation17] sm:$0xff]
          %v7728 = vld [vmem:[#allocation17 + $0x8] sm:$0xff]
          %v7729 = vld [vmem:[#allocation17 + $0x10] sm:$0xff]
          %v7730 = vld [vmem:[#allocation17 + $0x18] sm:$0xff]
          %v7731 = vld [vmem:[#allocation17 + $0x20] sm:$0xff]
          %v7732 = vld [vmem:[#allocation17 + $0x28] sm:$0xff]
          %v7733 = vld [vmem:[#allocation17 + $0x30] sm:$0xff]
          %v7734 = vld [vmem:[#allocation17 + $0x38] sm:$0xff]
          %v7735 = vld [vmem:[#allocation17 + $0x40] sm:$0xff]
          %v7736 = vld [vmem:[#allocation17 + $0x48] sm:$0xff]
          %v7737 = vld [vmem:[#allocation17 + $0x50] sm:$0x7]
          %v7738 = vld [vmem:[#allocation17 + $0x58] sm:$0x7]
          %v7739 = vld [vmem:[#allocation17 + $0x60] sm:$0x7]
          %v7740 = vld [vmem:[#allocation17 + $0x68] sm:$0x7]
          %v7741 = vld [vmem:[#allocation17 + $0x70] sm:$0x7]
          %v7742 = vld [vmem:[#allocation17 + $0x78] sm:$0x7]
          %v7743 = vld [vmem:[#allocation17 + $0x80] sm:$0x7]
          %v7744 = vld [vmem:[#allocation17 + $0x88] sm:$0x7]
          %v7745 = vld [vmem:[#allocation17 + $0x90] sm:$0x7]
          %v7746 = vld [vmem:[#allocation17 + $0x98] sm:$0x7]
          %v7747 = vadd.f32 %v7707, %v7727
          %v7748 = vadd.f32 %v7708, %v7728
          %v7749 = vadd.f32 %v7709, %v7729
          %v7750 = vadd.f32 %v7710, %v7730
          %v7751 = vadd.f32 %v7711, %v7731
          %v7752 = vadd.f32 %v7712, %v7732
          %v7753 = vadd.f32 %v7713, %v7733
          %v7754 = vadd.f32 %v7714, %v7734
          %v7755 = vadd.f32 %v7715, %v7735
          %v7756 = vadd.f32 %v7716, %v7736
          %v7757 = vadd.f32 %v7717, %v7737
          %v7758 = vadd.f32 %v7718, %v7738
          %v7759 = vadd.f32 %v7719, %v7739
          %v7760 = vadd.f32 %v7720, %v7740
          %v7761 = vadd.f32 %v7721, %v7741
          %v7762 = vadd.f32 %v7722, %v7742
          %v7763 = vadd.f32 %v7723, %v7743
          %v7764 = vadd.f32 %v7724, %v7744
          %v7765 = vadd.f32 %v7725, %v7745
          %v7766 = vadd.f32 %v7726, %v7746
          %7767 = vst [vmem:[%s5813] sm:$0xff] %v7747
          %7768 = vst [vmem:[%s5813 + $0x8] sm:$0xff] %v7748
          %7769 = vst [vmem:[%s5813 + $0x10] sm:$0xff] %v7749
          %7770 = vst [vmem:[%s5813 + $0x18] sm:$0xff] %v7750
          %7771 = vst [vmem:[%s5813 + $0x20] sm:$0xff] %v7751
          %7772 = vst [vmem:[%s5813 + $0x28] sm:$0xff] %v7752
          %7773 = vst [vmem:[%s5813 + $0x30] sm:$0xff] %v7753
          %7774 = vst [vmem:[%s5813 + $0x38] sm:$0xff] %v7754
          %7775 = vst [vmem:[%s5813 + $0x40] sm:$0xff] %v7755
          %7776 = vst [vmem:[%s5813 + $0x48] sm:$0xff] %v7756
          %7777 = vst [vmem:[%s5813 + $0x50] sm:$0x7] %v7757
          %7778 = vst [vmem:[%s5813 + $0x58] sm:$0x7] %v7758
          %7779 = vst [vmem:[%s5813 + $0x60] sm:$0x7] %v7759
          %7780 = vst [vmem:[%s5813 + $0x68] sm:$0x7] %v7760
          %7781 = vst [vmem:[%s5813 + $0x70] sm:$0x7] %v7761
          %7782 = vst [vmem:[%s5813 + $0x78] sm:$0x7] %v7762
          %7783 = vst [vmem:[%s5813 + $0x80] sm:$0x7] %v7763
          %7784 = vst [vmem:[%s5813 + $0x88] sm:$0x7] %v7764
          %7785 = vst [vmem:[%s5813 + $0x90] sm:$0x7] %v7765
          %7786 = vst [vmem:[%s5813 + $0x98] sm:$0x7] %v7766
          %s7787 = scalar_lea.vmem %s10, 160
          %7788 = vst [vmem:[%s7787] sm:$0xff] %v7747
          %7789 = vst [vmem:[%s7787 + $0x8] sm:$0xff] %v7748
          %7790 = vst [vmem:[%s7787 + $0x10] sm:$0xff] %v7749
          %7791 = vst [vmem:[%s7787 + $0x18] sm:$0xff] %v7750
          %7792 = vst [vmem:[%s7787 + $0x20] sm:$0xff] %v7751
          %7793 = vst [vmem:[%s7787 + $0x28] sm:$0xff] %v7752
          %7794 = vst [vmem:[%s7787 + $0x30] sm:$0xff] %v7753
          %7795 = vst [vmem:[%s7787 + $0x38] sm:$0xff] %v7754
          %7796 = vst [vmem:[%s7787 + $0x40] sm:$0xff] %v7755
          %7797 = vst [vmem:[%s7787 + $0x48] sm:$0xff] %v7756
          %7798 = vst [vmem:[%s7787 + $0x50] sm:$0x7] %v7757
          %7799 = vst [vmem:[%s7787 + $0x58] sm:$0x7] %v7758
          %7800 = vst [vmem:[%s7787 + $0x60] sm:$0x7] %v7759
          %7801 = vst [vmem:[%s7787 + $0x68] sm:$0x7] %v7760
          %7802 = vst [vmem:[%s7787 + $0x70] sm:$0x7] %v7761
          %7803 = vst [vmem:[%s7787 + $0x78] sm:$0x7] %v7762
          %7804 = vst [vmem:[%s7787 + $0x80] sm:$0x7] %v7763
          %7805 = vst [vmem:[%s7787 + $0x88] sm:$0x7] %v7764
          %7806 = vst [vmem:[%s7787 + $0x90] sm:$0x7] %v7765
          %7807 = vst [vmem:[%s7787 + $0x98] sm:$0x7] %v7766
        $region108: #{tpu_custom_call.1} parent=59 // pred_fallthru
          _
        // Predicated region
        $region109: #{tpu_custom_call.1} parent=59 // pred_check
          %p7808 = pneg %p307
        $region110: #{tpu_custom_call.1} parent=59 // pred_check_branch
          %7810 = sbr.rel (%p7808) target = $region112
        $region111: #{tpu_custom_call.1} parent=59 // pred_region
          _
        $region112: #{tpu_custom_call.1} parent=59 // pred_fallthru
          _
        // Predicated region
        $region113: #{tpu_custom_call.1} parent=59 // pred_check
          %p7811 = pneg %p307
        $region114: #{tpu_custom_call.1} parent=59 // pred_check_branch
          %7813 = sbr.rel (%p7811) target = $region116
        $region115: #{tpu_custom_call.1} parent=59 // pred_region
          _
        $region116: #{tpu_custom_call.1} parent=59 // pred_fallthru
          _
      $region60: #{tpu_custom_call.1} parent=5 // pred_fallthru
        _
      %p7814 = scmp.le.s32.totalorder 2, %s27
      // Predicated region
      $region117: #{tpu_custom_call.1} parent=5 // pred_check
        %p7815 = pneg %p7814
      $region118: #{tpu_custom_call.1} parent=5 // pred_check_branch
        %7817 = sbr.rel (%p7815) target = $region120
      $region119: #{tpu_custom_call.1} parent=5 // pred_region
        %s7818 = ssub.s32 %s27, 2
      $region120: #{tpu_custom_call.1} parent=5 // pred_fallthru
        _
    $region6: #{tpu_custom_call.1} parent=1 // loop_footer
      %s31 = sadd.s32 1, %s27
    $region7: #{tpu_custom_call.1} parent=1 // loop_footer_branch
      %26 = sbr.rel target = $region3
    $region8: #{tpu_custom_call.1} parent=1 // loop_exit
      _
    %7819 = vsyncpa [#allocation5], 1
    %s7820 = scalar_lea.sflag [#allocation5], 1
    %7821 = vsyncpa %s7820, 1
    %7822 = vsyncpa [#allocation7], 1
    %s7823 = scalar_lea.sflag [#allocation7], 1
    %7824 = vsyncpa %s7823, 1
    %7825 = vsyncpa [#allocation10], 1
    %s7826 = scalar_lea.sflag [#allocation10], 1
    %7827 = vsyncpa %s7826, 1
    %7828 = vsyncpa [#allocation13], 1
    %s7829 = scalar_lea.sflag [#allocation13], 1
    %7830 = vsyncpa %s7829, 1
    %7831 = vsyncpa [#allocation16], 1

</llo_original>
